<compile_context>
chip_gen: v7x
topology: tpu7x:2x2x1
jax: 0.10.0
libtpu: 0.0.40
codegen_flags: <defaults>
</compile_context>

<pallas_src>
import jax
import jax.numpy as jnp
from jax.experimental import pallas as pl
from jax.experimental.pallas import tpu as pltpu

_PAD = 16  # sublane-aligned left pad of the W axis (bf16 packs 16 sublanes)
_CP = pltpu.CompilerParams(
    dimension_semantics=("parallel",),
    vmem_limit_bytes=32 * 1024 * 1024,
)


def _round_up(x, m):
    return (x + m - 1) // m * m


def _pick_btile(B):
    # Up to 8 images per grid step, but keep >= 2 grid steps when B allows so the
    # "parallel" grid axis has work for both v7x TensorCores.
    if B >= 16:
        return 8
    return max(1, B // 2)


def _features_kernel(x_ref, w1_ref, b1_ref, w2_ref, b2_ref, o_ref,
                     xp1, ys1, xp2, ys2):
    # x_ref : (BT, 32, 32, 4) bf16   batch tile of NHWC images (Cin padded to 4)
    # w1_ref: (36, 32)  bf16         rows ordered (kh, kw, cin4)
    # b1_ref: (1, 32)   f32
    # w2_ref: (288, 64) bf16         rows ordered (kh, kw, cin)
    # b2_ref: (1, 64)   f32
    # o_ref : (BT, 64, 64) bf16      per image: rows = ho*8 + wo, cols = c
    # scratches (per-core, reused by every image in the tile):
    #   xp1 (34, 64, 4)  bf16  padded conv1 input
    #   ys1 (1024, 32)   f32   conv1+ReLU output
    #   xp2 (18, 48, 32) bf16  padded conv2 input
    #   ys2 (256, 64)    f32   conv2+ReLU output
    H1, W1, C1 = 32, 32, 4
    H2, W2, C2 = 16, 16, 32
    BT = x_ref.shape[0]

    def conv_relu(xp, w_ref, b_ref, H, W, C, kh_chunks):
        # im2col matmul(s); kh_chunks groups consecutive kh taps per contraction
        # (conv2 uses 3 chunks of K=96 to avoid a big live (256,288) im2col).
        acc = None
        for khs in kh_chunks:
            taps = []
            for kh in khs:
                for kw in range(3):
                    patch = xp[kh:kh + H, _PAD - 1 + kw:_PAD - 1 + kw + W, :]
                    taps.append(patch.reshape(H * W, C))
            im = taps[0] if len(taps) == 1 else jnp.concatenate(taps, axis=-1)
            r0 = khs[0] * 3 * C
            part = jnp.dot(im, w_ref[r0:r0 + 3 * len(khs) * C, :],
                           preferred_element_type=jnp.float32)
            acc = part if acc is None else acc + part
        return jnp.maximum(acc + b_ref[...], 0.0)           # (H*W, Cout) f32

    def maxpool2(ys, H, W, Cout):
        # rows of ys are h*W + w; 2x2 / stride-2 pool via strided sublane reads.
        ew = ys[pl.ds(0, H * W // 2, stride=2), :]           # w even
        ow = ys[pl.ds(1, H * W // 2, stride=2), :]           # w odd
        wmax = jnp.maximum(ew, ow)                           # rows = h*(W//2)+wo
        wmax = wmax.reshape(H // 2, 2, W // 2, Cout)         # (ho, hpar, wo, c)
        return jnp.maximum(wmax[:, 0], wmax[:, 1])           # (H//2, W//2, Cout)

    # Zero padded scratches ONCE per grid step: only the halo cells are read as
    # padding and the interior is fully rewritten per image, so zeros stay valid
    # for every image in the tile (amortized by BT).
    xp1[...] = jnp.zeros_like(xp1)
    xp2[...] = jnp.zeros_like(xp2)

    @pl.loop(0, BT)
    def _(i):
        # ---- stage 1: conv(4->32, pad=1) + ReLU + maxpool ----
        xp1[1:H1 + 1, _PAD:_PAD + W1, :] = x_ref[i]          # aligned bf16 store
        ys1[...] = conv_relu(xp1, w1_ref, b1_ref, H1, W1, C1, ((0, 1, 2),))
        p1 = maxpool2(ys1, H1, W1, 32)                       # (16, 16, 32) f32

        # ---- stage 2: conv(32->64, pad=1) + ReLU + maxpool ----
        xp2[1:H2 + 1, _PAD:_PAD + W2, :] = p1.astype(jnp.bfloat16)
        ys2[...] = conv_relu(xp2, w2_ref, b2_ref, H2, W2, C2, ((0,), (1,), (2,)))
        p2 = maxpool2(ys2, H2, W2, 64)                       # (8, 8, 64) f32

        # flatten in (h, w, c) order -> (1, 64, 64) block (matches fc1_w rows).
        # TODO(synk): last dim 64 (<128) -> lane-masked store; a lane-dense form
        # would need a sublane->lane relayout that isn't worth it for 8 KB/image.
        o_ref[pl.ds(i, 1), :, :] = p2.reshape(1, 64, 64).astype(o_ref.dtype)


def _mlp_kernel(x_ref, w1_ref, b1_ref, w2_ref, b2_ref, o_ref):
    # Linear(4096,128) + ReLU + Linear(128, 128-padded), bf16 MXU, f32 accumulate.
    h = jnp.dot(x_ref[...], w1_ref[...], preferred_element_type=jnp.float32)
    h = jnp.maximum(h + b1_ref[...], 0.0).astype(jnp.bfloat16)
    o_ref[...] = jnp.dot(h, w2_ref[...],
                         preferred_element_type=jnp.float32) + b2_ref[...]


def _features(x_nhwc4, w1, b1, w2, b2, bt):
    B = x_nhwc4.shape[0]
    return pl.pallas_call(
        _features_kernel,
        out_shape=jax.ShapeDtypeStruct((B, 64, 64), jnp.bfloat16),
        grid=(B // bt,),
        in_specs=[
            pl.BlockSpec((bt, 32, 32, 4), lambda b: (b, 0, 0, 0)),
            pl.BlockSpec((36, 32), lambda b: (0, 0)),     # resident across grid
            pl.BlockSpec((1, 32), lambda b: (0, 0)),
            pl.BlockSpec((288, 64), lambda b: (0, 0)),
            pl.BlockSpec((1, 64), lambda b: (0, 0)),
        ],
        out_specs=pl.BlockSpec((bt, 64, 64), lambda b: (b, 0, 0)),
        scratch_shapes=[
            pltpu.VMEM((34, _PAD + 32 + _PAD, 4), jnp.bfloat16),   # padded conv1 in
            pltpu.VMEM((32 * 32, 32), jnp.float32),                # conv1+ReLU out
            pltpu.VMEM((18, _PAD + 16 + _PAD, 32), jnp.bfloat16),  # padded conv2 in
            pltpu.VMEM((16 * 16, 64), jnp.float32),                # conv2+ReLU out
        ],
        compiler_params=_CP,
    )(x_nhwc4, w1, b1, w2, b2)


def _mlp(flat, fc1_w, fc1_b, fc2_w, fc2_b):
    B, K = flat.shape
    n_pad = fc2_w.shape[-1]
    bm = B if B <= 256 else 256     # bigger M tile: fewer steps / fc1_w re-pushes
    Bp = _round_up(B, bm)
    if Bp != B:
        flat = jnp.pad(flat, ((0, Bp - B), (0, 0)))
    out = pl.pallas_call(
        _mlp_kernel,
        out_shape=jax.ShapeDtypeStruct((Bp, n_pad), jnp.float32),
        grid=(Bp // bm,),
        in_specs=[
            pl.BlockSpec((bm, K), lambda i: (i, 0)),
            pl.BlockSpec((K, 128), lambda i: (0, 0)),     # fc1_w resident
            pl.BlockSpec((1, 128), lambda i: (0, 0)),
            pl.BlockSpec((128, n_pad), lambda i: (0, 0)),
            pl.BlockSpec((1, n_pad), lambda i: (0, 0)),
        ],
        out_specs=pl.BlockSpec((bm, n_pad), lambda i: (i, 0)),
        compiler_params=_CP,
    )(flat, fc1_w, fc1_b, fc2_w, fc2_b)
    return out[:B]


def init_params(key, num_classes=10):
    # Deterministic synthetic weights matching SimpleCNN.__init__ shapes.
    # NOTE for importing real torch weights:
    #  - conv1: torch (32,3,3,3) -> transpose(2,3,1,0) -> (3,3,3,32), pad cin 3->4
    #           with a zero channel -> reshape(36, 32)
    #  - conv2: torch (64,32,3,3) -> transpose(2,3,1,0).reshape(288, 64)
    #  - fc1  : torch rows are (c,h,w) flatten; permute rows to (h,w,c) order here.
    ks = jax.random.split(key, 8)
    s = 0.05
    w1 = jax.random.normal(ks[0], (3, 3, 3, 32), jnp.float32) * s
    w1 = jnp.pad(w1, ((0, 0), (0, 0), (0, 1), (0, 0)))       # cin 3 -> 4 (zeros)
    w1 = w1.reshape(36, 32).astype(jnp.bfloat16)
    b1 = jax.random.normal(ks[1], (1, 32), jnp.float32) * s
    w2 = (jax.random.normal(ks[2], (3, 3, 32, 64), jnp.float32) * s)
    w2 = w2.reshape(288, 64).astype(jnp.bfloat16)
    b2 = jax.random.normal(ks[3], (1, 64), jnp.float32) * s
    fc1_w = (jax.random.normal(ks[4], (64 * 8 * 8, 128), jnp.float32) * s
             ).astype(jnp.bfloat16)                           # rows in (h,w,c) order
    fc1_b = jax.random.normal(ks[5], (1, 128), jnp.float32) * s
    # fc2 lane-padded from num_classes to 128 (zeros); sliced off in the wrapper.
    fc2_w = jnp.zeros((128, 128), jnp.float32).at[:, :num_classes].set(
        jax.random.normal(ks[6], (128, num_classes), jnp.float32) * s
    ).astype(jnp.bfloat16)
    fc2_b = jnp.zeros((1, 128), jnp.float32).at[:, :num_classes].set(
        jax.random.normal(ks[7], (1, num_classes), jnp.float32) * s)
    return dict(w1=w1, b1=b1, w2=w2, b2=b2,
                fc1_w=fc1_w, fc1_b=fc1_b, fc2_w=fc2_w, fc2_b=fc2_b)


def simple_cnn_forward(x_nchw, params, num_classes=10):
    B = x_nchw.shape[0]
    # NCHW -> NHWC, pad Cin 3->4 (lane alignment), cast bf16: one tiny XLA fusion.
    # TODO(synk): could be folded into the features kernel with an in-kernel transpose.
    x = jnp.transpose(x_nchw, (0, 2, 3, 1))
    x = jnp.pad(x, ((0, 0), (0, 0), (0, 0), (0, 1))).astype(jnp.bfloat16)
    bt = _pick_btile(B)
    Bp = _round_up(B, bt)
    if Bp != B:
        x = jnp.pad(x, ((0, Bp - B), (0, 0), (0, 0), (0, 0)))
    feat = _features(x, params["w1"], params["b1"], params["w2"], params["b2"], bt)
    # torch Flatten order is baked into fc1_w at init, so this is a free
    # contiguous reshape of the (Bp, h*w, c) feature map (no transpose op).
    flat = feat.reshape(Bp, 64 * 64)                          # (Bp, 4096) bf16
    # nn.Dropout(0.2): inference-mode identity (no mask, no 1/(1-p) scaling).
    # TODO(synk): training-mode dropout (pltpu.prng_random_bits mask) not implemented.
    logits = _mlp(flat, params["fc1_w"], params["fc1_b"],
                  params["fc2_w"], params["fc2_b"])
    return logits[:B, :num_classes]                           # drop batch/lane padding


if __name__ == "__main__":
    key = jax.random.PRNGKey(0)
    k_x, k_p = jax.random.split(key)
    # Linear(64*8*8, 128) implies a 3x32x32 (CIFAR-like) input; small batch=2.
    x = jax.random.normal(k_x, (2, 3, 32, 32), jnp.float32)
    params = init_params(k_p, num_classes=10)
    out = jax.jit(simple_cnn_forward)(x, params)
    out = jax.block_until_ready(out)
    assert out.shape == (2, 10) and out.dtype == jnp.float32
    print("KERNEL_OK")
</pallas_src>

<mosaic_0001>
module attributes {stable_mosaic.version = 11 : i64} {
  func.func @_features_kernel(%arg0: i32, %arg1: memref<1x32x32x4xbf16, #tpu.memory_space<vmem>>, %arg2: memref<36x32xbf16, #tpu.memory_space<vmem>>, %arg3: memref<1x32xf32, #tpu.memory_space<vmem>>, %arg4: memref<288x64xbf16, #tpu.memory_space<vmem>>, %arg5: memref<1x64xf32, #tpu.memory_space<vmem>>, %arg6: memref<1x64x64xbf16, #tpu.memory_space<vmem>>, %arg7: memref<34x64x4xbf16, #tpu.memory_space<vmem>>, %arg8: memref<1024x32xf32, #tpu.memory_space<vmem>>, %arg9: memref<18x48x32xbf16, #tpu.memory_space<vmem>>, %arg10: memref<256x64xf32, #tpu.memory_space<vmem>>) attributes {dimension_semantics = [#tpu.dimension_semantics<parallel>], iteration_bounds = array<i64: 2>, scalar_prefetch = 0 : i64, scratch_operands = 4 : i64, tpu.core_type = #tpu.core_type<tc>, window_params = [{transform_indices = @transform_0, window_bounds = array<i64: 1, 32, 32, 4>}, {pipeline_mode = #tpu.pipeline_mode<synchronous>, transform_indices = @transform_1, window_bounds = array<i64: 36, 32>}, {pipeline_mode = #tpu.pipeline_mode<synchronous>, transform_indices = @transform_2, window_bounds = array<i64: 1, 32>}, {pipeline_mode = #tpu.pipeline_mode<synchronous>, transform_indices = @transform_3, window_bounds = array<i64: 288, 64>}, {pipeline_mode = #tpu.pipeline_mode<synchronous>, transform_indices = @transform_4, window_bounds = array<i64: 1, 64>}, {transform_indices = @transform_5, window_bounds = array<i64: 1, 64, 64>}]} {
    %cst = arith.constant 0.000000e+00 : bf16
    %0 = vector.broadcast %cst : bf16 to vector<34x64x4xbf16>
    %c0 = arith.constant 0 : index
    %c0_0 = arith.constant 0 : index
    %c0_1 = arith.constant 0 : index
    %1 = vector.load %arg7[%c0, %c0_0, %c0_1] : memref<34x64x4xbf16, #tpu.memory_space<vmem>>, vector<34x64x4xbf16>
    tpu.vector_store %arg7[%c0, %c0_0, %c0_1], %0 {strides = array<i32>} : memref<34x64x4xbf16, #tpu.memory_space<vmem>>, vector<34x64x4xbf16>,
    %cst_2 = arith.constant 0.000000e+00 : bf16
    %2 = vector.broadcast %cst_2 : bf16 to vector<18x48x32xbf16>
    %c0_3 = arith.constant 0 : index
    %c0_4 = arith.constant 0 : index
    %c0_5 = arith.constant 0 : index
    %3 = vector.load %arg9[%c0_3, %c0_4, %c0_5] : memref<18x48x32xbf16, #tpu.memory_space<vmem>>, vector<18x48x32xbf16>
    tpu.vector_store %arg9[%c0_3, %c0_4, %c0_5], %2 {strides = array<i32>} : memref<18x48x32xbf16, #tpu.memory_space<vmem>>, vector<18x48x32xbf16>,
    %c0_i32 = arith.constant 0 : i32
    %c1_i32 = arith.constant 1 : i32
    %4 = arith.muli %c0_i32, %c1_i32 : i32
    %c0_i32_6 = arith.constant 0 : i32
    %5 = arith.addi %c0_i32_6, %4 : i32
    %6 = arith.index_cast %5 : i32 to index
    %c0_7 = arith.constant 0 : index
    %c0_8 = arith.constant 0 : index
    %c0_9 = arith.constant 0 : index
    %7 = vector.load %arg1[%6, %c0_7, %c0_8, %c0_9] : memref<1x32x32x4xbf16, #tpu.memory_space<vmem>>, vector<1x32x32x4xbf16>
    %8 = vector.shape_cast %7 : vector<1x32x32x4xbf16> to vector<32x32x4xbf16>
    %c1 = arith.constant 1 : index
    %c16 = arith.constant 16 : index
    %c0_10 = arith.constant 0 : index
    %9 = vector.load %arg7[%c1, %c16, %c0_10] : memref<34x64x4xbf16, #tpu.memory_space<vmem>>, vector<32x32x4xbf16>
    tpu.vector_store %arg7[%c1, %c16, %c0_10], %8 {strides = array<i32>} : memref<34x64x4xbf16, #tpu.memory_space<vmem>>, vector<32x32x4xbf16>,
    %c0_11 = arith.constant 0 : index
    %c15 = arith.constant 15 : index
    %c0_12 = arith.constant 0 : index
    %10 = vector.load %arg7[%c0_11, %c15, %c0_12] : memref<34x64x4xbf16, #tpu.memory_space<vmem>>, vector<32x32x4xbf16>
    %11 = vector.shape_cast %10 : vector<32x32x4xbf16> to vector<1024x4xbf16>
    %c0_13 = arith.constant 0 : index
    %c16_14 = arith.constant 16 : index
    %c0_15 = arith.constant 0 : index
    %12 = vector.load %arg7[%c0_13, %c16_14, %c0_15] : memref<34x64x4xbf16, #tpu.memory_space<vmem>>, vector<32x32x4xbf16>
    %13 = vector.shape_cast %12 : vector<32x32x4xbf16> to vector<1024x4xbf16>
    %c0_16 = arith.constant 0 : index
    %c17 = arith.constant 17 : index
    %c0_17 = arith.constant 0 : index
    %14 = vector.load %arg7[%c0_16, %c17, %c0_17] : memref<34x64x4xbf16, #tpu.memory_space<vmem>>, vector<32x32x4xbf16>
    %15 = vector.shape_cast %14 : vector<32x32x4xbf16> to vector<1024x4xbf16>
    %c1_18 = arith.constant 1 : index
    %c15_19 = arith.constant 15 : index
    %c0_20 = arith.constant 0 : index
    %16 = vector.load %arg7[%c1_18, %c15_19, %c0_20] : memref<34x64x4xbf16, #tpu.memory_space<vmem>>, vector<32x32x4xbf16>
    %17 = vector.shape_cast %16 : vector<32x32x4xbf16> to vector<1024x4xbf16>
    %c1_21 = arith.constant 1 : index
    %c16_22 = arith.constant 16 : index
    %c0_23 = arith.constant 0 : index
    %18 = vector.load %arg7[%c1_21, %c16_22, %c0_23] : memref<34x64x4xbf16, #tpu.memory_space<vmem>>, vector<32x32x4xbf16>
    %19 = vector.shape_cast %18 : vector<32x32x4xbf16> to vector<1024x4xbf16>
    %c1_24 = arith.constant 1 : index
    %c17_25 = arith.constant 17 : index
    %c0_26 = arith.constant 0 : index
    %20 = vector.load %arg7[%c1_24, %c17_25, %c0_26] : memref<34x64x4xbf16, #tpu.memory_space<vmem>>, vector<32x32x4xbf16>
    %21 = vector.shape_cast %20 : vector<32x32x4xbf16> to vector<1024x4xbf16>
    %c2 = arith.constant 2 : index
    %c15_27 = arith.constant 15 : index
    %c0_28 = arith.constant 0 : index
    %22 = vector.load %arg7[%c2, %c15_27, %c0_28] : memref<34x64x4xbf16, #tpu.memory_space<vmem>>, vector<32x32x4xbf16>
    %23 = vector.shape_cast %22 : vector<32x32x4xbf16> to vector<1024x4xbf16>
    %c2_29 = arith.constant 2 : index
    %c16_30 = arith.constant 16 : index
    %c0_31 = arith.constant 0 : index
    %24 = vector.load %arg7[%c2_29, %c16_30, %c0_31] : memref<34x64x4xbf16, #tpu.memory_space<vmem>>, vector<32x32x4xbf16>
    %25 = vector.shape_cast %24 : vector<32x32x4xbf16> to vector<1024x4xbf16>
    %c2_32 = arith.constant 2 : index
    %c17_33 = arith.constant 17 : index
    %c0_34 = arith.constant 0 : index
    %26 = vector.load %arg7[%c2_32, %c17_33, %c0_34] : memref<34x64x4xbf16, #tpu.memory_space<vmem>>, vector<32x32x4xbf16>
    %27 = vector.shape_cast %26 : vector<32x32x4xbf16> to vector<1024x4xbf16>
    %28 = tpu.concatenate %11, %13, %15, %17, %19, %21, %23, %25, %27 in 1 : vector<1024x4xbf16>, vector<1024x4xbf16>, vector<1024x4xbf16>, vector<1024x4xbf16>, vector<1024x4xbf16>, vector<1024x4xbf16>, vector<1024x4xbf16>, vector<1024x4xbf16>, vector<1024x4xbf16> -> vector<1024x36xbf16>
    %c0_35 = arith.constant 0 : index
    %c0_36 = arith.constant 0 : index
    %29 = vector.load %arg2[%c0_35, %c0_36] : memref<36x32xbf16, #tpu.memory_space<vmem>>, vector<36x32xbf16>
    %cst_37 = arith.constant dense<0.000000e+00> : vector<1024x32xf32>
    %30 = tpu.matmul %28, %29, %cst_37 {dimension_numbers = #tpu.dot_dimension_numbers<[1], [0], [0], [1], [0, 0, 1, 1], [], []>} : vector<1024x36xbf16>, vector<36x32xbf16>, vector<1024x32xf32> -> vector<1024x32xf32>
    %c0_38 = arith.constant 0 : index
    %c0_39 = arith.constant 0 : index
    %31 = vector.load %arg3[%c0_38, %c0_39] : memref<1x32xf32, #tpu.memory_space<vmem>>, vector<1x32xf32>
    %32 = vector.broadcast %31 : vector<1x32xf32> to vector<1024x32xf32>
    %33 = arith.addf %30, %32 : vector<1024x32xf32>
    %cst_40 = arith.constant 0.000000e+00 : f32
    %34 = vector.broadcast %cst_40 : f32 to vector<1024x32xf32>
    %35 = arith.maximumf %33, %34 : vector<1024x32xf32>
    %c0_41 = arith.constant 0 : index
    %c0_42 = arith.constant 0 : index
    %36 = vector.load %arg8[%c0_41, %c0_42] : memref<1024x32xf32, #tpu.memory_space<vmem>>, vector<1024x32xf32>
    tpu.vector_store %arg8[%c0_41, %c0_42], %35 {strides = array<i32>} : memref<1024x32xf32, #tpu.memory_space<vmem>>, vector<1024x32xf32>,
    %c0_43 = arith.constant 0 : index
    %c0_44 = arith.constant 0 : index
    %37 = tpu.strided_load %arg8[%c0_43, %c0_44] {strides = array<i32: 2, 1>} : memref<1024x32xf32, #tpu.memory_space<vmem>>, vector<512x32xf32>
    %c1_45 = arith.constant 1 : index
    %c0_46 = arith.constant 0 : index
    %38 = tpu.strided_load %arg8[%c1_45, %c0_46] {strides = array<i32: 2, 1>} : memref<1024x32xf32, #tpu.memory_space<vmem>>, vector<512x32xf32>
    %39 = arith.maximumf %37, %38 : vector<512x32xf32>
    %40 = vector.shape_cast %39 : vector<512x32xf32> to vector<16x2x16x32xf32>
    %41 = vector.extract_strided_slice %40 {offsets = [0, 0, 0, 0], sizes = [16, 1, 16, 32], strides = [1, 1, 1, 1]} : vector<16x2x16x32xf32> to vector<16x1x16x32xf32>
    %42 = vector.shape_cast %41 : vector<16x1x16x32xf32> to vector<16x16x32xf32>
    %43 = vector.extract_strided_slice %40 {offsets = [0, 1, 0, 0], sizes = [16, 1, 16, 32], strides = [1, 1, 1, 1]} : vector<16x2x16x32xf32> to vector<16x1x16x32xf32>
    %44 = vector.shape_cast %43 : vector<16x1x16x32xf32> to vector<16x16x32xf32>
    %45 = arith.maximumf %42, %44 : vector<16x16x32xf32>
    %46 = arith.truncf %45 : vector<16x16x32xf32> to vector<16x16x32xbf16>
    %c1_47 = arith.constant 1 : index
    %c16_48 = arith.constant 16 : index
    %c0_49 = arith.constant 0 : index
    %47 = vector.load %arg9[%c1_47, %c16_48, %c0_49] : memref<18x48x32xbf16, #tpu.memory_space<vmem>>, vector<16x16x32xbf16>
    tpu.vector_store %arg9[%c1_47, %c16_48, %c0_49], %46 {strides = array<i32>} : memref<18x48x32xbf16, #tpu.memory_space<vmem>>, vector<16x16x32xbf16>,
    %c0_50 = arith.constant 0 : index
    %c15_51 = arith.constant 15 : index
    %c0_52 = arith.constant 0 : index
    %48 = vector.load %arg9[%c0_50, %c15_51, %c0_52] : memref<18x48x32xbf16, #tpu.memory_space<vmem>>, vector<16x16x32xbf16>
    %49 = vector.shape_cast %48 : vector<16x16x32xbf16> to vector<256x32xbf16>
    %c0_53 = arith.constant 0 : index
    %c16_54 = arith.constant 16 : index
    %c0_55 = arith.constant 0 : index
    %50 = vector.load %arg9[%c0_53, %c16_54, %c0_55] : memref<18x48x32xbf16, #tpu.memory_space<vmem>>, vector<16x16x32xbf16>
    %51 = vector.shape_cast %50 : vector<16x16x32xbf16> to vector<256x32xbf16>
    %c0_56 = arith.constant 0 : index
    %c17_57 = arith.constant 17 : index
    %c0_58 = arith.constant 0 : index
    %52 = vector.load %arg9[%c0_56, %c17_57, %c0_58] : memref<18x48x32xbf16, #tpu.memory_space<vmem>>, vector<16x16x32xbf16>
    %53 = vector.shape_cast %52 : vector<16x16x32xbf16> to vector<256x32xbf16>
    %54 = tpu.concatenate %49, %51, %53 in 1 : vector<256x32xbf16>, vector<256x32xbf16>, vector<256x32xbf16> -> vector<256x96xbf16>
    %c0_59 = arith.constant 0 : index
    %c0_60 = arith.constant 0 : index
    %55 = vector.load %arg4[%c0_59, %c0_60] : memref<288x64xbf16, #tpu.memory_space<vmem>>, vector<96x64xbf16>
    %cst_61 = arith.constant dense<0.000000e+00> : vector<256x64xf32>
    %56 = tpu.matmul %54, %55, %cst_61 {dimension_numbers = #tpu.dot_dimension_numbers<[1], [0], [0], [1], [0, 0, 1, 1], [], []>} : vector<256x96xbf16>, vector<96x64xbf16>, vector<256x64xf32> -> vector<256x64xf32>
    %c1_62 = arith.constant 1 : index
    %c15_63 = arith.constant 15 : index
    %c0_64 = arith.constant 0 : index
    %57 = vector.load %arg9[%c1_62, %c15_63, %c0_64] : memref<18x48x32xbf16, #tpu.memory_space<vmem>>, vector<16x16x32xbf16>
    %58 = vector.shape_cast %57 : vector<16x16x32xbf16> to vector<256x32xbf16>
    %c1_65 = arith.constant 1 : index
    %c16_66 = arith.constant 16 : index
    %c0_67 = arith.constant 0 : index
    %59 = vector.load %arg9[%c1_65, %c16_66, %c0_67] : memref<18x48x32xbf16, #tpu.memory_space<vmem>>, vector<16x16x32xbf16>
    %60 = vector.shape_cast %59 : vector<16x16x32xbf16> to vector<256x32xbf16>
    %c1_68 = arith.constant 1 : index
    %c17_69 = arith.constant 17 : index
    %c0_70 = arith.constant 0 : index
    %61 = vector.load %arg9[%c1_68, %c17_69, %c0_70] : memref<18x48x32xbf16, #tpu.memory_space<vmem>>, vector<16x16x32xbf16>
    %62 = vector.shape_cast %61 : vector<16x16x32xbf16> to vector<256x32xbf16>
    %63 = tpu.concatenate %58, %60, %62 in 1 : vector<256x32xbf16>, vector<256x32xbf16>, vector<256x32xbf16> -> vector<256x96xbf16>
    %c96 = arith.constant 96 : index
    %c0_71 = arith.constant 0 : index
    %64 = vector.load %arg4[%c96, %c0_71] : memref<288x64xbf16, #tpu.memory_space<vmem>>, vector<96x64xbf16>
    %cst_72 = arith.constant dense<0.000000e+00> : vector<256x64xf32>
    %65 = tpu.matmul %63, %64, %cst_72 {dimension_numbers = #tpu.dot_dimension_numbers<[1], [0], [0], [1], [0, 0, 1, 1], [], []>} : vector<256x96xbf16>, vector<96x64xbf16>, vector<256x64xf32> -> vector<256x64xf32>
    %66 = arith.addf %56, %65 : vector<256x64xf32>
    %c2_73 = arith.constant 2 : index
    %c15_74 = arith.constant 15 : index
    %c0_75 = arith.constant 0 : index
    %67 = vector.load %arg9[%c2_73, %c15_74, %c0_75] : memref<18x48x32xbf16, #tpu.memory_space<vmem>>, vector<16x16x32xbf16>
    %68 = vector.shape_cast %67 : vector<16x16x32xbf16> to vector<256x32xbf16>
    %c2_76 = arith.constant 2 : index
    %c16_77 = arith.constant 16 : index
    %c0_78 = arith.constant 0 : index
    %69 = vector.load %arg9[%c2_76, %c16_77, %c0_78] : memref<18x48x32xbf16, #tpu.memory_space<vmem>>, vector<16x16x32xbf16>
    %70 = vector.shape_cast %69 : vector<16x16x32xbf16> to vector<256x32xbf16>
    %c2_79 = arith.constant 2 : index
    %c17_80 = arith.constant 17 : index
    %c0_81 = arith.constant 0 : index
    %71 = vector.load %arg9[%c2_79, %c17_80, %c0_81] : memref<18x48x32xbf16, #tpu.memory_space<vmem>>, vector<16x16x32xbf16>
    %72 = vector.shape_cast %71 : vector<16x16x32xbf16> to vector<256x32xbf16>
    %73 = tpu.concatenate %68, %70, %72 in 1 : vector<256x32xbf16>, vector<256x32xbf16>, vector<256x32xbf16> -> vector<256x96xbf16>
    %c192 = arith.constant 192 : index
    %c0_82 = arith.constant 0 : index
    %74 = vector.load %arg4[%c192, %c0_82] : memref<288x64xbf16, #tpu.memory_space<vmem>>, vector<96x64xbf16>
    %cst_83 = arith.constant dense<0.000000e+00> : vector<256x64xf32>
    %75 = tpu.matmul %73, %74, %cst_83 {dimension_numbers = #tpu.dot_dimension_numbers<[1], [0], [0], [1], [0, 0, 1, 1], [], []>} : vector<256x96xbf16>, vector<96x64xbf16>, vector<256x64xf32> -> vector<256x64xf32>
    %76 = arith.addf %66, %75 : vector<256x64xf32>
    %c0_84 = arith.constant 0 : index
    %c0_85 = arith.constant 0 : index
    %77 = vector.load %arg5[%c0_84, %c0_85] : memref<1x64xf32, #tpu.memory_space<vmem>>, vector<1x64xf32>
    %78 = vector.broadcast %77 : vector<1x64xf32> to vector<256x64xf32>
    %79 = arith.addf %76, %78 : vector<256x64xf32>
    %cst_86 = arith.constant 0.000000e+00 : f32
    %80 = vector.broadcast %cst_86 : f32 to vector<256x64xf32>
    %81 = arith.maximumf %79, %80 : vector<256x64xf32>
    %c0_87 = arith.constant 0 : index
    %c0_88 = arith.constant 0 : index
    %82 = vector.load %arg10[%c0_87, %c0_88] : memref<256x64xf32, #tpu.memory_space<vmem>>, vector<256x64xf32>
    tpu.vector_store %arg10[%c0_87, %c0_88], %81 {strides = array<i32>} : memref<256x64xf32, #tpu.memory_space<vmem>>, vector<256x64xf32>,
    %c0_89 = arith.constant 0 : index
    %c0_90 = arith.constant 0 : index
    %83 = tpu.strided_load %arg10[%c0_89, %c0_90] {strides = array<i32: 2, 1>} : memref<256x64xf32, #tpu.memory_space<vmem>>, vector<128x64xf32>
    %c1_91 = arith.constant 1 : index
    %c0_92 = arith.constant 0 : index
    %84 = tpu.strided_load %arg10[%c1_91, %c0_92] {strides = array<i32: 2, 1>} : memref<256x64xf32, #tpu.memory_space<vmem>>, vector<128x64xf32>
    %85 = arith.maximumf %83, %84 : vector<128x64xf32>
    %86 = vector.shape_cast %85 : vector<128x64xf32> to vector<8x2x8x64xf32>
    %87 = vector.extract_strided_slice %86 {offsets = [0, 0, 0, 0], sizes = [8, 1, 8, 64], strides = [1, 1, 1, 1]} : vector<8x2x8x64xf32> to vector<8x1x8x64xf32>
    %88 = vector.shape_cast %87 : vector<8x1x8x64xf32> to vector<8x8x64xf32>
    %89 = vector.extract_strided_slice %86 {offsets = [0, 1, 0, 0], sizes = [8, 1, 8, 64], strides = [1, 1, 1, 1]} : vector<8x2x8x64xf32> to vector<8x1x8x64xf32>
    %90 = vector.shape_cast %89 : vector<8x1x8x64xf32> to vector<8x8x64xf32>
    %91 = arith.maximumf %88, %90 : vector<8x8x64xf32>
    %92 = vector.shape_cast %91 : vector<8x8x64xf32> to vector<1x64x64xf32>
    %93 = arith.truncf %92 : vector<1x64x64xf32> to vector<1x64x64xbf16>
    %94 = arith.index_cast %5 : i32 to index
    %c0_93 = arith.constant 0 : index
    %c0_94 = arith.constant 0 : index
    %95 = vector.load %arg6[%94, %c0_93, %c0_94] : memref<1x64x64xbf16, #tpu.memory_space<vmem>>, vector<1x64x64xbf16>
    tpu.vector_store %arg6[%94, %c0_93, %c0_94], %93 {strides = array<i32>} : memref<1x64x64xbf16, #tpu.memory_space<vmem>>, vector<1x64x64xbf16>,
    %c1_i32_95 = arith.constant 1 : i32
    return
  }
  func.func @transform_0(%arg0: i32) -> (i32, i32, i32, i32) {
    %c0_i32 = arith.constant 0 : i32
    %c0_i32_0 = arith.constant 0 : i32
    %c0_i32_1 = arith.constant 0 : i32
    %c0_i32_2 = arith.constant 0 : i32
    return %arg0, %c0_i32, %c0_i32_0, %c0_i32_1 : i32, i32, i32, i32
  }
  func.func @transform_1(%arg0: i32) -> (i32, i32) {
    %c0_i32 = arith.constant 0 : i32
    %c0_i32_0 = arith.constant 0 : i32
    %c0_i32_1 = arith.constant 0 : i32
    return %c0_i32, %c0_i32_0 : i32, i32
  }
  func.func @transform_2(%arg0: i32) -> (i32, i32) {
    %c0_i32 = arith.constant 0 : i32
    %c0_i32_0 = arith.constant 0 : i32
    %c0_i32_1 = arith.constant 0 : i32
    return %c0_i32, %c0_i32_0 : i32, i32
  }
  func.func @transform_3(%arg0: i32) -> (i32, i32) {
    %c0_i32 = arith.constant 0 : i32
    %c0_i32_0 = arith.constant 0 : i32
    %c0_i32_1 = arith.constant 0 : i32
    return %c0_i32, %c0_i32_0 : i32, i32
  }
  func.func @transform_4(%arg0: i32) -> (i32, i32) {
    %c0_i32 = arith.constant 0 : i32
    %c0_i32_0 = arith.constant 0 : i32
    %c0_i32_1 = arith.constant 0 : i32
    return %c0_i32, %c0_i32_0 : i32, i32
  }
  func.func @transform_5(%arg0: i32) -> (i32, i32, i32) {
    %c0_i32 = arith.constant 0 : i32
    %c0_i32_0 = arith.constant 0 : i32
    %c0_i32_1 = arith.constant 0 : i32
    return %arg0, %c0_i32, %c0_i32_0 : i32, i32, i32
  }
}

module attributes {stable_mosaic.version = 11 : i64} {
  func.func @_mlp_kernel(%arg0: i32, %arg1: memref<2x4096xbf16, #tpu.memory_space<vmem>>, %arg2: memref<4096x128xbf16, #tpu.memory_space<vmem>>, %arg3: memref<1x128xf32, #tpu.memory_space<vmem>>, %arg4: memref<128x128xbf16, #tpu.memory_space<vmem>>, %arg5: memref<1x128xf32, #tpu.memory_space<vmem>>, %arg6: memref<2x128xf32, #tpu.memory_space<vmem>>) attributes {dimension_semantics = [#tpu.dimension_semantics<parallel>], iteration_bounds = array<i64: 1>, scalar_prefetch = 0 : i64, scratch_operands = 0 : i64, tpu.core_type = #tpu.core_type<tc>, window_params = [{transform_indices = @transform_0, window_bounds = array<i64: 2, 4096>}, {pipeline_mode = #tpu.pipeline_mode<synchronous>, transform_indices = @transform_1, window_bounds = array<i64: 4096, 128>}, {pipeline_mode = #tpu.pipeline_mode<synchronous>, transform_indices = @transform_2, window_bounds = array<i64: 1, 128>}, {pipeline_mode = #tpu.pipeline_mode<synchronous>, transform_indices = @transform_3, window_bounds = array<i64: 128, 128>}, {pipeline_mode = #tpu.pipeline_mode<synchronous>, transform_indices = @transform_4, window_bounds = array<i64: 1, 128>}, {transform_indices = @transform_5, window_bounds = array<i64: 2, 128>}]} {
    %c0 = arith.constant 0 : index
    %c0_0 = arith.constant 0 : index
    %0 = vector.load %arg1[%c0, %c0_0] : memref<2x4096xbf16, #tpu.memory_space<vmem>>, vector<2x4096xbf16>
    %c0_1 = arith.constant 0 : index
    %c0_2 = arith.constant 0 : index
    %1 = vector.load %arg2[%c0_1, %c0_2] : memref<4096x128xbf16, #tpu.memory_space<vmem>>, vector<4096x128xbf16>
    %cst = arith.constant dense<0.000000e+00> : vector<2x128xf32>
    %2 = tpu.matmul %0, %1, %cst {dimension_numbers = #tpu.dot_dimension_numbers<[1], [0], [0], [1], [0, 0, 1, 1], [], []>} : vector<2x4096xbf16>, vector<4096x128xbf16>, vector<2x128xf32> -> vector<2x128xf32>
    %c0_3 = arith.constant 0 : index
    %c0_4 = arith.constant 0 : index
    %3 = vector.load %arg3[%c0_3, %c0_4] : memref<1x128xf32, #tpu.memory_space<vmem>>, vector<1x128xf32>
    %4 = vector.broadcast %3 : vector<1x128xf32> to vector<2x128xf32>
    %5 = arith.addf %2, %4 : vector<2x128xf32>
    %cst_5 = arith.constant 0.000000e+00 : f32
    %6 = vector.broadcast %cst_5 : f32 to vector<2x128xf32>
    %7 = arith.maximumf %5, %6 : vector<2x128xf32>
    %8 = arith.truncf %7 : vector<2x128xf32> to vector<2x128xbf16>
    %c0_6 = arith.constant 0 : index
    %c0_7 = arith.constant 0 : index
    %9 = vector.load %arg4[%c0_6, %c0_7] : memref<128x128xbf16, #tpu.memory_space<vmem>>, vector<128x128xbf16>
    %cst_8 = arith.constant dense<0.000000e+00> : vector<2x128xf32>
    %10 = tpu.matmul %8, %9, %cst_8 {dimension_numbers = #tpu.dot_dimension_numbers<[1], [0], [0], [1], [0, 0, 1, 1], [], []>} : vector<2x128xbf16>, vector<128x128xbf16>, vector<2x128xf32> -> vector<2x128xf32>
    %c0_9 = arith.constant 0 : index
    %c0_10 = arith.constant 0 : index
    %11 = vector.load %arg5[%c0_9, %c0_10] : memref<1x128xf32, #tpu.memory_space<vmem>>, vector<1x128xf32>
    %12 = vector.broadcast %11 : vector<1x128xf32> to vector<2x128xf32>
    %13 = arith.addf %10, %12 : vector<2x128xf32>
    %c0_11 = arith.constant 0 : index
    %c0_12 = arith.constant 0 : index
    %14 = vector.load %arg6[%c0_11, %c0_12] : memref<2x128xf32, #tpu.memory_space<vmem>>, vector<2x128xf32>
    tpu.vector_store %arg6[%c0_11, %c0_12], %13 {strides = array<i32>} : memref<2x128xf32, #tpu.memory_space<vmem>>, vector<2x128xf32>,
    return
  }
  func.func @transform_0(%arg0: i32) -> (i32, i32) {
    %c0_i32 = arith.constant 0 : i32
    %c0_i32_0 = arith.constant 0 : i32
    return %arg0, %c0_i32 : i32, i32
  }
  func.func @transform_1(%arg0: i32) -> (i32, i32) {
    %c0_i32 = arith.constant 0 : i32
    %c0_i32_0 = arith.constant 0 : i32
    %c0_i32_1 = arith.constant 0 : i32
    return %c0_i32, %c0_i32_0 : i32, i32
  }
  func.func @transform_2(%arg0: i32) -> (i32, i32) {
    %c0_i32 = arith.constant 0 : i32
    %c0_i32_0 = arith.constant 0 : i32
    %c0_i32_1 = arith.constant 0 : i32
    return %c0_i32, %c0_i32_0 : i32, i32
  }
  func.func @transform_3(%arg0: i32) -> (i32, i32) {
    %c0_i32 = arith.constant 0 : i32
    %c0_i32_0 = arith.constant 0 : i32
    %c0_i32_1 = arith.constant 0 : i32
    return %c0_i32, %c0_i32_0 : i32, i32
  }
  func.func @transform_4(%arg0: i32) -> (i32, i32) {
    %c0_i32 = arith.constant 0 : i32
    %c0_i32_0 = arith.constant 0 : i32
    %c0_i32_1 = arith.constant 0 : i32
    return %c0_i32, %c0_i32_0 : i32, i32
  }
  func.func @transform_5(%arg0: i32) -> (i32, i32) {
    %c0_i32 = arith.constant 0 : i32
    %c0_i32_0 = arith.constant 0 : i32
    return %arg0, %c0_i32 : i32, i32
  }
}

</mosaic_0001>

<llo_original>
// kernel: simple_cnn_forward.3
$region0: #{simple_cnn_forward.3}
  #allocation0 [shape = 'u32[]', space=smem, size = 0x4, offset = 0x4, fixed_abs, tag = 'smem constant byte address 0x4 - core index']
  #allocation1 [shape = 'u32[144,128]{1,0:T(1,128)}', space=vmem, size = 0x12000, scoped, tag = 'internal scratch']
  %s0 = inlined_call_operand.vmem [shape: bf16[2,4096], index: 0, kind: input, shape index: {}]
  %s1 = inlined_call_operand.vmem [shape: bf16[4096,128], index: 1, kind: input, shape index: {}]
  %s2 = inlined_call_operand.vmem [shape: f32[1,128], index: 2, kind: input, shape index: {}]
  %s3 = inlined_call_operand.vmem [shape: bf16[128,128], index: 3, kind: input, shape index: {}]
  %s4 = inlined_call_operand.vmem [shape: f32[1,128], index: 4, kind: input, shape index: {}]
  %s5 = inlined_call_operand.hbm [shape: f32[2,128], index: 5, kind: output, shape index: {}]
  %s6 = sld [smem:[#allocation0]]
  $region30: #{simple_cnn_forward.3} parent=0
    _
  %s8 = ssub.s32 1, %s6
  %s9 = scalar_select 0, %s8, %s6
  $region1: #{simple_cnn_forward.3} parent=0
    #allocation2 [shape = 'u8[1024]{0}', space=vmem, size = 0x400, scoped, tag = 'output window, operand 0, single buffered']
    #allocation3 [shape = 's32[1]{0}', space=sflag, size = 0x4, scoped, tag = 'scoped memory for simple_cnn_forward.3']
    %10 = vsyncpa [#allocation3], 0
    // Predicated region
    $region2: #{simple_cnn_forward.3} parent=1 // pred_check
      _
    $region3: #{simple_cnn_forward.3} parent=1 // pred_check_branch
      %12 = sbr.rel (0) target = $region5
    $region4: #{simple_cnn_forward.3} parent=1 // pred_region
      _
    $region5: #{simple_cnn_forward.3} parent=1 // pred_fallthru
      _
    // Predicated region
    $region6: #{simple_cnn_forward.3} parent=1 // pred_check
      _
    $region7: #{simple_cnn_forward.3} parent=1 // pred_check_branch
      %14 = sbr.rel (0) target = $region9
    $region8: #{simple_cnn_forward.3} parent=1 // pred_region
      _
    $region9: #{simple_cnn_forward.3} parent=1 // pred_fallthru
      _
    // Predicated region
    $region10: #{simple_cnn_forward.3} parent=1 // pred_check
      _
    $region11: #{simple_cnn_forward.3} parent=1 // pred_check_branch
      %16 = sbr.rel (0) target = $region13
    $region12: #{simple_cnn_forward.3} parent=1 // pred_region
      _
    $region13: #{simple_cnn_forward.3} parent=1 // pred_fallthru
      _
    // Predicated region
    $region14: #{simple_cnn_forward.3} parent=1 // pred_check
      _
    $region15: #{simple_cnn_forward.3} parent=1 // pred_check_branch
      %18 = sbr.rel (0) target = $region17
    $region16: #{simple_cnn_forward.3} parent=1 // pred_region
      _
    $region17: #{simple_cnn_forward.3} parent=1 // pred_fallthru
      _
    // Predicated region
    $region18: #{simple_cnn_forward.3} parent=1 // pred_check
      _
    $region19: #{simple_cnn_forward.3} parent=1 // pred_check_branch
      %20 = sbr.rel (0) target = $region21
    $region20: #{simple_cnn_forward.3} parent=1 // pred_region
      _
    $region21: #{simple_cnn_forward.3} parent=1 // pred_fallthru
      _
    %v22 = vld [vmem:[%s0] sm:$0xff]
    %v23 = vld [vmem:[%s0 + $0x8] sm:$0xff]
    %v24 = vld [vmem:[%s0 + $0x10] sm:$0xff]
    %v25 = vld [vmem:[%s0 + $0x18] sm:$0xff]
    %v26 = vld [vmem:[%s1] sm:$0xf]
    %v27 = vld [vmem:[%s1 + $0x4] sm:$0xf]
    %v28 = vld [vmem:[%s1 + $0x8] sm:$0xf]
    %v29 = vld [vmem:[%s1 + $0xc] sm:$0xf]
    %v30 = vld [vmem:[%s1 + $0x10] sm:$0xf]
    %v31 = vld [vmem:[%s1 + $0x14] sm:$0xf]
    %v32 = vld [vmem:[%s1 + $0x18] sm:$0xf]
    %v33 = vld [vmem:[%s1 + $0x1c] sm:$0xf]
    %v34 = vld [vmem:[%s1 + $0x20] sm:$0xf]
    %v35 = vld [vmem:[%s1 + $0x24] sm:$0xf]
    %v36 = vld [vmem:[%s1 + $0x28] sm:$0xf]
    %v37 = vld [vmem:[%s1 + $0x2c] sm:$0xf]
    %v38 = vld [vmem:[%s1 + $0x30] sm:$0xf]
    %v39 = vld [vmem:[%s1 + $0x34] sm:$0xf]
    %v40 = vld [vmem:[%s1 + $0x38] sm:$0xf]
    %v41 = vld [vmem:[%s1 + $0x3c] sm:$0xf]
    %v42 = vld [vmem:[%s1 + $0x40] sm:$0xf]
    %v43 = vld [vmem:[%s1 + $0x44] sm:$0xf]
    %v44 = vld [vmem:[%s1 + $0x48] sm:$0xf]
    %v45 = vld [vmem:[%s1 + $0x4c] sm:$0xf]
    %v46 = vld [vmem:[%s1 + $0x50] sm:$0xf]
    %v47 = vld [vmem:[%s1 + $0x54] sm:$0xf]
    %v48 = vld [vmem:[%s1 + $0x58] sm:$0xf]
    %v49 = vld [vmem:[%s1 + $0x5c] sm:$0xf]
    %v50 = vld [vmem:[%s1 + $0x60] sm:$0xf]
    %v51 = vld [vmem:[%s1 + $0x64] sm:$0xf]
    %v52 = vld [vmem:[%s1 + $0x68] sm:$0xf]
    %v53 = vld [vmem:[%s1 + $0x6c] sm:$0xf]
    %v54 = vld [vmem:[%s1 + $0x70] sm:$0xf]
    %v55 = vld [vmem:[%s1 + $0x74] sm:$0xf]
    %v56 = vld [vmem:[%s1 + $0x78] sm:$0xf]
    %v57 = vld [vmem:[%s1 + $0x7c] sm:$0xf]
    %v58 = vld [vmem:[%s1 + $0x80] sm:$0xf]
    %v59 = vld [vmem:[%s1 + $0x84] sm:$0xf]
    %v60 = vld [vmem:[%s1 + $0x88] sm:$0xf]
    %v61 = vld [vmem:[%s1 + $0x8c] sm:$0xf]
    %v62 = vld [vmem:[%s1 + $0x90] sm:$0xf]
    %v63 = vld [vmem:[%s1 + $0x94] sm:$0xf]
    %v64 = vld [vmem:[%s1 + $0x98] sm:$0xf]
    %v65 = vld [vmem:[%s1 + $0x9c] sm:$0xf]
    %v66 = vld [vmem:[%s1 + $0xa0] sm:$0xf]
    %v67 = vld [vmem:[%s1 + $0xa4] sm:$0xf]
    %v68 = vld [vmem:[%s1 + $0xa8] sm:$0xf]
    %v69 = vld [vmem:[%s1 + $0xac] sm:$0xf]
    %v70 = vld [vmem:[%s1 + $0xb0] sm:$0xf]
    %v71 = vld [vmem:[%s1 + $0xb4] sm:$0xf]
    %v72 = vld [vmem:[%s1 + $0xb8] sm:$0xf]
    %v73 = vld [vmem:[%s1 + $0xbc] sm:$0xf]
    %v74 = vld [vmem:[%s1 + $0xc0] sm:$0xf]
    %v75 = vld [vmem:[%s1 + $0xc4] sm:$0xf]
    %v76 = vld [vmem:[%s1 + $0xc8] sm:$0xf]
    %v77 = vld [vmem:[%s1 + $0xcc] sm:$0xf]
    %v78 = vld [vmem:[%s1 + $0xd0] sm:$0xf]
    %v79 = vld [vmem:[%s1 + $0xd4] sm:$0xf]
    %v80 = vld [vmem:[%s1 + $0xd8] sm:$0xf]
    %v81 = vld [vmem:[%s1 + $0xdc] sm:$0xf]
    %v82 = vld [vmem:[%s1 + $0xe0] sm:$0xf]
    %v83 = vld [vmem:[%s1 + $0xe4] sm:$0xf]
    %v84 = vld [vmem:[%s1 + $0xe8] sm:$0xf]
    %v85 = vld [vmem:[%s1 + $0xec] sm:$0xf]
    %v86 = vld [vmem:[%s1 + $0xf0] sm:$0xf]
    %v87 = vld [vmem:[%s1 + $0xf4] sm:$0xf]
    %v88 = vld [vmem:[%s1 + $0xf8] sm:$0xf]
    %v89 = vld [vmem:[%s1 + $0xfc] sm:$0xf]
    %v90 = vld [vmem:[%s1 + $0x100] sm:$0xf]
    %v91 = vld [vmem:[%s1 + $0x104] sm:$0xf]
    %v92 = vld [vmem:[%s1 + $0x108] sm:$0xf]
    %v93 = vld [vmem:[%s1 + $0x10c] sm:$0xf]
    %v94 = vld [vmem:[%s1 + $0x110] sm:$0xf]
    %v95 = vld [vmem:[%s1 + $0x114] sm:$0xf]
    %v96 = vld [vmem:[%s1 + $0x118] sm:$0xf]
    %v97 = vld [vmem:[%s1 + $0x11c] sm:$0xf]
    %v98 = vld [vmem:[%s1 + $0x120] sm:$0xf]
    %v99 = vld [vmem:[%s1 + $0x124] sm:$0xf]
    %v100 = vld [vmem:[%s1 + $0x128] sm:$0xf]
    %v101 = vld [vmem:[%s1 + $0x12c] sm:$0xf]
    %v102 = vld [vmem:[%s1 + $0x130] sm:$0xf]
    %v103 = vld [vmem:[%s1 + $0x134] sm:$0xf]
    %v104 = vld [vmem:[%s1 + $0x138] sm:$0xf]
    %v105 = vld [vmem:[%s1 + $0x13c] sm:$0xf]
    %v106 = vld [vmem:[%s1 + $0x140] sm:$0xf]
    %v107 = vld [vmem:[%s1 + $0x144] sm:$0xf]
    %v108 = vld [vmem:[%s1 + $0x148] sm:$0xf]
    %v109 = vld [vmem:[%s1 + $0x14c] sm:$0xf]
    %v110 = vld [vmem:[%s1 + $0x150] sm:$0xf]
    %v111 = vld [vmem:[%s1 + $0x154] sm:$0xf]
    %v112 = vld [vmem:[%s1 + $0x158] sm:$0xf]
    %v113 = vld [vmem:[%s1 + $0x15c] sm:$0xf]
    %v114 = vld [vmem:[%s1 + $0x160] sm:$0xf]
    %v115 = vld [vmem:[%s1 + $0x164] sm:$0xf]
    %v116 = vld [vmem:[%s1 + $0x168] sm:$0xf]
    %v117 = vld [vmem:[%s1 + $0x16c] sm:$0xf]
    %v118 = vld [vmem:[%s1 + $0x170] sm:$0xf]
    %v119 = vld [vmem:[%s1 + $0x174] sm:$0xf]
    %v120 = vld [vmem:[%s1 + $0x178] sm:$0xf]
    %v121 = vld [vmem:[%s1 + $0x17c] sm:$0xf]
    %v122 = vld [vmem:[%s1 + $0x180] sm:$0xf]
    %v123 = vld [vmem:[%s1 + $0x184] sm:$0xf]
    %v124 = vld [vmem:[%s1 + $0x188] sm:$0xf]
    %v125 = vld [vmem:[%s1 + $0x18c] sm:$0xf]
    %v126 = vld [vmem:[%s1 + $0x190] sm:$0xf]
    %v127 = vld [vmem:[%s1 + $0x194] sm:$0xf]
    %v128 = vld [vmem:[%s1 + $0x198] sm:$0xf]
    %v129 = vld [vmem:[%s1 + $0x19c] sm:$0xf]
    %v130 = vld [vmem:[%s1 + $0x1a0] sm:$0xf]
    %v131 = vld [vmem:[%s1 + $0x1a4] sm:$0xf]
    %v132 = vld [vmem:[%s1 + $0x1a8] sm:$0xf]
    %v133 = vld [vmem:[%s1 + $0x1ac] sm:$0xf]
    %v134 = vld [vmem:[%s1 + $0x1b0] sm:$0xf]
    %v135 = vld [vmem:[%s1 + $0x1b4] sm:$0xf]
    %v136 = vld [vmem:[%s1 + $0x1b8] sm:$0xf]
    %v137 = vld [vmem:[%s1 + $0x1bc] sm:$0xf]
    %v138 = vld [vmem:[%s1 + $0x1c0] sm:$0xf]
    %v139 = vld [vmem:[%s1 + $0x1c4] sm:$0xf]
    %v140 = vld [vmem:[%s1 + $0x1c8] sm:$0xf]
    %v141 = vld [vmem:[%s1 + $0x1cc] sm:$0xf]
    %v142 = vld [vmem:[%s1 + $0x1d0] sm:$0xf]
    %v143 = vld [vmem:[%s1 + $0x1d4] sm:$0xf]
    %v144 = vld [vmem:[%s1 + $0x1d8] sm:$0xf]
    %v145 = vld [vmem:[%s1 + $0x1dc] sm:$0xf]
    %v146 = vld [vmem:[%s1 + $0x1e0] sm:$0xf]
    %v147 = vld [vmem:[%s1 + $0x1e4] sm:$0xf]
    %v148 = vld [vmem:[%s1 + $0x1e8] sm:$0xf]
    %v149 = vld [vmem:[%s1 + $0x1ec] sm:$0xf]
    %v150 = vld [vmem:[%s1 + $0x1f0] sm:$0xf]
    %v151 = vld [vmem:[%s1 + $0x1f4] sm:$0xf]
    %v152 = vld [vmem:[%s1 + $0x1f8] sm:$0xf]
    %v153 = vld [vmem:[%s1 + $0x1fc] sm:$0xf]
    %v154 = vld [vmem:[%s1 + $0x200] sm:$0xf]
    %v155 = vld [vmem:[%s1 + $0x204] sm:$0xf]
    %v156 = vld [vmem:[%s1 + $0x208] sm:$0xf]
    %v157 = vld [vmem:[%s1 + $0x20c] sm:$0xf]
    %v158 = vld [vmem:[%s1 + $0x210] sm:$0xf]
    %v159 = vld [vmem:[%s1 + $0x214] sm:$0xf]
    %v160 = vld [vmem:[%s1 + $0x218] sm:$0xf]
    %v161 = vld [vmem:[%s1 + $0x21c] sm:$0xf]
    %v162 = vld [vmem:[%s1 + $0x220] sm:$0xf]
    %v163 = vld [vmem:[%s1 + $0x224] sm:$0xf]
    %v164 = vld [vmem:[%s1 + $0x228] sm:$0xf]
    %v165 = vld [vmem:[%s1 + $0x22c] sm:$0xf]
    %v166 = vld [vmem:[%s1 + $0x230] sm:$0xf]
    %v167 = vld [vmem:[%s1 + $0x234] sm:$0xf]
    %v168 = vld [vmem:[%s1 + $0x238] sm:$0xf]
    %v169 = vld [vmem:[%s1 + $0x23c] sm:$0xf]
    %v170 = vld [vmem:[%s1 + $0x240] sm:$0xf]
    %v171 = vld [vmem:[%s1 + $0x244] sm:$0xf]
    %v172 = vld [vmem:[%s1 + $0x248] sm:$0xf]
    %v173 = vld [vmem:[%s1 + $0x24c] sm:$0xf]
    %v174 = vld [vmem:[%s1 + $0x250] sm:$0xf]
    %v175 = vld [vmem:[%s1 + $0x254] sm:$0xf]
    %v176 = vld [vmem:[%s1 + $0x258] sm:$0xf]
    %v177 = vld [vmem:[%s1 + $0x25c] sm:$0xf]
    %v178 = vld [vmem:[%s1 + $0x260] sm:$0xf]
    %v179 = vld [vmem:[%s1 + $0x264] sm:$0xf]
    %v180 = vld [vmem:[%s1 + $0x268] sm:$0xf]
    %v181 = vld [vmem:[%s1 + $0x26c] sm:$0xf]
    %v182 = vld [vmem:[%s1 + $0x270] sm:$0xf]
    %v183 = vld [vmem:[%s1 + $0x274] sm:$0xf]
    %v184 = vld [vmem:[%s1 + $0x278] sm:$0xf]
    %v185 = vld [vmem:[%s1 + $0x27c] sm:$0xf]
    %v186 = vld [vmem:[%s1 + $0x280] sm:$0xf]
    %v187 = vld [vmem:[%s1 + $0x284] sm:$0xf]
    %v188 = vld [vmem:[%s1 + $0x288] sm:$0xf]
    %v189 = vld [vmem:[%s1 + $0x28c] sm:$0xf]
    %v190 = vld [vmem:[%s1 + $0x290] sm:$0xf]
    %v191 = vld [vmem:[%s1 + $0x294] sm:$0xf]
    %v192 = vld [vmem:[%s1 + $0x298] sm:$0xf]
    %v193 = vld [vmem:[%s1 + $0x29c] sm:$0xf]
    %v194 = vld [vmem:[%s1 + $0x2a0] sm:$0xf]
    %v195 = vld [vmem:[%s1 + $0x2a4] sm:$0xf]
    %v196 = vld [vmem:[%s1 + $0x2a8] sm:$0xf]
    %v197 = vld [vmem:[%s1 + $0x2ac] sm:$0xf]
    %v198 = vld [vmem:[%s1 + $0x2b0] sm:$0xf]
    %v199 = vld [vmem:[%s1 + $0x2b4] sm:$0xf]
    %v200 = vld [vmem:[%s1 + $0x2b8] sm:$0xf]
    %v201 = vld [vmem:[%s1 + $0x2bc] sm:$0xf]
    %v202 = vld [vmem:[%s1 + $0x2c0] sm:$0xf]
    %v203 = vld [vmem:[%s1 + $0x2c4] sm:$0xf]
    %v204 = vld [vmem:[%s1 + $0x2c8] sm:$0xf]
    %v205 = vld [vmem:[%s1 + $0x2cc] sm:$0xf]
    %v206 = vld [vmem:[%s1 + $0x2d0] sm:$0xf]
    %v207 = vld [vmem:[%s1 + $0x2d4] sm:$0xf]
    %v208 = vld [vmem:[%s1 + $0x2d8] sm:$0xf]
    %v209 = vld [vmem:[%s1 + $0x2dc] sm:$0xf]
    %v210 = vld [vmem:[%s1 + $0x2e0] sm:$0xf]
    %v211 = vld [vmem:[%s1 + $0x2e4] sm:$0xf]
    %v212 = vld [vmem:[%s1 + $0x2e8] sm:$0xf]
    %v213 = vld [vmem:[%s1 + $0x2ec] sm:$0xf]
    %v214 = vld [vmem:[%s1 + $0x2f0] sm:$0xf]
    %v215 = vld [vmem:[%s1 + $0x2f4] sm:$0xf]
    %v216 = vld [vmem:[%s1 + $0x2f8] sm:$0xf]
    %v217 = vld [vmem:[%s1 + $0x2fc] sm:$0xf]
    %v218 = vld [vmem:[%s1 + $0x300] sm:$0xf]
    %v219 = vld [vmem:[%s1 + $0x304] sm:$0xf]
    %v220 = vld [vmem:[%s1 + $0x308] sm:$0xf]
    %v221 = vld [vmem:[%s1 + $0x30c] sm:$0xf]
    %v222 = vld [vmem:[%s1 + $0x310] sm:$0xf]
    %v223 = vld [vmem:[%s1 + $0x314] sm:$0xf]
    %v224 = vld [vmem:[%s1 + $0x318] sm:$0xf]
    %v225 = vld [vmem:[%s1 + $0x31c] sm:$0xf]
    %v226 = vld [vmem:[%s1 + $0x320] sm:$0xf]
    %v227 = vld [vmem:[%s1 + $0x324] sm:$0xf]
    %v228 = vld [vmem:[%s1 + $0x328] sm:$0xf]
    %v229 = vld [vmem:[%s1 + $0x32c] sm:$0xf]
    %v230 = vld [vmem:[%s1 + $0x330] sm:$0xf]
    %v231 = vld [vmem:[%s1 + $0x334] sm:$0xf]
    %v232 = vld [vmem:[%s1 + $0x338] sm:$0xf]
    %v233 = vld [vmem:[%s1 + $0x33c] sm:$0xf]
    %v234 = vld [vmem:[%s1 + $0x340] sm:$0xf]
    %v235 = vld [vmem:[%s1 + $0x344] sm:$0xf]
    %v236 = vld [vmem:[%s1 + $0x348] sm:$0xf]
    %v237 = vld [vmem:[%s1 + $0x34c] sm:$0xf]
    %v238 = vld [vmem:[%s1 + $0x350] sm:$0xf]
    %v239 = vld [vmem:[%s1 + $0x354] sm:$0xf]
    %v240 = vld [vmem:[%s1 + $0x358] sm:$0xf]
    %v241 = vld [vmem:[%s1 + $0x35c] sm:$0xf]
    %v242 = vld [vmem:[%s1 + $0x360] sm:$0xf]
    %v243 = vld [vmem:[%s1 + $0x364] sm:$0xf]
    %v244 = vld [vmem:[%s1 + $0x368] sm:$0xf]
    %v245 = vld [vmem:[%s1 + $0x36c] sm:$0xf]
    %v246 = vld [vmem:[%s1 + $0x370] sm:$0xf]
    %v247 = vld [vmem:[%s1 + $0x374] sm:$0xf]
    %v248 = vld [vmem:[%s1 + $0x378] sm:$0xf]
    %v249 = vld [vmem:[%s1 + $0x37c] sm:$0xf]
    %v250 = vld [vmem:[%s1 + $0x380] sm:$0xf]
    %v251 = vld [vmem:[%s1 + $0x384] sm:$0xf]
    %v252 = vld [vmem:[%s1 + $0x388] sm:$0xf]
    %v253 = vld [vmem:[%s1 + $0x38c] sm:$0xf]
    %v254 = vld [vmem:[%s1 + $0x390] sm:$0xf]
    %v255 = vld [vmem:[%s1 + $0x394] sm:$0xf]
    %v256 = vld [vmem:[%s1 + $0x398] sm:$0xf]
    %v257 = vld [vmem:[%s1 + $0x39c] sm:$0xf]
    %v258 = vld [vmem:[%s1 + $0x3a0] sm:$0xf]
    %v259 = vld [vmem:[%s1 + $0x3a4] sm:$0xf]
    %v260 = vld [vmem:[%s1 + $0x3a8] sm:$0xf]
    %v261 = vld [vmem:[%s1 + $0x3ac] sm:$0xf]
    %v262 = vld [vmem:[%s1 + $0x3b0] sm:$0xf]
    %v263 = vld [vmem:[%s1 + $0x3b4] sm:$0xf]
    %v264 = vld [vmem:[%s1 + $0x3b8] sm:$0xf]
    %v265 = vld [vmem:[%s1 + $0x3bc] sm:$0xf]
    %v266 = vld [vmem:[%s1 + $0x3c0] sm:$0xf]
    %v267 = vld [vmem:[%s1 + $0x3c4] sm:$0xf]
    %v268 = vld [vmem:[%s1 + $0x3c8] sm:$0xf]
    %v269 = vld [vmem:[%s1 + $0x3cc] sm:$0xf]
    %v270 = vld [vmem:[%s1 + $0x3d0] sm:$0xf]
    %v271 = vld [vmem:[%s1 + $0x3d4] sm:$0xf]
    %v272 = vld [vmem:[%s1 + $0x3d8] sm:$0xf]
    %v273 = vld [vmem:[%s1 + $0x3dc] sm:$0xf]
    %v274 = vld [vmem:[%s1 + $0x3e0] sm:$0xf]
    %v275 = vld [vmem:[%s1 + $0x3e4] sm:$0xf]
    %v276 = vld [vmem:[%s1 + $0x3e8] sm:$0xf]
    %v277 = vld [vmem:[%s1 + $0x3ec] sm:$0xf]
    %v278 = vld [vmem:[%s1 + $0x3f0] sm:$0xf]
    %v279 = vld [vmem:[%s1 + $0x3f4] sm:$0xf]
    %v280 = vld [vmem:[%s1 + $0x3f8] sm:$0xf]
    %v281 = vld [vmem:[%s1 + $0x3fc] sm:$0xf]
    %v282 = vld [vmem:[%s1 + $0x400] sm:$0xf]
    %v283 = vld [vmem:[%s1 + $0x404] sm:$0xf]
    %v284 = vld [vmem:[%s1 + $0x408] sm:$0xf]
    %v285 = vld [vmem:[%s1 + $0x40c] sm:$0xf]
    %v286 = vld [vmem:[%s1 + $0x410] sm:$0xf]
    %v287 = vld [vmem:[%s1 + $0x414] sm:$0xf]
    %v288 = vld [vmem:[%s1 + $0x418] sm:$0xf]
    %v289 = vld [vmem:[%s1 + $0x41c] sm:$0xf]
    %v290 = vld [vmem:[%s1 + $0x420] sm:$0xf]
    %v291 = vld [vmem:[%s1 + $0x424] sm:$0xf]
    %v292 = vld [vmem:[%s1 + $0x428] sm:$0xf]
    %v293 = vld [vmem:[%s1 + $0x42c] sm:$0xf]
    %v294 = vld [vmem:[%s1 + $0x430] sm:$0xf]
    %v295 = vld [vmem:[%s1 + $0x434] sm:$0xf]
    %v296 = vld [vmem:[%s1 + $0x438] sm:$0xf]
    %v297 = vld [vmem:[%s1 + $0x43c] sm:$0xf]
    %v298 = vld [vmem:[%s1 + $0x440] sm:$0xf]
    %v299 = vld [vmem:[%s1 + $0x444] sm:$0xf]
    %v300 = vld [vmem:[%s1 + $0x448] sm:$0xf]
    %v301 = vld [vmem:[%s1 + $0x44c] sm:$0xf]
    %v302 = vld [vmem:[%s1 + $0x450] sm:$0xf]
    %v303 = vld [vmem:[%s1 + $0x454] sm:$0xf]
    %v304 = vld [vmem:[%s1 + $0x458] sm:$0xf]
    %v305 = vld [vmem:[%s1 + $0x45c] sm:$0xf]
    %v306 = vld [vmem:[%s1 + $0x460] sm:$0xf]
    %v307 = vld [vmem:[%s1 + $0x464] sm:$0xf]
    %v308 = vld [vmem:[%s1 + $0x468] sm:$0xf]
    %v309 = vld [vmem:[%s1 + $0x46c] sm:$0xf]
    %v310 = vld [vmem:[%s1 + $0x470] sm:$0xf]
    %v311 = vld [vmem:[%s1 + $0x474] sm:$0xf]
    %v312 = vld [vmem:[%s1 + $0x478] sm:$0xf]
    %v313 = vld [vmem:[%s1 + $0x47c] sm:$0xf]
    %v314 = vld [vmem:[%s1 + $0x480] sm:$0xf]
    %v315 = vld [vmem:[%s1 + $0x484] sm:$0xf]
    %v316 = vld [vmem:[%s1 + $0x488] sm:$0xf]
    %v317 = vld [vmem:[%s1 + $0x48c] sm:$0xf]
    %v318 = vld [vmem:[%s1 + $0x490] sm:$0xf]
    %v319 = vld [vmem:[%s1 + $0x494] sm:$0xf]
    %v320 = vld [vmem:[%s1 + $0x498] sm:$0xf]
    %v321 = vld [vmem:[%s1 + $0x49c] sm:$0xf]
    %v322 = vld [vmem:[%s1 + $0x4a0] sm:$0xf]
    %v323 = vld [vmem:[%s1 + $0x4a4] sm:$0xf]
    %v324 = vld [vmem:[%s1 + $0x4a8] sm:$0xf]
    %v325 = vld [vmem:[%s1 + $0x4ac] sm:$0xf]
    %v326 = vld [vmem:[%s1 + $0x4b0] sm:$0xf]
    %v327 = vld [vmem:[%s1 + $0x4b4] sm:$0xf]
    %v328 = vld [vmem:[%s1 + $0x4b8] sm:$0xf]
    %v329 = vld [vmem:[%s1 + $0x4bc] sm:$0xf]
    %v330 = vld [vmem:[%s1 + $0x4c0] sm:$0xf]
    %v331 = vld [vmem:[%s1 + $0x4c4] sm:$0xf]
    %v332 = vld [vmem:[%s1 + $0x4c8] sm:$0xf]
    %v333 = vld [vmem:[%s1 + $0x4cc] sm:$0xf]
    %v334 = vld [vmem:[%s1 + $0x4d0] sm:$0xf]
    %v335 = vld [vmem:[%s1 + $0x4d4] sm:$0xf]
    %v336 = vld [vmem:[%s1 + $0x4d8] sm:$0xf]
    %v337 = vld [vmem:[%s1 + $0x4dc] sm:$0xf]
    %v338 = vld [vmem:[%s1 + $0x4e0] sm:$0xf]
    %v339 = vld [vmem:[%s1 + $0x4e4] sm:$0xf]
    %v340 = vld [vmem:[%s1 + $0x4e8] sm:$0xf]
    %v341 = vld [vmem:[%s1 + $0x4ec] sm:$0xf]
    %v342 = vld [vmem:[%s1 + $0x4f0] sm:$0xf]
    %v343 = vld [vmem:[%s1 + $0x4f4] sm:$0xf]
    %v344 = vld [vmem:[%s1 + $0x4f8] sm:$0xf]
    %v345 = vld [vmem:[%s1 + $0x4fc] sm:$0xf]
    %v346 = vld [vmem:[%s1 + $0x500] sm:$0xf]
    %v347 = vld [vmem:[%s1 + $0x504] sm:$0xf]
    %v348 = vld [vmem:[%s1 + $0x508] sm:$0xf]
    %v349 = vld [vmem:[%s1 + $0x50c] sm:$0xf]
    %v350 = vld [vmem:[%s1 + $0x510] sm:$0xf]
    %v351 = vld [vmem:[%s1 + $0x514] sm:$0xf]
    %v352 = vld [vmem:[%s1 + $0x518] sm:$0xf]
    %v353 = vld [vmem:[%s1 + $0x51c] sm:$0xf]
    %v354 = vld [vmem:[%s1 + $0x520] sm:$0xf]
    %v355 = vld [vmem:[%s1 + $0x524] sm:$0xf]
    %v356 = vld [vmem:[%s1 + $0x528] sm:$0xf]
    %v357 = vld [vmem:[%s1 + $0x52c] sm:$0xf]
    %v358 = vld [vmem:[%s1 + $0x530] sm:$0xf]
    %v359 = vld [vmem:[%s1 + $0x534] sm:$0xf]
    %v360 = vld [vmem:[%s1 + $0x538] sm:$0xf]
    %v361 = vld [vmem:[%s1 + $0x53c] sm:$0xf]
    %v362 = vld [vmem:[%s1 + $0x540] sm:$0xf]
    %v363 = vld [vmem:[%s1 + $0x544] sm:$0xf]
    %v364 = vld [vmem:[%s1 + $0x548] sm:$0xf]
    %v365 = vld [vmem:[%s1 + $0x54c] sm:$0xf]
    %v366 = vld [vmem:[%s1 + $0x550] sm:$0xf]
    %v367 = vld [vmem:[%s1 + $0x554] sm:$0xf]
    %v368 = vld [vmem:[%s1 + $0x558] sm:$0xf]
    %v369 = vld [vmem:[%s1 + $0x55c] sm:$0xf]
    %v370 = vld [vmem:[%s1 + $0x560] sm:$0xf]
    %v371 = vld [vmem:[%s1 + $0x564] sm:$0xf]
    %v372 = vld [vmem:[%s1 + $0x568] sm:$0xf]
    %v373 = vld [vmem:[%s1 + $0x56c] sm:$0xf]
    %v374 = vld [vmem:[%s1 + $0x570] sm:$0xf]
    %v375 = vld [vmem:[%s1 + $0x574] sm:$0xf]
    %v376 = vld [vmem:[%s1 + $0x578] sm:$0xf]
    %v377 = vld [vmem:[%s1 + $0x57c] sm:$0xf]
    %v378 = vld [vmem:[%s1 + $0x580] sm:$0xf]
    %v379 = vld [vmem:[%s1 + $0x584] sm:$0xf]
    %v380 = vld [vmem:[%s1 + $0x588] sm:$0xf]
    %v381 = vld [vmem:[%s1 + $0x58c] sm:$0xf]
    %v382 = vld [vmem:[%s1 + $0x590] sm:$0xf]
    %v383 = vld [vmem:[%s1 + $0x594] sm:$0xf]
    %v384 = vld [vmem:[%s1 + $0x598] sm:$0xf]
    %v385 = vld [vmem:[%s1 + $0x59c] sm:$0xf]
    %v386 = vld [vmem:[%s1 + $0x5a0] sm:$0xf]
    %v387 = vld [vmem:[%s1 + $0x5a4] sm:$0xf]
    %v388 = vld [vmem:[%s1 + $0x5a8] sm:$0xf]
    %v389 = vld [vmem:[%s1 + $0x5ac] sm:$0xf]
    %v390 = vld [vmem:[%s1 + $0x5b0] sm:$0xf]
    %v391 = vld [vmem:[%s1 + $0x5b4] sm:$0xf]
    %v392 = vld [vmem:[%s1 + $0x5b8] sm:$0xf]
    %v393 = vld [vmem:[%s1 + $0x5bc] sm:$0xf]
    %v394 = vld [vmem:[%s1 + $0x5c0] sm:$0xf]
    %v395 = vld [vmem:[%s1 + $0x5c4] sm:$0xf]
    %v396 = vld [vmem:[%s1 + $0x5c8] sm:$0xf]
    %v397 = vld [vmem:[%s1 + $0x5cc] sm:$0xf]
    %v398 = vld [vmem:[%s1 + $0x5d0] sm:$0xf]
    %v399 = vld [vmem:[%s1 + $0x5d4] sm:$0xf]
    %v400 = vld [vmem:[%s1 + $0x5d8] sm:$0xf]
    %v401 = vld [vmem:[%s1 + $0x5dc] sm:$0xf]
    %v402 = vld [vmem:[%s1 + $0x5e0] sm:$0xf]
    %v403 = vld [vmem:[%s1 + $0x5e4] sm:$0xf]
    %v404 = vld [vmem:[%s1 + $0x5e8] sm:$0xf]
    %v405 = vld [vmem:[%s1 + $0x5ec] sm:$0xf]
    %v406 = vld [vmem:[%s1 + $0x5f0] sm:$0xf]
    %v407 = vld [vmem:[%s1 + $0x5f4] sm:$0xf]
    %v408 = vld [vmem:[%s1 + $0x5f8] sm:$0xf]
    %v409 = vld [vmem:[%s1 + $0x5fc] sm:$0xf]
    %v410 = vld [vmem:[%s1 + $0x600] sm:$0xf]
    %v411 = vld [vmem:[%s1 + $0x604] sm:$0xf]
    %v412 = vld [vmem:[%s1 + $0x608] sm:$0xf]
    %v413 = vld [vmem:[%s1 + $0x60c] sm:$0xf]
    %v414 = vld [vmem:[%s1 + $0x610] sm:$0xf]
    %v415 = vld [vmem:[%s1 + $0x614] sm:$0xf]
    %v416 = vld [vmem:[%s1 + $0x618] sm:$0xf]
    %v417 = vld [vmem:[%s1 + $0x61c] sm:$0xf]
    %v418 = vld [vmem:[%s1 + $0x620] sm:$0xf]
    %v419 = vld [vmem:[%s1 + $0x624] sm:$0xf]
    %v420 = vld [vmem:[%s1 + $0x628] sm:$0xf]
    %v421 = vld [vmem:[%s1 + $0x62c] sm:$0xf]
    %v422 = vld [vmem:[%s1 + $0x630] sm:$0xf]
    %v423 = vld [vmem:[%s1 + $0x634] sm:$0xf]
    %v424 = vld [vmem:[%s1 + $0x638] sm:$0xf]
    %v425 = vld [vmem:[%s1 + $0x63c] sm:$0xf]
    %v426 = vld [vmem:[%s1 + $0x640] sm:$0xf]
    %v427 = vld [vmem:[%s1 + $0x644] sm:$0xf]
    %v428 = vld [vmem:[%s1 + $0x648] sm:$0xf]
    %v429 = vld [vmem:[%s1 + $0x64c] sm:$0xf]
    %v430 = vld [vmem:[%s1 + $0x650] sm:$0xf]
    %v431 = vld [vmem:[%s1 + $0x654] sm:$0xf]
    %v432 = vld [vmem:[%s1 + $0x658] sm:$0xf]
    %v433 = vld [vmem:[%s1 + $0x65c] sm:$0xf]
    %v434 = vld [vmem:[%s1 + $0x660] sm:$0xf]
    %v435 = vld [vmem:[%s1 + $0x664] sm:$0xf]
    %v436 = vld [vmem:[%s1 + $0x668] sm:$0xf]
    %v437 = vld [vmem:[%s1 + $0x66c] sm:$0xf]
    %v438 = vld [vmem:[%s1 + $0x670] sm:$0xf]
    %v439 = vld [vmem:[%s1 + $0x674] sm:$0xf]
    %v440 = vld [vmem:[%s1 + $0x678] sm:$0xf]
    %v441 = vld [vmem:[%s1 + $0x67c] sm:$0xf]
    %v442 = vld [vmem:[%s1 + $0x680] sm:$0xf]
    %v443 = vld [vmem:[%s1 + $0x684] sm:$0xf]
    %v444 = vld [vmem:[%s1 + $0x688] sm:$0xf]
    %v445 = vld [vmem:[%s1 + $0x68c] sm:$0xf]
    %v446 = vld [vmem:[%s1 + $0x690] sm:$0xf]
    %v447 = vld [vmem:[%s1 + $0x694] sm:$0xf]
    %v448 = vld [vmem:[%s1 + $0x698] sm:$0xf]
    %v449 = vld [vmem:[%s1 + $0x69c] sm:$0xf]
    %v450 = vld [vmem:[%s1 + $0x6a0] sm:$0xf]
    %v451 = vld [vmem:[%s1 + $0x6a4] sm:$0xf]
    %v452 = vld [vmem:[%s1 + $0x6a8] sm:$0xf]
    %v453 = vld [vmem:[%s1 + $0x6ac] sm:$0xf]
    %v454 = vld [vmem:[%s1 + $0x6b0] sm:$0xf]
    %v455 = vld [vmem:[%s1 + $0x6b4] sm:$0xf]
    %v456 = vld [vmem:[%s1 + $0x6b8] sm:$0xf]
    %v457 = vld [vmem:[%s1 + $0x6bc] sm:$0xf]
    %v458 = vld [vmem:[%s1 + $0x6c0] sm:$0xf]
    %v459 = vld [vmem:[%s1 + $0x6c4] sm:$0xf]
    %v460 = vld [vmem:[%s1 + $0x6c8] sm:$0xf]
    %v461 = vld [vmem:[%s1 + $0x6cc] sm:$0xf]
    %v462 = vld [vmem:[%s1 + $0x6d0] sm:$0xf]
    %v463 = vld [vmem:[%s1 + $0x6d4] sm:$0xf]
    %v464 = vld [vmem:[%s1 + $0x6d8] sm:$0xf]
    %v465 = vld [vmem:[%s1 + $0x6dc] sm:$0xf]
    %v466 = vld [vmem:[%s1 + $0x6e0] sm:$0xf]
    %v467 = vld [vmem:[%s1 + $0x6e4] sm:$0xf]
    %v468 = vld [vmem:[%s1 + $0x6e8] sm:$0xf]
    %v469 = vld [vmem:[%s1 + $0x6ec] sm:$0xf]
    %v470 = vld [vmem:[%s1 + $0x6f0] sm:$0xf]
    %v471 = vld [vmem:[%s1 + $0x6f4] sm:$0xf]
    %v472 = vld [vmem:[%s1 + $0x6f8] sm:$0xf]
    %v473 = vld [vmem:[%s1 + $0x6fc] sm:$0xf]
    %v474 = vld [vmem:[%s1 + $0x700] sm:$0xf]
    %v475 = vld [vmem:[%s1 + $0x704] sm:$0xf]
    %v476 = vld [vmem:[%s1 + $0x708] sm:$0xf]
    %v477 = vld [vmem:[%s1 + $0x70c] sm:$0xf]
    %v478 = vld [vmem:[%s1 + $0x710] sm:$0xf]
    %v479 = vld [vmem:[%s1 + $0x714] sm:$0xf]
    %v480 = vld [vmem:[%s1 + $0x718] sm:$0xf]
    %v481 = vld [vmem:[%s1 + $0x71c] sm:$0xf]
    %v482 = vld [vmem:[%s1 + $0x720] sm:$0xf]
    %v483 = vld [vmem:[%s1 + $0x724] sm:$0xf]
    %v484 = vld [vmem:[%s1 + $0x728] sm:$0xf]
    %v485 = vld [vmem:[%s1 + $0x72c] sm:$0xf]
    %v486 = vld [vmem:[%s1 + $0x730] sm:$0xf]
    %v487 = vld [vmem:[%s1 + $0x734] sm:$0xf]
    %v488 = vld [vmem:[%s1 + $0x738] sm:$0xf]
    %v489 = vld [vmem:[%s1 + $0x73c] sm:$0xf]
    %v490 = vld [vmem:[%s1 + $0x740] sm:$0xf]
    %v491 = vld [vmem:[%s1 + $0x744] sm:$0xf]
    %v492 = vld [vmem:[%s1 + $0x748] sm:$0xf]
    %v493 = vld [vmem:[%s1 + $0x74c] sm:$0xf]
    %v494 = vld [vmem:[%s1 + $0x750] sm:$0xf]
    %v495 = vld [vmem:[%s1 + $0x754] sm:$0xf]
    %v496 = vld [vmem:[%s1 + $0x758] sm:$0xf]
    %v497 = vld [vmem:[%s1 + $0x75c] sm:$0xf]
    %v498 = vld [vmem:[%s1 + $0x760] sm:$0xf]
    %v499 = vld [vmem:[%s1 + $0x764] sm:$0xf]
    %v500 = vld [vmem:[%s1 + $0x768] sm:$0xf]
    %v501 = vld [vmem:[%s1 + $0x76c] sm:$0xf]
    %v502 = vld [vmem:[%s1 + $0x770] sm:$0xf]
    %v503 = vld [vmem:[%s1 + $0x774] sm:$0xf]
    %v504 = vld [vmem:[%s1 + $0x778] sm:$0xf]
    %v505 = vld [vmem:[%s1 + $0x77c] sm:$0xf]
    %v506 = vld [vmem:[%s1 + $0x780] sm:$0xf]
    %v507 = vld [vmem:[%s1 + $0x784] sm:$0xf]
    %v508 = vld [vmem:[%s1 + $0x788] sm:$0xf]
    %v509 = vld [vmem:[%s1 + $0x78c] sm:$0xf]
    %v510 = vld [vmem:[%s1 + $0x790] sm:$0xf]
    %v511 = vld [vmem:[%s1 + $0x794] sm:$0xf]
    %v512 = vld [vmem:[%s1 + $0x798] sm:$0xf]
    %v513 = vld [vmem:[%s1 + $0x79c] sm:$0xf]
    %v514 = vld [vmem:[%s1 + $0x7a0] sm:$0xf]
    %v515 = vld [vmem:[%s1 + $0x7a4] sm:$0xf]
    %v516 = vld [vmem:[%s1 + $0x7a8] sm:$0xf]
    %v517 = vld [vmem:[%s1 + $0x7ac] sm:$0xf]
    %v518 = vld [vmem:[%s1 + $0x7b0] sm:$0xf]
    %v519 = vld [vmem:[%s1 + $0x7b4] sm:$0xf]
    %v520 = vld [vmem:[%s1 + $0x7b8] sm:$0xf]
    %v521 = vld [vmem:[%s1 + $0x7bc] sm:$0xf]
    %v522 = vld [vmem:[%s1 + $0x7c0] sm:$0xf]
    %v523 = vld [vmem:[%s1 + $0x7c4] sm:$0xf]
    %v524 = vld [vmem:[%s1 + $0x7c8] sm:$0xf]
    %v525 = vld [vmem:[%s1 + $0x7cc] sm:$0xf]
    %v526 = vld [vmem:[%s1 + $0x7d0] sm:$0xf]
    %v527 = vld [vmem:[%s1 + $0x7d4] sm:$0xf]
    %v528 = vld [vmem:[%s1 + $0x7d8] sm:$0xf]
    %v529 = vld [vmem:[%s1 + $0x7dc] sm:$0xf]
    %v530 = vld [vmem:[%s1 + $0x7e0] sm:$0xf]
    %v531 = vld [vmem:[%s1 + $0x7e4] sm:$0xf]
    %v532 = vld [vmem:[%s1 + $0x7e8] sm:$0xf]
    %v533 = vld [vmem:[%s1 + $0x7ec] sm:$0xf]
    %v534 = vld [vmem:[%s1 + $0x7f0] sm:$0xf]
    %v535 = vld [vmem:[%s1 + $0x7f4] sm:$0xf]
    %v536 = vld [vmem:[%s1 + $0x7f8] sm:$0xf]
    %v537 = vld [vmem:[%s1 + $0x7fc] sm:$0xf]
    %v538 = vld [vmem:[%s2] sm:$0x1]
    %v540 = vlaneseq
    %v541 = vshrl.u32 %v540, 7
    %v542 = vsub.s32 0, %v541
    %v543 = vrot.slane %v538, %v542
    %v549 = vcombine.high %v22, %v22
    %v551 = vunpack.c.l.s4 1966171168
    %v552 = vunpack.c.0.s8 %v551
    %v553 = vlaneseq
    %v554 = vshrl.u32 %v553, 7
    %v555 = vsub.s32 %v552, %v554
    %v556 = vrot.slane %v22, %v555
    %v558 = vunpack.c.l.s4 1966171168
    %v559 = vunpack.c.0.s8 %v558
    %v560 = vlaneseq
    %v561 = vshrl.u32 %v560, 7
    %v562 = vsub.s32 %v559, %v561
    %v563 = vrot.slane %v549, %v562
    %v564 = vcombine.high %v556, %v556
    %v565 = vcombine.high %v563, %v563
    %v567 = vunpack.c.l.s4 1966171168
    %v568 = vunpack.c.0.s8 %v567
    %v569 = vlaneseq
    %v570 = vshrl.u32 %v569, 7
    %v571 = vsub.s32 %v568, %v570
    %v572 = vrot.slane %v556, %v571
    %v574 = vunpack.c.l.s4 1966171168
    %v575 = vunpack.c.0.s8 %v574
    %v576 = vlaneseq
    %v577 = vshrl.u32 %v576, 7
    %v578 = vsub.s32 %v575, %v577
    %v579 = vrot.slane %v563, %v578
    %v581 = vunpack.c.l.s4 1966171168
    %v582 = vunpack.c.0.s8 %v581
    %v583 = vlaneseq
    %v584 = vshrl.u32 %v583, 7
    %v585 = vsub.s32 %v582, %v584
    %v586 = vrot.slane %v564, %v585
    %v588 = vunpack.c.l.s4 1966171168
    %v589 = vunpack.c.0.s8 %v588
    %v590 = vlaneseq
    %v591 = vshrl.u32 %v590, 7
    %v592 = vsub.s32 %v589, %v591
    %v593 = vrot.slane %v565, %v592
    %v594 = vcombine.high %v572, %v572
    %v595 = vcombine.high %v579, %v579
    %v596 = vcombine.high %v586, %v586
    %v597 = vcombine.high %v593, %v593
    %v598 = vcombine.high %v23, %v23
    %v600 = vunpack.c.l.s4 1966171168
    %v601 = vunpack.c.0.s8 %v600
    %v602 = vlaneseq
    %v603 = vshrl.u32 %v602, 7
    %v604 = vsub.s32 %v601, %v603
    %v605 = vrot.slane %v23, %v604
    %v607 = vunpack.c.l.s4 1966171168
    %v608 = vunpack.c.0.s8 %v607
    %v609 = vlaneseq
    %v610 = vshrl.u32 %v609, 7
    %v611 = vsub.s32 %v608, %v610
    %v612 = vrot.slane %v598, %v611
    %v613 = vcombine.high %v605, %v605
    %v614 = vcombine.high %v612, %v612
    %v616 = vunpack.c.l.s4 1966171168
    %v617 = vunpack.c.0.s8 %v616
    %v618 = vlaneseq
    %v619 = vshrl.u32 %v618, 7
    %v620 = vsub.s32 %v617, %v619
    %v621 = vrot.slane %v605, %v620
    %v623 = vunpack.c.l.s4 1966171168
    %v624 = vunpack.c.0.s8 %v623
    %v625 = vlaneseq
    %v626 = vshrl.u32 %v625, 7
    %v627 = vsub.s32 %v624, %v626
    %v628 = vrot.slane %v612, %v627
    %v630 = vunpack.c.l.s4 1966171168
    %v631 = vunpack.c.0.s8 %v630
    %v632 = vlaneseq
    %v633 = vshrl.u32 %v632, 7
    %v634 = vsub.s32 %v631, %v633
    %v635 = vrot.slane %v613, %v634
    %v637 = vunpack.c.l.s4 1966171168
    %v638 = vunpack.c.0.s8 %v637
    %v639 = vlaneseq
    %v640 = vshrl.u32 %v639, 7
    %v641 = vsub.s32 %v638, %v640
    %v642 = vrot.slane %v614, %v641
    %v643 = vcombine.high %v621, %v621
    %v644 = vcombine.high %v628, %v628
    %v645 = vcombine.high %v635, %v635
    %v646 = vcombine.high %v642, %v642
    %v647 = vcombine.high %v24, %v24
    %v649 = vunpack.c.l.s4 1966171168
    %v650 = vunpack.c.0.s8 %v649
    %v651 = vlaneseq
    %v652 = vshrl.u32 %v651, 7
    %v653 = vsub.s32 %v650, %v652
    %v654 = vrot.slane %v24, %v653
    %v656 = vunpack.c.l.s4 1966171168
    %v657 = vunpack.c.0.s8 %v656
    %v658 = vlaneseq
    %v659 = vshrl.u32 %v658, 7
    %v660 = vsub.s32 %v657, %v659
    %v661 = vrot.slane %v647, %v660
    %v662 = vcombine.high %v654, %v654
    %v663 = vcombine.high %v661, %v661
    %v665 = vunpack.c.l.s4 1966171168
    %v666 = vunpack.c.0.s8 %v665
    %v667 = vlaneseq
    %v668 = vshrl.u32 %v667, 7
    %v669 = vsub.s32 %v666, %v668
    %v670 = vrot.slane %v654, %v669
    %v672 = vunpack.c.l.s4 1966171168
    %v673 = vunpack.c.0.s8 %v672
    %v674 = vlaneseq
    %v675 = vshrl.u32 %v674, 7
    %v676 = vsub.s32 %v673, %v675
    %v677 = vrot.slane %v661, %v676
    %v679 = vunpack.c.l.s4 1966171168
    %v680 = vunpack.c.0.s8 %v679
    %v681 = vlaneseq
    %v682 = vshrl.u32 %v681, 7
    %v683 = vsub.s32 %v680, %v682
    %v684 = vrot.slane %v662, %v683
    %v686 = vunpack.c.l.s4 1966171168
    %v687 = vunpack.c.0.s8 %v686
    %v688 = vlaneseq
    %v689 = vshrl.u32 %v688, 7
    %v690 = vsub.s32 %v687, %v689
    %v691 = vrot.slane %v663, %v690
    %v692 = vcombine.high %v670, %v670
    %v693 = vcombine.high %v677, %v677
    %v694 = vcombine.high %v684, %v684
    %v695 = vcombine.high %v691, %v691
    %v696 = vcombine.high %v25, %v25
    %v698 = vunpack.c.l.s4 1966171168
    %v699 = vunpack.c.0.s8 %v698
    %v700 = vlaneseq
    %v701 = vshrl.u32 %v700, 7
    %v702 = vsub.s32 %v699, %v701
    %v703 = vrot.slane %v25, %v702
    %v705 = vunpack.c.l.s4 1966171168
    %v706 = vunpack.c.0.s8 %v705
    %v707 = vlaneseq
    %v708 = vshrl.u32 %v707, 7
    %v709 = vsub.s32 %v706, %v708
    %v710 = vrot.slane %v696, %v709
    %v711 = vcombine.high %v703, %v703
    %v712 = vcombine.high %v710, %v710
    %v714 = vunpack.c.l.s4 1966171168
    %v715 = vunpack.c.0.s8 %v714
    %v716 = vlaneseq
    %v717 = vshrl.u32 %v716, 7
    %v718 = vsub.s32 %v715, %v717
    %v719 = vrot.slane %v703, %v718
    %v721 = vunpack.c.l.s4 1966171168
    %v722 = vunpack.c.0.s8 %v721
    %v723 = vlaneseq
    %v724 = vshrl.u32 %v723, 7
    %v725 = vsub.s32 %v722, %v724
    %v726 = vrot.slane %v710, %v725
    %v728 = vunpack.c.l.s4 1966171168
    %v729 = vunpack.c.0.s8 %v728
    %v730 = vlaneseq
    %v731 = vshrl.u32 %v730, 7
    %v732 = vsub.s32 %v729, %v731
    %v733 = vrot.slane %v711, %v732
    %v735 = vunpack.c.l.s4 1966171168
    %v736 = vunpack.c.0.s8 %v735
    %v737 = vlaneseq
    %v738 = vshrl.u32 %v737, 7
    %v739 = vsub.s32 %v736, %v738
    %v740 = vrot.slane %v712, %v739
    %v741 = vcombine.high %v719, %v719
    %v742 = vcombine.high %v726, %v726
    %v743 = vcombine.high %v733, %v733
    %v744 = vcombine.high %v740, %v740
    %v1289 = vunpack.c.l.b16 %v26
    %v1290 = vunpack.c.l.b16 %v27
    %v1291 = vunpack.c.l.b16 %v28
    %v1292 = vunpack.c.l.b16 %v29
    %v1293 = vunpack.c.l.b16 %v30
    %v1294 = vunpack.c.l.b16 %v31
    %v1295 = vunpack.c.l.b16 %v32
    %v1296 = vunpack.c.l.b16 %v33
    %v1297 = vunpack.c.l.b16 %v34
    %v1298 = vunpack.c.l.b16 %v35
    %v1299 = vunpack.c.l.b16 %v36
    %v1300 = vunpack.c.l.b16 %v37
    %v1301 = vunpack.c.l.b16 %v38
    %v1302 = vunpack.c.l.b16 %v39
    %v1303 = vunpack.c.l.b16 %v40
    %v1304 = vunpack.c.l.b16 %v41
    %v1305 = vunpack.c.l.b16 %v42
    %v1306 = vunpack.c.l.b16 %v43
    %v1307 = vunpack.c.l.b16 %v44
    %v1308 = vunpack.c.l.b16 %v45
    %v1309 = vunpack.c.l.b16 %v46
    %v1310 = vunpack.c.l.b16 %v47
    %v1311 = vunpack.c.l.b16 %v48
    %v1312 = vunpack.c.l.b16 %v49
    %v1313 = vunpack.c.l.b16 %v50
    %v1314 = vunpack.c.l.b16 %v51
    %v1315 = vunpack.c.l.b16 %v52
    %v1316 = vunpack.c.l.b16 %v53
    %v1317 = vunpack.c.l.b16 %v54
    %v1318 = vunpack.c.l.b16 %v55
    %v1319 = vunpack.c.l.b16 %v56
    %v1320 = vunpack.c.l.b16 %v57
    %v1321 = vunpack.c.l.b16 %v58
    %v1322 = vunpack.c.l.b16 %v59
    %v1323 = vunpack.c.l.b16 %v60
    %v1324 = vunpack.c.l.b16 %v61
    %v1325 = vunpack.c.l.b16 %v62
    %v1326 = vunpack.c.l.b16 %v63
    %v1327 = vunpack.c.l.b16 %v64
    %v1328 = vunpack.c.l.b16 %v65
    %v1329 = vunpack.c.l.b16 %v66
    %v1330 = vunpack.c.l.b16 %v67
    %v1331 = vunpack.c.l.b16 %v68
    %v1332 = vunpack.c.l.b16 %v69
    %v1333 = vunpack.c.l.b16 %v70
    %v1334 = vunpack.c.l.b16 %v71
    %v1335 = vunpack.c.l.b16 %v72
    %v1336 = vunpack.c.l.b16 %v73
    %v1337 = vunpack.c.l.b16 %v74
    %v1338 = vunpack.c.l.b16 %v75
    %v1339 = vunpack.c.l.b16 %v76
    %v1340 = vunpack.c.l.b16 %v77
    %v1341 = vunpack.c.l.b16 %v78
    %v1342 = vunpack.c.l.b16 %v79
    %v1343 = vunpack.c.l.b16 %v80
    %v1344 = vunpack.c.l.b16 %v81
    %v1345 = vunpack.c.l.b16 %v82
    %v1346 = vunpack.c.l.b16 %v83
    %v1347 = vunpack.c.l.b16 %v84
    %v1348 = vunpack.c.l.b16 %v85
    %v1349 = vunpack.c.l.b16 %v86
    %v1350 = vunpack.c.l.b16 %v87
    %v1351 = vunpack.c.l.b16 %v88
    %v1352 = vunpack.c.l.b16 %v89
    %v1353 = vunpack.c.l.b16 %v90
    %v1354 = vunpack.c.l.b16 %v91
    %v1355 = vunpack.c.l.b16 %v92
    %v1356 = vunpack.c.l.b16 %v93
    %v1357 = vunpack.c.l.b16 %v94
    %v1358 = vunpack.c.l.b16 %v95
    %v1359 = vunpack.c.l.b16 %v96
    %v1360 = vunpack.c.l.b16 %v97
    %v1361 = vunpack.c.l.b16 %v98
    %v1362 = vunpack.c.l.b16 %v99
    %v1363 = vunpack.c.l.b16 %v100
    %v1364 = vunpack.c.l.b16 %v101
    %v1365 = vunpack.c.l.b16 %v102
    %v1366 = vunpack.c.l.b16 %v103
    %v1367 = vunpack.c.l.b16 %v104
    %v1368 = vunpack.c.l.b16 %v105
    %v1369 = vunpack.c.l.b16 %v106
    %v1370 = vunpack.c.l.b16 %v107
    %v1371 = vunpack.c.l.b16 %v108
    %v1372 = vunpack.c.l.b16 %v109
    %v1373 = vunpack.c.l.b16 %v110
    %v1374 = vunpack.c.l.b16 %v111
    %v1375 = vunpack.c.l.b16 %v112
    %v1376 = vunpack.c.l.b16 %v113
    %v1377 = vunpack.c.l.b16 %v114
    %v1378 = vunpack.c.l.b16 %v115
    %v1379 = vunpack.c.l.b16 %v116
    %v1380 = vunpack.c.l.b16 %v117
    %v1381 = vunpack.c.l.b16 %v118
    %v1382 = vunpack.c.l.b16 %v119
    %v1383 = vunpack.c.l.b16 %v120
    %v1384 = vunpack.c.l.b16 %v121
    %v1385 = vunpack.c.l.b16 %v122
    %v1386 = vunpack.c.l.b16 %v123
    %v1387 = vunpack.c.l.b16 %v124
    %v1388 = vunpack.c.l.b16 %v125
    %v1389 = vunpack.c.l.b16 %v126
    %v1390 = vunpack.c.l.b16 %v127
    %v1391 = vunpack.c.l.b16 %v128
    %v1392 = vunpack.c.l.b16 %v129
    %v1393 = vunpack.c.l.b16 %v130
    %v1394 = vunpack.c.l.b16 %v131
    %v1395 = vunpack.c.l.b16 %v132
    %v1396 = vunpack.c.l.b16 %v133
    %v1397 = vunpack.c.l.b16 %v134
    %v1398 = vunpack.c.l.b16 %v135
    %v1399 = vunpack.c.l.b16 %v136
    %v1400 = vunpack.c.l.b16 %v137
    %v1401 = vunpack.c.l.b16 %v138
    %v1402 = vunpack.c.l.b16 %v139
    %v1403 = vunpack.c.l.b16 %v140
    %v1404 = vunpack.c.l.b16 %v141
    %v1405 = vunpack.c.l.b16 %v142
    %v1406 = vunpack.c.l.b16 %v143
    %v1407 = vunpack.c.l.b16 %v144
    %v1408 = vunpack.c.l.b16 %v145
    %v1409 = vunpack.c.l.b16 %v146
    %v1410 = vunpack.c.l.b16 %v147
    %v1411 = vunpack.c.l.b16 %v148
    %v1412 = vunpack.c.l.b16 %v149
    %v1413 = vunpack.c.l.b16 %v150
    %v1414 = vunpack.c.l.b16 %v151
    %v1415 = vunpack.c.l.b16 %v152
    %v1416 = vunpack.c.l.b16 %v153
    %v1417 = vunpack.c.l.b16 %v154
    %v1418 = vunpack.c.l.b16 %v155
    %v1419 = vunpack.c.l.b16 %v156
    %v1420 = vunpack.c.l.b16 %v157
    %v1421 = vunpack.c.l.b16 %v158
    %v1422 = vunpack.c.l.b16 %v159
    %v1423 = vunpack.c.l.b16 %v160
    %v1424 = vunpack.c.l.b16 %v161
    %v1425 = vunpack.c.l.b16 %v162
    %v1426 = vunpack.c.l.b16 %v163
    %v1427 = vunpack.c.l.b16 %v164
    %v1428 = vunpack.c.l.b16 %v165
    %v1429 = vunpack.c.l.b16 %v166
    %v1430 = vunpack.c.l.b16 %v167
    %v1431 = vunpack.c.l.b16 %v168
    %v1432 = vunpack.c.l.b16 %v169
    %v1433 = vunpack.c.l.b16 %v170
    %v1434 = vunpack.c.l.b16 %v171
    %v1435 = vunpack.c.l.b16 %v172
    %v1436 = vunpack.c.l.b16 %v173
    %v1437 = vunpack.c.l.b16 %v174
    %v1438 = vunpack.c.l.b16 %v175
    %v1439 = vunpack.c.l.b16 %v176
    %v1440 = vunpack.c.l.b16 %v177
    %v1441 = vunpack.c.l.b16 %v178
    %v1442 = vunpack.c.l.b16 %v179
    %v1443 = vunpack.c.l.b16 %v180
    %v1444 = vunpack.c.l.b16 %v181
    %v1445 = vunpack.c.l.b16 %v182
    %v1446 = vunpack.c.l.b16 %v183
    %v1447 = vunpack.c.l.b16 %v184
    %v1448 = vunpack.c.l.b16 %v185
    %v1449 = vunpack.c.l.b16 %v186
    %v1450 = vunpack.c.l.b16 %v187
    %v1451 = vunpack.c.l.b16 %v188
    %v1452 = vunpack.c.l.b16 %v189
    %v1453 = vunpack.c.l.b16 %v190
    %v1454 = vunpack.c.l.b16 %v191
    %v1455 = vunpack.c.l.b16 %v192
    %v1456 = vunpack.c.l.b16 %v193
    %v1457 = vunpack.c.l.b16 %v194
    %v1458 = vunpack.c.l.b16 %v195
    %v1459 = vunpack.c.l.b16 %v196
    %v1460 = vunpack.c.l.b16 %v197
    %v1461 = vunpack.c.l.b16 %v198
    %v1462 = vunpack.c.l.b16 %v199
    %v1463 = vunpack.c.l.b16 %v200
    %v1464 = vunpack.c.l.b16 %v201
    %v1465 = vunpack.c.l.b16 %v202
    %v1466 = vunpack.c.l.b16 %v203
    %v1467 = vunpack.c.l.b16 %v204
    %v1468 = vunpack.c.l.b16 %v205
    %v1469 = vunpack.c.l.b16 %v206
    %v1470 = vunpack.c.l.b16 %v207
    %v1471 = vunpack.c.l.b16 %v208
    %v1472 = vunpack.c.l.b16 %v209
    %v1473 = vunpack.c.l.b16 %v210
    %v1474 = vunpack.c.l.b16 %v211
    %v1475 = vunpack.c.l.b16 %v212
    %v1476 = vunpack.c.l.b16 %v213
    %v1477 = vunpack.c.l.b16 %v214
    %v1478 = vunpack.c.l.b16 %v215
    %v1479 = vunpack.c.l.b16 %v216
    %v1480 = vunpack.c.l.b16 %v217
    %v1481 = vunpack.c.l.b16 %v218
    %v1482 = vunpack.c.l.b16 %v219
    %v1483 = vunpack.c.l.b16 %v220
    %v1484 = vunpack.c.l.b16 %v221
    %v1485 = vunpack.c.l.b16 %v222
    %v1486 = vunpack.c.l.b16 %v223
    %v1487 = vunpack.c.l.b16 %v224
    %v1488 = vunpack.c.l.b16 %v225
    %v1489 = vunpack.c.l.b16 %v226
    %v1490 = vunpack.c.l.b16 %v227
    %v1491 = vunpack.c.l.b16 %v228
    %v1492 = vunpack.c.l.b16 %v229
    %v1493 = vunpack.c.l.b16 %v230
    %v1494 = vunpack.c.l.b16 %v231
    %v1495 = vunpack.c.l.b16 %v232
    %v1496 = vunpack.c.l.b16 %v233
    %v1497 = vunpack.c.l.b16 %v234
    %v1498 = vunpack.c.l.b16 %v235
    %v1499 = vunpack.c.l.b16 %v236
    %v1500 = vunpack.c.l.b16 %v237
    %v1501 = vunpack.c.l.b16 %v238
    %v1502 = vunpack.c.l.b16 %v239
    %v1503 = vunpack.c.l.b16 %v240
    %v1504 = vunpack.c.l.b16 %v241
    %v1505 = vunpack.c.l.b16 %v242
    %v1506 = vunpack.c.l.b16 %v243
    %v1507 = vunpack.c.l.b16 %v244
    %v1508 = vunpack.c.l.b16 %v245
    %v1509 = vunpack.c.l.b16 %v246
    %v1510 = vunpack.c.l.b16 %v247
    %v1511 = vunpack.c.l.b16 %v248
    %v1512 = vunpack.c.l.b16 %v249
    %v1513 = vunpack.c.l.b16 %v250
    %v1514 = vunpack.c.l.b16 %v251
    %v1515 = vunpack.c.l.b16 %v252
    %v1516 = vunpack.c.l.b16 %v253
    %v1517 = vunpack.c.l.b16 %v254
    %v1518 = vunpack.c.l.b16 %v255
    %v1519 = vunpack.c.l.b16 %v256
    %v1520 = vunpack.c.l.b16 %v257
    %v1521 = vunpack.c.l.b16 %v258
    %v1522 = vunpack.c.l.b16 %v259
    %v1523 = vunpack.c.l.b16 %v260
    %v1524 = vunpack.c.l.b16 %v261
    %v1525 = vunpack.c.l.b16 %v262
    %v1526 = vunpack.c.l.b16 %v263
    %v1527 = vunpack.c.l.b16 %v264
    %v1528 = vunpack.c.l.b16 %v265
    %v1529 = vunpack.c.l.b16 %v266
    %v1530 = vunpack.c.l.b16 %v267
    %v1531 = vunpack.c.l.b16 %v268
    %v1532 = vunpack.c.l.b16 %v269
    %v1533 = vunpack.c.l.b16 %v270
    %v1534 = vunpack.c.l.b16 %v271
    %v1535 = vunpack.c.l.b16 %v272
    %v1536 = vunpack.c.l.b16 %v273
    %v1537 = vunpack.c.l.b16 %v274
    %v1538 = vunpack.c.l.b16 %v275
    %v1539 = vunpack.c.l.b16 %v276
    %v1540 = vunpack.c.l.b16 %v277
    %v1541 = vunpack.c.l.b16 %v278
    %v1542 = vunpack.c.l.b16 %v279
    %v1543 = vunpack.c.l.b16 %v280
    %v1544 = vunpack.c.l.b16 %v281
    %v1545 = vunpack.c.l.b16 %v282
    %v1546 = vunpack.c.l.b16 %v283
    %v1547 = vunpack.c.l.b16 %v284
    %v1548 = vunpack.c.l.b16 %v285
    %v1549 = vunpack.c.l.b16 %v286
    %v1550 = vunpack.c.l.b16 %v287
    %v1551 = vunpack.c.l.b16 %v288
    %v1552 = vunpack.c.l.b16 %v289
    %v1553 = vunpack.c.l.b16 %v290
    %v1554 = vunpack.c.l.b16 %v291
    %v1555 = vunpack.c.l.b16 %v292
    %v1556 = vunpack.c.l.b16 %v293
    %v1557 = vunpack.c.l.b16 %v294
    %v1558 = vunpack.c.l.b16 %v295
    %v1559 = vunpack.c.l.b16 %v296
    %v1560 = vunpack.c.l.b16 %v297
    %v1561 = vunpack.c.l.b16 %v298
    %v1562 = vunpack.c.l.b16 %v299
    %v1563 = vunpack.c.l.b16 %v300
    %v1564 = vunpack.c.l.b16 %v301
    %v1565 = vunpack.c.l.b16 %v302
    %v1566 = vunpack.c.l.b16 %v303
    %v1567 = vunpack.c.l.b16 %v304
    %v1568 = vunpack.c.l.b16 %v305
    %v1569 = vunpack.c.l.b16 %v306
    %v1570 = vunpack.c.l.b16 %v307
    %v1571 = vunpack.c.l.b16 %v308
    %v1572 = vunpack.c.l.b16 %v309
    %v1573 = vunpack.c.l.b16 %v310
    %v1574 = vunpack.c.l.b16 %v311
    %v1575 = vunpack.c.l.b16 %v312
    %v1576 = vunpack.c.l.b16 %v313
    %v1577 = vunpack.c.l.b16 %v314
    %v1578 = vunpack.c.l.b16 %v315
    %v1579 = vunpack.c.l.b16 %v316
    %v1580 = vunpack.c.l.b16 %v317
    %v1581 = vunpack.c.l.b16 %v318
    %v1582 = vunpack.c.l.b16 %v319
    %v1583 = vunpack.c.l.b16 %v320
    %v1584 = vunpack.c.l.b16 %v321
    %v1585 = vunpack.c.l.b16 %v322
    %v1586 = vunpack.c.l.b16 %v323
    %v1587 = vunpack.c.l.b16 %v324
    %v1588 = vunpack.c.l.b16 %v325
    %v1589 = vunpack.c.l.b16 %v326
    %v1590 = vunpack.c.l.b16 %v327
    %v1591 = vunpack.c.l.b16 %v328
    %v1592 = vunpack.c.l.b16 %v329
    %v1593 = vunpack.c.l.b16 %v330
    %v1594 = vunpack.c.l.b16 %v331
    %v1595 = vunpack.c.l.b16 %v332
    %v1596 = vunpack.c.l.b16 %v333
    %v1597 = vunpack.c.l.b16 %v334
    %v1598 = vunpack.c.l.b16 %v335
    %v1599 = vunpack.c.l.b16 %v336
    %v1600 = vunpack.c.l.b16 %v337
    %v1601 = vunpack.c.l.b16 %v338
    %v1602 = vunpack.c.l.b16 %v339
    %v1603 = vunpack.c.l.b16 %v340
    %v1604 = vunpack.c.l.b16 %v341
    %v1605 = vunpack.c.l.b16 %v342
    %v1606 = vunpack.c.l.b16 %v343
    %v1607 = vunpack.c.l.b16 %v344
    %v1608 = vunpack.c.l.b16 %v345
    %v1609 = vunpack.c.l.b16 %v346
    %v1610 = vunpack.c.l.b16 %v347
    %v1611 = vunpack.c.l.b16 %v348
    %v1612 = vunpack.c.l.b16 %v349
    %v1613 = vunpack.c.l.b16 %v350
    %v1614 = vunpack.c.l.b16 %v351
    %v1615 = vunpack.c.l.b16 %v352
    %v1616 = vunpack.c.l.b16 %v353
    %v1617 = vunpack.c.l.b16 %v354
    %v1618 = vunpack.c.l.b16 %v355
    %v1619 = vunpack.c.l.b16 %v356
    %v1620 = vunpack.c.l.b16 %v357
    %v1621 = vunpack.c.l.b16 %v358
    %v1622 = vunpack.c.l.b16 %v359
    %v1623 = vunpack.c.l.b16 %v360
    %v1624 = vunpack.c.l.b16 %v361
    %v1625 = vunpack.c.l.b16 %v362
    %v1626 = vunpack.c.l.b16 %v363
    %v1627 = vunpack.c.l.b16 %v364
    %v1628 = vunpack.c.l.b16 %v365
    %v1629 = vunpack.c.l.b16 %v366
    %v1630 = vunpack.c.l.b16 %v367
    %v1631 = vunpack.c.l.b16 %v368
    %v1632 = vunpack.c.l.b16 %v369
    %v1633 = vunpack.c.l.b16 %v370
    %v1634 = vunpack.c.l.b16 %v371
    %v1635 = vunpack.c.l.b16 %v372
    %v1636 = vunpack.c.l.b16 %v373
    %v1637 = vunpack.c.l.b16 %v374
    %v1638 = vunpack.c.l.b16 %v375
    %v1639 = vunpack.c.l.b16 %v376
    %v1640 = vunpack.c.l.b16 %v377
    %v1641 = vunpack.c.l.b16 %v378
    %v1642 = vunpack.c.l.b16 %v379
    %v1643 = vunpack.c.l.b16 %v380
    %v1644 = vunpack.c.l.b16 %v381
    %v1645 = vunpack.c.l.b16 %v382
    %v1646 = vunpack.c.l.b16 %v383
    %v1647 = vunpack.c.l.b16 %v384
    %v1648 = vunpack.c.l.b16 %v385
    %v1649 = vunpack.c.l.b16 %v386
    %v1650 = vunpack.c.l.b16 %v387
    %v1651 = vunpack.c.l.b16 %v388
    %v1652 = vunpack.c.l.b16 %v389
    %v1653 = vunpack.c.l.b16 %v390
    %v1654 = vunpack.c.l.b16 %v391
    %v1655 = vunpack.c.l.b16 %v392
    %v1656 = vunpack.c.l.b16 %v393
    %v1657 = vunpack.c.l.b16 %v394
    %v1658 = vunpack.c.l.b16 %v395
    %v1659 = vunpack.c.l.b16 %v396
    %v1660 = vunpack.c.l.b16 %v397
    %v1661 = vunpack.c.l.b16 %v398
    %v1662 = vunpack.c.l.b16 %v399
    %v1663 = vunpack.c.l.b16 %v400
    %v1664 = vunpack.c.l.b16 %v401
    %v1665 = vunpack.c.l.b16 %v402
    %v1666 = vunpack.c.l.b16 %v403
    %v1667 = vunpack.c.l.b16 %v404
    %v1668 = vunpack.c.l.b16 %v405
    %v1669 = vunpack.c.l.b16 %v406
    %v1670 = vunpack.c.l.b16 %v407
    %v1671 = vunpack.c.l.b16 %v408
    %v1672 = vunpack.c.l.b16 %v409
    %v1673 = vunpack.c.l.b16 %v410
    %v1674 = vunpack.c.l.b16 %v411
    %v1675 = vunpack.c.l.b16 %v412
    %v1676 = vunpack.c.l.b16 %v413
    %v1677 = vunpack.c.l.b16 %v414
    %v1678 = vunpack.c.l.b16 %v415
    %v1679 = vunpack.c.l.b16 %v416
    %v1680 = vunpack.c.l.b16 %v417
    %v1681 = vunpack.c.l.b16 %v418
    %v1682 = vunpack.c.l.b16 %v419
    %v1683 = vunpack.c.l.b16 %v420
    %v1684 = vunpack.c.l.b16 %v421
    %v1685 = vunpack.c.l.b16 %v422
    %v1686 = vunpack.c.l.b16 %v423
    %v1687 = vunpack.c.l.b16 %v424
    %v1688 = vunpack.c.l.b16 %v425
    %v1689 = vunpack.c.l.b16 %v426
    %v1690 = vunpack.c.l.b16 %v427
    %v1691 = vunpack.c.l.b16 %v428
    %v1692 = vunpack.c.l.b16 %v429
    %v1693 = vunpack.c.l.b16 %v430
    %v1694 = vunpack.c.l.b16 %v431
    %v1695 = vunpack.c.l.b16 %v432
    %v1696 = vunpack.c.l.b16 %v433
    %v1697 = vunpack.c.l.b16 %v434
    %v1698 = vunpack.c.l.b16 %v435
    %v1699 = vunpack.c.l.b16 %v436
    %v1700 = vunpack.c.l.b16 %v437
    %v1701 = vunpack.c.l.b16 %v438
    %v1702 = vunpack.c.l.b16 %v439
    %v1703 = vunpack.c.l.b16 %v440
    %v1704 = vunpack.c.l.b16 %v441
    %v1705 = vunpack.c.l.b16 %v442
    %v1706 = vunpack.c.l.b16 %v443
    %v1707 = vunpack.c.l.b16 %v444
    %v1708 = vunpack.c.l.b16 %v445
    %v1709 = vunpack.c.l.b16 %v446
    %v1710 = vunpack.c.l.b16 %v447
    %v1711 = vunpack.c.l.b16 %v448
    %v1712 = vunpack.c.l.b16 %v449
    %v1713 = vunpack.c.l.b16 %v450
    %v1714 = vunpack.c.l.b16 %v451
    %v1715 = vunpack.c.l.b16 %v452
    %v1716 = vunpack.c.l.b16 %v453
    %v1717 = vunpack.c.l.b16 %v454
    %v1718 = vunpack.c.l.b16 %v455
    %v1719 = vunpack.c.l.b16 %v456
    %v1720 = vunpack.c.l.b16 %v457
    %v1721 = vunpack.c.l.b16 %v458
    %v1722 = vunpack.c.l.b16 %v459
    %v1723 = vunpack.c.l.b16 %v460
    %v1724 = vunpack.c.l.b16 %v461
    %v1725 = vunpack.c.l.b16 %v462
    %v1726 = vunpack.c.l.b16 %v463
    %v1727 = vunpack.c.l.b16 %v464
    %v1728 = vunpack.c.l.b16 %v465
    %v1729 = vunpack.c.l.b16 %v466
    %v1730 = vunpack.c.l.b16 %v467
    %v1731 = vunpack.c.l.b16 %v468
    %v1732 = vunpack.c.l.b16 %v469
    %v1733 = vunpack.c.l.b16 %v470
    %v1734 = vunpack.c.l.b16 %v471
    %v1735 = vunpack.c.l.b16 %v472
    %v1736 = vunpack.c.l.b16 %v473
    %v1737 = vunpack.c.l.b16 %v474
    %v1738 = vunpack.c.l.b16 %v475
    %v1739 = vunpack.c.l.b16 %v476
    %v1740 = vunpack.c.l.b16 %v477
    %v1741 = vunpack.c.l.b16 %v478
    %v1742 = vunpack.c.l.b16 %v479
    %v1743 = vunpack.c.l.b16 %v480
    %v1744 = vunpack.c.l.b16 %v481
    %v1745 = vunpack.c.l.b16 %v482
    %v1746 = vunpack.c.l.b16 %v483
    %v1747 = vunpack.c.l.b16 %v484
    %v1748 = vunpack.c.l.b16 %v485
    %v1749 = vunpack.c.l.b16 %v486
    %v1750 = vunpack.c.l.b16 %v487
    %v1751 = vunpack.c.l.b16 %v488
    %v1752 = vunpack.c.l.b16 %v489
    %v1753 = vunpack.c.l.b16 %v490
    %v1754 = vunpack.c.l.b16 %v491
    %v1755 = vunpack.c.l.b16 %v492
    %v1756 = vunpack.c.l.b16 %v493
    %v1757 = vunpack.c.l.b16 %v494
    %v1758 = vunpack.c.l.b16 %v495
    %v1759 = vunpack.c.l.b16 %v496
    %v1760 = vunpack.c.l.b16 %v497
    %v1761 = vunpack.c.l.b16 %v498
    %v1762 = vunpack.c.l.b16 %v499
    %v1763 = vunpack.c.l.b16 %v500
    %v1764 = vunpack.c.l.b16 %v501
    %v1765 = vunpack.c.l.b16 %v502
    %v1766 = vunpack.c.l.b16 %v503
    %v1767 = vunpack.c.l.b16 %v504
    %v1768 = vunpack.c.l.b16 %v505
    %v1769 = vunpack.c.l.b16 %v506
    %v1770 = vunpack.c.l.b16 %v507
    %v1771 = vunpack.c.l.b16 %v508
    %v1772 = vunpack.c.l.b16 %v509
    %v1773 = vunpack.c.l.b16 %v510
    %v1774 = vunpack.c.l.b16 %v511
    %v1775 = vunpack.c.l.b16 %v512
    %v1776 = vunpack.c.l.b16 %v513
    %v1777 = vunpack.c.l.b16 %v514
    %v1778 = vunpack.c.l.b16 %v515
    %v1779 = vunpack.c.l.b16 %v516
    %v1780 = vunpack.c.l.b16 %v517
    %v1781 = vunpack.c.l.b16 %v518
    %v1782 = vunpack.c.l.b16 %v519
    %v1783 = vunpack.c.l.b16 %v520
    %v1784 = vunpack.c.l.b16 %v521
    %v1785 = vunpack.c.l.b16 %v522
    %v1786 = vunpack.c.l.b16 %v523
    %v1787 = vunpack.c.l.b16 %v524
    %v1788 = vunpack.c.l.b16 %v525
    %v1789 = vunpack.c.l.b16 %v526
    %v1790 = vunpack.c.l.b16 %v527
    %v1791 = vunpack.c.l.b16 %v528
    %v1792 = vunpack.c.l.b16 %v529
    %v1793 = vunpack.c.l.b16 %v530
    %v1794 = vunpack.c.l.b16 %v531
    %v1795 = vunpack.c.l.b16 %v532
    %v1796 = vunpack.c.l.b16 %v533
    %v1797 = vunpack.c.l.b16 %v534
    %v1798 = vunpack.c.l.b16 %v535
    %v1799 = vunpack.c.l.b16 %v536
    %v1800 = vunpack.c.l.b16 %v537
    %v1801 = vpack.c.b16 %v1290, %v1289
    %v1802 = vpack.c.b16 %v1292, %v1291
    %v1803 = vpack.c.b16 %v1294, %v1293
    %v1804 = vpack.c.b16 %v1296, %v1295
    %v1805 = vpack.c.b16 %v1298, %v1297
    %v1806 = vpack.c.b16 %v1300, %v1299
    %v1807 = vpack.c.b16 %v1302, %v1301
    %v1808 = vpack.c.b16 %v1304, %v1303
    %v1809 = vpack.c.b16 %v1306, %v1305
    %v1810 = vpack.c.b16 %v1308, %v1307
    %v1811 = vpack.c.b16 %v1310, %v1309
    %v1812 = vpack.c.b16 %v1312, %v1311
    %v1813 = vpack.c.b16 %v1314, %v1313
    %v1814 = vpack.c.b16 %v1316, %v1315
    %v1815 = vpack.c.b16 %v1318, %v1317
    %v1816 = vpack.c.b16 %v1320, %v1319
    %v1817 = vpack.c.b16 %v1322, %v1321
    %v1818 = vpack.c.b16 %v1324, %v1323
    %v1819 = vpack.c.b16 %v1326, %v1325
    %v1820 = vpack.c.b16 %v1328, %v1327
    %v1821 = vpack.c.b16 %v1330, %v1329
    %v1822 = vpack.c.b16 %v1332, %v1331
    %v1823 = vpack.c.b16 %v1334, %v1333
    %v1824 = vpack.c.b16 %v1336, %v1335
    %v1825 = vpack.c.b16 %v1338, %v1337
    %v1826 = vpack.c.b16 %v1340, %v1339
    %v1827 = vpack.c.b16 %v1342, %v1341
    %v1828 = vpack.c.b16 %v1344, %v1343
    %v1829 = vpack.c.b16 %v1346, %v1345
    %v1830 = vpack.c.b16 %v1348, %v1347
    %v1831 = vpack.c.b16 %v1350, %v1349
    %v1832 = vpack.c.b16 %v1352, %v1351
    %v1833 = vpack.c.b16 %v1354, %v1353
    %v1834 = vpack.c.b16 %v1356, %v1355
    %v1835 = vpack.c.b16 %v1358, %v1357
    %v1836 = vpack.c.b16 %v1360, %v1359
    %v1837 = vpack.c.b16 %v1362, %v1361
    %v1838 = vpack.c.b16 %v1364, %v1363
    %v1839 = vpack.c.b16 %v1366, %v1365
    %v1840 = vpack.c.b16 %v1368, %v1367
    %v1841 = vpack.c.b16 %v1370, %v1369
    %v1842 = vpack.c.b16 %v1372, %v1371
    %v1843 = vpack.c.b16 %v1374, %v1373
    %v1844 = vpack.c.b16 %v1376, %v1375
    %v1845 = vpack.c.b16 %v1378, %v1377
    %v1846 = vpack.c.b16 %v1380, %v1379
    %v1847 = vpack.c.b16 %v1382, %v1381
    %v1848 = vpack.c.b16 %v1384, %v1383
    %v1849 = vpack.c.b16 %v1386, %v1385
    %v1850 = vpack.c.b16 %v1388, %v1387
    %v1851 = vpack.c.b16 %v1390, %v1389
    %v1852 = vpack.c.b16 %v1392, %v1391
    %v1853 = vpack.c.b16 %v1394, %v1393
    %v1854 = vpack.c.b16 %v1396, %v1395
    %v1855 = vpack.c.b16 %v1398, %v1397
    %v1856 = vpack.c.b16 %v1400, %v1399
    %v1857 = vpack.c.b16 %v1402, %v1401
    %v1858 = vpack.c.b16 %v1404, %v1403
    %v1859 = vpack.c.b16 %v1406, %v1405
    %v1860 = vpack.c.b16 %v1408, %v1407
    %v1861 = vpack.c.b16 %v1410, %v1409
    %v1862 = vpack.c.b16 %v1412, %v1411
    %v1863 = vpack.c.b16 %v1414, %v1413
    %v1864 = vpack.c.b16 %v1416, %v1415
    %v1865 = vpack.c.b16 %v1418, %v1417
    %v1866 = vpack.c.b16 %v1420, %v1419
    %v1867 = vpack.c.b16 %v1422, %v1421
    %v1868 = vpack.c.b16 %v1424, %v1423
    %v1869 = vpack.c.b16 %v1426, %v1425
    %v1870 = vpack.c.b16 %v1428, %v1427
    %v1871 = vpack.c.b16 %v1430, %v1429
    %v1872 = vpack.c.b16 %v1432, %v1431
    %v1873 = vpack.c.b16 %v1434, %v1433
    %v1874 = vpack.c.b16 %v1436, %v1435
    %v1875 = vpack.c.b16 %v1438, %v1437
    %v1876 = vpack.c.b16 %v1440, %v1439
    %v1877 = vpack.c.b16 %v1442, %v1441
    %v1878 = vpack.c.b16 %v1444, %v1443
    %v1879 = vpack.c.b16 %v1446, %v1445
    %v1880 = vpack.c.b16 %v1448, %v1447
    %v1881 = vpack.c.b16 %v1450, %v1449
    %v1882 = vpack.c.b16 %v1452, %v1451
    %v1883 = vpack.c.b16 %v1454, %v1453
    %v1884 = vpack.c.b16 %v1456, %v1455
    %v1885 = vpack.c.b16 %v1458, %v1457
    %v1886 = vpack.c.b16 %v1460, %v1459
    %v1887 = vpack.c.b16 %v1462, %v1461
    %v1888 = vpack.c.b16 %v1464, %v1463
    %v1889 = vpack.c.b16 %v1466, %v1465
    %v1890 = vpack.c.b16 %v1468, %v1467
    %v1891 = vpack.c.b16 %v1470, %v1469
    %v1892 = vpack.c.b16 %v1472, %v1471
    %v1893 = vpack.c.b16 %v1474, %v1473
    %v1894 = vpack.c.b16 %v1476, %v1475
    %v1895 = vpack.c.b16 %v1478, %v1477
    %v1896 = vpack.c.b16 %v1480, %v1479
    %v1897 = vpack.c.b16 %v1482, %v1481
    %v1898 = vpack.c.b16 %v1484, %v1483
    %v1899 = vpack.c.b16 %v1486, %v1485
    %v1900 = vpack.c.b16 %v1488, %v1487
    %v1901 = vpack.c.b16 %v1490, %v1489
    %v1902 = vpack.c.b16 %v1492, %v1491
    %v1903 = vpack.c.b16 %v1494, %v1493
    %v1904 = vpack.c.b16 %v1496, %v1495
    %v1905 = vpack.c.b16 %v1498, %v1497
    %v1906 = vpack.c.b16 %v1500, %v1499
    %v1907 = vpack.c.b16 %v1502, %v1501
    %v1908 = vpack.c.b16 %v1504, %v1503
    %v1909 = vpack.c.b16 %v1506, %v1505
    %v1910 = vpack.c.b16 %v1508, %v1507
    %v1911 = vpack.c.b16 %v1510, %v1509
    %v1912 = vpack.c.b16 %v1512, %v1511
    %v1913 = vpack.c.b16 %v1514, %v1513
    %v1914 = vpack.c.b16 %v1516, %v1515
    %v1915 = vpack.c.b16 %v1518, %v1517
    %v1916 = vpack.c.b16 %v1520, %v1519
    %v1917 = vpack.c.b16 %v1522, %v1521
    %v1918 = vpack.c.b16 %v1524, %v1523
    %v1919 = vpack.c.b16 %v1526, %v1525
    %v1920 = vpack.c.b16 %v1528, %v1527
    %v1921 = vpack.c.b16 %v1530, %v1529
    %v1922 = vpack.c.b16 %v1532, %v1531
    %v1923 = vpack.c.b16 %v1534, %v1533
    %v1924 = vpack.c.b16 %v1536, %v1535
    %v1925 = vpack.c.b16 %v1538, %v1537
    %v1926 = vpack.c.b16 %v1540, %v1539
    %v1927 = vpack.c.b16 %v1542, %v1541
    %v1928 = vpack.c.b16 %v1544, %v1543
    %v1929 = vpack.c.b16 %v1546, %v1545
    %v1930 = vpack.c.b16 %v1548, %v1547
    %v1931 = vpack.c.b16 %v1550, %v1549
    %v1932 = vpack.c.b16 %v1552, %v1551
    %v1933 = vpack.c.b16 %v1554, %v1553
    %v1934 = vpack.c.b16 %v1556, %v1555
    %v1935 = vpack.c.b16 %v1558, %v1557
    %v1936 = vpack.c.b16 %v1560, %v1559
    %v1937 = vpack.c.b16 %v1562, %v1561
    %v1938 = vpack.c.b16 %v1564, %v1563
    %v1939 = vpack.c.b16 %v1566, %v1565
    %v1940 = vpack.c.b16 %v1568, %v1567
    %v1941 = vpack.c.b16 %v1570, %v1569
    %v1942 = vpack.c.b16 %v1572, %v1571
    %v1943 = vpack.c.b16 %v1574, %v1573
    %v1944 = vpack.c.b16 %v1576, %v1575
    %v1945 = vpack.c.b16 %v1578, %v1577
    %v1946 = vpack.c.b16 %v1580, %v1579
    %v1947 = vpack.c.b16 %v1582, %v1581
    %v1948 = vpack.c.b16 %v1584, %v1583
    %v1949 = vpack.c.b16 %v1586, %v1585
    %v1950 = vpack.c.b16 %v1588, %v1587
    %v1951 = vpack.c.b16 %v1590, %v1589
    %v1952 = vpack.c.b16 %v1592, %v1591
    %v1953 = vpack.c.b16 %v1594, %v1593
    %v1954 = vpack.c.b16 %v1596, %v1595
    %v1955 = vpack.c.b16 %v1598, %v1597
    %v1956 = vpack.c.b16 %v1600, %v1599
    %v1957 = vpack.c.b16 %v1602, %v1601
    %v1958 = vpack.c.b16 %v1604, %v1603
    %v1959 = vpack.c.b16 %v1606, %v1605
    %v1960 = vpack.c.b16 %v1608, %v1607
    %v1961 = vpack.c.b16 %v1610, %v1609
    %v1962 = vpack.c.b16 %v1612, %v1611
    %v1963 = vpack.c.b16 %v1614, %v1613
    %v1964 = vpack.c.b16 %v1616, %v1615
    %v1965 = vpack.c.b16 %v1618, %v1617
    %v1966 = vpack.c.b16 %v1620, %v1619
    %v1967 = vpack.c.b16 %v1622, %v1621
    %v1968 = vpack.c.b16 %v1624, %v1623
    %v1969 = vpack.c.b16 %v1626, %v1625
    %v1970 = vpack.c.b16 %v1628, %v1627
    %v1971 = vpack.c.b16 %v1630, %v1629
    %v1972 = vpack.c.b16 %v1632, %v1631
    %v1973 = vpack.c.b16 %v1634, %v1633
    %v1974 = vpack.c.b16 %v1636, %v1635
    %v1975 = vpack.c.b16 %v1638, %v1637
    %v1976 = vpack.c.b16 %v1640, %v1639
    %v1977 = vpack.c.b16 %v1642, %v1641
    %v1978 = vpack.c.b16 %v1644, %v1643
    %v1979 = vpack.c.b16 %v1646, %v1645
    %v1980 = vpack.c.b16 %v1648, %v1647
    %v1981 = vpack.c.b16 %v1650, %v1649
    %v1982 = vpack.c.b16 %v1652, %v1651
    %v1983 = vpack.c.b16 %v1654, %v1653
    %v1984 = vpack.c.b16 %v1656, %v1655
    %v1985 = vpack.c.b16 %v1658, %v1657
    %v1986 = vpack.c.b16 %v1660, %v1659
    %v1987 = vpack.c.b16 %v1662, %v1661
    %v1988 = vpack.c.b16 %v1664, %v1663
    %v1989 = vpack.c.b16 %v1666, %v1665
    %v1990 = vpack.c.b16 %v1668, %v1667
    %v1991 = vpack.c.b16 %v1670, %v1669
    %v1992 = vpack.c.b16 %v1672, %v1671
    %v1993 = vpack.c.b16 %v1674, %v1673
    %v1994 = vpack.c.b16 %v1676, %v1675
    %v1995 = vpack.c.b16 %v1678, %v1677
    %v1996 = vpack.c.b16 %v1680, %v1679
    %v1997 = vpack.c.b16 %v1682, %v1681
    %v1998 = vpack.c.b16 %v1684, %v1683
    %v1999 = vpack.c.b16 %v1686, %v1685
    %v2000 = vpack.c.b16 %v1688, %v1687
    %v2001 = vpack.c.b16 %v1690, %v1689
    %v2002 = vpack.c.b16 %v1692, %v1691
    %v2003 = vpack.c.b16 %v1694, %v1693
    %v2004 = vpack.c.b16 %v1696, %v1695
    %v2005 = vpack.c.b16 %v1698, %v1697
    %v2006 = vpack.c.b16 %v1700, %v1699
    %v2007 = vpack.c.b16 %v1702, %v1701
    %v2008 = vpack.c.b16 %v1704, %v1703
    %v2009 = vpack.c.b16 %v1706, %v1705
    %v2010 = vpack.c.b16 %v1708, %v1707
    %v2011 = vpack.c.b16 %v1710, %v1709
    %v2012 = vpack.c.b16 %v1712, %v1711
    %v2013 = vpack.c.b16 %v1714, %v1713
    %v2014 = vpack.c.b16 %v1716, %v1715
    %v2015 = vpack.c.b16 %v1718, %v1717
    %v2016 = vpack.c.b16 %v1720, %v1719
    %v2017 = vpack.c.b16 %v1722, %v1721
    %v2018 = vpack.c.b16 %v1724, %v1723
    %v2019 = vpack.c.b16 %v1726, %v1725
    %v2020 = vpack.c.b16 %v1728, %v1727
    %v2021 = vpack.c.b16 %v1730, %v1729
    %v2022 = vpack.c.b16 %v1732, %v1731
    %v2023 = vpack.c.b16 %v1734, %v1733
    %v2024 = vpack.c.b16 %v1736, %v1735
    %v2025 = vpack.c.b16 %v1738, %v1737
    %v2026 = vpack.c.b16 %v1740, %v1739
    %v2027 = vpack.c.b16 %v1742, %v1741
    %v2028 = vpack.c.b16 %v1744, %v1743
    %v2029 = vpack.c.b16 %v1746, %v1745
    %v2030 = vpack.c.b16 %v1748, %v1747
    %v2031 = vpack.c.b16 %v1750, %v1749
    %v2032 = vpack.c.b16 %v1752, %v1751
    %v2033 = vpack.c.b16 %v1754, %v1753
    %v2034 = vpack.c.b16 %v1756, %v1755
    %v2035 = vpack.c.b16 %v1758, %v1757
    %v2036 = vpack.c.b16 %v1760, %v1759
    %v2037 = vpack.c.b16 %v1762, %v1761
    %v2038 = vpack.c.b16 %v1764, %v1763
    %v2039 = vpack.c.b16 %v1766, %v1765
    %v2040 = vpack.c.b16 %v1768, %v1767
    %v2041 = vpack.c.b16 %v1770, %v1769
    %v2042 = vpack.c.b16 %v1772, %v1771
    %v2043 = vpack.c.b16 %v1774, %v1773
    %v2044 = vpack.c.b16 %v1776, %v1775
    %v2045 = vpack.c.b16 %v1778, %v1777
    %v2046 = vpack.c.b16 %v1780, %v1779
    %v2047 = vpack.c.b16 %v1782, %v1781
    %v2048 = vpack.c.b16 %v1784, %v1783
    %v2049 = vpack.c.b16 %v1786, %v1785
    %v2050 = vpack.c.b16 %v1788, %v1787
    %v2051 = vpack.c.b16 %v1790, %v1789
    %v2052 = vpack.c.b16 %v1792, %v1791
    %v2053 = vpack.c.b16 %v1794, %v1793
    %v2054 = vpack.c.b16 %v1796, %v1795
    %v2055 = vpack.c.b16 %v1798, %v1797
    %v2056 = vpack.c.b16 %v1800, %v1799
    %2313 = vmatprep.subr.bf16.mxu0 0
    %2314 = vmatpush1.bf16.msra.mxu0 %v1801
    %2315 = vmatprep.subr.bf16.mxu0 0
    %2316 = vmatpush1.bf16.msra.mxu0 %v1802
    %2317 = vmatprep.subr.bf16.mxu0 0
    %2318 = vmatpush1.bf16.msra.mxu0 %v1803
    %2319 = vmatprep.subr.bf16.mxu0 0
    %2320 = vmatpush1.bf16.msra.mxu0 %v1804
    %2321 = vmatprep.subr.bf16.mxu0 0
    %2322 = vmatpush1.bf16.msra.mxu0 %v1805
    %2323 = vmatprep.subr.bf16.mxu0 0
    %2324 = vmatpush1.bf16.msra.mxu0 %v1806
    %2325 = vmatprep.subr.bf16.mxu0 0
    %2326 = vmatpush1.bf16.msra.mxu0 %v1807
    %2327 = vmatprep.subr.bf16.mxu0 0
    %2328 = vmatpush1.bf16.msra.mxu0 %v1808
    %2329 = vmatprep.subr.bf16.mxu0 0
    %2330 = vmatpush1.bf16.msra.mxu0 %v1809
    %2331 = vmatprep.subr.bf16.mxu0 0
    %2332 = vmatpush1.bf16.msra.mxu0 %v1810
    %2333 = vmatprep.subr.bf16.mxu0 0
    %2334 = vmatpush1.bf16.msra.mxu0 %v1811
    %2335 = vmatprep.subr.bf16.mxu0 0
    %2336 = vmatpush1.bf16.msra.mxu0 %v1812
    %2337 = vmatprep.subr.bf16.mxu0 0
    %2338 = vmatpush1.bf16.msra.mxu0 %v1813
    %2339 = vmatprep.subr.bf16.mxu0 0
    %2340 = vmatpush1.bf16.msra.mxu0 %v1814
    %2341 = vmatprep.subr.bf16.mxu0 0
    %2342 = vmatpush1.bf16.msra.mxu0 %v1815
    %2343 = vmatprep.subr.bf16.mxu0 0
    %2344 = vmatpush1.bf16.msra.mxu0 %v1816
    %2345 = vmatprep.mubr.bf16.mxu0 %v586
    %2346 = vmatmul.mubr.bf16.gmra.mrb[0].mxu0 %v572
    %v2347 = vpop.f32.mrb[0].mxu0
    %v2348 = vadd.f32 %v543, %v2347
    %v2349 = vpop.f32.mrb[0].mxu0
    %v2350 = vpop.f32.mrb[0].mxu0
    %v2351 = vpop.f32.mrb[0].mxu0
    %2352 = vdwg.mxu0
    %2353 = vmatprep.subr.bf16.mxu0 0
    %2354 = vmatpush1.bf16.msra.mxu0 %v1817
    %2355 = vmatprep.subr.bf16.mxu0 0
    %2356 = vmatpush1.bf16.msra.mxu0 %v1818
    %2357 = vmatprep.subr.bf16.mxu0 0
    %2358 = vmatpush1.bf16.msra.mxu0 %v1819
    %2359 = vmatprep.subr.bf16.mxu0 0
    %2360 = vmatpush1.bf16.msra.mxu0 %v1820
    %2361 = vmatprep.subr.bf16.mxu0 0
    %2362 = vmatpush1.bf16.msra.mxu0 %v1821
    %2363 = vmatprep.subr.bf16.mxu0 0
    %2364 = vmatpush1.bf16.msra.mxu0 %v1822
    %2365 = vmatprep.subr.bf16.mxu0 0
    %2366 = vmatpush1.bf16.msra.mxu0 %v1823
    %2367 = vmatprep.subr.bf16.mxu0 0
    %2368 = vmatpush1.bf16.msra.mxu0 %v1824
    %2369 = vmatprep.subr.bf16.mxu0 0
    %2370 = vmatpush1.bf16.msra.mxu0 %v1825
    %2371 = vmatprep.subr.bf16.mxu0 0
    %2372 = vmatpush1.bf16.msra.mxu0 %v1826
    %2373 = vmatprep.subr.bf16.mxu0 0
    %2374 = vmatpush1.bf16.msra.mxu0 %v1827
    %2375 = vmatprep.subr.bf16.mxu0 0
    %2376 = vmatpush1.bf16.msra.mxu0 %v1828
    %2377 = vmatprep.subr.bf16.mxu0 0
    %2378 = vmatpush1.bf16.msra.mxu0 %v1829
    %2379 = vmatprep.subr.bf16.mxu0 0
    %2380 = vmatpush1.bf16.msra.mxu0 %v1830
    %2381 = vmatprep.subr.bf16.mxu0 0
    %2382 = vmatpush1.bf16.msra.mxu0 %v1831
    %2383 = vmatprep.subr.bf16.mxu0 0
    %2384 = vmatpush1.bf16.msra.mxu0 %v1832
    %2385 = vmatprep.mubr.bf16.mxu0 %v596
    %2386 = vmatmul.mubr.bf16.gmra.mrb[0].mxu0 %v594
    %v2387 = vpop.f32.mrb[0].mxu0
    %v2388 = vadd.f32 %v2348, %v2387
    %v2389 = vpop.f32.mrb[0].mxu0
    %v2390 = vpop.f32.mrb[0].mxu0
    %v2391 = vpop.f32.mrb[0].mxu0
    %2392 = vdwg.mxu0
    %2393 = vmatprep.subr.bf16.mxu0 0
    %2394 = vmatpush1.bf16.msra.mxu0 %v1833
    %2395 = vmatprep.subr.bf16.mxu0 0
    %2396 = vmatpush1.bf16.msra.mxu0 %v1834
    %2397 = vmatprep.subr.bf16.mxu0 0
    %2398 = vmatpush1.bf16.msra.mxu0 %v1835
    %2399 = vmatprep.subr.bf16.mxu0 0
    %2400 = vmatpush1.bf16.msra.mxu0 %v1836
    %2401 = vmatprep.subr.bf16.mxu0 0
    %2402 = vmatpush1.bf16.msra.mxu0 %v1837
    %2403 = vmatprep.subr.bf16.mxu0 0
    %2404 = vmatpush1.bf16.msra.mxu0 %v1838
    %2405 = vmatprep.subr.bf16.mxu0 0
    %2406 = vmatpush1.bf16.msra.mxu0 %v1839
    %2407 = vmatprep.subr.bf16.mxu0 0
    %2408 = vmatpush1.bf16.msra.mxu0 %v1840
    %2409 = vmatprep.subr.bf16.mxu0 0
    %2410 = vmatpush1.bf16.msra.mxu0 %v1841
    %2411 = vmatprep.subr.bf16.mxu0 0
    %2412 = vmatpush1.bf16.msra.mxu0 %v1842
    %2413 = vmatprep.subr.bf16.mxu0 0
    %2414 = vmatpush1.bf16.msra.mxu0 %v1843
    %2415 = vmatprep.subr.bf16.mxu0 0
    %2416 = vmatpush1.bf16.msra.mxu0 %v1844
    %2417 = vmatprep.subr.bf16.mxu0 0
    %2418 = vmatpush1.bf16.msra.mxu0 %v1845
    %2419 = vmatprep.subr.bf16.mxu0 0
    %2420 = vmatpush1.bf16.msra.mxu0 %v1846
    %2421 = vmatprep.subr.bf16.mxu0 0
    %2422 = vmatpush1.bf16.msra.mxu0 %v1847
    %2423 = vmatprep.subr.bf16.mxu0 0
    %2424 = vmatpush1.bf16.msra.mxu0 %v1848
    %2425 = vmatprep.mubr.bf16.mxu0 %v593
    %2426 = vmatmul.mubr.bf16.gmra.mrb[0].mxu0 %v579
    %v2427 = vpop.f32.mrb[0].mxu0
    %v2428 = vadd.f32 %v2388, %v2427
    %v2429 = vpop.f32.mrb[0].mxu0
    %v2430 = vpop.f32.mrb[0].mxu0
    %v2431 = vpop.f32.mrb[0].mxu0
    %2432 = vdwg.mxu0
    %2433 = vmatprep.subr.bf16.mxu0 0
    %2434 = vmatpush1.bf16.msra.mxu0 %v1849
    %2435 = vmatprep.subr.bf16.mxu0 0
    %2436 = vmatpush1.bf16.msra.mxu0 %v1850
    %2437 = vmatprep.subr.bf16.mxu0 0
    %2438 = vmatpush1.bf16.msra.mxu0 %v1851
    %2439 = vmatprep.subr.bf16.mxu0 0
    %2440 = vmatpush1.bf16.msra.mxu0 %v1852
    %2441 = vmatprep.subr.bf16.mxu0 0
    %2442 = vmatpush1.bf16.msra.mxu0 %v1853
    %2443 = vmatprep.subr.bf16.mxu0 0
    %2444 = vmatpush1.bf16.msra.mxu0 %v1854
    %2445 = vmatprep.subr.bf16.mxu0 0
    %2446 = vmatpush1.bf16.msra.mxu0 %v1855
    %2447 = vmatprep.subr.bf16.mxu0 0
    %2448 = vmatpush1.bf16.msra.mxu0 %v1856
    %2449 = vmatprep.subr.bf16.mxu0 0
    %2450 = vmatpush1.bf16.msra.mxu0 %v1857
    %2451 = vmatprep.subr.bf16.mxu0 0
    %2452 = vmatpush1.bf16.msra.mxu0 %v1858
    %2453 = vmatprep.subr.bf16.mxu0 0
    %2454 = vmatpush1.bf16.msra.mxu0 %v1859
    %2455 = vmatprep.subr.bf16.mxu0 0
    %2456 = vmatpush1.bf16.msra.mxu0 %v1860
    %2457 = vmatprep.subr.bf16.mxu0 0
    %2458 = vmatpush1.bf16.msra.mxu0 %v1861
    %2459 = vmatprep.subr.bf16.mxu0 0
    %2460 = vmatpush1.bf16.msra.mxu0 %v1862
    %2461 = vmatprep.subr.bf16.mxu0 0
    %2462 = vmatpush1.bf16.msra.mxu0 %v1863
    %2463 = vmatprep.subr.bf16.mxu0 0
    %2464 = vmatpush1.bf16.msra.mxu0 %v1864
    %2465 = vmatprep.mubr.bf16.mxu0 %v597
    %2466 = vmatmul.mubr.bf16.gmra.mrb[0].mxu0 %v595
    %v2467 = vpop.f32.mrb[0].mxu0
    %v2468 = vadd.f32 %v2428, %v2467
    %v2469 = vpop.f32.mrb[0].mxu0
    %v2470 = vpop.f32.mrb[0].mxu0
    %v2471 = vpop.f32.mrb[0].mxu0
    %2472 = vdwg.mxu0
    %2473 = vmatprep.subr.bf16.mxu0 0
    %2474 = vmatpush1.bf16.msra.mxu0 %v1865
    %2475 = vmatprep.subr.bf16.mxu0 0
    %2476 = vmatpush1.bf16.msra.mxu0 %v1866
    %2477 = vmatprep.subr.bf16.mxu0 0
    %2478 = vmatpush1.bf16.msra.mxu0 %v1867
    %2479 = vmatprep.subr.bf16.mxu0 0
    %2480 = vmatpush1.bf16.msra.mxu0 %v1868
    %2481 = vmatprep.subr.bf16.mxu0 0
    %2482 = vmatpush1.bf16.msra.mxu0 %v1869
    %2483 = vmatprep.subr.bf16.mxu0 0
    %2484 = vmatpush1.bf16.msra.mxu0 %v1870
    %2485 = vmatprep.subr.bf16.mxu0 0
    %2486 = vmatpush1.bf16.msra.mxu0 %v1871
    %2487 = vmatprep.subr.bf16.mxu0 0
    %2488 = vmatpush1.bf16.msra.mxu0 %v1872
    %2489 = vmatprep.subr.bf16.mxu0 0
    %2490 = vmatpush1.bf16.msra.mxu0 %v1873
    %2491 = vmatprep.subr.bf16.mxu0 0
    %2492 = vmatpush1.bf16.msra.mxu0 %v1874
    %2493 = vmatprep.subr.bf16.mxu0 0
    %2494 = vmatpush1.bf16.msra.mxu0 %v1875
    %2495 = vmatprep.subr.bf16.mxu0 0
    %2496 = vmatpush1.bf16.msra.mxu0 %v1876
    %2497 = vmatprep.subr.bf16.mxu0 0
    %2498 = vmatpush1.bf16.msra.mxu0 %v1877
    %2499 = vmatprep.subr.bf16.mxu0 0
    %2500 = vmatpush1.bf16.msra.mxu0 %v1878
    %2501 = vmatprep.subr.bf16.mxu0 0
    %2502 = vmatpush1.bf16.msra.mxu0 %v1879
    %2503 = vmatprep.subr.bf16.mxu0 0
    %2504 = vmatpush1.bf16.msra.mxu0 %v1880
    %2505 = vmatprep.mubr.bf16.mxu0 %v635
    %2506 = vmatmul.mubr.bf16.gmra.mrb[0].mxu0 %v621
    %v2507 = vpop.f32.mrb[0].mxu0
    %v2508 = vadd.f32 %v2468, %v2507
    %v2509 = vpop.f32.mrb[0].mxu0
    %v2510 = vpop.f32.mrb[0].mxu0
    %v2511 = vpop.f32.mrb[0].mxu0
    %2512 = vdwg.mxu0
    %2513 = vmatprep.subr.bf16.mxu0 0
    %2514 = vmatpush1.bf16.msra.mxu0 %v1881
    %2515 = vmatprep.subr.bf16.mxu0 0
    %2516 = vmatpush1.bf16.msra.mxu0 %v1882
    %2517 = vmatprep.subr.bf16.mxu0 0
    %2518 = vmatpush1.bf16.msra.mxu0 %v1883
    %2519 = vmatprep.subr.bf16.mxu0 0
    %2520 = vmatpush1.bf16.msra.mxu0 %v1884
    %2521 = vmatprep.subr.bf16.mxu0 0
    %2522 = vmatpush1.bf16.msra.mxu0 %v1885
    %2523 = vmatprep.subr.bf16.mxu0 0
    %2524 = vmatpush1.bf16.msra.mxu0 %v1886
    %2525 = vmatprep.subr.bf16.mxu0 0
    %2526 = vmatpush1.bf16.msra.mxu0 %v1887
    %2527 = vmatprep.subr.bf16.mxu0 0
    %2528 = vmatpush1.bf16.msra.mxu0 %v1888
    %2529 = vmatprep.subr.bf16.mxu0 0
    %2530 = vmatpush1.bf16.msra.mxu0 %v1889
    %2531 = vmatprep.subr.bf16.mxu0 0
    %2532 = vmatpush1.bf16.msra.mxu0 %v1890
    %2533 = vmatprep.subr.bf16.mxu0 0
    %2534 = vmatpush1.bf16.msra.mxu0 %v1891
    %2535 = vmatprep.subr.bf16.mxu0 0
    %2536 = vmatpush1.bf16.msra.mxu0 %v1892
    %2537 = vmatprep.subr.bf16.mxu0 0
    %2538 = vmatpush1.bf16.msra.mxu0 %v1893
    %2539 = vmatprep.subr.bf16.mxu0 0
    %2540 = vmatpush1.bf16.msra.mxu0 %v1894
    %2541 = vmatprep.subr.bf16.mxu0 0
    %2542 = vmatpush1.bf16.msra.mxu0 %v1895
    %2543 = vmatprep.subr.bf16.mxu0 0
    %2544 = vmatpush1.bf16.msra.mxu0 %v1896
    %2545 = vmatprep.mubr.bf16.mxu0 %v645
    %2546 = vmatmul.mubr.bf16.gmra.mrb[0].mxu0 %v643
    %v2547 = vpop.f32.mrb[0].mxu0
    %v2548 = vadd.f32 %v2508, %v2547
    %v2549 = vpop.f32.mrb[0].mxu0
    %v2550 = vpop.f32.mrb[0].mxu0
    %v2551 = vpop.f32.mrb[0].mxu0
    %2552 = vdwg.mxu0
    %2553 = vmatprep.subr.bf16.mxu0 0
    %2554 = vmatpush1.bf16.msra.mxu0 %v1897
    %2555 = vmatprep.subr.bf16.mxu0 0
    %2556 = vmatpush1.bf16.msra.mxu0 %v1898
    %2557 = vmatprep.subr.bf16.mxu0 0
    %2558 = vmatpush1.bf16.msra.mxu0 %v1899
    %2559 = vmatprep.subr.bf16.mxu0 0
    %2560 = vmatpush1.bf16.msra.mxu0 %v1900
    %2561 = vmatprep.subr.bf16.mxu0 0
    %2562 = vmatpush1.bf16.msra.mxu0 %v1901
    %2563 = vmatprep.subr.bf16.mxu0 0
    %2564 = vmatpush1.bf16.msra.mxu0 %v1902
    %2565 = vmatprep.subr.bf16.mxu0 0
    %2566 = vmatpush1.bf16.msra.mxu0 %v1903
    %2567 = vmatprep.subr.bf16.mxu0 0
    %2568 = vmatpush1.bf16.msra.mxu0 %v1904
    %2569 = vmatprep.subr.bf16.mxu0 0
    %2570 = vmatpush1.bf16.msra.mxu0 %v1905
    %2571 = vmatprep.subr.bf16.mxu0 0
    %2572 = vmatpush1.bf16.msra.mxu0 %v1906
    %2573 = vmatprep.subr.bf16.mxu0 0
    %2574 = vmatpush1.bf16.msra.mxu0 %v1907
    %2575 = vmatprep.subr.bf16.mxu0 0
    %2576 = vmatpush1.bf16.msra.mxu0 %v1908
    %2577 = vmatprep.subr.bf16.mxu0 0
    %2578 = vmatpush1.bf16.msra.mxu0 %v1909
    %2579 = vmatprep.subr.bf16.mxu0 0
    %2580 = vmatpush1.bf16.msra.mxu0 %v1910
    %2581 = vmatprep.subr.bf16.mxu0 0
    %2582 = vmatpush1.bf16.msra.mxu0 %v1911
    %2583 = vmatprep.subr.bf16.mxu0 0
    %2584 = vmatpush1.bf16.msra.mxu0 %v1912
    %2585 = vmatprep.mubr.bf16.mxu0 %v642
    %2586 = vmatmul.mubr.bf16.gmra.mrb[0].mxu0 %v628
    %v2587 = vpop.f32.mrb[0].mxu0
    %v2588 = vadd.f32 %v2548, %v2587
    %v2589 = vpop.f32.mrb[0].mxu0
    %v2590 = vpop.f32.mrb[0].mxu0
    %v2591 = vpop.f32.mrb[0].mxu0
    %2592 = vdwg.mxu0
    %2593 = vmatprep.subr.bf16.mxu0 0
    %2594 = vmatpush1.bf16.msra.mxu0 %v1913
    %2595 = vmatprep.subr.bf16.mxu0 0
    %2596 = vmatpush1.bf16.msra.mxu0 %v1914
    %2597 = vmatprep.subr.bf16.mxu0 0
    %2598 = vmatpush1.bf16.msra.mxu0 %v1915
    %2599 = vmatprep.subr.bf16.mxu0 0
    %2600 = vmatpush1.bf16.msra.mxu0 %v1916
    %2601 = vmatprep.subr.bf16.mxu0 0
    %2602 = vmatpush1.bf16.msra.mxu0 %v1917
    %2603 = vmatprep.subr.bf16.mxu0 0
    %2604 = vmatpush1.bf16.msra.mxu0 %v1918
    %2605 = vmatprep.subr.bf16.mxu0 0
    %2606 = vmatpush1.bf16.msra.mxu0 %v1919
    %2607 = vmatprep.subr.bf16.mxu0 0
    %2608 = vmatpush1.bf16.msra.mxu0 %v1920
    %2609 = vmatprep.subr.bf16.mxu0 0
    %2610 = vmatpush1.bf16.msra.mxu0 %v1921
    %2611 = vmatprep.subr.bf16.mxu0 0
    %2612 = vmatpush1.bf16.msra.mxu0 %v1922
    %2613 = vmatprep.subr.bf16.mxu0 0
    %2614 = vmatpush1.bf16.msra.mxu0 %v1923
    %2615 = vmatprep.subr.bf16.mxu0 0
    %2616 = vmatpush1.bf16.msra.mxu0 %v1924
    %2617 = vmatprep.subr.bf16.mxu0 0
    %2618 = vmatpush1.bf16.msra.mxu0 %v1925
    %2619 = vmatprep.subr.bf16.mxu0 0
    %2620 = vmatpush1.bf16.msra.mxu0 %v1926
    %2621 = vmatprep.subr.bf16.mxu0 0
    %2622 = vmatpush1.bf16.msra.mxu0 %v1927
    %2623 = vmatprep.subr.bf16.mxu0 0
    %2624 = vmatpush1.bf16.msra.mxu0 %v1928
    %2625 = vmatprep.mubr.bf16.mxu0 %v646
    %2626 = vmatmul.mubr.bf16.gmra.mrb[0].mxu0 %v644
    %v2627 = vpop.f32.mrb[0].mxu0
    %v2628 = vadd.f32 %v2588, %v2627
    %v2629 = vpop.f32.mrb[0].mxu0
    %v2630 = vpop.f32.mrb[0].mxu0
    %v2631 = vpop.f32.mrb[0].mxu0
    %2632 = vdwg.mxu0
    %2633 = vmatprep.subr.bf16.mxu0 0
    %2634 = vmatpush1.bf16.msra.mxu0 %v1929
    %2635 = vmatprep.subr.bf16.mxu0 0
    %2636 = vmatpush1.bf16.msra.mxu0 %v1930
    %2637 = vmatprep.subr.bf16.mxu0 0
    %2638 = vmatpush1.bf16.msra.mxu0 %v1931
    %2639 = vmatprep.subr.bf16.mxu0 0
    %2640 = vmatpush1.bf16.msra.mxu0 %v1932
    %2641 = vmatprep.subr.bf16.mxu0 0
    %2642 = vmatpush1.bf16.msra.mxu0 %v1933
    %2643 = vmatprep.subr.bf16.mxu0 0
    %2644 = vmatpush1.bf16.msra.mxu0 %v1934
    %2645 = vmatprep.subr.bf16.mxu0 0
    %2646 = vmatpush1.bf16.msra.mxu0 %v1935
    %2647 = vmatprep.subr.bf16.mxu0 0
    %2648 = vmatpush1.bf16.msra.mxu0 %v1936
    %2649 = vmatprep.subr.bf16.mxu0 0
    %2650 = vmatpush1.bf16.msra.mxu0 %v1937
    %2651 = vmatprep.subr.bf16.mxu0 0
    %2652 = vmatpush1.bf16.msra.mxu0 %v1938
    %2653 = vmatprep.subr.bf16.mxu0 0
    %2654 = vmatpush1.bf16.msra.mxu0 %v1939
    %2655 = vmatprep.subr.bf16.mxu0 0
    %2656 = vmatpush1.bf16.msra.mxu0 %v1940
    %2657 = vmatprep.subr.bf16.mxu0 0
    %2658 = vmatpush1.bf16.msra.mxu0 %v1941
    %2659 = vmatprep.subr.bf16.mxu0 0
    %2660 = vmatpush1.bf16.msra.mxu0 %v1942
    %2661 = vmatprep.subr.bf16.mxu0 0
    %2662 = vmatpush1.bf16.msra.mxu0 %v1943
    %2663 = vmatprep.subr.bf16.mxu0 0
    %2664 = vmatpush1.bf16.msra.mxu0 %v1944
    %2665 = vmatprep.mubr.bf16.mxu0 %v684
    %2666 = vmatmul.mubr.bf16.gmra.mrb[0].mxu0 %v670
    %v2667 = vpop.f32.mrb[0].mxu0
    %v2668 = vadd.f32 %v2628, %v2667
    %v2669 = vpop.f32.mrb[0].mxu0
    %v2670 = vpop.f32.mrb[0].mxu0
    %v2671 = vpop.f32.mrb[0].mxu0
    %2672 = vdwg.mxu0
    %2673 = vmatprep.subr.bf16.mxu0 0
    %2674 = vmatpush1.bf16.msra.mxu0 %v1945
    %2675 = vmatprep.subr.bf16.mxu0 0
    %2676 = vmatpush1.bf16.msra.mxu0 %v1946
    %2677 = vmatprep.subr.bf16.mxu0 0
    %2678 = vmatpush1.bf16.msra.mxu0 %v1947
    %2679 = vmatprep.subr.bf16.mxu0 0
    %2680 = vmatpush1.bf16.msra.mxu0 %v1948
    %2681 = vmatprep.subr.bf16.mxu0 0
    %2682 = vmatpush1.bf16.msra.mxu0 %v1949
    %2683 = vmatprep.subr.bf16.mxu0 0
    %2684 = vmatpush1.bf16.msra.mxu0 %v1950
    %2685 = vmatprep.subr.bf16.mxu0 0
    %2686 = vmatpush1.bf16.msra.mxu0 %v1951
    %2687 = vmatprep.subr.bf16.mxu0 0
    %2688 = vmatpush1.bf16.msra.mxu0 %v1952
    %2689 = vmatprep.subr.bf16.mxu0 0
    %2690 = vmatpush1.bf16.msra.mxu0 %v1953
    %2691 = vmatprep.subr.bf16.mxu0 0
    %2692 = vmatpush1.bf16.msra.mxu0 %v1954
    %2693 = vmatprep.subr.bf16.mxu0 0
    %2694 = vmatpush1.bf16.msra.mxu0 %v1955
    %2695 = vmatprep.subr.bf16.mxu0 0
    %2696 = vmatpush1.bf16.msra.mxu0 %v1956
    %2697 = vmatprep.subr.bf16.mxu0 0
    %2698 = vmatpush1.bf16.msra.mxu0 %v1957
    %2699 = vmatprep.subr.bf16.mxu0 0
    %2700 = vmatpush1.bf16.msra.mxu0 %v1958
    %2701 = vmatprep.subr.bf16.mxu0 0
    %2702 = vmatpush1.bf16.msra.mxu0 %v1959
    %2703 = vmatprep.subr.bf16.mxu0 0
    %2704 = vmatpush1.bf16.msra.mxu0 %v1960
    %2705 = vmatprep.mubr.bf16.mxu0 %v694
    %2706 = vmatmul.mubr.bf16.gmra.mrb[0].mxu0 %v692
    %v2707 = vpop.f32.mrb[0].mxu0
    %v2708 = vadd.f32 %v2668, %v2707
    %v2709 = vpop.f32.mrb[0].mxu0
    %v2710 = vpop.f32.mrb[0].mxu0
    %v2711 = vpop.f32.mrb[0].mxu0
    %2712 = vdwg.mxu0
    %2713 = vmatprep.subr.bf16.mxu0 0
    %2714 = vmatpush1.bf16.msra.mxu0 %v1961
    %2715 = vmatprep.subr.bf16.mxu0 0
    %2716 = vmatpush1.bf16.msra.mxu0 %v1962
    %2717 = vmatprep.subr.bf16.mxu0 0
    %2718 = vmatpush1.bf16.msra.mxu0 %v1963
    %2719 = vmatprep.subr.bf16.mxu0 0
    %2720 = vmatpush1.bf16.msra.mxu0 %v1964
    %2721 = vmatprep.subr.bf16.mxu0 0
    %2722 = vmatpush1.bf16.msra.mxu0 %v1965
    %2723 = vmatprep.subr.bf16.mxu0 0
    %2724 = vmatpush1.bf16.msra.mxu0 %v1966
    %2725 = vmatprep.subr.bf16.mxu0 0
    %2726 = vmatpush1.bf16.msra.mxu0 %v1967
    %2727 = vmatprep.subr.bf16.mxu0 0
    %2728 = vmatpush1.bf16.msra.mxu0 %v1968
    %2729 = vmatprep.subr.bf16.mxu0 0
    %2730 = vmatpush1.bf16.msra.mxu0 %v1969
    %2731 = vmatprep.subr.bf16.mxu0 0
    %2732 = vmatpush1.bf16.msra.mxu0 %v1970
    %2733 = vmatprep.subr.bf16.mxu0 0
    %2734 = vmatpush1.bf16.msra.mxu0 %v1971
    %2735 = vmatprep.subr.bf16.mxu0 0
    %2736 = vmatpush1.bf16.msra.mxu0 %v1972
    %2737 = vmatprep.subr.bf16.mxu0 0
    %2738 = vmatpush1.bf16.msra.mxu0 %v1973
    %2739 = vmatprep.subr.bf16.mxu0 0
    %2740 = vmatpush1.bf16.msra.mxu0 %v1974
    %2741 = vmatprep.subr.bf16.mxu0 0
    %2742 = vmatpush1.bf16.msra.mxu0 %v1975
    %2743 = vmatprep.subr.bf16.mxu0 0
    %2744 = vmatpush1.bf16.msra.mxu0 %v1976
    %2745 = vmatprep.mubr.bf16.mxu0 %v691
    %2746 = vmatmul.mubr.bf16.gmra.mrb[0].mxu0 %v677
    %v2747 = vpop.f32.mrb[0].mxu0
    %v2748 = vadd.f32 %v2708, %v2747
    %v2749 = vpop.f32.mrb[0].mxu0
    %v2750 = vpop.f32.mrb[0].mxu0
    %v2751 = vpop.f32.mrb[0].mxu0
    %2752 = vdwg.mxu0
    %2753 = vmatprep.subr.bf16.mxu0 0
    %2754 = vmatpush1.bf16.msra.mxu0 %v1977
    %2755 = vmatprep.subr.bf16.mxu0 0
    %2756 = vmatpush1.bf16.msra.mxu0 %v1978
    %2757 = vmatprep.subr.bf16.mxu0 0
    %2758 = vmatpush1.bf16.msra.mxu0 %v1979
    %2759 = vmatprep.subr.bf16.mxu0 0
    %2760 = vmatpush1.bf16.msra.mxu0 %v1980
    %2761 = vmatprep.subr.bf16.mxu0 0
    %2762 = vmatpush1.bf16.msra.mxu0 %v1981
    %2763 = vmatprep.subr.bf16.mxu0 0
    %2764 = vmatpush1.bf16.msra.mxu0 %v1982
    %2765 = vmatprep.subr.bf16.mxu0 0
    %2766 = vmatpush1.bf16.msra.mxu0 %v1983
    %2767 = vmatprep.subr.bf16.mxu0 0
    %2768 = vmatpush1.bf16.msra.mxu0 %v1984
    %2769 = vmatprep.subr.bf16.mxu0 0
    %2770 = vmatpush1.bf16.msra.mxu0 %v1985
    %2771 = vmatprep.subr.bf16.mxu0 0
    %2772 = vmatpush1.bf16.msra.mxu0 %v1986
    %2773 = vmatprep.subr.bf16.mxu0 0
    %2774 = vmatpush1.bf16.msra.mxu0 %v1987
    %2775 = vmatprep.subr.bf16.mxu0 0
    %2776 = vmatpush1.bf16.msra.mxu0 %v1988
    %2777 = vmatprep.subr.bf16.mxu0 0
    %2778 = vmatpush1.bf16.msra.mxu0 %v1989
    %2779 = vmatprep.subr.bf16.mxu0 0
    %2780 = vmatpush1.bf16.msra.mxu0 %v1990
    %2781 = vmatprep.subr.bf16.mxu0 0
    %2782 = vmatpush1.bf16.msra.mxu0 %v1991
    %2783 = vmatprep.subr.bf16.mxu0 0
    %2784 = vmatpush1.bf16.msra.mxu0 %v1992
    %2785 = vmatprep.mubr.bf16.mxu0 %v695
    %2786 = vmatmul.mubr.bf16.gmra.mrb[0].mxu0 %v693
    %v2787 = vpop.f32.mrb[0].mxu0
    %v2788 = vadd.f32 %v2748, %v2787
    %v2789 = vpop.f32.mrb[0].mxu0
    %v2790 = vpop.f32.mrb[0].mxu0
    %v2791 = vpop.f32.mrb[0].mxu0
    %2792 = vdwg.mxu0
    %2793 = vmatprep.subr.bf16.mxu0 0
    %2794 = vmatpush1.bf16.msra.mxu0 %v1993
    %2795 = vmatprep.subr.bf16.mxu0 0
    %2796 = vmatpush1.bf16.msra.mxu0 %v1994
    %2797 = vmatprep.subr.bf16.mxu0 0
    %2798 = vmatpush1.bf16.msra.mxu0 %v1995
    %2799 = vmatprep.subr.bf16.mxu0 0
    %2800 = vmatpush1.bf16.msra.mxu0 %v1996
    %2801 = vmatprep.subr.bf16.mxu0 0
    %2802 = vmatpush1.bf16.msra.mxu0 %v1997
    %2803 = vmatprep.subr.bf16.mxu0 0
    %2804 = vmatpush1.bf16.msra.mxu0 %v1998
    %2805 = vmatprep.subr.bf16.mxu0 0
    %2806 = vmatpush1.bf16.msra.mxu0 %v1999
    %2807 = vmatprep.subr.bf16.mxu0 0
    %2808 = vmatpush1.bf16.msra.mxu0 %v2000
    %2809 = vmatprep.subr.bf16.mxu0 0
    %2810 = vmatpush1.bf16.msra.mxu0 %v2001
    %2811 = vmatprep.subr.bf16.mxu0 0
    %2812 = vmatpush1.bf16.msra.mxu0 %v2002
    %2813 = vmatprep.subr.bf16.mxu0 0
    %2814 = vmatpush1.bf16.msra.mxu0 %v2003
    %2815 = vmatprep.subr.bf16.mxu0 0
    %2816 = vmatpush1.bf16.msra.mxu0 %v2004
    %2817 = vmatprep.subr.bf16.mxu0 0
    %2818 = vmatpush1.bf16.msra.mxu0 %v2005
    %2819 = vmatprep.subr.bf16.mxu0 0
    %2820 = vmatpush1.bf16.msra.mxu0 %v2006
    %2821 = vmatprep.subr.bf16.mxu0 0
    %2822 = vmatpush1.bf16.msra.mxu0 %v2007
    %2823 = vmatprep.subr.bf16.mxu0 0
    %2824 = vmatpush1.bf16.msra.mxu0 %v2008
    %2825 = vmatprep.mubr.bf16.mxu0 %v733
    %2826 = vmatmul.mubr.bf16.gmra.mrb[0].mxu0 %v719
    %v2827 = vpop.f32.mrb[0].mxu0
    %v2828 = vadd.f32 %v2788, %v2827
    %v2829 = vpop.f32.mrb[0].mxu0
    %v2830 = vpop.f32.mrb[0].mxu0
    %v2831 = vpop.f32.mrb[0].mxu0
    %2832 = vdwg.mxu0
    %2833 = vmatprep.subr.bf16.mxu0 0
    %2834 = vmatpush1.bf16.msra.mxu0 %v2009
    %2835 = vmatprep.subr.bf16.mxu0 0
    %2836 = vmatpush1.bf16.msra.mxu0 %v2010
    %2837 = vmatprep.subr.bf16.mxu0 0
    %2838 = vmatpush1.bf16.msra.mxu0 %v2011
    %2839 = vmatprep.subr.bf16.mxu0 0
    %2840 = vmatpush1.bf16.msra.mxu0 %v2012
    %2841 = vmatprep.subr.bf16.mxu0 0
    %2842 = vmatpush1.bf16.msra.mxu0 %v2013
    %2843 = vmatprep.subr.bf16.mxu0 0
    %2844 = vmatpush1.bf16.msra.mxu0 %v2014
    %2845 = vmatprep.subr.bf16.mxu0 0
    %2846 = vmatpush1.bf16.msra.mxu0 %v2015
    %2847 = vmatprep.subr.bf16.mxu0 0
    %2848 = vmatpush1.bf16.msra.mxu0 %v2016
    %2849 = vmatprep.subr.bf16.mxu0 0
    %2850 = vmatpush1.bf16.msra.mxu0 %v2017
    %2851 = vmatprep.subr.bf16.mxu0 0
    %2852 = vmatpush1.bf16.msra.mxu0 %v2018
    %2853 = vmatprep.subr.bf16.mxu0 0
    %2854 = vmatpush1.bf16.msra.mxu0 %v2019
    %2855 = vmatprep.subr.bf16.mxu0 0
    %2856 = vmatpush1.bf16.msra.mxu0 %v2020
    %2857 = vmatprep.subr.bf16.mxu0 0
    %2858 = vmatpush1.bf16.msra.mxu0 %v2021
    %2859 = vmatprep.subr.bf16.mxu0 0
    %2860 = vmatpush1.bf16.msra.mxu0 %v2022
    %2861 = vmatprep.subr.bf16.mxu0 0
    %2862 = vmatpush1.bf16.msra.mxu0 %v2023
    %2863 = vmatprep.subr.bf16.mxu0 0
    %2864 = vmatpush1.bf16.msra.mxu0 %v2024
    %2865 = vmatprep.mubr.bf16.mxu0 %v743
    %2866 = vmatmul.mubr.bf16.gmra.mrb[0].mxu0 %v741
    %v2867 = vpop.f32.mrb[0].mxu0
    %v2868 = vadd.f32 %v2828, %v2867
    %v2869 = vpop.f32.mrb[0].mxu0
    %v2870 = vpop.f32.mrb[0].mxu0
    %v2871 = vpop.f32.mrb[0].mxu0
    %2872 = vdwg.mxu0
    %2873 = vmatprep.subr.bf16.mxu0 0
    %2874 = vmatpush1.bf16.msra.mxu0 %v2025
    %2875 = vmatprep.subr.bf16.mxu0 0
    %2876 = vmatpush1.bf16.msra.mxu0 %v2026
    %2877 = vmatprep.subr.bf16.mxu0 0
    %2878 = vmatpush1.bf16.msra.mxu0 %v2027
    %2879 = vmatprep.subr.bf16.mxu0 0
    %2880 = vmatpush1.bf16.msra.mxu0 %v2028
    %2881 = vmatprep.subr.bf16.mxu0 0
    %2882 = vmatpush1.bf16.msra.mxu0 %v2029
    %2883 = vmatprep.subr.bf16.mxu0 0
    %2884 = vmatpush1.bf16.msra.mxu0 %v2030
    %2885 = vmatprep.subr.bf16.mxu0 0
    %2886 = vmatpush1.bf16.msra.mxu0 %v2031
    %2887 = vmatprep.subr.bf16.mxu0 0
    %2888 = vmatpush1.bf16.msra.mxu0 %v2032
    %2889 = vmatprep.subr.bf16.mxu0 0
    %2890 = vmatpush1.bf16.msra.mxu0 %v2033
    %2891 = vmatprep.subr.bf16.mxu0 0
    %2892 = vmatpush1.bf16.msra.mxu0 %v2034
    %2893 = vmatprep.subr.bf16.mxu0 0
    %2894 = vmatpush1.bf16.msra.mxu0 %v2035
    %2895 = vmatprep.subr.bf16.mxu0 0
    %2896 = vmatpush1.bf16.msra.mxu0 %v2036
    %2897 = vmatprep.subr.bf16.mxu0 0
    %2898 = vmatpush1.bf16.msra.mxu0 %v2037
    %2899 = vmatprep.subr.bf16.mxu0 0
    %2900 = vmatpush1.bf16.msra.mxu0 %v2038
    %2901 = vmatprep.subr.bf16.mxu0 0
    %2902 = vmatpush1.bf16.msra.mxu0 %v2039
    %2903 = vmatprep.subr.bf16.mxu0 0
    %2904 = vmatpush1.bf16.msra.mxu0 %v2040
    %2905 = vmatprep.mubr.bf16.mxu0 %v740
    %2906 = vmatmul.mubr.bf16.gmra.mrb[0].mxu0 %v726
    %v2907 = vpop.f32.mrb[0].mxu0
    %v2908 = vadd.f32 %v2868, %v2907
    %v2909 = vpop.f32.mrb[0].mxu0
    %v2910 = vpop.f32.mrb[0].mxu0
    %v2911 = vpop.f32.mrb[0].mxu0
    %2912 = vdwg.mxu0
    %2913 = vmatprep.subr.bf16.mxu0 0
    %2914 = vmatpush1.bf16.msra.mxu0 %v2041
    %2915 = vmatprep.subr.bf16.mxu0 0
    %2916 = vmatpush1.bf16.msra.mxu0 %v2042
    %2917 = vmatprep.subr.bf16.mxu0 0
    %2918 = vmatpush1.bf16.msra.mxu0 %v2043
    %2919 = vmatprep.subr.bf16.mxu0 0
    %2920 = vmatpush1.bf16.msra.mxu0 %v2044
    %2921 = vmatprep.subr.bf16.mxu0 0
    %2922 = vmatpush1.bf16.msra.mxu0 %v2045
    %2923 = vmatprep.subr.bf16.mxu0 0
    %2924 = vmatpush1.bf16.msra.mxu0 %v2046
    %2925 = vmatprep.subr.bf16.mxu0 0
    %2926 = vmatpush1.bf16.msra.mxu0 %v2047
    %2927 = vmatprep.subr.bf16.mxu0 0
    %2928 = vmatpush1.bf16.msra.mxu0 %v2048
    %2929 = vmatprep.subr.bf16.mxu0 0
    %2930 = vmatpush1.bf16.msra.mxu0 %v2049
    %2931 = vmatprep.subr.bf16.mxu0 0
    %2932 = vmatpush1.bf16.msra.mxu0 %v2050
    %2933 = vmatprep.subr.bf16.mxu0 0
    %2934 = vmatpush1.bf16.msra.mxu0 %v2051
    %2935 = vmatprep.subr.bf16.mxu0 0
    %2936 = vmatpush1.bf16.msra.mxu0 %v2052
    %2937 = vmatprep.subr.bf16.mxu0 0
    %2938 = vmatpush1.bf16.msra.mxu0 %v2053
    %2939 = vmatprep.subr.bf16.mxu0 0
    %2940 = vmatpush1.bf16.msra.mxu0 %v2054
    %2941 = vmatprep.subr.bf16.mxu0 0
    %2942 = vmatpush1.bf16.msra.mxu0 %v2055
    %2943 = vmatprep.subr.bf16.mxu0 0
    %2944 = vmatpush1.bf16.msra.mxu0 %v2056
    %2945 = vmatprep.mubr.bf16.mxu0 %v744
    %2946 = vmatmul.mubr.bf16.gmra.mrb[0].mxu0 %v742
    %v2947 = vpop.f32.mrb[0].mxu0
    %v2948 = vadd.f32 %v2908, %v2947
    %v2949 = vpop.f32.mrb[0].mxu0
    %v2950 = vpop.f32.mrb[0].mxu0
    %v2951 = vpop.f32.mrb[0].mxu0
    %2952 = vdwg.mxu0
    %v2953 = vmax.f32 %v2948, 0.0
    %v2954 = vpack.c.bf16 %v2953, %v2953
    %v2955 = vld [vmem:[%s3] sm:$0xf]
    %v2956 = vld [vmem:[%s3 + $0x4] sm:$0xf]
    %v2957 = vld [vmem:[%s3 + $0x8] sm:$0xf]
    %v2958 = vld [vmem:[%s3 + $0xc] sm:$0xf]
    %v2959 = vld [vmem:[%s3 + $0x10] sm:$0xf]
    %v2960 = vld [vmem:[%s3 + $0x14] sm:$0xf]
    %v2961 = vld [vmem:[%s3 + $0x18] sm:$0xf]
    %v2962 = vld [vmem:[%s3 + $0x1c] sm:$0xf]
    %v2963 = vld [vmem:[%s3 + $0x20] sm:$0xf]
    %v2964 = vld [vmem:[%s3 + $0x24] sm:$0xf]
    %v2965 = vld [vmem:[%s3 + $0x28] sm:$0xf]
    %v2966 = vld [vmem:[%s3 + $0x2c] sm:$0xf]
    %v2967 = vld [vmem:[%s3 + $0x30] sm:$0xf]
    %v2968 = vld [vmem:[%s3 + $0x34] sm:$0xf]
    %v2969 = vld [vmem:[%s3 + $0x38] sm:$0xf]
    %v2970 = vld [vmem:[%s3 + $0x3c] sm:$0xf]
    %v2971 = vld [vmem:[%s4] sm:$0x1]
    %v2973 = vlaneseq
    %v2974 = vshrl.u32 %v2973, 7
    %v2975 = vsub.s32 0, %v2974
    %v2976 = vrot.slane %v2971, %v2975
    %v2994 = vunpack.c.l.b16 %v2955
    %v2995 = vunpack.c.l.b16 %v2956
    %v2996 = vunpack.c.l.b16 %v2957
    %v2997 = vunpack.c.l.b16 %v2958
    %v2998 = vunpack.c.l.b16 %v2959
    %v2999 = vunpack.c.l.b16 %v2960
    %v3000 = vunpack.c.l.b16 %v2961
    %v3001 = vunpack.c.l.b16 %v2962
    %v3002 = vunpack.c.l.b16 %v2963
    %v3003 = vunpack.c.l.b16 %v2964
    %v3004 = vunpack.c.l.b16 %v2965
    %v3005 = vunpack.c.l.b16 %v2966
    %v3006 = vunpack.c.l.b16 %v2967
    %v3007 = vunpack.c.l.b16 %v2968
    %v3008 = vunpack.c.l.b16 %v2969
    %v3009 = vunpack.c.l.b16 %v2970
    %v3010 = vpack.c.b16 %v2995, %v2994
    %v3011 = vpack.c.b16 %v2997, %v2996
    %v3012 = vpack.c.b16 %v2999, %v2998
    %v3013 = vpack.c.b16 %v3001, %v3000
    %v3014 = vpack.c.b16 %v3003, %v3002
    %v3015 = vpack.c.b16 %v3005, %v3004
    %v3016 = vpack.c.b16 %v3007, %v3006
    %v3017 = vpack.c.b16 %v3009, %v3008
    %3026 = vmatprep.subr.bf16.mxu0 0
    %3027 = vmatpush1.bf16.msra.mxu0 %v3010
    %3028 = vmatprep.subr.bf16.mxu0 0
    %3029 = vmatpush1.bf16.msra.mxu0 %v3011
    %3030 = vmatprep.subr.bf16.mxu0 0
    %3031 = vmatpush1.bf16.msra.mxu0 %v3012
    %3032 = vmatprep.subr.bf16.mxu0 0
    %3033 = vmatpush1.bf16.msra.mxu0 %v3013
    %3034 = vmatprep.subr.bf16.mxu0 0
    %3035 = vmatpush1.bf16.msra.mxu0 %v3014
    %3036 = vmatprep.subr.bf16.mxu0 0
    %3037 = vmatpush1.bf16.msra.mxu0 %v3015
    %3038 = vmatprep.subr.bf16.mxu0 0
    %3039 = vmatpush1.bf16.msra.mxu0 %v3016
    %3040 = vmatprep.subr.bf16.mxu0 0
    %3041 = vmatpush1.bf16.msra.mxu0 %v3017
    %3042 = vmatprep.subr.bf16.mxu0 0
    %3043 = vmatpush1.bf16.msra.mxu0 0
    %3044 = vmatprep.subr.bf16.mxu0 0
    %3045 = vmatpush1.bf16.msra.mxu0 0
    %3046 = vmatprep.subr.bf16.mxu0 0
    %3047 = vmatpush1.bf16.msra.mxu0 0
    %3048 = vmatprep.subr.bf16.mxu0 0
    %3049 = vmatpush1.bf16.msra.mxu0 0
    %3050 = vmatprep.subr.bf16.mxu0 0
    %3051 = vmatpush1.bf16.msra.mxu0 0
    %3052 = vmatprep.subr.bf16.mxu0 0
    %3053 = vmatpush1.bf16.msra.mxu0 0
    %3054 = vmatprep.subr.bf16.mxu0 0
    %3055 = vmatpush1.bf16.msra.mxu0 0
    %3056 = vmatprep.subr.bf16.mxu0 0
    %3057 = vmatpush1.bf16.msra.mxu0 0
    %3058 = vmatprep.mubr.bf16.mxu0 0
    %3059 = vmatmul.mubr.bf16.gmra.mrb[0].mxu0 %v2954
    %v3060 = vpop.f32.mrb[0].mxu0
    %v3061 = vadd.f32 %v2976, %v3060
    %v3062 = vpop.f32.mrb[0].mxu0
    %v3063 = vpop.f32.mrb[0].mxu0
    %v3064 = vpop.f32.mrb[0].mxu0
    %3065 = vdwg.mxu0
    %3066 = vst [vmem:[#allocation2] sm:$0x3] %v3061
    // Predicated region
    $region22: #{simple_cnn_forward.3} parent=1 // pred_check
      _
    $region23: #{simple_cnn_forward.3} parent=1 // pred_check_branch
      %3068 = sbr.rel (0) target = $region25
    $region24: #{simple_cnn_forward.3} parent=1 // pred_region
      %s3070 = ssub.s32 32, 32
      %3071 = vsyncadd [#allocation3], %s3070
      %s3073 = sshll.u32 [#allocation2], 4
      %s3074 = int_to_ptr.vmem [resolvable:$true] %s3073
      %3076 = dma.vmem_to_hbm [thread:$0]  %s3074, 32, %s5, [#allocation3]
    $region25: #{simple_cnn_forward.3} parent=1 // pred_fallthru
      _
    // Predicated region
    $region26: #{simple_cnn_forward.3} parent=1 // pred_check
      _
    $region27: #{simple_cnn_forward.3} parent=1 // pred_check_branch
      %3078 = sbr.rel (0) target = $region29
    $region28: #{simple_cnn_forward.3} parent=1 // pred_region
      %3079 = dma.done [#allocation3], 32
    $region29: #{simple_cnn_forward.3} parent=1 // pred_fallthru
      _
    %3080 = vsyncpa [#allocation3], 1

// kernel: simple_cnn_forward.2
$region0: #{simple_cnn_forward.2}
  #allocation0 [shape = 'u32[]', space=smem, size = 0x4, offset = 0x4, fixed_abs, tag = 'smem constant byte address 0x4 - core index']
  #allocation1 [shape = 'u32[144,128]{1,0:T(1,128)}', space=vmem, size = 0x12000, scoped, tag = 'internal scratch']
  #allocation2 [shape = 'bf16[34,64,4]{2,1,0:T(16,128)(2,1)}', space=vmem, size = 0x88000, scoped, tag = 'scratch operand']
  #allocation3 [shape = 'f32[1024,32]{1,0:T(8,128)}', space=vmem, size = 0x80000, scoped, tag = 'scratch operand']
  #allocation4 [shape = 'bf16[18,48,32]{2,1,0:T(16,128)(2,1)}', space=vmem, size = 0x36000, scoped, tag = 'scratch operand']
  #allocation5 [shape = 'f32[256,64]{1,0:T(8,128)}', space=vmem, size = 0x20000, scoped, tag = 'scratch operand']
  %s0 = inlined_call_operand.vmem [shape: bf16[2,32,32,4], index: 0, kind: input, shape index: {}]
  %s1 = inlined_call_operand.vmem [shape: bf16[36,32], index: 1, kind: input, shape index: {}]
  %s2 = inlined_call_operand.vmem [shape: f32[1,32], index: 2, kind: input, shape index: {}]
  %s3 = inlined_call_operand.vmem [shape: bf16[288,64], index: 3, kind: input, shape index: {}]
  %s4 = inlined_call_operand.vmem [shape: f32[1,64], index: 4, kind: input, shape index: {}]
  %s5 = inlined_call_operand.vmem [shape: bf16[2,64,64], index: 5, kind: output, shape index: {}]
  %s6 = sld [smem:[#allocation0]]
  $region53: #{simple_cnn_forward.2} parent=0
    _
  %s8 = ssub.s32 1, %s6
  %s9 = scalar_select 0, %s8, %s6
  loop: start=0, step=1, limit=4
  $region2: #{simple_cnn_forward.2} parent=0 // loop_pre_header
    _
  $region3: #{simple_cnn_forward.2} parent=0 // loop_header
    %s11 = sphi 0, %s15
    %p12 = scmp.ge.s32.totalorder %s11, 4
    %s21 = sphi 0, %s23
    %s24 = sphi 0, %s21
    %s25 = sphi 0, %s24
    %s41 = sphi 0, %s25
    %s45 = sphi 0, %s45
    %s47 = sphi 0, %s45
    %s48 = sphi 0, %s47
    %s62 = sphi 0, %s48
    %s66 = sphi 0, %s66
    %s68 = sphi 0, %s66
    %s69 = sphi 0, %s68
    %s83 = sphi 0, %s69
    %s87 = sphi 0, %s87
    %s89 = sphi 0, %s87
    %s90 = sphi 0, %s89
    %s104 = sphi 0, %s90
    %s108 = sphi 0, %s108
    %s110 = sphi 0, %s108
    %s111 = sphi 0, %s110
    %s125 = sphi 0, %s111
    %s131 = sphi 0, %s133
    %s134 = sphi 0, %s131
    %s135 = sphi 0, %s134
    %s151 = sphi 0, %s135
  $region4: #{simple_cnn_forward.2} parent=0 // loop_header_branch
    %14 = sbr.rel (%p12) target = $region8
  $region5: #{simple_cnn_forward.2} parent=0 // loop_body
    %s16 = ssub.s32 %s11, 1
    %s17 = ssub.s32 %s11, 2
    %s18 = sadd.s32 %s11, 1
    %s19 = ssub.s32 %s11, %s18
    %p20 = scmp.eq.s32.totalorder %s19, 0
    %s22 = sadd.s32 %s21, 1
    %s23 = scalar_select %p20, %s21, %s22
    %p26 = pneg %p20
    %p27 = scmp.eq.s32.totalorder %s11, 1
    %p28 = por %p26, %p27
    %p29 = scmp.ne.s32.totalorder %s21, %s24
    %p30 = scmp.eq.s32.totalorder %s11, 0
    %p31 = por %p29, %p30
    %p32 = scmp.ne.s32.totalorder %s21, %s24
    %p33 = scmp.eq.s32.totalorder %s16, 1
    %p34 = por %p32, %p33
    %p35 = scmp.ne.s32.totalorder %s24, %s25
    %p36 = scmp.eq.s32.totalorder %s16, 0
    %p37 = por %p35, %p36
    %p38 = scmp.ne.s32.totalorder %s24, %s25
    %p39 = scmp.eq.s32.totalorder %s17, 1
    %p40 = por %p38, %p39
    %p42 = scmp.ne.s32.totalorder %s25, %s41
    %p43 = scmp.eq.s32.totalorder %s17, 0
    %p44 = por %p42, %p43
    %s46 = sadd.s32 %s45, 1
    %p49 = scmp.eq.s32.totalorder %s11, 1
    %p50 = scmp.ne.s32.totalorder %s45, %s47
    %p51 = scmp.eq.s32.totalorder %s11, 0
    %p52 = por %p50, %p51
    %p53 = scmp.ne.s32.totalorder %s45, %s47
    %p54 = scmp.eq.s32.totalorder %s16, 1
    %p55 = por %p53, %p54
    %p56 = scmp.ne.s32.totalorder %s47, %s48
    %p57 = scmp.eq.s32.totalorder %s16, 0
    %p58 = por %p56, %p57
    %p59 = scmp.ne.s32.totalorder %s47, %s48
    %p60 = scmp.eq.s32.totalorder %s17, 1
    %p61 = por %p59, %p60
    %p63 = scmp.ne.s32.totalorder %s48, %s62
    %p64 = scmp.eq.s32.totalorder %s17, 0
    %p65 = por %p63, %p64
    %s67 = sadd.s32 %s66, 1
    %p70 = scmp.eq.s32.totalorder %s11, 1
    %p71 = scmp.ne.s32.totalorder %s66, %s68
    %p72 = scmp.eq.s32.totalorder %s11, 0
    %p73 = por %p71, %p72
    %p74 = scmp.ne.s32.totalorder %s66, %s68
    %p75 = scmp.eq.s32.totalorder %s16, 1
    %p76 = por %p74, %p75
    %p77 = scmp.ne.s32.totalorder %s68, %s69
    %p78 = scmp.eq.s32.totalorder %s16, 0
    %p79 = por %p77, %p78
    %p80 = scmp.ne.s32.totalorder %s68, %s69
    %p81 = scmp.eq.s32.totalorder %s17, 1
    %p82 = por %p80, %p81
    %p84 = scmp.ne.s32.totalorder %s69, %s83
    %p85 = scmp.eq.s32.totalorder %s17, 0
    %p86 = por %p84, %p85
    %s88 = sadd.s32 %s87, 1
    %p91 = scmp.eq.s32.totalorder %s11, 1
    %p92 = scmp.ne.s32.totalorder %s87, %s89
    %p93 = scmp.eq.s32.totalorder %s11, 0
    %p94 = por %p92, %p93
    %p95 = scmp.ne.s32.totalorder %s87, %s89
    %p96 = scmp.eq.s32.totalorder %s16, 1
    %p97 = por %p95, %p96
    %p98 = scmp.ne.s32.totalorder %s89, %s90
    %p99 = scmp.eq.s32.totalorder %s16, 0
    %p100 = por %p98, %p99
    %p101 = scmp.ne.s32.totalorder %s89, %s90
    %p102 = scmp.eq.s32.totalorder %s17, 1
    %p103 = por %p101, %p102
    %p105 = scmp.ne.s32.totalorder %s90, %s104
    %p106 = scmp.eq.s32.totalorder %s17, 0
    %p107 = por %p105, %p106
    %s109 = sadd.s32 %s108, 1
    %p112 = scmp.eq.s32.totalorder %s11, 1
    %p113 = scmp.ne.s32.totalorder %s108, %s110
    %p114 = scmp.eq.s32.totalorder %s11, 0
    %p115 = por %p113, %p114
    %p116 = scmp.ne.s32.totalorder %s108, %s110
    %p117 = scmp.eq.s32.totalorder %s16, 1
    %p118 = por %p116, %p117
    %p119 = scmp.ne.s32.totalorder %s110, %s111
    %p120 = scmp.eq.s32.totalorder %s16, 0
    %p121 = por %p119, %p120
    %p122 = scmp.ne.s32.totalorder %s110, %s111
    %p123 = scmp.eq.s32.totalorder %s17, 1
    %p124 = por %p122, %p123
    %p126 = scmp.ne.s32.totalorder %s111, %s125
    %p127 = scmp.eq.s32.totalorder %s17, 0
    %p128 = por %p126, %p127
    %s129 = ssub.s32 %s11, %s18
    %p130 = scmp.eq.s32.totalorder %s129, 0
    %s132 = sadd.s32 %s131, 1
    %s133 = scalar_select %p130, %s131, %s132
    %p136 = pneg %p130
    %p137 = scmp.eq.s32.totalorder %s11, 1
    %p138 = por %p136, %p137
    %p139 = scmp.ne.s32.totalorder %s131, %s134
    %p140 = scmp.eq.s32.totalorder %s11, 0
    %p141 = por %p139, %p140
    %p142 = scmp.ne.s32.totalorder %s131, %s134
    %p143 = scmp.eq.s32.totalorder %s16, 1
    %p144 = por %p142, %p143
    %p145 = scmp.ne.s32.totalorder %s134, %s135
    %p146 = scmp.eq.s32.totalorder %s16, 0
    %p147 = por %p145, %p146
    %p148 = scmp.ne.s32.totalorder %s134, %s135
    %p149 = scmp.eq.s32.totalorder %s17, 1
    %p150 = por %p148, %p149
    %p152 = scmp.ne.s32.totalorder %s135, %s151
    %p153 = scmp.eq.s32.totalorder %s17, 0
    %p154 = por %p152, %p153
    %p155 = scmp.le.s32.totalorder 1, %s11
    %p156 = scmp.lt.s32.totalorder %s11, 3
    %p157 = pnand %p155, %p156
    %p158 = pneg %p157
    // Predicated region
    $region9: #{simple_cnn_forward.2} parent=5 // pred_check
      _
    $region10: #{simple_cnn_forward.2} parent=5 // pred_check_branch
      %160 = sbr.rel (%p157) target = $region12
    $region11: #{simple_cnn_forward.2} parent=5 // pred_region
      %s161 = ssub.s32 %s11, 1
      // Predicated region
      $region13: #{simple_cnn_forward.2} parent=11 // pred_check
        %p162 = pneg %p58
      $region14: #{simple_cnn_forward.2} parent=11 // pred_check_branch
        %164 = sbr.rel (%p162) target = $region16
      $region15: #{simple_cnn_forward.2} parent=11 // pred_region
        _
      $region16: #{simple_cnn_forward.2} parent=11 // pred_fallthru
        _
      // Predicated region
      $region17: #{simple_cnn_forward.2} parent=11 // pred_check
        %p165 = pneg %p79
      $region18: #{simple_cnn_forward.2} parent=11 // pred_check_branch
        %167 = sbr.rel (%p165) target = $region20
      $region19: #{simple_cnn_forward.2} parent=11 // pred_region
        _
      $region20: #{simple_cnn_forward.2} parent=11 // pred_fallthru
        _
      // Predicated region
      $region21: #{simple_cnn_forward.2} parent=11 // pred_check
        %p168 = pneg %p100
      $region22: #{simple_cnn_forward.2} parent=11 // pred_check_branch
        %170 = sbr.rel (%p168) target = $region24
      $region23: #{simple_cnn_forward.2} parent=11 // pred_region
        _
      $region24: #{simple_cnn_forward.2} parent=11 // pred_fallthru
        _
      // Predicated region
      $region25: #{simple_cnn_forward.2} parent=11 // pred_check
        %p171 = pneg %p121
      $region26: #{simple_cnn_forward.2} parent=11 // pred_check_branch
        %173 = sbr.rel (%p171) target = $region28
      $region27: #{simple_cnn_forward.2} parent=11 // pred_region
        _
      $region28: #{simple_cnn_forward.2} parent=11 // pred_fallthru
        _
    $region12: #{simple_cnn_forward.2} parent=5 // pred_fallthru
      _
    %p174 = scmp.lt.s32.totalorder %s11, 2
    // Predicated region
    $region29: #{simple_cnn_forward.2} parent=5 // pred_check
      %p175 = pneg %p174
    $region30: #{simple_cnn_forward.2} parent=5 // pred_check_branch
      %177 = sbr.rel (%p175) target = $region32
    $region31: #{simple_cnn_forward.2} parent=5 // pred_region
      // Predicated region
      $region33: #{simple_cnn_forward.2} parent=31 // pred_check
        %p178 = pneg %p31
      $region34: #{simple_cnn_forward.2} parent=31 // pred_check_branch
        %180 = sbr.rel (%p178) target = $region36
      $region35: #{simple_cnn_forward.2} parent=31 // pred_region
        %p181 = scmp.lt.s32.totalorder %s11, 1
        %s182 = scalar_select %p181, %s11, 1
        %s183 = smul.addr %s182, 128
        %s184 = smul.addr %s183, 4
        %s185 = scalar_lea.vmem %s0, %s184
      $region36: #{simple_cnn_forward.2} parent=31 // pred_fallthru
        _
    $region32: #{simple_cnn_forward.2} parent=5 // pred_fallthru
      _
    %p186 = scmp.le.s32.totalorder 1, %s11
    %p187 = scmp.lt.s32.totalorder %s11, 3
    %p188 = pnand %p186, %p187
    %p189 = pneg %p188
    // Predicated region
    $region37: #{simple_cnn_forward.2} parent=5 // pred_check
      _
    $region38: #{simple_cnn_forward.2} parent=5 // pred_check_branch
      %191 = sbr.rel (%p188) target = $region40
    $region39: #{simple_cnn_forward.2} parent=5 // pred_region
      %s192 = ssub.s32 %s11, 1
      %p193 = scmp.lt.s32.totalorder %s16, 1
      %s194 = scalar_select %p193, %s16, 1
      %s195 = smul.addr %s194, 128
      %s196 = smul.addr %s195, 4
      %s197 = scalar_lea.vmem %s0, %s196
      %p198 = pneg %p37
      %p199 = pneg %p34
      %p200 = pneg %p58
      %p201 = pneg %p55
      %p202 = pneg %p79
      %p203 = pneg %p76
      %p204 = pneg %p100
      %p205 = pneg %p97
      %p206 = pneg %p121
      %p207 = pneg %p118
      %p208 = pneg %p147
      %p209 = pneg %p144
      %p210 = scmp.lt.s32.totalorder %s16, 1
      %s211 = scalar_select %p210, %s16, 1
      %s212 = smul.addr %s211, 8
      %s213 = smul.addr %s212, 4
      %s214 = scalar_lea.vmem %s5, %s213
      %p215 = scmp.lt.s32.totalorder %s16, 1
      %s216 = scalar_select %p215, %s16, 1
      %s217 = smul.addr %s216, 128
      %s218 = smul.addr %s217, 4
      %s219 = scalar_lea.vmem %s0, %s218
      %p220 = scmp.lt.s32.totalorder %s16, 1
      %s221 = scalar_select %p220, %s16, 1
      %s222 = smul.addr %s221, 8
      %s223 = smul.addr %s222, 4
      %s224 = scalar_lea.vmem %s5, %s223
      %vm226 = vcmask 31744
      %227 = vst.msk [vmem:[#allocation2] sm:$0xff] %vm226, 0
      %228 = vst.msk [vmem:[#allocation2 + $0x8] sm:$0xff] %vm226, 0
      %229 = vst.msk [vmem:[#allocation2 + $0x10] sm:$0xff] %vm226, 0
      %230 = vst.msk [vmem:[#allocation2 + $0x18] sm:$0xff] %vm226, 0
      %231 = vst.msk [vmem:[#allocation2 + $0x20] sm:$0xff] %vm226, 0
      %232 = vst.msk [vmem:[#allocation2 + $0x28] sm:$0xff] %vm226, 0
      %233 = vst.msk [vmem:[#allocation2 + $0x30] sm:$0xff] %vm226, 0
      %234 = vst.msk [vmem:[#allocation2 + $0x38] sm:$0xff] %vm226, 0
      %235 = vst.msk [vmem:[#allocation2 + $0x40] sm:$0xff] %vm226, 0
      %236 = vst.msk [vmem:[#allocation2 + $0x48] sm:$0xff] %vm226, 0
      %237 = vst.msk [vmem:[#allocation2 + $0x50] sm:$0xff] %vm226, 0
      %238 = vst.msk [vmem:[#allocation2 + $0x58] sm:$0xff] %vm226, 0
      %239 = vst.msk [vmem:[#allocation2 + $0x60] sm:$0xff] %vm226, 0
      %240 = vst.msk [vmem:[#allocation2 + $0x68] sm:$0xff] %vm226, 0
      %241 = vst.msk [vmem:[#allocation2 + $0x70] sm:$0xff] %vm226, 0
      %242 = vst.msk [vmem:[#allocation2 + $0x78] sm:$0xff] %vm226, 0
      %243 = vst.msk [vmem:[#allocation2 + $0x80] sm:$0xff] %vm226, 0
      %244 = vst.msk [vmem:[#allocation2 + $0x88] sm:$0xff] %vm226, 0
      %245 = vst.msk [vmem:[#allocation2 + $0x90] sm:$0xff] %vm226, 0
      %246 = vst.msk [vmem:[#allocation2 + $0x98] sm:$0xff] %vm226, 0
      %247 = vst.msk [vmem:[#allocation2 + $0xa0] sm:$0xff] %vm226, 0
      %248 = vst.msk [vmem:[#allocation2 + $0xa8] sm:$0xff] %vm226, 0
      %249 = vst.msk [vmem:[#allocation2 + $0xb0] sm:$0xff] %vm226, 0
      %250 = vst.msk [vmem:[#allocation2 + $0xb8] sm:$0xff] %vm226, 0
      %251 = vst.msk [vmem:[#allocation2 + $0xc0] sm:$0xff] %vm226, 0
      %252 = vst.msk [vmem:[#allocation2 + $0xc8] sm:$0xff] %vm226, 0
      %253 = vst.msk [vmem:[#allocation2 + $0xd0] sm:$0xff] %vm226, 0
      %254 = vst.msk [vmem:[#allocation2 + $0xd8] sm:$0xff] %vm226, 0
      %255 = vst.msk [vmem:[#allocation2 + $0xe0] sm:$0xff] %vm226, 0
      %256 = vst.msk [vmem:[#allocation2 + $0xe8] sm:$0xff] %vm226, 0
      %257 = vst.msk [vmem:[#allocation2 + $0xf0] sm:$0xff] %vm226, 0
      %258 = vst.msk [vmem:[#allocation2 + $0xf8] sm:$0xff] %vm226, 0
      %259 = vst.msk [vmem:[#allocation2 + $0x100] sm:$0xff] %vm226, 0
      %260 = vst.msk [vmem:[#allocation2 + $0x108] sm:$0xff] %vm226, 0
      %261 = vst.msk [vmem:[#allocation2 + $0x110] sm:$0xff] %vm226, 0
      %262 = vst.msk [vmem:[#allocation2 + $0x118] sm:$0xff] %vm226, 0
      %263 = vst.msk [vmem:[#allocation2 + $0x120] sm:$0xff] %vm226, 0
      %264 = vst.msk [vmem:[#allocation2 + $0x128] sm:$0xff] %vm226, 0
      %265 = vst.msk [vmem:[#allocation2 + $0x130] sm:$0xff] %vm226, 0
      %266 = vst.msk [vmem:[#allocation2 + $0x138] sm:$0xff] %vm226, 0
      %267 = vst.msk [vmem:[#allocation2 + $0x140] sm:$0xff] %vm226, 0
      %268 = vst.msk [vmem:[#allocation2 + $0x148] sm:$0xff] %vm226, 0
      %269 = vst.msk [vmem:[#allocation2 + $0x150] sm:$0xff] %vm226, 0
      %270 = vst.msk [vmem:[#allocation2 + $0x158] sm:$0xff] %vm226, 0
      %271 = vst.msk [vmem:[#allocation2 + $0x160] sm:$0xff] %vm226, 0
      %272 = vst.msk [vmem:[#allocation2 + $0x168] sm:$0xff] %vm226, 0
      %273 = vst.msk [vmem:[#allocation2 + $0x170] sm:$0xff] %vm226, 0
      %274 = vst.msk [vmem:[#allocation2 + $0x178] sm:$0xff] %vm226, 0
      %275 = vst.msk [vmem:[#allocation2 + $0x180] sm:$0xff] %vm226, 0
      %276 = vst.msk [vmem:[#allocation2 + $0x188] sm:$0xff] %vm226, 0
      %277 = vst.msk [vmem:[#allocation2 + $0x190] sm:$0xff] %vm226, 0
      %278 = vst.msk [vmem:[#allocation2 + $0x198] sm:$0xff] %vm226, 0
      %279 = vst.msk [vmem:[#allocation2 + $0x1a0] sm:$0xff] %vm226, 0
      %280 = vst.msk [vmem:[#allocation2 + $0x1a8] sm:$0xff] %vm226, 0
      %281 = vst.msk [vmem:[#allocation2 + $0x1b0] sm:$0xff] %vm226, 0
      %282 = vst.msk [vmem:[#allocation2 + $0x1b8] sm:$0xff] %vm226, 0
      %283 = vst.msk [vmem:[#allocation2 + $0x1c0] sm:$0xff] %vm226, 0
      %284 = vst.msk [vmem:[#allocation2 + $0x1c8] sm:$0xff] %vm226, 0
      %285 = vst.msk [vmem:[#allocation2 + $0x1d0] sm:$0xff] %vm226, 0
      %286 = vst.msk [vmem:[#allocation2 + $0x1d8] sm:$0xff] %vm226, 0
      %287 = vst.msk [vmem:[#allocation2 + $0x1e0] sm:$0xff] %vm226, 0
      %288 = vst.msk [vmem:[#allocation2 + $0x1e8] sm:$0xff] %vm226, 0
      %289 = vst.msk [vmem:[#allocation2 + $0x1f0] sm:$0xff] %vm226, 0
      %290 = vst.msk [vmem:[#allocation2 + $0x1f8] sm:$0xff] %vm226, 0
      %291 = vst.msk [vmem:[#allocation2 + $0x200] sm:$0xff] %vm226, 0
      %292 = vst.msk [vmem:[#allocation2 + $0x208] sm:$0xff] %vm226, 0
      %293 = vst.msk [vmem:[#allocation2 + $0x210] sm:$0xff] %vm226, 0
      %294 = vst.msk [vmem:[#allocation2 + $0x218] sm:$0xff] %vm226, 0
      %295 = vst.msk [vmem:[#allocation2 + $0x220] sm:$0xff] %vm226, 0
      %296 = vst.msk [vmem:[#allocation2 + $0x228] sm:$0xff] %vm226, 0
      %297 = vst.msk [vmem:[#allocation2 + $0x230] sm:$0xff] %vm226, 0
      %298 = vst.msk [vmem:[#allocation2 + $0x238] sm:$0xff] %vm226, 0
      %299 = vst.msk [vmem:[#allocation2 + $0x240] sm:$0xff] %vm226, 0
      %300 = vst.msk [vmem:[#allocation2 + $0x248] sm:$0xff] %vm226, 0
      %301 = vst.msk [vmem:[#allocation2 + $0x250] sm:$0xff] %vm226, 0
      %302 = vst.msk [vmem:[#allocation2 + $0x258] sm:$0xff] %vm226, 0
      %303 = vst.msk [vmem:[#allocation2 + $0x260] sm:$0xff] %vm226, 0
      %304 = vst.msk [vmem:[#allocation2 + $0x268] sm:$0xff] %vm226, 0
      %305 = vst.msk [vmem:[#allocation2 + $0x270] sm:$0xff] %vm226, 0
      %306 = vst.msk [vmem:[#allocation2 + $0x278] sm:$0xff] %vm226, 0
      %307 = vst.msk [vmem:[#allocation2 + $0x280] sm:$0xff] %vm226, 0
      %308 = vst.msk [vmem:[#allocation2 + $0x288] sm:$0xff] %vm226, 0
      %309 = vst.msk [vmem:[#allocation2 + $0x290] sm:$0xff] %vm226, 0
      %310 = vst.msk [vmem:[#allocation2 + $0x298] sm:$0xff] %vm226, 0
      %311 = vst.msk [vmem:[#allocation2 + $0x2a0] sm:$0xff] %vm226, 0
      %312 = vst.msk [vmem:[#allocation2 + $0x2a8] sm:$0xff] %vm226, 0
      %313 = vst.msk [vmem:[#allocation2 + $0x2b0] sm:$0xff] %vm226, 0
      %314 = vst.msk [vmem:[#allocation2 + $0x2b8] sm:$0xff] %vm226, 0
      %315 = vst.msk [vmem:[#allocation2 + $0x2c0] sm:$0xff] %vm226, 0
      %316 = vst.msk [vmem:[#allocation2 + $0x2c8] sm:$0xff] %vm226, 0
      %317 = vst.msk [vmem:[#allocation2 + $0x2d0] sm:$0xff] %vm226, 0
      %318 = vst.msk [vmem:[#allocation2 + $0x2d8] sm:$0xff] %vm226, 0
      %319 = vst.msk [vmem:[#allocation2 + $0x2e0] sm:$0xff] %vm226, 0
      %320 = vst.msk [vmem:[#allocation2 + $0x2e8] sm:$0xff] %vm226, 0
      %321 = vst.msk [vmem:[#allocation2 + $0x2f0] sm:$0xff] %vm226, 0
      %322 = vst.msk [vmem:[#allocation2 + $0x2f8] sm:$0xff] %vm226, 0
      %323 = vst.msk [vmem:[#allocation2 + $0x300] sm:$0xff] %vm226, 0
      %324 = vst.msk [vmem:[#allocation2 + $0x308] sm:$0xff] %vm226, 0
      %325 = vst.msk [vmem:[#allocation2 + $0x310] sm:$0xff] %vm226, 0
      %326 = vst.msk [vmem:[#allocation2 + $0x318] sm:$0xff] %vm226, 0
      %327 = vst.msk [vmem:[#allocation2 + $0x320] sm:$0xff] %vm226, 0
      %328 = vst.msk [vmem:[#allocation2 + $0x328] sm:$0xff] %vm226, 0
      %329 = vst.msk [vmem:[#allocation2 + $0x330] sm:$0xff] %vm226, 0
      %330 = vst.msk [vmem:[#allocation2 + $0x338] sm:$0xff] %vm226, 0
      %331 = vst.msk [vmem:[#allocation2 + $0x340] sm:$0xff] %vm226, 0
      %332 = vst.msk [vmem:[#allocation2 + $0x348] sm:$0xff] %vm226, 0
      %333 = vst.msk [vmem:[#allocation2 + $0x350] sm:$0xff] %vm226, 0
      %334 = vst.msk [vmem:[#allocation2 + $0x358] sm:$0xff] %vm226, 0
      %335 = vst.msk [vmem:[#allocation2 + $0x360] sm:$0xff] %vm226, 0
      %336 = vst.msk [vmem:[#allocation2 + $0x368] sm:$0xff] %vm226, 0
      %337 = vst.msk [vmem:[#allocation2 + $0x370] sm:$0xff] %vm226, 0
      %338 = vst.msk [vmem:[#allocation2 + $0x378] sm:$0xff] %vm226, 0
      %339 = vst.msk [vmem:[#allocation2 + $0x380] sm:$0xff] %vm226, 0
      %340 = vst.msk [vmem:[#allocation2 + $0x388] sm:$0xff] %vm226, 0
      %341 = vst.msk [vmem:[#allocation2 + $0x390] sm:$0xff] %vm226, 0
      %342 = vst.msk [vmem:[#allocation2 + $0x398] sm:$0xff] %vm226, 0
      %343 = vst.msk [vmem:[#allocation2 + $0x3a0] sm:$0xff] %vm226, 0
      %344 = vst.msk [vmem:[#allocation2 + $0x3a8] sm:$0xff] %vm226, 0
      %345 = vst.msk [vmem:[#allocation2 + $0x3b0] sm:$0xff] %vm226, 0
      %346 = vst.msk [vmem:[#allocation2 + $0x3b8] sm:$0xff] %vm226, 0
      %347 = vst.msk [vmem:[#allocation2 + $0x3c0] sm:$0xff] %vm226, 0
      %348 = vst.msk [vmem:[#allocation2 + $0x3c8] sm:$0xff] %vm226, 0
      %349 = vst.msk [vmem:[#allocation2 + $0x3d0] sm:$0xff] %vm226, 0
      %350 = vst.msk [vmem:[#allocation2 + $0x3d8] sm:$0xff] %vm226, 0
      %351 = vst.msk [vmem:[#allocation2 + $0x3e0] sm:$0xff] %vm226, 0
      %352 = vst.msk [vmem:[#allocation2 + $0x3e8] sm:$0xff] %vm226, 0
      %353 = vst.msk [vmem:[#allocation2 + $0x3f0] sm:$0xff] %vm226, 0
      %354 = vst.msk [vmem:[#allocation2 + $0x3f8] sm:$0xff] %vm226, 0
      %355 = vst.msk [vmem:[#allocation2 + $0x400] sm:$0xff] %vm226, 0
      %356 = vst.msk [vmem:[#allocation2 + $0x408] sm:$0xff] %vm226, 0
      %357 = vst.msk [vmem:[#allocation2 + $0x410] sm:$0xff] %vm226, 0
      %358 = vst.msk [vmem:[#allocation2 + $0x418] sm:$0xff] %vm226, 0
      %359 = vst.msk [vmem:[#allocation2 + $0x420] sm:$0xff] %vm226, 0
      %360 = vst.msk [vmem:[#allocation2 + $0x428] sm:$0xff] %vm226, 0
      %361 = vst.msk [vmem:[#allocation2 + $0x430] sm:$0xff] %vm226, 0
      %362 = vst.msk [vmem:[#allocation2 + $0x438] sm:$0xff] %vm226, 0
      %vm363 = vcmask 261120
      %364 = vst.msk [vmem:[#allocation4] sm:$0xff] %vm363, 0
      %365 = vst.msk [vmem:[#allocation4 + $0x8] sm:$0xff] %vm363, 0
      %366 = vst.msk [vmem:[#allocation4 + $0x10] sm:$0xff] %vm363, 0
      %367 = vst.msk [vmem:[#allocation4 + $0x18] sm:$0xff] %vm363, 0
      %368 = vst.msk [vmem:[#allocation4 + $0x20] sm:$0xff] %vm363, 0
      %369 = vst.msk [vmem:[#allocation4 + $0x28] sm:$0xff] %vm363, 0
      %370 = vst.msk [vmem:[#allocation4 + $0x30] sm:$0xff] %vm363, 0
      %371 = vst.msk [vmem:[#allocation4 + $0x38] sm:$0xff] %vm363, 0
      %372 = vst.msk [vmem:[#allocation4 + $0x40] sm:$0xff] %vm363, 0
      %373 = vst.msk [vmem:[#allocation4 + $0x48] sm:$0xff] %vm363, 0
      %374 = vst.msk [vmem:[#allocation4 + $0x50] sm:$0xff] %vm363, 0
      %375 = vst.msk [vmem:[#allocation4 + $0x58] sm:$0xff] %vm363, 0
      %376 = vst.msk [vmem:[#allocation4 + $0x60] sm:$0xff] %vm363, 0
      %377 = vst.msk [vmem:[#allocation4 + $0x68] sm:$0xff] %vm363, 0
      %378 = vst.msk [vmem:[#allocation4 + $0x70] sm:$0xff] %vm363, 0
      %379 = vst.msk [vmem:[#allocation4 + $0x78] sm:$0xff] %vm363, 0
      %380 = vst.msk [vmem:[#allocation4 + $0x80] sm:$0xff] %vm363, 0
      %381 = vst.msk [vmem:[#allocation4 + $0x88] sm:$0xff] %vm363, 0
      %382 = vst.msk [vmem:[#allocation4 + $0x90] sm:$0xff] %vm363, 0
      %383 = vst.msk [vmem:[#allocation4 + $0x98] sm:$0xff] %vm363, 0
      %384 = vst.msk [vmem:[#allocation4 + $0xa0] sm:$0xff] %vm363, 0
      %385 = vst.msk [vmem:[#allocation4 + $0xa8] sm:$0xff] %vm363, 0
      %386 = vst.msk [vmem:[#allocation4 + $0xb0] sm:$0xff] %vm363, 0
      %387 = vst.msk [vmem:[#allocation4 + $0xb8] sm:$0xff] %vm363, 0
      %388 = vst.msk [vmem:[#allocation4 + $0xc0] sm:$0xff] %vm363, 0
      %389 = vst.msk [vmem:[#allocation4 + $0xc8] sm:$0xff] %vm363, 0
      %390 = vst.msk [vmem:[#allocation4 + $0xd0] sm:$0xff] %vm363, 0
      %391 = vst.msk [vmem:[#allocation4 + $0xd8] sm:$0xff] %vm363, 0
      %392 = vst.msk [vmem:[#allocation4 + $0xe0] sm:$0xff] %vm363, 0
      %393 = vst.msk [vmem:[#allocation4 + $0xe8] sm:$0xff] %vm363, 0
      %394 = vst.msk [vmem:[#allocation4 + $0xf0] sm:$0xff] %vm363, 0
      %395 = vst.msk [vmem:[#allocation4 + $0xf8] sm:$0xff] %vm363, 0
      %396 = vst.msk [vmem:[#allocation4 + $0x100] sm:$0xff] %vm363, 0
      %397 = vst.msk [vmem:[#allocation4 + $0x108] sm:$0xff] %vm363, 0
      %398 = vst.msk [vmem:[#allocation4 + $0x110] sm:$0xff] %vm363, 0
      %399 = vst.msk [vmem:[#allocation4 + $0x118] sm:$0xff] %vm363, 0
      %400 = vst.msk [vmem:[#allocation4 + $0x120] sm:$0xff] %vm363, 0
      %401 = vst.msk [vmem:[#allocation4 + $0x128] sm:$0xff] %vm363, 0
      %402 = vst.msk [vmem:[#allocation4 + $0x130] sm:$0xff] %vm363, 0
      %403 = vst.msk [vmem:[#allocation4 + $0x138] sm:$0xff] %vm363, 0
      %404 = vst.msk [vmem:[#allocation4 + $0x140] sm:$0xff] %vm363, 0
      %405 = vst.msk [vmem:[#allocation4 + $0x148] sm:$0xff] %vm363, 0
      %406 = vst.msk [vmem:[#allocation4 + $0x150] sm:$0xff] %vm363, 0
      %407 = vst.msk [vmem:[#allocation4 + $0x158] sm:$0xff] %vm363, 0
      %408 = vst.msk [vmem:[#allocation4 + $0x160] sm:$0xff] %vm363, 0
      %409 = vst.msk [vmem:[#allocation4 + $0x168] sm:$0xff] %vm363, 0
      %410 = vst.msk [vmem:[#allocation4 + $0x170] sm:$0xff] %vm363, 0
      %411 = vst.msk [vmem:[#allocation4 + $0x178] sm:$0xff] %vm363, 0
      %412 = vst.msk [vmem:[#allocation4 + $0x180] sm:$0xff] %vm363, 0
      %413 = vst.msk [vmem:[#allocation4 + $0x188] sm:$0xff] %vm363, 0
      %414 = vst.msk [vmem:[#allocation4 + $0x190] sm:$0xff] %vm363, 0
      %415 = vst.msk [vmem:[#allocation4 + $0x198] sm:$0xff] %vm363, 0
      %416 = vst.msk [vmem:[#allocation4 + $0x1a0] sm:$0xff] %vm363, 0
      %417 = vst.msk [vmem:[#allocation4 + $0x1a8] sm:$0xff] %vm363, 0
      %v418 = vld [vmem:[%s219] sm:$0xf]
      %v419 = vld [vmem:[%s219 + $0x4] sm:$0xf]
      %v420 = vld [vmem:[%s219 + $0x8] sm:$0xf]
      %v421 = vld [vmem:[%s219 + $0xc] sm:$0xf]
      %v422 = vld [vmem:[%s219 + $0x10] sm:$0xf]
      %v423 = vld [vmem:[%s219 + $0x14] sm:$0xf]
      %v424 = vld [vmem:[%s219 + $0x18] sm:$0xf]
      %v425 = vld [vmem:[%s219 + $0x1c] sm:$0xf]
      %v426 = vld [vmem:[%s219 + $0x20] sm:$0xf]
      %v427 = vld [vmem:[%s219 + $0x24] sm:$0xf]
      %v428 = vld [vmem:[%s219 + $0x28] sm:$0xf]
      %v429 = vld [vmem:[%s219 + $0x2c] sm:$0xf]
      %v430 = vld [vmem:[%s219 + $0x30] sm:$0xf]
      %v431 = vld [vmem:[%s219 + $0x34] sm:$0xf]
      %v432 = vld [vmem:[%s219 + $0x38] sm:$0xf]
      %v433 = vld [vmem:[%s219 + $0x3c] sm:$0xf]
      %v434 = vld [vmem:[%s219 + $0x40] sm:$0xf]
      %v435 = vld [vmem:[%s219 + $0x44] sm:$0xf]
      %v436 = vld [vmem:[%s219 + $0x48] sm:$0xf]
      %v437 = vld [vmem:[%s219 + $0x4c] sm:$0xf]
      %v438 = vld [vmem:[%s219 + $0x50] sm:$0xf]
      %v439 = vld [vmem:[%s219 + $0x54] sm:$0xf]
      %v440 = vld [vmem:[%s219 + $0x58] sm:$0xf]
      %v441 = vld [vmem:[%s219 + $0x5c] sm:$0xf]
      %v442 = vld [vmem:[%s219 + $0x60] sm:$0xf]
      %v443 = vld [vmem:[%s219 + $0x64] sm:$0xf]
      %v444 = vld [vmem:[%s219 + $0x68] sm:$0xf]
      %v445 = vld [vmem:[%s219 + $0x6c] sm:$0xf]
      %v446 = vld [vmem:[%s219 + $0x70] sm:$0xf]
      %v447 = vld [vmem:[%s219 + $0x74] sm:$0xf]
      %v448 = vld [vmem:[%s219 + $0x78] sm:$0xf]
      %v449 = vld [vmem:[%s219 + $0x7c] sm:$0xf]
      %v450 = vld [vmem:[%s219 + $0x80] sm:$0xf]
      %v451 = vld [vmem:[%s219 + $0x84] sm:$0xf]
      %v452 = vld [vmem:[%s219 + $0x88] sm:$0xf]
      %v453 = vld [vmem:[%s219 + $0x8c] sm:$0xf]
      %v454 = vld [vmem:[%s219 + $0x90] sm:$0xf]
      %v455 = vld [vmem:[%s219 + $0x94] sm:$0xf]
      %v456 = vld [vmem:[%s219 + $0x98] sm:$0xf]
      %v457 = vld [vmem:[%s219 + $0x9c] sm:$0xf]
      %v458 = vld [vmem:[%s219 + $0xa0] sm:$0xf]
      %v459 = vld [vmem:[%s219 + $0xa4] sm:$0xf]
      %v460 = vld [vmem:[%s219 + $0xa8] sm:$0xf]
      %v461 = vld [vmem:[%s219 + $0xac] sm:$0xf]
      %v462 = vld [vmem:[%s219 + $0xb0] sm:$0xf]
      %v463 = vld [vmem:[%s219 + $0xb4] sm:$0xf]
      %v464 = vld [vmem:[%s219 + $0xb8] sm:$0xf]
      %v465 = vld [vmem:[%s219 + $0xbc] sm:$0xf]
      %v466 = vld [vmem:[%s219 + $0xc0] sm:$0xf]
      %v467 = vld [vmem:[%s219 + $0xc4] sm:$0xf]
      %v468 = vld [vmem:[%s219 + $0xc8] sm:$0xf]
      %v469 = vld [vmem:[%s219 + $0xcc] sm:$0xf]
      %v470 = vld [vmem:[%s219 + $0xd0] sm:$0xf]
      %v471 = vld [vmem:[%s219 + $0xd4] sm:$0xf]
      %v472 = vld [vmem:[%s219 + $0xd8] sm:$0xf]
      %v473 = vld [vmem:[%s219 + $0xdc] sm:$0xf]
      %v474 = vld [vmem:[%s219 + $0xe0] sm:$0xf]
      %v475 = vld [vmem:[%s219 + $0xe4] sm:$0xf]
      %v476 = vld [vmem:[%s219 + $0xe8] sm:$0xf]
      %v477 = vld [vmem:[%s219 + $0xec] sm:$0xf]
      %v478 = vld [vmem:[%s219 + $0xf0] sm:$0xf]
      %v479 = vld [vmem:[%s219 + $0xf4] sm:$0xf]
      %v480 = vld [vmem:[%s219 + $0xf8] sm:$0xf]
      %v481 = vld [vmem:[%s219 + $0xfc] sm:$0xf]
      %v482 = vld [vmem:[%s219 + $0x100] sm:$0xf]
      %v483 = vld [vmem:[%s219 + $0x104] sm:$0xf]
      %v484 = vld [vmem:[%s219 + $0x108] sm:$0xf]
      %v485 = vld [vmem:[%s219 + $0x10c] sm:$0xf]
      %v486 = vld [vmem:[%s219 + $0x110] sm:$0xf]
      %v487 = vld [vmem:[%s219 + $0x114] sm:$0xf]
      %v488 = vld [vmem:[%s219 + $0x118] sm:$0xf]
      %v489 = vld [vmem:[%s219 + $0x11c] sm:$0xf]
      %v490 = vld [vmem:[%s219 + $0x120] sm:$0xf]
      %v491 = vld [vmem:[%s219 + $0x124] sm:$0xf]
      %v492 = vld [vmem:[%s219 + $0x128] sm:$0xf]
      %v493 = vld [vmem:[%s219 + $0x12c] sm:$0xf]
      %v494 = vld [vmem:[%s219 + $0x130] sm:$0xf]
      %v495 = vld [vmem:[%s219 + $0x134] sm:$0xf]
      %v496 = vld [vmem:[%s219 + $0x138] sm:$0xf]
      %v497 = vld [vmem:[%s219 + $0x13c] sm:$0xf]
      %v498 = vld [vmem:[%s219 + $0x140] sm:$0xf]
      %v499 = vld [vmem:[%s219 + $0x144] sm:$0xf]
      %v500 = vld [vmem:[%s219 + $0x148] sm:$0xf]
      %v501 = vld [vmem:[%s219 + $0x14c] sm:$0xf]
      %v502 = vld [vmem:[%s219 + $0x150] sm:$0xf]
      %v503 = vld [vmem:[%s219 + $0x154] sm:$0xf]
      %v504 = vld [vmem:[%s219 + $0x158] sm:$0xf]
      %v505 = vld [vmem:[%s219 + $0x15c] sm:$0xf]
      %v506 = vld [vmem:[%s219 + $0x160] sm:$0xf]
      %v507 = vld [vmem:[%s219 + $0x164] sm:$0xf]
      %v508 = vld [vmem:[%s219 + $0x168] sm:$0xf]
      %v509 = vld [vmem:[%s219 + $0x16c] sm:$0xf]
      %v510 = vld [vmem:[%s219 + $0x170] sm:$0xf]
      %v511 = vld [vmem:[%s219 + $0x174] sm:$0xf]
      %v512 = vld [vmem:[%s219 + $0x178] sm:$0xf]
      %v513 = vld [vmem:[%s219 + $0x17c] sm:$0xf]
      %v514 = vld [vmem:[%s219 + $0x180] sm:$0xf]
      %v515 = vld [vmem:[%s219 + $0x184] sm:$0xf]
      %v516 = vld [vmem:[%s219 + $0x188] sm:$0xf]
      %v517 = vld [vmem:[%s219 + $0x18c] sm:$0xf]
      %v518 = vld [vmem:[%s219 + $0x190] sm:$0xf]
      %v519 = vld [vmem:[%s219 + $0x194] sm:$0xf]
      %v520 = vld [vmem:[%s219 + $0x198] sm:$0xf]
      %v521 = vld [vmem:[%s219 + $0x19c] sm:$0xf]
      %v522 = vld [vmem:[%s219 + $0x1a0] sm:$0xf]
      %v523 = vld [vmem:[%s219 + $0x1a4] sm:$0xf]
      %v524 = vld [vmem:[%s219 + $0x1a8] sm:$0xf]
      %v525 = vld [vmem:[%s219 + $0x1ac] sm:$0xf]
      %v526 = vld [vmem:[%s219 + $0x1b0] sm:$0xf]
      %v527 = vld [vmem:[%s219 + $0x1b4] sm:$0xf]
      %v528 = vld [vmem:[%s219 + $0x1b8] sm:$0xf]
      %v529 = vld [vmem:[%s219 + $0x1bc] sm:$0xf]
      %v530 = vld [vmem:[%s219 + $0x1c0] sm:$0xf]
      %v531 = vld [vmem:[%s219 + $0x1c4] sm:$0xf]
      %v532 = vld [vmem:[%s219 + $0x1c8] sm:$0xf]
      %v533 = vld [vmem:[%s219 + $0x1cc] sm:$0xf]
      %v534 = vld [vmem:[%s219 + $0x1d0] sm:$0xf]
      %v535 = vld [vmem:[%s219 + $0x1d4] sm:$0xf]
      %v536 = vld [vmem:[%s219 + $0x1d8] sm:$0xf]
      %v537 = vld [vmem:[%s219 + $0x1dc] sm:$0xf]
      %v538 = vld [vmem:[%s219 + $0x1e0] sm:$0xf]
      %v539 = vld [vmem:[%s219 + $0x1e4] sm:$0xf]
      %v540 = vld [vmem:[%s219 + $0x1e8] sm:$0xf]
      %v541 = vld [vmem:[%s219 + $0x1ec] sm:$0xf]
      %v542 = vld [vmem:[%s219 + $0x1f0] sm:$0xf]
      %v543 = vld [vmem:[%s219 + $0x1f4] sm:$0xf]
      %v544 = vld [vmem:[%s219 + $0x1f8] sm:$0xf]
      %v545 = vld [vmem:[%s219 + $0x1fc] sm:$0xf]
      %v674 = vunpack.c.l.b16 %v418
      %v675 = vunpack.c.l.b16 %v419
      %v676 = vunpack.c.l.b16 %v420
      %v677 = vunpack.c.l.b16 %v421
      %v678 = vunpack.c.l.b16 %v422
      %v679 = vunpack.c.l.b16 %v423
      %v680 = vunpack.c.l.b16 %v424
      %v681 = vunpack.c.l.b16 %v425
      %v682 = vunpack.c.l.b16 %v426
      %v683 = vunpack.c.l.b16 %v427
      %v684 = vunpack.c.l.b16 %v428
      %v685 = vunpack.c.l.b16 %v429
      %v686 = vunpack.c.l.b16 %v430
      %v687 = vunpack.c.l.b16 %v431
      %v688 = vunpack.c.l.b16 %v432
      %v689 = vunpack.c.l.b16 %v433
      %v690 = vunpack.c.l.b16 %v434
      %v691 = vunpack.c.l.b16 %v435
      %v692 = vunpack.c.l.b16 %v436
      %v693 = vunpack.c.l.b16 %v437
      %v694 = vunpack.c.l.b16 %v438
      %v695 = vunpack.c.l.b16 %v439
      %v696 = vunpack.c.l.b16 %v440
      %v697 = vunpack.c.l.b16 %v441
      %v698 = vunpack.c.l.b16 %v442
      %v699 = vunpack.c.l.b16 %v443
      %v700 = vunpack.c.l.b16 %v444
      %v701 = vunpack.c.l.b16 %v445
      %v702 = vunpack.c.l.b16 %v446
      %v703 = vunpack.c.l.b16 %v447
      %v704 = vunpack.c.l.b16 %v448
      %v705 = vunpack.c.l.b16 %v449
      %v706 = vunpack.c.l.b16 %v450
      %v707 = vunpack.c.l.b16 %v451
      %v708 = vunpack.c.l.b16 %v452
      %v709 = vunpack.c.l.b16 %v453
      %v710 = vunpack.c.l.b16 %v454
      %v711 = vunpack.c.l.b16 %v455
      %v712 = vunpack.c.l.b16 %v456
      %v713 = vunpack.c.l.b16 %v457
      %v714 = vunpack.c.l.b16 %v458
      %v715 = vunpack.c.l.b16 %v459
      %v716 = vunpack.c.l.b16 %v460
      %v717 = vunpack.c.l.b16 %v461
      %v718 = vunpack.c.l.b16 %v462
      %v719 = vunpack.c.l.b16 %v463
      %v720 = vunpack.c.l.b16 %v464
      %v721 = vunpack.c.l.b16 %v465
      %v722 = vunpack.c.l.b16 %v466
      %v723 = vunpack.c.l.b16 %v467
      %v724 = vunpack.c.l.b16 %v468
      %v725 = vunpack.c.l.b16 %v469
      %v726 = vunpack.c.l.b16 %v470
      %v727 = vunpack.c.l.b16 %v471
      %v728 = vunpack.c.l.b16 %v472
      %v729 = vunpack.c.l.b16 %v473
      %v730 = vunpack.c.l.b16 %v474
      %v731 = vunpack.c.l.b16 %v475
      %v732 = vunpack.c.l.b16 %v476
      %v733 = vunpack.c.l.b16 %v477
      %v734 = vunpack.c.l.b16 %v478
      %v735 = vunpack.c.l.b16 %v479
      %v736 = vunpack.c.l.b16 %v480
      %v737 = vunpack.c.l.b16 %v481
      %v738 = vunpack.c.l.b16 %v482
      %v739 = vunpack.c.l.b16 %v483
      %v740 = vunpack.c.l.b16 %v484
      %v741 = vunpack.c.l.b16 %v485
      %v742 = vunpack.c.l.b16 %v486
      %v743 = vunpack.c.l.b16 %v487
      %v744 = vunpack.c.l.b16 %v488
      %v745 = vunpack.c.l.b16 %v489
      %v746 = vunpack.c.l.b16 %v490
      %v747 = vunpack.c.l.b16 %v491
      %v748 = vunpack.c.l.b16 %v492
      %v749 = vunpack.c.l.b16 %v493
      %v750 = vunpack.c.l.b16 %v494
      %v751 = vunpack.c.l.b16 %v495
      %v752 = vunpack.c.l.b16 %v496
      %v753 = vunpack.c.l.b16 %v497
      %v754 = vunpack.c.l.b16 %v498
      %v755 = vunpack.c.l.b16 %v499
      %v756 = vunpack.c.l.b16 %v500
      %v757 = vunpack.c.l.b16 %v501
      %v758 = vunpack.c.l.b16 %v502
      %v759 = vunpack.c.l.b16 %v503
      %v760 = vunpack.c.l.b16 %v504
      %v761 = vunpack.c.l.b16 %v505
      %v762 = vunpack.c.l.b16 %v506
      %v763 = vunpack.c.l.b16 %v507
      %v764 = vunpack.c.l.b16 %v508
      %v765 = vunpack.c.l.b16 %v509
      %v766 = vunpack.c.l.b16 %v510
      %v767 = vunpack.c.l.b16 %v511
      %v768 = vunpack.c.l.b16 %v512
      %v769 = vunpack.c.l.b16 %v513
      %v770 = vunpack.c.l.b16 %v514
      %v771 = vunpack.c.l.b16 %v515
      %v772 = vunpack.c.l.b16 %v516
      %v773 = vunpack.c.l.b16 %v517
      %v774 = vunpack.c.l.b16 %v518
      %v775 = vunpack.c.l.b16 %v519
      %v776 = vunpack.c.l.b16 %v520
      %v777 = vunpack.c.l.b16 %v521
      %v778 = vunpack.c.l.b16 %v522
      %v779 = vunpack.c.l.b16 %v523
      %v780 = vunpack.c.l.b16 %v524
      %v781 = vunpack.c.l.b16 %v525
      %v782 = vunpack.c.l.b16 %v526
      %v783 = vunpack.c.l.b16 %v527
      %v784 = vunpack.c.l.b16 %v528
      %v785 = vunpack.c.l.b16 %v529
      %v786 = vunpack.c.l.b16 %v530
      %v787 = vunpack.c.l.b16 %v531
      %v788 = vunpack.c.l.b16 %v532
      %v789 = vunpack.c.l.b16 %v533
      %v790 = vunpack.c.l.b16 %v534
      %v791 = vunpack.c.l.b16 %v535
      %v792 = vunpack.c.l.b16 %v536
      %v793 = vunpack.c.l.b16 %v537
      %v794 = vunpack.c.l.b16 %v538
      %v795 = vunpack.c.l.b16 %v539
      %v796 = vunpack.c.l.b16 %v540
      %v797 = vunpack.c.l.b16 %v541
      %v798 = vunpack.c.l.b16 %v542
      %v799 = vunpack.c.l.b16 %v543
      %v800 = vunpack.c.l.b16 %v544
      %v801 = vunpack.c.l.b16 %v545
      %v802 = vpack.c.b16 %v675, %v674
      %v803 = vpack.c.b16 %v677, %v676
      %v804 = vpack.c.b16 %v679, %v678
      %v805 = vpack.c.b16 %v681, %v680
      %v806 = vpack.c.b16 %v683, %v682
      %v807 = vpack.c.b16 %v685, %v684
      %v808 = vpack.c.b16 %v687, %v686
      %v809 = vpack.c.b16 %v689, %v688
      %v810 = vpack.c.b16 %v691, %v690
      %v811 = vpack.c.b16 %v693, %v692
      %v812 = vpack.c.b16 %v695, %v694
      %v813 = vpack.c.b16 %v697, %v696
      %v814 = vpack.c.b16 %v699, %v698
      %v815 = vpack.c.b16 %v701, %v700
      %v816 = vpack.c.b16 %v703, %v702
      %v817 = vpack.c.b16 %v705, %v704
      %v818 = vpack.c.b16 %v707, %v706
      %v819 = vpack.c.b16 %v709, %v708
      %v820 = vpack.c.b16 %v711, %v710
      %v821 = vpack.c.b16 %v713, %v712
      %v822 = vpack.c.b16 %v715, %v714
      %v823 = vpack.c.b16 %v717, %v716
      %v824 = vpack.c.b16 %v719, %v718
      %v825 = vpack.c.b16 %v721, %v720
      %v826 = vpack.c.b16 %v723, %v722
      %v827 = vpack.c.b16 %v725, %v724
      %v828 = vpack.c.b16 %v727, %v726
      %v829 = vpack.c.b16 %v729, %v728
      %v830 = vpack.c.b16 %v731, %v730
      %v831 = vpack.c.b16 %v733, %v732
      %v832 = vpack.c.b16 %v735, %v734
      %v833 = vpack.c.b16 %v737, %v736
      %v834 = vpack.c.b16 %v739, %v738
      %v835 = vpack.c.b16 %v741, %v740
      %v836 = vpack.c.b16 %v743, %v742
      %v837 = vpack.c.b16 %v745, %v744
      %v838 = vpack.c.b16 %v747, %v746
      %v839 = vpack.c.b16 %v749, %v748
      %v840 = vpack.c.b16 %v751, %v750
      %v841 = vpack.c.b16 %v753, %v752
      %v842 = vpack.c.b16 %v755, %v754
      %v843 = vpack.c.b16 %v757, %v756
      %v844 = vpack.c.b16 %v759, %v758
      %v845 = vpack.c.b16 %v761, %v760
      %v846 = vpack.c.b16 %v763, %v762
      %v847 = vpack.c.b16 %v765, %v764
      %v848 = vpack.c.b16 %v767, %v766
      %v849 = vpack.c.b16 %v769, %v768
      %v850 = vpack.c.b16 %v771, %v770
      %v851 = vpack.c.b16 %v773, %v772
      %v852 = vpack.c.b16 %v775, %v774
      %v853 = vpack.c.b16 %v777, %v776
      %v854 = vpack.c.b16 %v779, %v778
      %v855 = vpack.c.b16 %v781, %v780
      %v856 = vpack.c.b16 %v783, %v782
      %v857 = vpack.c.b16 %v785, %v784
      %v858 = vpack.c.b16 %v787, %v786
      %v859 = vpack.c.b16 %v789, %v788
      %v860 = vpack.c.b16 %v791, %v790
      %v861 = vpack.c.b16 %v793, %v792
      %v862 = vpack.c.b16 %v795, %v794
      %v863 = vpack.c.b16 %v797, %v796
      %v864 = vpack.c.b16 %v799, %v798
      %v865 = vpack.c.b16 %v801, %v800
      %s930 = scalar_lea.vmem [#allocation2], 32
      %931 = vst.msk [vmem:[%s930 + $0x8] sm:$0xff] %vm226, %v802
      %932 = vst.msk [vmem:[%s930 + $0x10] sm:$0xff] %vm226, %v803
      %933 = vst.msk [vmem:[%s930 + $0x28] sm:$0xff] %vm226, %v804
      %934 = vst.msk [vmem:[%s930 + $0x30] sm:$0xff] %vm226, %v805
      %935 = vst.msk [vmem:[%s930 + $0x48] sm:$0xff] %vm226, %v806
      %936 = vst.msk [vmem:[%s930 + $0x50] sm:$0xff] %vm226, %v807
      %937 = vst.msk [vmem:[%s930 + $0x68] sm:$0xff] %vm226, %v808
      %938 = vst.msk [vmem:[%s930 + $0x70] sm:$0xff] %vm226, %v809
      %939 = vst.msk [vmem:[%s930 + $0x88] sm:$0xff] %vm226, %v810
      %940 = vst.msk [vmem:[%s930 + $0x90] sm:$0xff] %vm226, %v811
      %941 = vst.msk [vmem:[%s930 + $0xa8] sm:$0xff] %vm226, %v812
      %942 = vst.msk [vmem:[%s930 + $0xb0] sm:$0xff] %vm226, %v813
      %943 = vst.msk [vmem:[%s930 + $0xc8] sm:$0xff] %vm226, %v814
      %944 = vst.msk [vmem:[%s930 + $0xd0] sm:$0xff] %vm226, %v815
      %945 = vst.msk [vmem:[%s930 + $0xe8] sm:$0xff] %vm226, %v816
      %946 = vst.msk [vmem:[%s930 + $0xf0] sm:$0xff] %vm226, %v817
      %947 = vst.msk [vmem:[%s930 + $0x108] sm:$0xff] %vm226, %v818
      %948 = vst.msk [vmem:[%s930 + $0x110] sm:$0xff] %vm226, %v819
      %949 = vst.msk [vmem:[%s930 + $0x128] sm:$0xff] %vm226, %v820
      %950 = vst.msk [vmem:[%s930 + $0x130] sm:$0xff] %vm226, %v821
      %951 = vst.msk [vmem:[%s930 + $0x148] sm:$0xff] %vm226, %v822
      %952 = vst.msk [vmem:[%s930 + $0x150] sm:$0xff] %vm226, %v823
      %953 = vst.msk [vmem:[%s930 + $0x168] sm:$0xff] %vm226, %v824
      %954 = vst.msk [vmem:[%s930 + $0x170] sm:$0xff] %vm226, %v825
      %955 = vst.msk [vmem:[%s930 + $0x188] sm:$0xff] %vm226, %v826
      %956 = vst.msk [vmem:[%s930 + $0x190] sm:$0xff] %vm226, %v827
      %957 = vst.msk [vmem:[%s930 + $0x1a8] sm:$0xff] %vm226, %v828
      %958 = vst.msk [vmem:[%s930 + $0x1b0] sm:$0xff] %vm226, %v829
      %959 = vst.msk [vmem:[%s930 + $0x1c8] sm:$0xff] %vm226, %v830
      %960 = vst.msk [vmem:[%s930 + $0x1d0] sm:$0xff] %vm226, %v831
      %961 = vst.msk [vmem:[%s930 + $0x1e8] sm:$0xff] %vm226, %v832
      %962 = vst.msk [vmem:[%s930 + $0x1f0] sm:$0xff] %vm226, %v833
      %963 = vst.msk [vmem:[%s930 + $0x208] sm:$0xff] %vm226, %v834
      %964 = vst.msk [vmem:[%s930 + $0x210] sm:$0xff] %vm226, %v835
      %965 = vst.msk [vmem:[%s930 + $0x228] sm:$0xff] %vm226, %v836
      %966 = vst.msk [vmem:[%s930 + $0x230] sm:$0xff] %vm226, %v837
      %967 = vst.msk [vmem:[%s930 + $0x248] sm:$0xff] %vm226, %v838
      %968 = vst.msk [vmem:[%s930 + $0x250] sm:$0xff] %vm226, %v839
      %969 = vst.msk [vmem:[%s930 + $0x268] sm:$0xff] %vm226, %v840
      %970 = vst.msk [vmem:[%s930 + $0x270] sm:$0xff] %vm226, %v841
      %971 = vst.msk [vmem:[%s930 + $0x288] sm:$0xff] %vm226, %v842
      %972 = vst.msk [vmem:[%s930 + $0x290] sm:$0xff] %vm226, %v843
      %973 = vst.msk [vmem:[%s930 + $0x2a8] sm:$0xff] %vm226, %v844
      %974 = vst.msk [vmem:[%s930 + $0x2b0] sm:$0xff] %vm226, %v845
      %975 = vst.msk [vmem:[%s930 + $0x2c8] sm:$0xff] %vm226, %v846
      %976 = vst.msk [vmem:[%s930 + $0x2d0] sm:$0xff] %vm226, %v847
      %977 = vst.msk [vmem:[%s930 + $0x2e8] sm:$0xff] %vm226, %v848
      %978 = vst.msk [vmem:[%s930 + $0x2f0] sm:$0xff] %vm226, %v849
      %979 = vst.msk [vmem:[%s930 + $0x308] sm:$0xff] %vm226, %v850
      %980 = vst.msk [vmem:[%s930 + $0x310] sm:$0xff] %vm226, %v851
      %981 = vst.msk [vmem:[%s930 + $0x328] sm:$0xff] %vm226, %v852
      %982 = vst.msk [vmem:[%s930 + $0x330] sm:$0xff] %vm226, %v853
      %983 = vst.msk [vmem:[%s930 + $0x348] sm:$0xff] %vm226, %v854
      %984 = vst.msk [vmem:[%s930 + $0x350] sm:$0xff] %vm226, %v855
      %985 = vst.msk [vmem:[%s930 + $0x368] sm:$0xff] %vm226, %v856
      %986 = vst.msk [vmem:[%s930 + $0x370] sm:$0xff] %vm226, %v857
      %987 = vst.msk [vmem:[%s930 + $0x388] sm:$0xff] %vm226, %v858
      %988 = vst.msk [vmem:[%s930 + $0x390] sm:$0xff] %vm226, %v859
      %989 = vst.msk [vmem:[%s930 + $0x3a8] sm:$0xff] %vm226, %v860
      %990 = vst.msk [vmem:[%s930 + $0x3b0] sm:$0xff] %vm226, %v861
      %991 = vst.msk [vmem:[%s930 + $0x3c8] sm:$0xff] %vm226, %v862
      %992 = vst.msk [vmem:[%s930 + $0x3d0] sm:$0xff] %vm226, %v863
      %993 = vst.msk [vmem:[%s930 + $0x3e8] sm:$0xff] %vm226, %v864
      %994 = vst.msk [vmem:[%s930 + $0x3f0] sm:$0xff] %vm226, %v865
      %v995 = vld [vmem:[#allocation2] sm:$0x80]
      %v996 = vld [vmem:[#allocation2 + $0x8] sm:$0xff]
      %v997 = vld [vmem:[#allocation2 + $0x10] sm:$0xff]
      %v998 = vld [vmem:[#allocation2 + $0x20] sm:$0x80]
      %v999 = vld [vmem:[#allocation2 + $0x28] sm:$0xff]
      %v1000 = vld [vmem:[#allocation2 + $0x30] sm:$0xff]
      %v1001 = vld [vmem:[#allocation2 + $0x40] sm:$0x80]
      %v1002 = vld [vmem:[#allocation2 + $0x48] sm:$0xff]
      %v1003 = vld [vmem:[#allocation2 + $0x50] sm:$0xff]
      %v1004 = vld [vmem:[#allocation2 + $0x60] sm:$0x80]
      %v1005 = vld [vmem:[#allocation2 + $0x68] sm:$0xff]
      %v1006 = vld [vmem:[#allocation2 + $0x70] sm:$0xff]
      %v1007 = vld [vmem:[#allocation2 + $0x80] sm:$0x80]
      %v1008 = vld [vmem:[#allocation2 + $0x88] sm:$0xff]
      %v1009 = vld [vmem:[#allocation2 + $0x90] sm:$0xff]
      %v1010 = vld [vmem:[#allocation2 + $0xa0] sm:$0x80]
      %v1011 = vld [vmem:[#allocation2 + $0xa8] sm:$0xff]
      %v1012 = vld [vmem:[#allocation2 + $0xb0] sm:$0xff]
      %v1013 = vld [vmem:[#allocation2 + $0xc0] sm:$0x80]
      %v1014 = vld [vmem:[#allocation2 + $0xc8] sm:$0xff]
      %v1015 = vld [vmem:[#allocation2 + $0xd0] sm:$0xff]
      %v1016 = vld [vmem:[#allocation2 + $0xe0] sm:$0x80]
      %v1017 = vld [vmem:[#allocation2 + $0xe8] sm:$0xff]
      %v1018 = vld [vmem:[#allocation2 + $0xf0] sm:$0xff]
      %v1019 = vld [vmem:[#allocation2 + $0x100] sm:$0x80]
      %v1020 = vld [vmem:[#allocation2 + $0x108] sm:$0xff]
      %v1021 = vld [vmem:[#allocation2 + $0x110] sm:$0xff]
      %v1022 = vld [vmem:[#allocation2 + $0x120] sm:$0x80]
      %v1023 = vld [vmem:[#allocation2 + $0x128] sm:$0xff]
      %v1024 = vld [vmem:[#allocation2 + $0x130] sm:$0xff]
      %v1025 = vld [vmem:[#allocation2 + $0x140] sm:$0x80]
      %v1026 = vld [vmem:[#allocation2 + $0x148] sm:$0xff]
      %v1027 = vld [vmem:[#allocation2 + $0x150] sm:$0xff]
      %v1028 = vld [vmem:[#allocation2 + $0x160] sm:$0x80]
      %v1029 = vld [vmem:[#allocation2 + $0x168] sm:$0xff]
      %v1030 = vld [vmem:[#allocation2 + $0x170] sm:$0xff]
      %v1031 = vld [vmem:[#allocation2 + $0x180] sm:$0x80]
      %v1032 = vld [vmem:[#allocation2 + $0x188] sm:$0xff]
      %v1033 = vld [vmem:[#allocation2 + $0x190] sm:$0xff]
      %v1034 = vld [vmem:[#allocation2 + $0x1a0] sm:$0x80]
      %v1035 = vld [vmem:[#allocation2 + $0x1a8] sm:$0xff]
      %v1036 = vld [vmem:[#allocation2 + $0x1b0] sm:$0xff]
      %v1037 = vld [vmem:[#allocation2 + $0x1c0] sm:$0x80]
      %v1038 = vld [vmem:[#allocation2 + $0x1c8] sm:$0xff]
      %v1039 = vld [vmem:[#allocation2 + $0x1d0] sm:$0xff]
      %v1040 = vld [vmem:[#allocation2 + $0x1e0] sm:$0x80]
      %v1041 = vld [vmem:[#allocation2 + $0x1e8] sm:$0xff]
      %v1042 = vld [vmem:[#allocation2 + $0x1f0] sm:$0xff]
      %v1043 = vld [vmem:[#allocation2 + $0x200] sm:$0x80]
      %v1044 = vld [vmem:[#allocation2 + $0x208] sm:$0xff]
      %v1045 = vld [vmem:[#allocation2 + $0x210] sm:$0xff]
      %v1046 = vld [vmem:[#allocation2 + $0x220] sm:$0x80]
      %v1047 = vld [vmem:[#allocation2 + $0x228] sm:$0xff]
      %v1048 = vld [vmem:[#allocation2 + $0x230] sm:$0xff]
      %v1049 = vld [vmem:[#allocation2 + $0x240] sm:$0x80]
      %v1050 = vld [vmem:[#allocation2 + $0x248] sm:$0xff]
      %v1051 = vld [vmem:[#allocation2 + $0x250] sm:$0xff]
      %v1052 = vld [vmem:[#allocation2 + $0x260] sm:$0x80]
      %v1053 = vld [vmem:[#allocation2 + $0x268] sm:$0xff]
      %v1054 = vld [vmem:[#allocation2 + $0x270] sm:$0xff]
      %v1055 = vld [vmem:[#allocation2 + $0x280] sm:$0x80]
      %v1056 = vld [vmem:[#allocation2 + $0x288] sm:$0xff]
      %v1057 = vld [vmem:[#allocation2 + $0x290] sm:$0xff]
      %v1058 = vld [vmem:[#allocation2 + $0x2a0] sm:$0x80]
      %v1059 = vld [vmem:[#allocation2 + $0x2a8] sm:$0xff]
      %v1060 = vld [vmem:[#allocation2 + $0x2b0] sm:$0xff]
      %v1061 = vld [vmem:[#allocation2 + $0x2c0] sm:$0x80]
      %v1062 = vld [vmem:[#allocation2 + $0x2c8] sm:$0xff]
      %v1063 = vld [vmem:[#allocation2 + $0x2d0] sm:$0xff]
      %v1064 = vld [vmem:[#allocation2 + $0x2e0] sm:$0x80]
      %v1065 = vld [vmem:[#allocation2 + $0x2e8] sm:$0xff]
      %v1066 = vld [vmem:[#allocation2 + $0x2f0] sm:$0xff]
      %v1067 = vld [vmem:[#allocation2 + $0x300] sm:$0x80]
      %v1068 = vld [vmem:[#allocation2 + $0x308] sm:$0xff]
      %v1069 = vld [vmem:[#allocation2 + $0x310] sm:$0xff]
      %v1070 = vld [vmem:[#allocation2 + $0x320] sm:$0x80]
      %v1071 = vld [vmem:[#allocation2 + $0x328] sm:$0xff]
      %v1072 = vld [vmem:[#allocation2 + $0x330] sm:$0xff]
      %v1073 = vld [vmem:[#allocation2 + $0x340] sm:$0x80]
      %v1074 = vld [vmem:[#allocation2 + $0x348] sm:$0xff]
      %v1075 = vld [vmem:[#allocation2 + $0x350] sm:$0xff]
      %v1076 = vld [vmem:[#allocation2 + $0x360] sm:$0x80]
      %v1077 = vld [vmem:[#allocation2 + $0x368] sm:$0xff]
      %v1078 = vld [vmem:[#allocation2 + $0x370] sm:$0xff]
      %v1079 = vld [vmem:[#allocation2 + $0x380] sm:$0x80]
      %v1080 = vld [vmem:[#allocation2 + $0x388] sm:$0xff]
      %v1081 = vld [vmem:[#allocation2 + $0x390] sm:$0xff]
      %v1082 = vld [vmem:[#allocation2 + $0x3a0] sm:$0x80]
      %v1083 = vld [vmem:[#allocation2 + $0x3a8] sm:$0xff]
      %v1084 = vld [vmem:[#allocation2 + $0x3b0] sm:$0xff]
      %v1085 = vld [vmem:[#allocation2 + $0x3c0] sm:$0x80]
      %v1086 = vld [vmem:[#allocation2 + $0x3c8] sm:$0xff]
      %v1087 = vld [vmem:[#allocation2 + $0x3d0] sm:$0xff]
      %v1088 = vld [vmem:[#allocation2 + $0x3e0] sm:$0x80]
      %v1089 = vld [vmem:[#allocation2 + $0x3e8] sm:$0xff]
      %v1090 = vld [vmem:[#allocation2 + $0x3f0] sm:$0xff]
      %vm1091 = vsmask.f32 256
      %v1093 = vshrl.u32 %v995, 16
      %v1095 = vrot.slane %v1093, 7
      %v1097 = vshrl.u32 %v996, 16
      %v1099 = vrot.slane %v1097, 7
      %v1100 = vshll.u32 %v996, 16
      %v1102 = vor.u32 %v1099, %v1100
      %v1103 = vsel %vm1091, %v1095, %v1102
      %v1105 = vshrl.u32 %v997, 16
      %v1107 = vrot.slane %v1105, 7
      %v1108 = vshll.u32 %v997, 16
      %v1110 = vor.u32 %v1107, %v1108
      %v1111 = vsel %vm1091, %v1099, %v1110
      %v1113 = vshrl.u32 %v998, 16
      %v1115 = vrot.slane %v1113, 7
      %v1117 = vshrl.u32 %v999, 16
      %v1119 = vrot.slane %v1117, 7
      %v1120 = vshll.u32 %v999, 16
      %v1122 = vor.u32 %v1119, %v1120
      %v1123 = vsel %vm1091, %v1115, %v1122
      %v1125 = vshrl.u32 %v1000, 16
      %v1127 = vrot.slane %v1125, 7
      %v1128 = vshll.u32 %v1000, 16
      %v1130 = vor.u32 %v1127, %v1128
      %v1131 = vsel %vm1091, %v1119, %v1130
      %v1133 = vshrl.u32 %v1001, 16
      %v1135 = vrot.slane %v1133, 7
      %v1137 = vshrl.u32 %v1002, 16
      %v1139 = vrot.slane %v1137, 7
      %v1140 = vshll.u32 %v1002, 16
      %v1142 = vor.u32 %v1139, %v1140
      %v1143 = vsel %vm1091, %v1135, %v1142
      %v1145 = vshrl.u32 %v1003, 16
      %v1147 = vrot.slane %v1145, 7
      %v1148 = vshll.u32 %v1003, 16
      %v1150 = vor.u32 %v1147, %v1148
      %v1151 = vsel %vm1091, %v1139, %v1150
      %v1153 = vshrl.u32 %v1004, 16
      %v1155 = vrot.slane %v1153, 7
      %v1157 = vshrl.u32 %v1005, 16
      %v1159 = vrot.slane %v1157, 7
      %v1160 = vshll.u32 %v1005, 16
      %v1162 = vor.u32 %v1159, %v1160
      %v1163 = vsel %vm1091, %v1155, %v1162
      %v1165 = vshrl.u32 %v1006, 16
      %v1167 = vrot.slane %v1165, 7
      %v1168 = vshll.u32 %v1006, 16
      %v1170 = vor.u32 %v1167, %v1168
      %v1171 = vsel %vm1091, %v1159, %v1170
      %v1173 = vshrl.u32 %v1007, 16
      %v1175 = vrot.slane %v1173, 7
      %v1177 = vshrl.u32 %v1008, 16
      %v1179 = vrot.slane %v1177, 7
      %v1180 = vshll.u32 %v1008, 16
      %v1182 = vor.u32 %v1179, %v1180
      %v1183 = vsel %vm1091, %v1175, %v1182
      %v1185 = vshrl.u32 %v1009, 16
      %v1187 = vrot.slane %v1185, 7
      %v1188 = vshll.u32 %v1009, 16
      %v1190 = vor.u32 %v1187, %v1188
      %v1191 = vsel %vm1091, %v1179, %v1190
      %v1193 = vshrl.u32 %v1010, 16
      %v1195 = vrot.slane %v1193, 7
      %v1197 = vshrl.u32 %v1011, 16
      %v1199 = vrot.slane %v1197, 7
      %v1200 = vshll.u32 %v1011, 16
      %v1202 = vor.u32 %v1199, %v1200
      %v1203 = vsel %vm1091, %v1195, %v1202
      %v1205 = vshrl.u32 %v1012, 16
      %v1207 = vrot.slane %v1205, 7
      %v1208 = vshll.u32 %v1012, 16
      %v1210 = vor.u32 %v1207, %v1208
      %v1211 = vsel %vm1091, %v1199, %v1210
      %v1213 = vshrl.u32 %v1013, 16
      %v1215 = vrot.slane %v1213, 7
      %v1217 = vshrl.u32 %v1014, 16
      %v1219 = vrot.slane %v1217, 7
      %v1220 = vshll.u32 %v1014, 16
      %v1222 = vor.u32 %v1219, %v1220
      %v1223 = vsel %vm1091, %v1215, %v1222
      %v1225 = vshrl.u32 %v1015, 16
      %v1227 = vrot.slane %v1225, 7
      %v1228 = vshll.u32 %v1015, 16
      %v1230 = vor.u32 %v1227, %v1228
      %v1231 = vsel %vm1091, %v1219, %v1230
      %v1233 = vshrl.u32 %v1016, 16
      %v1235 = vrot.slane %v1233, 7
      %v1237 = vshrl.u32 %v1017, 16
      %v1239 = vrot.slane %v1237, 7
      %v1240 = vshll.u32 %v1017, 16
      %v1242 = vor.u32 %v1239, %v1240
      %v1243 = vsel %vm1091, %v1235, %v1242
      %v1245 = vshrl.u32 %v1018, 16
      %v1247 = vrot.slane %v1245, 7
      %v1248 = vshll.u32 %v1018, 16
      %v1250 = vor.u32 %v1247, %v1248
      %v1251 = vsel %vm1091, %v1239, %v1250
      %v1253 = vshrl.u32 %v1019, 16
      %v1255 = vrot.slane %v1253, 7
      %v1257 = vshrl.u32 %v1020, 16
      %v1259 = vrot.slane %v1257, 7
      %v1260 = vshll.u32 %v1020, 16
      %v1262 = vor.u32 %v1259, %v1260
      %v1263 = vsel %vm1091, %v1255, %v1262
      %v1265 = vshrl.u32 %v1021, 16
      %v1267 = vrot.slane %v1265, 7
      %v1268 = vshll.u32 %v1021, 16
      %v1270 = vor.u32 %v1267, %v1268
      %v1271 = vsel %vm1091, %v1259, %v1270
      %v1273 = vshrl.u32 %v1022, 16
      %v1275 = vrot.slane %v1273, 7
      %v1277 = vshrl.u32 %v1023, 16
      %v1279 = vrot.slane %v1277, 7
      %v1280 = vshll.u32 %v1023, 16
      %v1282 = vor.u32 %v1279, %v1280
      %v1283 = vsel %vm1091, %v1275, %v1282
      %v1285 = vshrl.u32 %v1024, 16
      %v1287 = vrot.slane %v1285, 7
      %v1288 = vshll.u32 %v1024, 16
      %v1290 = vor.u32 %v1287, %v1288
      %v1291 = vsel %vm1091, %v1279, %v1290
      %v1293 = vshrl.u32 %v1025, 16
      %v1295 = vrot.slane %v1293, 7
      %v1297 = vshrl.u32 %v1026, 16
      %v1299 = vrot.slane %v1297, 7
      %v1300 = vshll.u32 %v1026, 16
      %v1302 = vor.u32 %v1299, %v1300
      %v1303 = vsel %vm1091, %v1295, %v1302
      %v1305 = vshrl.u32 %v1027, 16
      %v1307 = vrot.slane %v1305, 7
      %v1308 = vshll.u32 %v1027, 16
      %v1310 = vor.u32 %v1307, %v1308
      %v1311 = vsel %vm1091, %v1299, %v1310
      %v1313 = vshrl.u32 %v1028, 16
      %v1315 = vrot.slane %v1313, 7
      %v1317 = vshrl.u32 %v1029, 16
      %v1319 = vrot.slane %v1317, 7
      %v1320 = vshll.u32 %v1029, 16
      %v1322 = vor.u32 %v1319, %v1320
      %v1323 = vsel %vm1091, %v1315, %v1322
      %v1325 = vshrl.u32 %v1030, 16
      %v1327 = vrot.slane %v1325, 7
      %v1328 = vshll.u32 %v1030, 16
      %v1330 = vor.u32 %v1327, %v1328
      %v1331 = vsel %vm1091, %v1319, %v1330
      %v1333 = vshrl.u32 %v1031, 16
      %v1335 = vrot.slane %v1333, 7
      %v1337 = vshrl.u32 %v1032, 16
      %v1339 = vrot.slane %v1337, 7
      %v1340 = vshll.u32 %v1032, 16
      %v1342 = vor.u32 %v1339, %v1340
      %v1343 = vsel %vm1091, %v1335, %v1342
      %v1345 = vshrl.u32 %v1033, 16
      %v1347 = vrot.slane %v1345, 7
      %v1348 = vshll.u32 %v1033, 16
      %v1350 = vor.u32 %v1347, %v1348
      %v1351 = vsel %vm1091, %v1339, %v1350
      %v1353 = vshrl.u32 %v1034, 16
      %v1355 = vrot.slane %v1353, 7
      %v1357 = vshrl.u32 %v1035, 16
      %v1359 = vrot.slane %v1357, 7
      %v1360 = vshll.u32 %v1035, 16
      %v1362 = vor.u32 %v1359, %v1360
      %v1363 = vsel %vm1091, %v1355, %v1362
      %v1365 = vshrl.u32 %v1036, 16
      %v1367 = vrot.slane %v1365, 7
      %v1368 = vshll.u32 %v1036, 16
      %v1370 = vor.u32 %v1367, %v1368
      %v1371 = vsel %vm1091, %v1359, %v1370
      %v1373 = vshrl.u32 %v1037, 16
      %v1375 = vrot.slane %v1373, 7
      %v1377 = vshrl.u32 %v1038, 16
      %v1379 = vrot.slane %v1377, 7
      %v1380 = vshll.u32 %v1038, 16
      %v1382 = vor.u32 %v1379, %v1380
      %v1383 = vsel %vm1091, %v1375, %v1382
      %v1385 = vshrl.u32 %v1039, 16
      %v1387 = vrot.slane %v1385, 7
      %v1388 = vshll.u32 %v1039, 16
      %v1390 = vor.u32 %v1387, %v1388
      %v1391 = vsel %vm1091, %v1379, %v1390
      %v1393 = vshrl.u32 %v1040, 16
      %v1395 = vrot.slane %v1393, 7
      %v1397 = vshrl.u32 %v1041, 16
      %v1399 = vrot.slane %v1397, 7
      %v1400 = vshll.u32 %v1041, 16
      %v1402 = vor.u32 %v1399, %v1400
      %v1403 = vsel %vm1091, %v1395, %v1402
      %v1405 = vshrl.u32 %v1042, 16
      %v1407 = vrot.slane %v1405, 7
      %v1408 = vshll.u32 %v1042, 16
      %v1410 = vor.u32 %v1407, %v1408
      %v1411 = vsel %vm1091, %v1399, %v1410
      %v1413 = vshrl.u32 %v1043, 16
      %v1415 = vrot.slane %v1413, 7
      %v1417 = vshrl.u32 %v1044, 16
      %v1419 = vrot.slane %v1417, 7
      %v1420 = vshll.u32 %v1044, 16
      %v1422 = vor.u32 %v1419, %v1420
      %v1423 = vsel %vm1091, %v1415, %v1422
      %v1425 = vshrl.u32 %v1045, 16
      %v1427 = vrot.slane %v1425, 7
      %v1428 = vshll.u32 %v1045, 16
      %v1430 = vor.u32 %v1427, %v1428
      %v1431 = vsel %vm1091, %v1419, %v1430
      %v1433 = vshrl.u32 %v1046, 16
      %v1435 = vrot.slane %v1433, 7
      %v1437 = vshrl.u32 %v1047, 16
      %v1439 = vrot.slane %v1437, 7
      %v1440 = vshll.u32 %v1047, 16
      %v1442 = vor.u32 %v1439, %v1440
      %v1443 = vsel %vm1091, %v1435, %v1442
      %v1445 = vshrl.u32 %v1048, 16
      %v1447 = vrot.slane %v1445, 7
      %v1448 = vshll.u32 %v1048, 16
      %v1450 = vor.u32 %v1447, %v1448
      %v1451 = vsel %vm1091, %v1439, %v1450
      %v1453 = vshrl.u32 %v1049, 16
      %v1455 = vrot.slane %v1453, 7
      %v1457 = vshrl.u32 %v1050, 16
      %v1459 = vrot.slane %v1457, 7
      %v1460 = vshll.u32 %v1050, 16
      %v1462 = vor.u32 %v1459, %v1460
      %v1463 = vsel %vm1091, %v1455, %v1462
      %v1465 = vshrl.u32 %v1051, 16
      %v1467 = vrot.slane %v1465, 7
      %v1468 = vshll.u32 %v1051, 16
      %v1470 = vor.u32 %v1467, %v1468
      %v1471 = vsel %vm1091, %v1459, %v1470
      %v1473 = vshrl.u32 %v1052, 16
      %v1475 = vrot.slane %v1473, 7
      %v1477 = vshrl.u32 %v1053, 16
      %v1479 = vrot.slane %v1477, 7
      %v1480 = vshll.u32 %v1053, 16
      %v1482 = vor.u32 %v1479, %v1480
      %v1483 = vsel %vm1091, %v1475, %v1482
      %v1485 = vshrl.u32 %v1054, 16
      %v1487 = vrot.slane %v1485, 7
      %v1488 = vshll.u32 %v1054, 16
      %v1490 = vor.u32 %v1487, %v1488
      %v1491 = vsel %vm1091, %v1479, %v1490
      %v1493 = vshrl.u32 %v1055, 16
      %v1495 = vrot.slane %v1493, 7
      %v1497 = vshrl.u32 %v1056, 16
      %v1499 = vrot.slane %v1497, 7
      %v1500 = vshll.u32 %v1056, 16
      %v1502 = vor.u32 %v1499, %v1500
      %v1503 = vsel %vm1091, %v1495, %v1502
      %v1505 = vshrl.u32 %v1057, 16
      %v1507 = vrot.slane %v1505, 7
      %v1508 = vshll.u32 %v1057, 16
      %v1510 = vor.u32 %v1507, %v1508
      %v1511 = vsel %vm1091, %v1499, %v1510
      %v1513 = vshrl.u32 %v1058, 16
      %v1515 = vrot.slane %v1513, 7
      %v1517 = vshrl.u32 %v1059, 16
      %v1519 = vrot.slane %v1517, 7
      %v1520 = vshll.u32 %v1059, 16
      %v1522 = vor.u32 %v1519, %v1520
      %v1523 = vsel %vm1091, %v1515, %v1522
      %v1525 = vshrl.u32 %v1060, 16
      %v1527 = vrot.slane %v1525, 7
      %v1528 = vshll.u32 %v1060, 16
      %v1530 = vor.u32 %v1527, %v1528
      %v1531 = vsel %vm1091, %v1519, %v1530
      %v1533 = vshrl.u32 %v1061, 16
      %v1535 = vrot.slane %v1533, 7
      %v1537 = vshrl.u32 %v1062, 16
      %v1539 = vrot.slane %v1537, 7
      %v1540 = vshll.u32 %v1062, 16
      %v1542 = vor.u32 %v1539, %v1540
      %v1543 = vsel %vm1091, %v1535, %v1542
      %v1545 = vshrl.u32 %v1063, 16
      %v1547 = vrot.slane %v1545, 7
      %v1548 = vshll.u32 %v1063, 16
      %v1550 = vor.u32 %v1547, %v1548
      %v1551 = vsel %vm1091, %v1539, %v1550
      %v1553 = vshrl.u32 %v1064, 16
      %v1555 = vrot.slane %v1553, 7
      %v1557 = vshrl.u32 %v1065, 16
      %v1559 = vrot.slane %v1557, 7
      %v1560 = vshll.u32 %v1065, 16
      %v1562 = vor.u32 %v1559, %v1560
      %v1563 = vsel %vm1091, %v1555, %v1562
      %v1565 = vshrl.u32 %v1066, 16
      %v1567 = vrot.slane %v1565, 7
      %v1568 = vshll.u32 %v1066, 16
      %v1570 = vor.u32 %v1567, %v1568
      %v1571 = vsel %vm1091, %v1559, %v1570
      %v1573 = vshrl.u32 %v1067, 16
      %v1575 = vrot.slane %v1573, 7
      %v1577 = vshrl.u32 %v1068, 16
      %v1579 = vrot.slane %v1577, 7
      %v1580 = vshll.u32 %v1068, 16
      %v1582 = vor.u32 %v1579, %v1580
      %v1583 = vsel %vm1091, %v1575, %v1582
      %v1585 = vshrl.u32 %v1069, 16
      %v1587 = vrot.slane %v1585, 7
      %v1588 = vshll.u32 %v1069, 16
      %v1590 = vor.u32 %v1587, %v1588
      %v1591 = vsel %vm1091, %v1579, %v1590
      %v1593 = vshrl.u32 %v1070, 16
      %v1595 = vrot.slane %v1593, 7
      %v1597 = vshrl.u32 %v1071, 16
      %v1599 = vrot.slane %v1597, 7
      %v1600 = vshll.u32 %v1071, 16
      %v1602 = vor.u32 %v1599, %v1600
      %v1603 = vsel %vm1091, %v1595, %v1602
      %v1605 = vshrl.u32 %v1072, 16
      %v1607 = vrot.slane %v1605, 7
      %v1608 = vshll.u32 %v1072, 16
      %v1610 = vor.u32 %v1607, %v1608
      %v1611 = vsel %vm1091, %v1599, %v1610
      %v1613 = vshrl.u32 %v1073, 16
      %v1615 = vrot.slane %v1613, 7
      %v1617 = vshrl.u32 %v1074, 16
      %v1619 = vrot.slane %v1617, 7
      %v1620 = vshll.u32 %v1074, 16
      %v1622 = vor.u32 %v1619, %v1620
      %v1623 = vsel %vm1091, %v1615, %v1622
      %v1625 = vshrl.u32 %v1075, 16
      %v1627 = vrot.slane %v1625, 7
      %v1628 = vshll.u32 %v1075, 16
      %v1630 = vor.u32 %v1627, %v1628
      %v1631 = vsel %vm1091, %v1619, %v1630
      %v1633 = vshrl.u32 %v1076, 16
      %v1635 = vrot.slane %v1633, 7
      %v1637 = vshrl.u32 %v1077, 16
      %v1639 = vrot.slane %v1637, 7
      %v1640 = vshll.u32 %v1077, 16
      %v1642 = vor.u32 %v1639, %v1640
      %v1643 = vsel %vm1091, %v1635, %v1642
      %v1645 = vshrl.u32 %v1078, 16
      %v1647 = vrot.slane %v1645, 7
      %v1648 = vshll.u32 %v1078, 16
      %v1650 = vor.u32 %v1647, %v1648
      %v1651 = vsel %vm1091, %v1639, %v1650
      %v1653 = vshrl.u32 %v1079, 16
      %v1655 = vrot.slane %v1653, 7
      %v1657 = vshrl.u32 %v1080, 16
      %v1659 = vrot.slane %v1657, 7
      %v1660 = vshll.u32 %v1080, 16
      %v1662 = vor.u32 %v1659, %v1660
      %v1663 = vsel %vm1091, %v1655, %v1662
      %v1665 = vshrl.u32 %v1081, 16
      %v1667 = vrot.slane %v1665, 7
      %v1668 = vshll.u32 %v1081, 16
      %v1670 = vor.u32 %v1667, %v1668
      %v1671 = vsel %vm1091, %v1659, %v1670
      %v1673 = vshrl.u32 %v1082, 16
      %v1675 = vrot.slane %v1673, 7
      %v1677 = vshrl.u32 %v1083, 16
      %v1679 = vrot.slane %v1677, 7
      %v1680 = vshll.u32 %v1083, 16
      %v1682 = vor.u32 %v1679, %v1680
      %v1683 = vsel %vm1091, %v1675, %v1682
      %v1685 = vshrl.u32 %v1084, 16
      %v1687 = vrot.slane %v1685, 7
      %v1688 = vshll.u32 %v1084, 16
      %v1690 = vor.u32 %v1687, %v1688
      %v1691 = vsel %vm1091, %v1679, %v1690
      %v1693 = vshrl.u32 %v1085, 16
      %v1695 = vrot.slane %v1693, 7
      %v1697 = vshrl.u32 %v1086, 16
      %v1699 = vrot.slane %v1697, 7
      %v1700 = vshll.u32 %v1086, 16
      %v1702 = vor.u32 %v1699, %v1700
      %v1703 = vsel %vm1091, %v1695, %v1702
      %v1705 = vshrl.u32 %v1087, 16
      %v1707 = vrot.slane %v1705, 7
      %v1708 = vshll.u32 %v1087, 16
      %v1710 = vor.u32 %v1707, %v1708
      %v1711 = vsel %vm1091, %v1699, %v1710
      %v1713 = vshrl.u32 %v1088, 16
      %v1715 = vrot.slane %v1713, 7
      %v1717 = vshrl.u32 %v1089, 16
      %v1719 = vrot.slane %v1717, 7
      %v1720 = vshll.u32 %v1089, 16
      %v1722 = vor.u32 %v1719, %v1720
      %v1723 = vsel %vm1091, %v1715, %v1722
      %v1725 = vshrl.u32 %v1090, 16
      %v1727 = vrot.slane %v1725, 7
      %v1728 = vshll.u32 %v1090, 16
      %v1730 = vor.u32 %v1727, %v1728
      %v1731 = vsel %vm1091, %v1719, %v1730
      %v1732 = vld [vmem:[#allocation2 + $0x18] sm:$0x1]
      %v1733 = vld [vmem:[#allocation2 + $0x38] sm:$0x1]
      %v1734 = vld [vmem:[#allocation2 + $0x58] sm:$0x1]
      %v1735 = vld [vmem:[#allocation2 + $0x78] sm:$0x1]
      %v1736 = vld [vmem:[#allocation2 + $0x98] sm:$0x1]
      %v1737 = vld [vmem:[#allocation2 + $0xb8] sm:$0x1]
      %v1738 = vld [vmem:[#allocation2 + $0xd8] sm:$0x1]
      %v1739 = vld [vmem:[#allocation2 + $0xf8] sm:$0x1]
      %v1740 = vld [vmem:[#allocation2 + $0x118] sm:$0x1]
      %v1741 = vld [vmem:[#allocation2 + $0x138] sm:$0x1]
      %v1742 = vld [vmem:[#allocation2 + $0x158] sm:$0x1]
      %v1743 = vld [vmem:[#allocation2 + $0x178] sm:$0x1]
      %v1744 = vld [vmem:[#allocation2 + $0x198] sm:$0x1]
      %v1745 = vld [vmem:[#allocation2 + $0x1b8] sm:$0x1]
      %v1746 = vld [vmem:[#allocation2 + $0x1d8] sm:$0x1]
      %v1747 = vld [vmem:[#allocation2 + $0x1f8] sm:$0x1]
      %v1748 = vld [vmem:[#allocation2 + $0x218] sm:$0x1]
      %v1749 = vld [vmem:[#allocation2 + $0x238] sm:$0x1]
      %v1750 = vld [vmem:[#allocation2 + $0x258] sm:$0x1]
      %v1751 = vld [vmem:[#allocation2 + $0x278] sm:$0x1]
      %v1752 = vld [vmem:[#allocation2 + $0x298] sm:$0x1]
      %v1753 = vld [vmem:[#allocation2 + $0x2b8] sm:$0x1]
      %v1754 = vld [vmem:[#allocation2 + $0x2d8] sm:$0x1]
      %v1755 = vld [vmem:[#allocation2 + $0x2f8] sm:$0x1]
      %v1756 = vld [vmem:[#allocation2 + $0x318] sm:$0x1]
      %v1757 = vld [vmem:[#allocation2 + $0x338] sm:$0x1]
      %v1758 = vld [vmem:[#allocation2 + $0x358] sm:$0x1]
      %v1759 = vld [vmem:[#allocation2 + $0x378] sm:$0x1]
      %v1760 = vld [vmem:[#allocation2 + $0x398] sm:$0x1]
      %v1761 = vld [vmem:[#allocation2 + $0x3b8] sm:$0x1]
      %v1762 = vld [vmem:[#allocation2 + $0x3d8] sm:$0x1]
      %v1763 = vld [vmem:[#allocation2 + $0x3f8] sm:$0x1]
      %vm1764 = vsmask.f32 7424
      %v1765 = vrot.slane %v1100, 1
      %v1766 = vor.u32 %v1097, %v1765
      %v1767 = vrot.slane %v1108, 1
      %v1768 = vsel %vm1764, %v1766, %v1767
      %v1769 = vor.u32 %v1105, %v1767
      %v1771 = vshll.u32 %v1732, 16
      %v1773 = vrot.slane %v1771, 1
      %v1774 = vsel %vm1764, %v1769, %v1773
      %v1775 = vrot.slane %v1120, 1
      %v1776 = vor.u32 %v1117, %v1775
      %v1777 = vrot.slane %v1128, 1
      %v1778 = vsel %vm1764, %v1776, %v1777
      %v1779 = vor.u32 %v1125, %v1777
      %v1781 = vshll.u32 %v1733, 16
      %v1783 = vrot.slane %v1781, 1
      %v1784 = vsel %vm1764, %v1779, %v1783
      %v1785 = vrot.slane %v1140, 1
      %v1786 = vor.u32 %v1137, %v1785
      %v1787 = vrot.slane %v1148, 1
      %v1788 = vsel %vm1764, %v1786, %v1787
      %v1789 = vor.u32 %v1145, %v1787
      %v1791 = vshll.u32 %v1734, 16
      %v1793 = vrot.slane %v1791, 1
      %v1794 = vsel %vm1764, %v1789, %v1793
      %v1795 = vrot.slane %v1160, 1
      %v1796 = vor.u32 %v1157, %v1795
      %v1797 = vrot.slane %v1168, 1
      %v1798 = vsel %vm1764, %v1796, %v1797
      %v1799 = vor.u32 %v1165, %v1797
      %v1801 = vshll.u32 %v1735, 16
      %v1803 = vrot.slane %v1801, 1
      %v1804 = vsel %vm1764, %v1799, %v1803
      %v1805 = vrot.slane %v1180, 1
      %v1806 = vor.u32 %v1177, %v1805
      %v1807 = vrot.slane %v1188, 1
      %v1808 = vsel %vm1764, %v1806, %v1807
      %v1809 = vor.u32 %v1185, %v1807
      %v1811 = vshll.u32 %v1736, 16
      %v1813 = vrot.slane %v1811, 1
      %v1814 = vsel %vm1764, %v1809, %v1813
      %v1815 = vrot.slane %v1200, 1
      %v1816 = vor.u32 %v1197, %v1815
      %v1817 = vrot.slane %v1208, 1
      %v1818 = vsel %vm1764, %v1816, %v1817
      %v1819 = vor.u32 %v1205, %v1817
      %v1821 = vshll.u32 %v1737, 16
      %v1823 = vrot.slane %v1821, 1
      %v1824 = vsel %vm1764, %v1819, %v1823
      %v1825 = vrot.slane %v1220, 1
      %v1826 = vor.u32 %v1217, %v1825
      %v1827 = vrot.slane %v1228, 1
      %v1828 = vsel %vm1764, %v1826, %v1827
      %v1829 = vor.u32 %v1225, %v1827
      %v1831 = vshll.u32 %v1738, 16
      %v1833 = vrot.slane %v1831, 1
      %v1834 = vsel %vm1764, %v1829, %v1833
      %v1835 = vrot.slane %v1240, 1
      %v1836 = vor.u32 %v1237, %v1835
      %v1837 = vrot.slane %v1248, 1
      %v1838 = vsel %vm1764, %v1836, %v1837
      %v1839 = vor.u32 %v1245, %v1837
      %v1841 = vshll.u32 %v1739, 16
      %v1843 = vrot.slane %v1841, 1
      %v1844 = vsel %vm1764, %v1839, %v1843
      %v1845 = vrot.slane %v1260, 1
      %v1846 = vor.u32 %v1257, %v1845
      %v1847 = vrot.slane %v1268, 1
      %v1848 = vsel %vm1764, %v1846, %v1847
      %v1849 = vor.u32 %v1265, %v1847
      %v1851 = vshll.u32 %v1740, 16
      %v1853 = vrot.slane %v1851, 1
      %v1854 = vsel %vm1764, %v1849, %v1853
      %v1855 = vrot.slane %v1280, 1
      %v1856 = vor.u32 %v1277, %v1855
      %v1857 = vrot.slane %v1288, 1
      %v1858 = vsel %vm1764, %v1856, %v1857
      %v1859 = vor.u32 %v1285, %v1857
      %v1861 = vshll.u32 %v1741, 16
      %v1863 = vrot.slane %v1861, 1
      %v1864 = vsel %vm1764, %v1859, %v1863
      %v1865 = vrot.slane %v1300, 1
      %v1866 = vor.u32 %v1297, %v1865
      %v1867 = vrot.slane %v1308, 1
      %v1868 = vsel %vm1764, %v1866, %v1867
      %v1869 = vor.u32 %v1305, %v1867
      %v1871 = vshll.u32 %v1742, 16
      %v1873 = vrot.slane %v1871, 1
      %v1874 = vsel %vm1764, %v1869, %v1873
      %v1875 = vrot.slane %v1320, 1
      %v1876 = vor.u32 %v1317, %v1875
      %v1877 = vrot.slane %v1328, 1
      %v1878 = vsel %vm1764, %v1876, %v1877
      %v1879 = vor.u32 %v1325, %v1877
      %v1881 = vshll.u32 %v1743, 16
      %v1883 = vrot.slane %v1881, 1
      %v1884 = vsel %vm1764, %v1879, %v1883
      %v1885 = vrot.slane %v1340, 1
      %v1886 = vor.u32 %v1337, %v1885
      %v1887 = vrot.slane %v1348, 1
      %v1888 = vsel %vm1764, %v1886, %v1887
      %v1889 = vor.u32 %v1345, %v1887
      %v1891 = vshll.u32 %v1744, 16
      %v1893 = vrot.slane %v1891, 1
      %v1894 = vsel %vm1764, %v1889, %v1893
      %v1895 = vrot.slane %v1360, 1
      %v1896 = vor.u32 %v1357, %v1895
      %v1897 = vrot.slane %v1368, 1
      %v1898 = vsel %vm1764, %v1896, %v1897
      %v1899 = vor.u32 %v1365, %v1897
      %v1901 = vshll.u32 %v1745, 16
      %v1903 = vrot.slane %v1901, 1
      %v1904 = vsel %vm1764, %v1899, %v1903
      %v1905 = vrot.slane %v1380, 1
      %v1906 = vor.u32 %v1377, %v1905
      %v1907 = vrot.slane %v1388, 1
      %v1908 = vsel %vm1764, %v1906, %v1907
      %v1909 = vor.u32 %v1385, %v1907
      %v1911 = vshll.u32 %v1746, 16
      %v1913 = vrot.slane %v1911, 1
      %v1914 = vsel %vm1764, %v1909, %v1913
      %v1915 = vrot.slane %v1400, 1
      %v1916 = vor.u32 %v1397, %v1915
      %v1917 = vrot.slane %v1408, 1
      %v1918 = vsel %vm1764, %v1916, %v1917
      %v1919 = vor.u32 %v1405, %v1917
      %v1921 = vshll.u32 %v1747, 16
      %v1923 = vrot.slane %v1921, 1
      %v1924 = vsel %vm1764, %v1919, %v1923
      %v1925 = vrot.slane %v1420, 1
      %v1926 = vor.u32 %v1417, %v1925
      %v1927 = vrot.slane %v1428, 1
      %v1928 = vsel %vm1764, %v1926, %v1927
      %v1929 = vor.u32 %v1425, %v1927
      %v1931 = vshll.u32 %v1748, 16
      %v1933 = vrot.slane %v1931, 1
      %v1934 = vsel %vm1764, %v1929, %v1933
      %v1935 = vrot.slane %v1440, 1
      %v1936 = vor.u32 %v1437, %v1935
      %v1937 = vrot.slane %v1448, 1
      %v1938 = vsel %vm1764, %v1936, %v1937
      %v1939 = vor.u32 %v1445, %v1937
      %v1941 = vshll.u32 %v1749, 16
      %v1943 = vrot.slane %v1941, 1
      %v1944 = vsel %vm1764, %v1939, %v1943
      %v1945 = vrot.slane %v1460, 1
      %v1946 = vor.u32 %v1457, %v1945
      %v1947 = vrot.slane %v1468, 1
      %v1948 = vsel %vm1764, %v1946, %v1947
      %v1949 = vor.u32 %v1465, %v1947
      %v1951 = vshll.u32 %v1750, 16
      %v1953 = vrot.slane %v1951, 1
      %v1954 = vsel %vm1764, %v1949, %v1953
      %v1955 = vrot.slane %v1480, 1
      %v1956 = vor.u32 %v1477, %v1955
      %v1957 = vrot.slane %v1488, 1
      %v1958 = vsel %vm1764, %v1956, %v1957
      %v1959 = vor.u32 %v1485, %v1957
      %v1961 = vshll.u32 %v1751, 16
      %v1963 = vrot.slane %v1961, 1
      %v1964 = vsel %vm1764, %v1959, %v1963
      %v1965 = vrot.slane %v1500, 1
      %v1966 = vor.u32 %v1497, %v1965
      %v1967 = vrot.slane %v1508, 1
      %v1968 = vsel %vm1764, %v1966, %v1967
      %v1969 = vor.u32 %v1505, %v1967
      %v1971 = vshll.u32 %v1752, 16
      %v1973 = vrot.slane %v1971, 1
      %v1974 = vsel %vm1764, %v1969, %v1973
      %v1975 = vrot.slane %v1520, 1
      %v1976 = vor.u32 %v1517, %v1975
      %v1977 = vrot.slane %v1528, 1
      %v1978 = vsel %vm1764, %v1976, %v1977
      %v1979 = vor.u32 %v1525, %v1977
      %v1981 = vshll.u32 %v1753, 16
      %v1983 = vrot.slane %v1981, 1
      %v1984 = vsel %vm1764, %v1979, %v1983
      %v1985 = vrot.slane %v1540, 1
      %v1986 = vor.u32 %v1537, %v1985
      %v1987 = vrot.slane %v1548, 1
      %v1988 = vsel %vm1764, %v1986, %v1987
      %v1989 = vor.u32 %v1545, %v1987
      %v1991 = vshll.u32 %v1754, 16
      %v1993 = vrot.slane %v1991, 1
      %v1994 = vsel %vm1764, %v1989, %v1993
      %v1995 = vrot.slane %v1560, 1
      %v1996 = vor.u32 %v1557, %v1995
      %v1997 = vrot.slane %v1568, 1
      %v1998 = vsel %vm1764, %v1996, %v1997
      %v1999 = vor.u32 %v1565, %v1997
      %v2001 = vshll.u32 %v1755, 16
      %v2003 = vrot.slane %v2001, 1
      %v2004 = vsel %vm1764, %v1999, %v2003
      %v2005 = vrot.slane %v1580, 1
      %v2006 = vor.u32 %v1577, %v2005
      %v2007 = vrot.slane %v1588, 1
      %v2008 = vsel %vm1764, %v2006, %v2007
      %v2009 = vor.u32 %v1585, %v2007
      %v2011 = vshll.u32 %v1756, 16
      %v2013 = vrot.slane %v2011, 1
      %v2014 = vsel %vm1764, %v2009, %v2013
      %v2015 = vrot.slane %v1600, 1
      %v2016 = vor.u32 %v1597, %v2015
      %v2017 = vrot.slane %v1608, 1
      %v2018 = vsel %vm1764, %v2016, %v2017
      %v2019 = vor.u32 %v1605, %v2017
      %v2021 = vshll.u32 %v1757, 16
      %v2023 = vrot.slane %v2021, 1
      %v2024 = vsel %vm1764, %v2019, %v2023
      %v2025 = vrot.slane %v1620, 1
      %v2026 = vor.u32 %v1617, %v2025
      %v2027 = vrot.slane %v1628, 1
      %v2028 = vsel %vm1764, %v2026, %v2027
      %v2029 = vor.u32 %v1625, %v2027
      %v2031 = vshll.u32 %v1758, 16
      %v2033 = vrot.slane %v2031, 1
      %v2034 = vsel %vm1764, %v2029, %v2033
      %v2035 = vrot.slane %v1640, 1
      %v2036 = vor.u32 %v1637, %v2035
      %v2037 = vrot.slane %v1648, 1
      %v2038 = vsel %vm1764, %v2036, %v2037
      %v2039 = vor.u32 %v1645, %v2037
      %v2041 = vshll.u32 %v1759, 16
      %v2043 = vrot.slane %v2041, 1
      %v2044 = vsel %vm1764, %v2039, %v2043
      %v2045 = vrot.slane %v1660, 1
      %v2046 = vor.u32 %v1657, %v2045
      %v2047 = vrot.slane %v1668, 1
      %v2048 = vsel %vm1764, %v2046, %v2047
      %v2049 = vor.u32 %v1665, %v2047
      %v2051 = vshll.u32 %v1760, 16
      %v2053 = vrot.slane %v2051, 1
      %v2054 = vsel %vm1764, %v2049, %v2053
      %v2055 = vrot.slane %v1680, 1
      %v2056 = vor.u32 %v1677, %v2055
      %v2057 = vrot.slane %v1688, 1
      %v2058 = vsel %vm1764, %v2056, %v2057
      %v2059 = vor.u32 %v1685, %v2057
      %v2061 = vshll.u32 %v1761, 16
      %v2063 = vrot.slane %v2061, 1
      %v2064 = vsel %vm1764, %v2059, %v2063
      %v2065 = vrot.slane %v1700, 1
      %v2066 = vor.u32 %v1697, %v2065
      %v2067 = vrot.slane %v1708, 1
      %v2068 = vsel %vm1764, %v2066, %v2067
      %v2069 = vor.u32 %v1705, %v2067
      %v2071 = vshll.u32 %v1762, 16
      %v2073 = vrot.slane %v2071, 1
      %v2074 = vsel %vm1764, %v2069, %v2073
      %v2075 = vrot.slane %v1720, 1
      %v2076 = vor.u32 %v1717, %v2075
      %v2077 = vrot.slane %v1728, 1
      %v2078 = vsel %vm1764, %v2076, %v2077
      %v2079 = vor.u32 %v1725, %v2077
      %v2081 = vshll.u32 %v1763, 16
      %v2083 = vrot.slane %v2081, 1
      %v2084 = vsel %vm1764, %v2079, %v2083
      %v2085 = vld [vmem:[%s930] sm:$0x80]
      %v2086 = vld [vmem:[%s930 + $0x8] sm:$0xff]
      %v2087 = vld [vmem:[%s930 + $0x10] sm:$0xff]
      %v2088 = vld [vmem:[%s930 + $0x20] sm:$0x80]
      %v2089 = vld [vmem:[%s930 + $0x28] sm:$0xff]
      %v2090 = vld [vmem:[%s930 + $0x30] sm:$0xff]
      %v2091 = vld [vmem:[%s930 + $0x40] sm:$0x80]
      %v2092 = vld [vmem:[%s930 + $0x48] sm:$0xff]
      %v2093 = vld [vmem:[%s930 + $0x50] sm:$0xff]
      %v2094 = vld [vmem:[%s930 + $0x60] sm:$0x80]
      %v2095 = vld [vmem:[%s930 + $0x68] sm:$0xff]
      %v2096 = vld [vmem:[%s930 + $0x70] sm:$0xff]
      %v2097 = vld [vmem:[%s930 + $0x80] sm:$0x80]
      %v2098 = vld [vmem:[%s930 + $0x88] sm:$0xff]
      %v2099 = vld [vmem:[%s930 + $0x90] sm:$0xff]
      %v2100 = vld [vmem:[%s930 + $0xa0] sm:$0x80]
      %v2101 = vld [vmem:[%s930 + $0xa8] sm:$0xff]
      %v2102 = vld [vmem:[%s930 + $0xb0] sm:$0xff]
      %v2103 = vld [vmem:[%s930 + $0xc0] sm:$0x80]
      %v2104 = vld [vmem:[%s930 + $0xc8] sm:$0xff]
      %v2105 = vld [vmem:[%s930 + $0xd0] sm:$0xff]
      %v2106 = vld [vmem:[%s930 + $0xe0] sm:$0x80]
      %v2107 = vld [vmem:[%s930 + $0xe8] sm:$0xff]
      %v2108 = vld [vmem:[%s930 + $0xf0] sm:$0xff]
      %v2109 = vld [vmem:[%s930 + $0x100] sm:$0x80]
      %v2110 = vld [vmem:[%s930 + $0x108] sm:$0xff]
      %v2111 = vld [vmem:[%s930 + $0x110] sm:$0xff]
      %v2112 = vld [vmem:[%s930 + $0x120] sm:$0x80]
      %v2113 = vld [vmem:[%s930 + $0x128] sm:$0xff]
      %v2114 = vld [vmem:[%s930 + $0x130] sm:$0xff]
      %v2115 = vld [vmem:[%s930 + $0x140] sm:$0x80]
      %v2116 = vld [vmem:[%s930 + $0x148] sm:$0xff]
      %v2117 = vld [vmem:[%s930 + $0x150] sm:$0xff]
      %v2118 = vld [vmem:[%s930 + $0x160] sm:$0x80]
      %v2119 = vld [vmem:[%s930 + $0x168] sm:$0xff]
      %v2120 = vld [vmem:[%s930 + $0x170] sm:$0xff]
      %v2121 = vld [vmem:[%s930 + $0x180] sm:$0x80]
      %v2122 = vld [vmem:[%s930 + $0x188] sm:$0xff]
      %v2123 = vld [vmem:[%s930 + $0x190] sm:$0xff]
      %v2124 = vld [vmem:[%s930 + $0x1a0] sm:$0x80]
      %v2125 = vld [vmem:[%s930 + $0x1a8] sm:$0xff]
      %v2126 = vld [vmem:[%s930 + $0x1b0] sm:$0xff]
      %v2127 = vld [vmem:[%s930 + $0x1c0] sm:$0x80]
      %v2128 = vld [vmem:[%s930 + $0x1c8] sm:$0xff]
      %v2129 = vld [vmem:[%s930 + $0x1d0] sm:$0xff]
      %v2130 = vld [vmem:[%s930 + $0x1e0] sm:$0x80]
      %v2131 = vld [vmem:[%s930 + $0x1e8] sm:$0xff]
      %v2132 = vld [vmem:[%s930 + $0x1f0] sm:$0xff]
      %v2133 = vld [vmem:[%s930 + $0x200] sm:$0x80]
      %v2134 = vld [vmem:[%s930 + $0x208] sm:$0xff]
      %v2135 = vld [vmem:[%s930 + $0x210] sm:$0xff]
      %v2136 = vld [vmem:[%s930 + $0x220] sm:$0x80]
      %v2137 = vld [vmem:[%s930 + $0x228] sm:$0xff]
      %v2138 = vld [vmem:[%s930 + $0x230] sm:$0xff]
      %v2139 = vld [vmem:[%s930 + $0x240] sm:$0x80]
      %v2140 = vld [vmem:[%s930 + $0x248] sm:$0xff]
      %v2141 = vld [vmem:[%s930 + $0x250] sm:$0xff]
      %v2142 = vld [vmem:[%s930 + $0x260] sm:$0x80]
      %v2143 = vld [vmem:[%s930 + $0x268] sm:$0xff]
      %v2144 = vld [vmem:[%s930 + $0x270] sm:$0xff]
      %v2145 = vld [vmem:[%s930 + $0x280] sm:$0x80]
      %v2146 = vld [vmem:[%s930 + $0x288] sm:$0xff]
      %v2147 = vld [vmem:[%s930 + $0x290] sm:$0xff]
      %v2148 = vld [vmem:[%s930 + $0x2a0] sm:$0x80]
      %v2149 = vld [vmem:[%s930 + $0x2a8] sm:$0xff]
      %v2150 = vld [vmem:[%s930 + $0x2b0] sm:$0xff]
      %v2151 = vld [vmem:[%s930 + $0x2c0] sm:$0x80]
      %v2152 = vld [vmem:[%s930 + $0x2c8] sm:$0xff]
      %v2153 = vld [vmem:[%s930 + $0x2d0] sm:$0xff]
      %v2154 = vld [vmem:[%s930 + $0x2e0] sm:$0x80]
      %v2155 = vld [vmem:[%s930 + $0x2e8] sm:$0xff]
      %v2156 = vld [vmem:[%s930 + $0x2f0] sm:$0xff]
      %v2157 = vld [vmem:[%s930 + $0x300] sm:$0x80]
      %v2158 = vld [vmem:[%s930 + $0x308] sm:$0xff]
      %v2159 = vld [vmem:[%s930 + $0x310] sm:$0xff]
      %v2160 = vld [vmem:[%s930 + $0x320] sm:$0x80]
      %v2161 = vld [vmem:[%s930 + $0x328] sm:$0xff]
      %v2162 = vld [vmem:[%s930 + $0x330] sm:$0xff]
      %v2163 = vld [vmem:[%s930 + $0x340] sm:$0x80]
      %v2164 = vld [vmem:[%s930 + $0x348] sm:$0xff]
      %v2165 = vld [vmem:[%s930 + $0x350] sm:$0xff]
      %v2166 = vld [vmem:[%s930 + $0x360] sm:$0x80]
      %v2167 = vld [vmem:[%s930 + $0x368] sm:$0xff]
      %v2168 = vld [vmem:[%s930 + $0x370] sm:$0xff]
      %v2169 = vld [vmem:[%s930 + $0x380] sm:$0x80]
      %v2170 = vld [vmem:[%s930 + $0x388] sm:$0xff]
      %v2171 = vld [vmem:[%s930 + $0x390] sm:$0xff]
      %v2172 = vld [vmem:[%s930 + $0x3a0] sm:$0x80]
      %v2173 = vld [vmem:[%s930 + $0x3a8] sm:$0xff]
      %v2174 = vld [vmem:[%s930 + $0x3b0] sm:$0xff]
      %v2175 = vld [vmem:[%s930 + $0x3c0] sm:$0x80]
      %v2176 = vld [vmem:[%s930 + $0x3c8] sm:$0xff]
      %v2177 = vld [vmem:[%s930 + $0x3d0] sm:$0xff]
      %v2178 = vld [vmem:[%s930 + $0x3e0] sm:$0x80]
      %v2179 = vld [vmem:[%s930 + $0x3e8] sm:$0xff]
      %v2180 = vld [vmem:[%s930 + $0x3f0] sm:$0xff]
      %v2182 = vshrl.u32 %v2085, 16
      %v2184 = vrot.slane %v2182, 7
      %v2186 = vshrl.u32 %v2086, 16
      %v2188 = vrot.slane %v2186, 7
      %v2189 = vshll.u32 %v2086, 16
      %v2191 = vor.u32 %v2188, %v2189
      %v2192 = vsel %vm1091, %v2184, %v2191
      %v2194 = vshrl.u32 %v2087, 16
      %v2196 = vrot.slane %v2194, 7
      %v2197 = vshll.u32 %v2087, 16
      %v2199 = vor.u32 %v2196, %v2197
      %v2200 = vsel %vm1091, %v2188, %v2199
      %v2202 = vshrl.u32 %v2088, 16
      %v2204 = vrot.slane %v2202, 7
      %v2206 = vshrl.u32 %v2089, 16
      %v2208 = vrot.slane %v2206, 7
      %v2209 = vshll.u32 %v2089, 16
      %v2211 = vor.u32 %v2208, %v2209
      %v2212 = vsel %vm1091, %v2204, %v2211
      %v2214 = vshrl.u32 %v2090, 16
      %v2216 = vrot.slane %v2214, 7
      %v2217 = vshll.u32 %v2090, 16
      %v2219 = vor.u32 %v2216, %v2217
      %v2220 = vsel %vm1091, %v2208, %v2219
      %v2222 = vshrl.u32 %v2091, 16
      %v2224 = vrot.slane %v2222, 7
      %v2226 = vshrl.u32 %v2092, 16
      %v2228 = vrot.slane %v2226, 7
      %v2229 = vshll.u32 %v2092, 16
      %v2231 = vor.u32 %v2228, %v2229
      %v2232 = vsel %vm1091, %v2224, %v2231
      %v2234 = vshrl.u32 %v2093, 16
      %v2236 = vrot.slane %v2234, 7
      %v2237 = vshll.u32 %v2093, 16
      %v2239 = vor.u32 %v2236, %v2237
      %v2240 = vsel %vm1091, %v2228, %v2239
      %v2242 = vshrl.u32 %v2094, 16
      %v2244 = vrot.slane %v2242, 7
      %v2246 = vshrl.u32 %v2095, 16
      %v2248 = vrot.slane %v2246, 7
      %v2249 = vshll.u32 %v2095, 16
      %v2251 = vor.u32 %v2248, %v2249
      %v2252 = vsel %vm1091, %v2244, %v2251
      %v2254 = vshrl.u32 %v2096, 16
      %v2256 = vrot.slane %v2254, 7
      %v2257 = vshll.u32 %v2096, 16
      %v2259 = vor.u32 %v2256, %v2257
      %v2260 = vsel %vm1091, %v2248, %v2259
      %v2262 = vshrl.u32 %v2097, 16
      %v2264 = vrot.slane %v2262, 7
      %v2266 = vshrl.u32 %v2098, 16
      %v2268 = vrot.slane %v2266, 7
      %v2269 = vshll.u32 %v2098, 16
      %v2271 = vor.u32 %v2268, %v2269
      %v2272 = vsel %vm1091, %v2264, %v2271
      %v2274 = vshrl.u32 %v2099, 16
      %v2276 = vrot.slane %v2274, 7
      %v2277 = vshll.u32 %v2099, 16
      %v2279 = vor.u32 %v2276, %v2277
      %v2280 = vsel %vm1091, %v2268, %v2279
      %v2282 = vshrl.u32 %v2100, 16
      %v2284 = vrot.slane %v2282, 7
      %v2286 = vshrl.u32 %v2101, 16
      %v2288 = vrot.slane %v2286, 7
      %v2289 = vshll.u32 %v2101, 16
      %v2291 = vor.u32 %v2288, %v2289
      %v2292 = vsel %vm1091, %v2284, %v2291
      %v2294 = vshrl.u32 %v2102, 16
      %v2296 = vrot.slane %v2294, 7
      %v2297 = vshll.u32 %v2102, 16
      %v2299 = vor.u32 %v2296, %v2297
      %v2300 = vsel %vm1091, %v2288, %v2299
      %v2302 = vshrl.u32 %v2103, 16
      %v2304 = vrot.slane %v2302, 7
      %v2306 = vshrl.u32 %v2104, 16
      %v2308 = vrot.slane %v2306, 7
      %v2309 = vshll.u32 %v2104, 16
      %v2311 = vor.u32 %v2308, %v2309
      %v2312 = vsel %vm1091, %v2304, %v2311
      %v2314 = vshrl.u32 %v2105, 16
      %v2316 = vrot.slane %v2314, 7
      %v2317 = vshll.u32 %v2105, 16
      %v2319 = vor.u32 %v2316, %v2317
      %v2320 = vsel %vm1091, %v2308, %v2319
      %v2322 = vshrl.u32 %v2106, 16
      %v2324 = vrot.slane %v2322, 7
      %v2326 = vshrl.u32 %v2107, 16
      %v2328 = vrot.slane %v2326, 7
      %v2329 = vshll.u32 %v2107, 16
      %v2331 = vor.u32 %v2328, %v2329
      %v2332 = vsel %vm1091, %v2324, %v2331
      %v2334 = vshrl.u32 %v2108, 16
      %v2336 = vrot.slane %v2334, 7
      %v2337 = vshll.u32 %v2108, 16
      %v2339 = vor.u32 %v2336, %v2337
      %v2340 = vsel %vm1091, %v2328, %v2339
      %v2342 = vshrl.u32 %v2109, 16
      %v2344 = vrot.slane %v2342, 7
      %v2346 = vshrl.u32 %v2110, 16
      %v2348 = vrot.slane %v2346, 7
      %v2349 = vshll.u32 %v2110, 16
      %v2351 = vor.u32 %v2348, %v2349
      %v2352 = vsel %vm1091, %v2344, %v2351
      %v2354 = vshrl.u32 %v2111, 16
      %v2356 = vrot.slane %v2354, 7
      %v2357 = vshll.u32 %v2111, 16
      %v2359 = vor.u32 %v2356, %v2357
      %v2360 = vsel %vm1091, %v2348, %v2359
      %v2362 = vshrl.u32 %v2112, 16
      %v2364 = vrot.slane %v2362, 7
      %v2366 = vshrl.u32 %v2113, 16
      %v2368 = vrot.slane %v2366, 7
      %v2369 = vshll.u32 %v2113, 16
      %v2371 = vor.u32 %v2368, %v2369
      %v2372 = vsel %vm1091, %v2364, %v2371
      %v2374 = vshrl.u32 %v2114, 16
      %v2376 = vrot.slane %v2374, 7
      %v2377 = vshll.u32 %v2114, 16
      %v2379 = vor.u32 %v2376, %v2377
      %v2380 = vsel %vm1091, %v2368, %v2379
      %v2382 = vshrl.u32 %v2115, 16
      %v2384 = vrot.slane %v2382, 7
      %v2386 = vshrl.u32 %v2116, 16
      %v2388 = vrot.slane %v2386, 7
      %v2389 = vshll.u32 %v2116, 16
      %v2391 = vor.u32 %v2388, %v2389
      %v2392 = vsel %vm1091, %v2384, %v2391
      %v2394 = vshrl.u32 %v2117, 16
      %v2396 = vrot.slane %v2394, 7
      %v2397 = vshll.u32 %v2117, 16
      %v2399 = vor.u32 %v2396, %v2397
      %v2400 = vsel %vm1091, %v2388, %v2399
      %v2402 = vshrl.u32 %v2118, 16
      %v2404 = vrot.slane %v2402, 7
      %v2406 = vshrl.u32 %v2119, 16
      %v2408 = vrot.slane %v2406, 7
      %v2409 = vshll.u32 %v2119, 16
      %v2411 = vor.u32 %v2408, %v2409
      %v2412 = vsel %vm1091, %v2404, %v2411
      %v2414 = vshrl.u32 %v2120, 16
      %v2416 = vrot.slane %v2414, 7
      %v2417 = vshll.u32 %v2120, 16
      %v2419 = vor.u32 %v2416, %v2417
      %v2420 = vsel %vm1091, %v2408, %v2419
      %v2422 = vshrl.u32 %v2121, 16
      %v2424 = vrot.slane %v2422, 7
      %v2426 = vshrl.u32 %v2122, 16
      %v2428 = vrot.slane %v2426, 7
      %v2429 = vshll.u32 %v2122, 16
      %v2431 = vor.u32 %v2428, %v2429
      %v2432 = vsel %vm1091, %v2424, %v2431
      %v2434 = vshrl.u32 %v2123, 16
      %v2436 = vrot.slane %v2434, 7
      %v2437 = vshll.u32 %v2123, 16
      %v2439 = vor.u32 %v2436, %v2437
      %v2440 = vsel %vm1091, %v2428, %v2439
      %v2442 = vshrl.u32 %v2124, 16
      %v2444 = vrot.slane %v2442, 7
      %v2446 = vshrl.u32 %v2125, 16
      %v2448 = vrot.slane %v2446, 7
      %v2449 = vshll.u32 %v2125, 16
      %v2451 = vor.u32 %v2448, %v2449
      %v2452 = vsel %vm1091, %v2444, %v2451
      %v2454 = vshrl.u32 %v2126, 16
      %v2456 = vrot.slane %v2454, 7
      %v2457 = vshll.u32 %v2126, 16
      %v2459 = vor.u32 %v2456, %v2457
      %v2460 = vsel %vm1091, %v2448, %v2459
      %v2462 = vshrl.u32 %v2127, 16
      %v2464 = vrot.slane %v2462, 7
      %v2466 = vshrl.u32 %v2128, 16
      %v2468 = vrot.slane %v2466, 7
      %v2469 = vshll.u32 %v2128, 16
      %v2471 = vor.u32 %v2468, %v2469
      %v2472 = vsel %vm1091, %v2464, %v2471
      %v2474 = vshrl.u32 %v2129, 16
      %v2476 = vrot.slane %v2474, 7
      %v2477 = vshll.u32 %v2129, 16
      %v2479 = vor.u32 %v2476, %v2477
      %v2480 = vsel %vm1091, %v2468, %v2479
      %v2482 = vshrl.u32 %v2130, 16
      %v2484 = vrot.slane %v2482, 7
      %v2486 = vshrl.u32 %v2131, 16
      %v2488 = vrot.slane %v2486, 7
      %v2489 = vshll.u32 %v2131, 16
      %v2491 = vor.u32 %v2488, %v2489
      %v2492 = vsel %vm1091, %v2484, %v2491
      %v2494 = vshrl.u32 %v2132, 16
      %v2496 = vrot.slane %v2494, 7
      %v2497 = vshll.u32 %v2132, 16
      %v2499 = vor.u32 %v2496, %v2497
      %v2500 = vsel %vm1091, %v2488, %v2499
      %v2502 = vshrl.u32 %v2133, 16
      %v2504 = vrot.slane %v2502, 7
      %v2506 = vshrl.u32 %v2134, 16
      %v2508 = vrot.slane %v2506, 7
      %v2509 = vshll.u32 %v2134, 16
      %v2511 = vor.u32 %v2508, %v2509
      %v2512 = vsel %vm1091, %v2504, %v2511
      %v2514 = vshrl.u32 %v2135, 16
      %v2516 = vrot.slane %v2514, 7
      %v2517 = vshll.u32 %v2135, 16
      %v2519 = vor.u32 %v2516, %v2517
      %v2520 = vsel %vm1091, %v2508, %v2519
      %v2522 = vshrl.u32 %v2136, 16
      %v2524 = vrot.slane %v2522, 7
      %v2526 = vshrl.u32 %v2137, 16
      %v2528 = vrot.slane %v2526, 7
      %v2529 = vshll.u32 %v2137, 16
      %v2531 = vor.u32 %v2528, %v2529
      %v2532 = vsel %vm1091, %v2524, %v2531
      %v2534 = vshrl.u32 %v2138, 16
      %v2536 = vrot.slane %v2534, 7
      %v2537 = vshll.u32 %v2138, 16
      %v2539 = vor.u32 %v2536, %v2537
      %v2540 = vsel %vm1091, %v2528, %v2539
      %v2542 = vshrl.u32 %v2139, 16
      %v2544 = vrot.slane %v2542, 7
      %v2546 = vshrl.u32 %v2140, 16
      %v2548 = vrot.slane %v2546, 7
      %v2549 = vshll.u32 %v2140, 16
      %v2551 = vor.u32 %v2548, %v2549
      %v2552 = vsel %vm1091, %v2544, %v2551
      %v2554 = vshrl.u32 %v2141, 16
      %v2556 = vrot.slane %v2554, 7
      %v2557 = vshll.u32 %v2141, 16
      %v2559 = vor.u32 %v2556, %v2557
      %v2560 = vsel %vm1091, %v2548, %v2559
      %v2562 = vshrl.u32 %v2142, 16
      %v2564 = vrot.slane %v2562, 7
      %v2566 = vshrl.u32 %v2143, 16
      %v2568 = vrot.slane %v2566, 7
      %v2569 = vshll.u32 %v2143, 16
      %v2571 = vor.u32 %v2568, %v2569
      %v2572 = vsel %vm1091, %v2564, %v2571
      %v2574 = vshrl.u32 %v2144, 16
      %v2576 = vrot.slane %v2574, 7
      %v2577 = vshll.u32 %v2144, 16
      %v2579 = vor.u32 %v2576, %v2577
      %v2580 = vsel %vm1091, %v2568, %v2579
      %v2582 = vshrl.u32 %v2145, 16
      %v2584 = vrot.slane %v2582, 7
      %v2586 = vshrl.u32 %v2146, 16
      %v2588 = vrot.slane %v2586, 7
      %v2589 = vshll.u32 %v2146, 16
      %v2591 = vor.u32 %v2588, %v2589
      %v2592 = vsel %vm1091, %v2584, %v2591
      %v2594 = vshrl.u32 %v2147, 16
      %v2596 = vrot.slane %v2594, 7
      %v2597 = vshll.u32 %v2147, 16
      %v2599 = vor.u32 %v2596, %v2597
      %v2600 = vsel %vm1091, %v2588, %v2599
      %v2602 = vshrl.u32 %v2148, 16
      %v2604 = vrot.slane %v2602, 7
      %v2606 = vshrl.u32 %v2149, 16
      %v2608 = vrot.slane %v2606, 7
      %v2609 = vshll.u32 %v2149, 16
      %v2611 = vor.u32 %v2608, %v2609
      %v2612 = vsel %vm1091, %v2604, %v2611
      %v2614 = vshrl.u32 %v2150, 16
      %v2616 = vrot.slane %v2614, 7
      %v2617 = vshll.u32 %v2150, 16
      %v2619 = vor.u32 %v2616, %v2617
      %v2620 = vsel %vm1091, %v2608, %v2619
      %v2622 = vshrl.u32 %v2151, 16
      %v2624 = vrot.slane %v2622, 7
      %v2626 = vshrl.u32 %v2152, 16
      %v2628 = vrot.slane %v2626, 7
      %v2629 = vshll.u32 %v2152, 16
      %v2631 = vor.u32 %v2628, %v2629
      %v2632 = vsel %vm1091, %v2624, %v2631
      %v2634 = vshrl.u32 %v2153, 16
      %v2636 = vrot.slane %v2634, 7
      %v2637 = vshll.u32 %v2153, 16
      %v2639 = vor.u32 %v2636, %v2637
      %v2640 = vsel %vm1091, %v2628, %v2639
      %v2642 = vshrl.u32 %v2154, 16
      %v2644 = vrot.slane %v2642, 7
      %v2646 = vshrl.u32 %v2155, 16
      %v2648 = vrot.slane %v2646, 7
      %v2649 = vshll.u32 %v2155, 16
      %v2651 = vor.u32 %v2648, %v2649
      %v2652 = vsel %vm1091, %v2644, %v2651
      %v2654 = vshrl.u32 %v2156, 16
      %v2656 = vrot.slane %v2654, 7
      %v2657 = vshll.u32 %v2156, 16
      %v2659 = vor.u32 %v2656, %v2657
      %v2660 = vsel %vm1091, %v2648, %v2659
      %v2662 = vshrl.u32 %v2157, 16
      %v2664 = vrot.slane %v2662, 7
      %v2666 = vshrl.u32 %v2158, 16
      %v2668 = vrot.slane %v2666, 7
      %v2669 = vshll.u32 %v2158, 16
      %v2671 = vor.u32 %v2668, %v2669
      %v2672 = vsel %vm1091, %v2664, %v2671
      %v2674 = vshrl.u32 %v2159, 16
      %v2676 = vrot.slane %v2674, 7
      %v2677 = vshll.u32 %v2159, 16
      %v2679 = vor.u32 %v2676, %v2677
      %v2680 = vsel %vm1091, %v2668, %v2679
      %v2682 = vshrl.u32 %v2160, 16
      %v2684 = vrot.slane %v2682, 7
      %v2686 = vshrl.u32 %v2161, 16
      %v2688 = vrot.slane %v2686, 7
      %v2689 = vshll.u32 %v2161, 16
      %v2691 = vor.u32 %v2688, %v2689
      %v2692 = vsel %vm1091, %v2684, %v2691
      %v2694 = vshrl.u32 %v2162, 16
      %v2696 = vrot.slane %v2694, 7
      %v2697 = vshll.u32 %v2162, 16
      %v2699 = vor.u32 %v2696, %v2697
      %v2700 = vsel %vm1091, %v2688, %v2699
      %v2702 = vshrl.u32 %v2163, 16
      %v2704 = vrot.slane %v2702, 7
      %v2706 = vshrl.u32 %v2164, 16
      %v2708 = vrot.slane %v2706, 7
      %v2709 = vshll.u32 %v2164, 16
      %v2711 = vor.u32 %v2708, %v2709
      %v2712 = vsel %vm1091, %v2704, %v2711
      %v2714 = vshrl.u32 %v2165, 16
      %v2716 = vrot.slane %v2714, 7
      %v2717 = vshll.u32 %v2165, 16
      %v2719 = vor.u32 %v2716, %v2717
      %v2720 = vsel %vm1091, %v2708, %v2719
      %v2722 = vshrl.u32 %v2166, 16
      %v2724 = vrot.slane %v2722, 7
      %v2726 = vshrl.u32 %v2167, 16
      %v2728 = vrot.slane %v2726, 7
      %v2729 = vshll.u32 %v2167, 16
      %v2731 = vor.u32 %v2728, %v2729
      %v2732 = vsel %vm1091, %v2724, %v2731
      %v2734 = vshrl.u32 %v2168, 16
      %v2736 = vrot.slane %v2734, 7
      %v2737 = vshll.u32 %v2168, 16
      %v2739 = vor.u32 %v2736, %v2737
      %v2740 = vsel %vm1091, %v2728, %v2739
      %v2742 = vshrl.u32 %v2169, 16
      %v2744 = vrot.slane %v2742, 7
      %v2746 = vshrl.u32 %v2170, 16
      %v2748 = vrot.slane %v2746, 7
      %v2749 = vshll.u32 %v2170, 16
      %v2751 = vor.u32 %v2748, %v2749
      %v2752 = vsel %vm1091, %v2744, %v2751
      %v2754 = vshrl.u32 %v2171, 16
      %v2756 = vrot.slane %v2754, 7
      %v2757 = vshll.u32 %v2171, 16
      %v2759 = vor.u32 %v2756, %v2757
      %v2760 = vsel %vm1091, %v2748, %v2759
      %v2762 = vshrl.u32 %v2172, 16
      %v2764 = vrot.slane %v2762, 7
      %v2766 = vshrl.u32 %v2173, 16
      %v2768 = vrot.slane %v2766, 7
      %v2769 = vshll.u32 %v2173, 16
      %v2771 = vor.u32 %v2768, %v2769
      %v2772 = vsel %vm1091, %v2764, %v2771
      %v2774 = vshrl.u32 %v2174, 16
      %v2776 = vrot.slane %v2774, 7
      %v2777 = vshll.u32 %v2174, 16
      %v2779 = vor.u32 %v2776, %v2777
      %v2780 = vsel %vm1091, %v2768, %v2779
      %v2782 = vshrl.u32 %v2175, 16
      %v2784 = vrot.slane %v2782, 7
      %v2786 = vshrl.u32 %v2176, 16
      %v2788 = vrot.slane %v2786, 7
      %v2789 = vshll.u32 %v2176, 16
      %v2791 = vor.u32 %v2788, %v2789
      %v2792 = vsel %vm1091, %v2784, %v2791
      %v2794 = vshrl.u32 %v2177, 16
      %v2796 = vrot.slane %v2794, 7
      %v2797 = vshll.u32 %v2177, 16
      %v2799 = vor.u32 %v2796, %v2797
      %v2800 = vsel %vm1091, %v2788, %v2799
      %v2802 = vshrl.u32 %v2178, 16
      %v2804 = vrot.slane %v2802, 7
      %v2806 = vshrl.u32 %v2179, 16
      %v2808 = vrot.slane %v2806, 7
      %v2809 = vshll.u32 %v2179, 16
      %v2811 = vor.u32 %v2808, %v2809
      %v2812 = vsel %vm1091, %v2804, %v2811
      %v2814 = vshrl.u32 %v2180, 16
      %v2816 = vrot.slane %v2814, 7
      %v2817 = vshll.u32 %v2180, 16
      %v2819 = vor.u32 %v2816, %v2817
      %v2820 = vsel %vm1091, %v2808, %v2819
      %v2821 = vld [vmem:[%s930 + $0x18] sm:$0x1]
      %v2822 = vld [vmem:[%s930 + $0x38] sm:$0x1]
      %v2823 = vld [vmem:[%s930 + $0x58] sm:$0x1]
      %v2824 = vld [vmem:[%s930 + $0x78] sm:$0x1]
      %v2825 = vld [vmem:[%s930 + $0x98] sm:$0x1]
      %v2826 = vld [vmem:[%s930 + $0xb8] sm:$0x1]
      %v2827 = vld [vmem:[%s930 + $0xd8] sm:$0x1]
      %v2828 = vld [vmem:[%s930 + $0xf8] sm:$0x1]
      %v2829 = vld [vmem:[%s930 + $0x118] sm:$0x1]
      %v2830 = vld [vmem:[%s930 + $0x138] sm:$0x1]
      %v2831 = vld [vmem:[%s930 + $0x158] sm:$0x1]
      %v2832 = vld [vmem:[%s930 + $0x178] sm:$0x1]
      %v2833 = vld [vmem:[%s930 + $0x198] sm:$0x1]
      %v2834 = vld [vmem:[%s930 + $0x1b8] sm:$0x1]
      %v2835 = vld [vmem:[%s930 + $0x1d8] sm:$0x1]
      %v2836 = vld [vmem:[%s930 + $0x1f8] sm:$0x1]
      %v2837 = vld [vmem:[%s930 + $0x218] sm:$0x1]
      %v2838 = vld [vmem:[%s930 + $0x238] sm:$0x1]
      %v2839 = vld [vmem:[%s930 + $0x258] sm:$0x1]
      %v2840 = vld [vmem:[%s930 + $0x278] sm:$0x1]
      %v2841 = vld [vmem:[%s930 + $0x298] sm:$0x1]
      %v2842 = vld [vmem:[%s930 + $0x2b8] sm:$0x1]
      %v2843 = vld [vmem:[%s930 + $0x2d8] sm:$0x1]
      %v2844 = vld [vmem:[%s930 + $0x2f8] sm:$0x1]
      %v2845 = vld [vmem:[%s930 + $0x318] sm:$0x1]
      %v2846 = vld [vmem:[%s930 + $0x338] sm:$0x1]
      %v2847 = vld [vmem:[%s930 + $0x358] sm:$0x1]
      %v2848 = vld [vmem:[%s930 + $0x378] sm:$0x1]
      %v2849 = vld [vmem:[%s930 + $0x398] sm:$0x1]
      %v2850 = vld [vmem:[%s930 + $0x3b8] sm:$0x1]
      %v2851 = vld [vmem:[%s930 + $0x3d8] sm:$0x1]
      %v2852 = vld [vmem:[%s930 + $0x3f8] sm:$0x1]
      %v2853 = vrot.slane %v2189, 1
      %v2854 = vor.u32 %v2186, %v2853
      %v2855 = vrot.slane %v2197, 1
      %v2856 = vsel %vm1764, %v2854, %v2855
      %v2857 = vor.u32 %v2194, %v2855
      %v2859 = vshll.u32 %v2821, 16
      %v2861 = vrot.slane %v2859, 1
      %v2862 = vsel %vm1764, %v2857, %v2861
      %v2863 = vrot.slane %v2209, 1
      %v2864 = vor.u32 %v2206, %v2863
      %v2865 = vrot.slane %v2217, 1
      %v2866 = vsel %vm1764, %v2864, %v2865
      %v2867 = vor.u32 %v2214, %v2865
      %v2869 = vshll.u32 %v2822, 16
      %v2871 = vrot.slane %v2869, 1
      %v2872 = vsel %vm1764, %v2867, %v2871
      %v2873 = vrot.slane %v2229, 1
      %v2874 = vor.u32 %v2226, %v2873
      %v2875 = vrot.slane %v2237, 1
      %v2876 = vsel %vm1764, %v2874, %v2875
      %v2877 = vor.u32 %v2234, %v2875
      %v2879 = vshll.u32 %v2823, 16
      %v2881 = vrot.slane %v2879, 1
      %v2882 = vsel %vm1764, %v2877, %v2881
      %v2883 = vrot.slane %v2249, 1
      %v2884 = vor.u32 %v2246, %v2883
      %v2885 = vrot.slane %v2257, 1
      %v2886 = vsel %vm1764, %v2884, %v2885
      %v2887 = vor.u32 %v2254, %v2885
      %v2889 = vshll.u32 %v2824, 16
      %v2891 = vrot.slane %v2889, 1
      %v2892 = vsel %vm1764, %v2887, %v2891
      %v2893 = vrot.slane %v2269, 1
      %v2894 = vor.u32 %v2266, %v2893
      %v2895 = vrot.slane %v2277, 1
      %v2896 = vsel %vm1764, %v2894, %v2895
      %v2897 = vor.u32 %v2274, %v2895
      %v2899 = vshll.u32 %v2825, 16
      %v2901 = vrot.slane %v2899, 1
      %v2902 = vsel %vm1764, %v2897, %v2901
      %v2903 = vrot.slane %v2289, 1
      %v2904 = vor.u32 %v2286, %v2903
      %v2905 = vrot.slane %v2297, 1
      %v2906 = vsel %vm1764, %v2904, %v2905
      %v2907 = vor.u32 %v2294, %v2905
      %v2909 = vshll.u32 %v2826, 16
      %v2911 = vrot.slane %v2909, 1
      %v2912 = vsel %vm1764, %v2907, %v2911
      %v2913 = vrot.slane %v2309, 1
      %v2914 = vor.u32 %v2306, %v2913
      %v2915 = vrot.slane %v2317, 1
      %v2916 = vsel %vm1764, %v2914, %v2915
      %v2917 = vor.u32 %v2314, %v2915
      %v2919 = vshll.u32 %v2827, 16
      %v2921 = vrot.slane %v2919, 1
      %v2922 = vsel %vm1764, %v2917, %v2921
      %v2923 = vrot.slane %v2329, 1
      %v2924 = vor.u32 %v2326, %v2923
      %v2925 = vrot.slane %v2337, 1
      %v2926 = vsel %vm1764, %v2924, %v2925
      %v2927 = vor.u32 %v2334, %v2925
      %v2929 = vshll.u32 %v2828, 16
      %v2931 = vrot.slane %v2929, 1
      %v2932 = vsel %vm1764, %v2927, %v2931
      %v2933 = vrot.slane %v2349, 1
      %v2934 = vor.u32 %v2346, %v2933
      %v2935 = vrot.slane %v2357, 1
      %v2936 = vsel %vm1764, %v2934, %v2935
      %v2937 = vor.u32 %v2354, %v2935
      %v2939 = vshll.u32 %v2829, 16
      %v2941 = vrot.slane %v2939, 1
      %v2942 = vsel %vm1764, %v2937, %v2941
      %v2943 = vrot.slane %v2369, 1
      %v2944 = vor.u32 %v2366, %v2943
      %v2945 = vrot.slane %v2377, 1
      %v2946 = vsel %vm1764, %v2944, %v2945
      %v2947 = vor.u32 %v2374, %v2945
      %v2949 = vshll.u32 %v2830, 16
      %v2951 = vrot.slane %v2949, 1
      %v2952 = vsel %vm1764, %v2947, %v2951
      %v2953 = vrot.slane %v2389, 1
      %v2954 = vor.u32 %v2386, %v2953
      %v2955 = vrot.slane %v2397, 1
      %v2956 = vsel %vm1764, %v2954, %v2955
      %v2957 = vor.u32 %v2394, %v2955
      %v2959 = vshll.u32 %v2831, 16
      %v2961 = vrot.slane %v2959, 1
      %v2962 = vsel %vm1764, %v2957, %v2961
      %v2963 = vrot.slane %v2409, 1
      %v2964 = vor.u32 %v2406, %v2963
      %v2965 = vrot.slane %v2417, 1
      %v2966 = vsel %vm1764, %v2964, %v2965
      %v2967 = vor.u32 %v2414, %v2965
      %v2969 = vshll.u32 %v2832, 16
      %v2971 = vrot.slane %v2969, 1
      %v2972 = vsel %vm1764, %v2967, %v2971
      %v2973 = vrot.slane %v2429, 1
      %v2974 = vor.u32 %v2426, %v2973
      %v2975 = vrot.slane %v2437, 1
      %v2976 = vsel %vm1764, %v2974, %v2975
      %v2977 = vor.u32 %v2434, %v2975
      %v2979 = vshll.u32 %v2833, 16
      %v2981 = vrot.slane %v2979, 1
      %v2982 = vsel %vm1764, %v2977, %v2981
      %v2983 = vrot.slane %v2449, 1
      %v2984 = vor.u32 %v2446, %v2983
      %v2985 = vrot.slane %v2457, 1
      %v2986 = vsel %vm1764, %v2984, %v2985
      %v2987 = vor.u32 %v2454, %v2985
      %v2989 = vshll.u32 %v2834, 16
      %v2991 = vrot.slane %v2989, 1
      %v2992 = vsel %vm1764, %v2987, %v2991
      %v2993 = vrot.slane %v2469, 1
      %v2994 = vor.u32 %v2466, %v2993
      %v2995 = vrot.slane %v2477, 1
      %v2996 = vsel %vm1764, %v2994, %v2995
      %v2997 = vor.u32 %v2474, %v2995
      %v2999 = vshll.u32 %v2835, 16
      %v3001 = vrot.slane %v2999, 1
      %v3002 = vsel %vm1764, %v2997, %v3001
      %v3003 = vrot.slane %v2489, 1
      %v3004 = vor.u32 %v2486, %v3003
      %v3005 = vrot.slane %v2497, 1
      %v3006 = vsel %vm1764, %v3004, %v3005
      %v3007 = vor.u32 %v2494, %v3005
      %v3009 = vshll.u32 %v2836, 16
      %v3011 = vrot.slane %v3009, 1
      %v3012 = vsel %vm1764, %v3007, %v3011
      %v3013 = vrot.slane %v2509, 1
      %v3014 = vor.u32 %v2506, %v3013
      %v3015 = vrot.slane %v2517, 1
      %v3016 = vsel %vm1764, %v3014, %v3015
      %v3017 = vor.u32 %v2514, %v3015
      %v3019 = vshll.u32 %v2837, 16
      %v3021 = vrot.slane %v3019, 1
      %v3022 = vsel %vm1764, %v3017, %v3021
      %v3023 = vrot.slane %v2529, 1
      %v3024 = vor.u32 %v2526, %v3023
      %v3025 = vrot.slane %v2537, 1
      %v3026 = vsel %vm1764, %v3024, %v3025
      %v3027 = vor.u32 %v2534, %v3025
      %v3029 = vshll.u32 %v2838, 16
      %v3031 = vrot.slane %v3029, 1
      %v3032 = vsel %vm1764, %v3027, %v3031
      %v3033 = vrot.slane %v2549, 1
      %v3034 = vor.u32 %v2546, %v3033
      %v3035 = vrot.slane %v2557, 1
      %v3036 = vsel %vm1764, %v3034, %v3035
      %v3037 = vor.u32 %v2554, %v3035
      %v3039 = vshll.u32 %v2839, 16
      %v3041 = vrot.slane %v3039, 1
      %v3042 = vsel %vm1764, %v3037, %v3041
      %v3043 = vrot.slane %v2569, 1
      %v3044 = vor.u32 %v2566, %v3043
      %v3045 = vrot.slane %v2577, 1
      %v3046 = vsel %vm1764, %v3044, %v3045
      %v3047 = vor.u32 %v2574, %v3045
      %v3049 = vshll.u32 %v2840, 16
      %v3051 = vrot.slane %v3049, 1
      %v3052 = vsel %vm1764, %v3047, %v3051
      %v3053 = vrot.slane %v2589, 1
      %v3054 = vor.u32 %v2586, %v3053
      %v3055 = vrot.slane %v2597, 1
      %v3056 = vsel %vm1764, %v3054, %v3055
      %v3057 = vor.u32 %v2594, %v3055
      %v3059 = vshll.u32 %v2841, 16
      %v3061 = vrot.slane %v3059, 1
      %v3062 = vsel %vm1764, %v3057, %v3061
      %v3063 = vrot.slane %v2609, 1
      %v3064 = vor.u32 %v2606, %v3063
      %v3065 = vrot.slane %v2617, 1
      %v3066 = vsel %vm1764, %v3064, %v3065
      %v3067 = vor.u32 %v2614, %v3065
      %v3069 = vshll.u32 %v2842, 16
      %v3071 = vrot.slane %v3069, 1
      %v3072 = vsel %vm1764, %v3067, %v3071
      %v3073 = vrot.slane %v2629, 1
      %v3074 = vor.u32 %v2626, %v3073
      %v3075 = vrot.slane %v2637, 1
      %v3076 = vsel %vm1764, %v3074, %v3075
      %v3077 = vor.u32 %v2634, %v3075
      %v3079 = vshll.u32 %v2843, 16
      %v3081 = vrot.slane %v3079, 1
      %v3082 = vsel %vm1764, %v3077, %v3081
      %v3083 = vrot.slane %v2649, 1
      %v3084 = vor.u32 %v2646, %v3083
      %v3085 = vrot.slane %v2657, 1
      %v3086 = vsel %vm1764, %v3084, %v3085
      %v3087 = vor.u32 %v2654, %v3085
      %v3089 = vshll.u32 %v2844, 16
      %v3091 = vrot.slane %v3089, 1
      %v3092 = vsel %vm1764, %v3087, %v3091
      %v3093 = vrot.slane %v2669, 1
      %v3094 = vor.u32 %v2666, %v3093
      %v3095 = vrot.slane %v2677, 1
      %v3096 = vsel %vm1764, %v3094, %v3095
      %v3097 = vor.u32 %v2674, %v3095
      %v3099 = vshll.u32 %v2845, 16
      %v3101 = vrot.slane %v3099, 1
      %v3102 = vsel %vm1764, %v3097, %v3101
      %v3103 = vrot.slane %v2689, 1
      %v3104 = vor.u32 %v2686, %v3103
      %v3105 = vrot.slane %v2697, 1
      %v3106 = vsel %vm1764, %v3104, %v3105
      %v3107 = vor.u32 %v2694, %v3105
      %v3109 = vshll.u32 %v2846, 16
      %v3111 = vrot.slane %v3109, 1
      %v3112 = vsel %vm1764, %v3107, %v3111
      %v3113 = vrot.slane %v2709, 1
      %v3114 = vor.u32 %v2706, %v3113
      %v3115 = vrot.slane %v2717, 1
      %v3116 = vsel %vm1764, %v3114, %v3115
      %v3117 = vor.u32 %v2714, %v3115
      %v3119 = vshll.u32 %v2847, 16
      %v3121 = vrot.slane %v3119, 1
      %v3122 = vsel %vm1764, %v3117, %v3121
      %v3123 = vrot.slane %v2729, 1
      %v3124 = vor.u32 %v2726, %v3123
      %v3125 = vrot.slane %v2737, 1
      %v3126 = vsel %vm1764, %v3124, %v3125
      %v3127 = vor.u32 %v2734, %v3125
      %v3129 = vshll.u32 %v2848, 16
      %v3131 = vrot.slane %v3129, 1
      %v3132 = vsel %vm1764, %v3127, %v3131
      %v3133 = vrot.slane %v2749, 1
      %v3134 = vor.u32 %v2746, %v3133
      %v3135 = vrot.slane %v2757, 1
      %v3136 = vsel %vm1764, %v3134, %v3135
      %v3137 = vor.u32 %v2754, %v3135
      %v3139 = vshll.u32 %v2849, 16
      %v3141 = vrot.slane %v3139, 1
      %v3142 = vsel %vm1764, %v3137, %v3141
      %v3143 = vrot.slane %v2769, 1
      %v3144 = vor.u32 %v2766, %v3143
      %v3145 = vrot.slane %v2777, 1
      %v3146 = vsel %vm1764, %v3144, %v3145
      %v3147 = vor.u32 %v2774, %v3145
      %v3149 = vshll.u32 %v2850, 16
      %v3151 = vrot.slane %v3149, 1
      %v3152 = vsel %vm1764, %v3147, %v3151
      %v3153 = vrot.slane %v2789, 1
      %v3154 = vor.u32 %v2786, %v3153
      %v3155 = vrot.slane %v2797, 1
      %v3156 = vsel %vm1764, %v3154, %v3155
      %v3157 = vor.u32 %v2794, %v3155
      %v3159 = vshll.u32 %v2851, 16
      %v3161 = vrot.slane %v3159, 1
      %v3162 = vsel %vm1764, %v3157, %v3161
      %v3163 = vrot.slane %v2809, 1
      %v3164 = vor.u32 %v2806, %v3163
      %v3165 = vrot.slane %v2817, 1
      %v3166 = vsel %vm1764, %v3164, %v3165
      %v3167 = vor.u32 %v2814, %v3165
      %v3169 = vshll.u32 %v2852, 16
      %v3171 = vrot.slane %v3169, 1
      %v3172 = vsel %vm1764, %v3167, %v3171
      %s3173 = scalar_lea.vmem [#allocation2], 64
      %v3174 = vld [vmem:[%s3173] sm:$0x80]
      %v3175 = vld [vmem:[%s3173 + $0x8] sm:$0xff]
      %v3176 = vld [vmem:[%s3173 + $0x10] sm:$0xff]
      %v3177 = vld [vmem:[%s3173 + $0x20] sm:$0x80]
      %v3178 = vld [vmem:[%s3173 + $0x28] sm:$0xff]
      %v3179 = vld [vmem:[%s3173 + $0x30] sm:$0xff]
      %v3180 = vld [vmem:[%s3173 + $0x40] sm:$0x80]
      %v3181 = vld [vmem:[%s3173 + $0x48] sm:$0xff]
      %v3182 = vld [vmem:[%s3173 + $0x50] sm:$0xff]
      %v3183 = vld [vmem:[%s3173 + $0x60] sm:$0x80]
      %v3184 = vld [vmem:[%s3173 + $0x68] sm:$0xff]
      %v3185 = vld [vmem:[%s3173 + $0x70] sm:$0xff]
      %v3186 = vld [vmem:[%s3173 + $0x80] sm:$0x80]
      %v3187 = vld [vmem:[%s3173 + $0x88] sm:$0xff]
      %v3188 = vld [vmem:[%s3173 + $0x90] sm:$0xff]
      %v3189 = vld [vmem:[%s3173 + $0xa0] sm:$0x80]
      %v3190 = vld [vmem:[%s3173 + $0xa8] sm:$0xff]
      %v3191 = vld [vmem:[%s3173 + $0xb0] sm:$0xff]
      %v3192 = vld [vmem:[%s3173 + $0xc0] sm:$0x80]
      %v3193 = vld [vmem:[%s3173 + $0xc8] sm:$0xff]
      %v3194 = vld [vmem:[%s3173 + $0xd0] sm:$0xff]
      %v3195 = vld [vmem:[%s3173 + $0xe0] sm:$0x80]
      %v3196 = vld [vmem:[%s3173 + $0xe8] sm:$0xff]
      %v3197 = vld [vmem:[%s3173 + $0xf0] sm:$0xff]
      %v3198 = vld [vmem:[%s3173 + $0x100] sm:$0x80]
      %v3199 = vld [vmem:[%s3173 + $0x108] sm:$0xff]
      %v3200 = vld [vmem:[%s3173 + $0x110] sm:$0xff]
      %v3201 = vld [vmem:[%s3173 + $0x120] sm:$0x80]
      %v3202 = vld [vmem:[%s3173 + $0x128] sm:$0xff]
      %v3203 = vld [vmem:[%s3173 + $0x130] sm:$0xff]
      %v3204 = vld [vmem:[%s3173 + $0x140] sm:$0x80]
      %v3205 = vld [vmem:[%s3173 + $0x148] sm:$0xff]
      %v3206 = vld [vmem:[%s3173 + $0x150] sm:$0xff]
      %v3207 = vld [vmem:[%s3173 + $0x160] sm:$0x80]
      %v3208 = vld [vmem:[%s3173 + $0x168] sm:$0xff]
      %v3209 = vld [vmem:[%s3173 + $0x170] sm:$0xff]
      %v3210 = vld [vmem:[%s3173 + $0x180] sm:$0x80]
      %v3211 = vld [vmem:[%s3173 + $0x188] sm:$0xff]
      %v3212 = vld [vmem:[%s3173 + $0x190] sm:$0xff]
      %v3213 = vld [vmem:[%s3173 + $0x1a0] sm:$0x80]
      %v3214 = vld [vmem:[%s3173 + $0x1a8] sm:$0xff]
      %v3215 = vld [vmem:[%s3173 + $0x1b0] sm:$0xff]
      %v3216 = vld [vmem:[%s3173 + $0x1c0] sm:$0x80]
      %v3217 = vld [vmem:[%s3173 + $0x1c8] sm:$0xff]
      %v3218 = vld [vmem:[%s3173 + $0x1d0] sm:$0xff]
      %v3219 = vld [vmem:[%s3173 + $0x1e0] sm:$0x80]
      %v3220 = vld [vmem:[%s3173 + $0x1e8] sm:$0xff]
      %v3221 = vld [vmem:[%s3173 + $0x1f0] sm:$0xff]
      %v3222 = vld [vmem:[%s3173 + $0x200] sm:$0x80]
      %v3223 = vld [vmem:[%s3173 + $0x208] sm:$0xff]
      %v3224 = vld [vmem:[%s3173 + $0x210] sm:$0xff]
      %v3225 = vld [vmem:[%s3173 + $0x220] sm:$0x80]
      %v3226 = vld [vmem:[%s3173 + $0x228] sm:$0xff]
      %v3227 = vld [vmem:[%s3173 + $0x230] sm:$0xff]
      %v3228 = vld [vmem:[%s3173 + $0x240] sm:$0x80]
      %v3229 = vld [vmem:[%s3173 + $0x248] sm:$0xff]
      %v3230 = vld [vmem:[%s3173 + $0x250] sm:$0xff]
      %v3231 = vld [vmem:[%s3173 + $0x260] sm:$0x80]
      %v3232 = vld [vmem:[%s3173 + $0x268] sm:$0xff]
      %v3233 = vld [vmem:[%s3173 + $0x270] sm:$0xff]
      %v3234 = vld [vmem:[%s3173 + $0x280] sm:$0x80]
      %v3235 = vld [vmem:[%s3173 + $0x288] sm:$0xff]
      %v3236 = vld [vmem:[%s3173 + $0x290] sm:$0xff]
      %v3237 = vld [vmem:[%s3173 + $0x2a0] sm:$0x80]
      %v3238 = vld [vmem:[%s3173 + $0x2a8] sm:$0xff]
      %v3239 = vld [vmem:[%s3173 + $0x2b0] sm:$0xff]
      %v3240 = vld [vmem:[%s3173 + $0x2c0] sm:$0x80]
      %v3241 = vld [vmem:[%s3173 + $0x2c8] sm:$0xff]
      %v3242 = vld [vmem:[%s3173 + $0x2d0] sm:$0xff]
      %v3243 = vld [vmem:[%s3173 + $0x2e0] sm:$0x80]
      %v3244 = vld [vmem:[%s3173 + $0x2e8] sm:$0xff]
      %v3245 = vld [vmem:[%s3173 + $0x2f0] sm:$0xff]
      %v3246 = vld [vmem:[%s3173 + $0x300] sm:$0x80]
      %v3247 = vld [vmem:[%s3173 + $0x308] sm:$0xff]
      %v3248 = vld [vmem:[%s3173 + $0x310] sm:$0xff]
      %v3249 = vld [vmem:[%s3173 + $0x320] sm:$0x80]
      %v3250 = vld [vmem:[%s3173 + $0x328] sm:$0xff]
      %v3251 = vld [vmem:[%s3173 + $0x330] sm:$0xff]
      %v3252 = vld [vmem:[%s3173 + $0x340] sm:$0x80]
      %v3253 = vld [vmem:[%s3173 + $0x348] sm:$0xff]
      %v3254 = vld [vmem:[%s3173 + $0x350] sm:$0xff]
      %v3255 = vld [vmem:[%s3173 + $0x360] sm:$0x80]
      %v3256 = vld [vmem:[%s3173 + $0x368] sm:$0xff]
      %v3257 = vld [vmem:[%s3173 + $0x370] sm:$0xff]
      %v3258 = vld [vmem:[%s3173 + $0x380] sm:$0x80]
      %v3259 = vld [vmem:[%s3173 + $0x388] sm:$0xff]
      %v3260 = vld [vmem:[%s3173 + $0x390] sm:$0xff]
      %v3261 = vld [vmem:[%s3173 + $0x3a0] sm:$0x80]
      %v3262 = vld [vmem:[%s3173 + $0x3a8] sm:$0xff]
      %v3263 = vld [vmem:[%s3173 + $0x3b0] sm:$0xff]
      %v3264 = vld [vmem:[%s3173 + $0x3c0] sm:$0x80]
      %v3265 = vld [vmem:[%s3173 + $0x3c8] sm:$0xff]
      %v3266 = vld [vmem:[%s3173 + $0x3d0] sm:$0xff]
      %v3267 = vld [vmem:[%s3173 + $0x3e0] sm:$0x80]
      %v3268 = vld [vmem:[%s3173 + $0x3e8] sm:$0xff]
      %v3269 = vld [vmem:[%s3173 + $0x3f0] sm:$0xff]
      %v3271 = vshrl.u32 %v3174, 16
      %v3273 = vrot.slane %v3271, 7
      %v3275 = vshrl.u32 %v3175, 16
      %v3277 = vrot.slane %v3275, 7
      %v3278 = vshll.u32 %v3175, 16
      %v3280 = vor.u32 %v3277, %v3278
      %v3281 = vsel %vm1091, %v3273, %v3280
      %v3283 = vshrl.u32 %v3176, 16
      %v3285 = vrot.slane %v3283, 7
      %v3286 = vshll.u32 %v3176, 16
      %v3288 = vor.u32 %v3285, %v3286
      %v3289 = vsel %vm1091, %v3277, %v3288
      %v3291 = vshrl.u32 %v3177, 16
      %v3293 = vrot.slane %v3291, 7
      %v3295 = vshrl.u32 %v3178, 16
      %v3297 = vrot.slane %v3295, 7
      %v3298 = vshll.u32 %v3178, 16
      %v3300 = vor.u32 %v3297, %v3298
      %v3301 = vsel %vm1091, %v3293, %v3300
      %v3303 = vshrl.u32 %v3179, 16
      %v3305 = vrot.slane %v3303, 7
      %v3306 = vshll.u32 %v3179, 16
      %v3308 = vor.u32 %v3305, %v3306
      %v3309 = vsel %vm1091, %v3297, %v3308
      %v3311 = vshrl.u32 %v3180, 16
      %v3313 = vrot.slane %v3311, 7
      %v3315 = vshrl.u32 %v3181, 16
      %v3317 = vrot.slane %v3315, 7
      %v3318 = vshll.u32 %v3181, 16
      %v3320 = vor.u32 %v3317, %v3318
      %v3321 = vsel %vm1091, %v3313, %v3320
      %v3323 = vshrl.u32 %v3182, 16
      %v3325 = vrot.slane %v3323, 7
      %v3326 = vshll.u32 %v3182, 16
      %v3328 = vor.u32 %v3325, %v3326
      %v3329 = vsel %vm1091, %v3317, %v3328
      %v3331 = vshrl.u32 %v3183, 16
      %v3333 = vrot.slane %v3331, 7
      %v3335 = vshrl.u32 %v3184, 16
      %v3337 = vrot.slane %v3335, 7
      %v3338 = vshll.u32 %v3184, 16
      %v3340 = vor.u32 %v3337, %v3338
      %v3341 = vsel %vm1091, %v3333, %v3340
      %v3343 = vshrl.u32 %v3185, 16
      %v3345 = vrot.slane %v3343, 7
      %v3346 = vshll.u32 %v3185, 16
      %v3348 = vor.u32 %v3345, %v3346
      %v3349 = vsel %vm1091, %v3337, %v3348
      %v3351 = vshrl.u32 %v3186, 16
      %v3353 = vrot.slane %v3351, 7
      %v3355 = vshrl.u32 %v3187, 16
      %v3357 = vrot.slane %v3355, 7
      %v3358 = vshll.u32 %v3187, 16
      %v3360 = vor.u32 %v3357, %v3358
      %v3361 = vsel %vm1091, %v3353, %v3360
      %v3363 = vshrl.u32 %v3188, 16
      %v3365 = vrot.slane %v3363, 7
      %v3366 = vshll.u32 %v3188, 16
      %v3368 = vor.u32 %v3365, %v3366
      %v3369 = vsel %vm1091, %v3357, %v3368
      %v3371 = vshrl.u32 %v3189, 16
      %v3373 = vrot.slane %v3371, 7
      %v3375 = vshrl.u32 %v3190, 16
      %v3377 = vrot.slane %v3375, 7
      %v3378 = vshll.u32 %v3190, 16
      %v3380 = vor.u32 %v3377, %v3378
      %v3381 = vsel %vm1091, %v3373, %v3380
      %v3383 = vshrl.u32 %v3191, 16
      %v3385 = vrot.slane %v3383, 7
      %v3386 = vshll.u32 %v3191, 16
      %v3388 = vor.u32 %v3385, %v3386
      %v3389 = vsel %vm1091, %v3377, %v3388
      %v3391 = vshrl.u32 %v3192, 16
      %v3393 = vrot.slane %v3391, 7
      %v3395 = vshrl.u32 %v3193, 16
      %v3397 = vrot.slane %v3395, 7
      %v3398 = vshll.u32 %v3193, 16
      %v3400 = vor.u32 %v3397, %v3398
      %v3401 = vsel %vm1091, %v3393, %v3400
      %v3403 = vshrl.u32 %v3194, 16
      %v3405 = vrot.slane %v3403, 7
      %v3406 = vshll.u32 %v3194, 16
      %v3408 = vor.u32 %v3405, %v3406
      %v3409 = vsel %vm1091, %v3397, %v3408
      %v3411 = vshrl.u32 %v3195, 16
      %v3413 = vrot.slane %v3411, 7
      %v3415 = vshrl.u32 %v3196, 16
      %v3417 = vrot.slane %v3415, 7
      %v3418 = vshll.u32 %v3196, 16
      %v3420 = vor.u32 %v3417, %v3418
      %v3421 = vsel %vm1091, %v3413, %v3420
      %v3423 = vshrl.u32 %v3197, 16
      %v3425 = vrot.slane %v3423, 7
      %v3426 = vshll.u32 %v3197, 16
      %v3428 = vor.u32 %v3425, %v3426
      %v3429 = vsel %vm1091, %v3417, %v3428
      %v3431 = vshrl.u32 %v3198, 16
      %v3433 = vrot.slane %v3431, 7
      %v3435 = vshrl.u32 %v3199, 16
      %v3437 = vrot.slane %v3435, 7
      %v3438 = vshll.u32 %v3199, 16
      %v3440 = vor.u32 %v3437, %v3438
      %v3441 = vsel %vm1091, %v3433, %v3440
      %v3443 = vshrl.u32 %v3200, 16
      %v3445 = vrot.slane %v3443, 7
      %v3446 = vshll.u32 %v3200, 16
      %v3448 = vor.u32 %v3445, %v3446
      %v3449 = vsel %vm1091, %v3437, %v3448
      %v3451 = vshrl.u32 %v3201, 16
      %v3453 = vrot.slane %v3451, 7
      %v3455 = vshrl.u32 %v3202, 16
      %v3457 = vrot.slane %v3455, 7
      %v3458 = vshll.u32 %v3202, 16
      %v3460 = vor.u32 %v3457, %v3458
      %v3461 = vsel %vm1091, %v3453, %v3460
      %v3463 = vshrl.u32 %v3203, 16
      %v3465 = vrot.slane %v3463, 7
      %v3466 = vshll.u32 %v3203, 16
      %v3468 = vor.u32 %v3465, %v3466
      %v3469 = vsel %vm1091, %v3457, %v3468
      %v3471 = vshrl.u32 %v3204, 16
      %v3473 = vrot.slane %v3471, 7
      %v3475 = vshrl.u32 %v3205, 16
      %v3477 = vrot.slane %v3475, 7
      %v3478 = vshll.u32 %v3205, 16
      %v3480 = vor.u32 %v3477, %v3478
      %v3481 = vsel %vm1091, %v3473, %v3480
      %v3483 = vshrl.u32 %v3206, 16
      %v3485 = vrot.slane %v3483, 7
      %v3486 = vshll.u32 %v3206, 16
      %v3488 = vor.u32 %v3485, %v3486
      %v3489 = vsel %vm1091, %v3477, %v3488
      %v3491 = vshrl.u32 %v3207, 16
      %v3493 = vrot.slane %v3491, 7
      %v3495 = vshrl.u32 %v3208, 16
      %v3497 = vrot.slane %v3495, 7
      %v3498 = vshll.u32 %v3208, 16
      %v3500 = vor.u32 %v3497, %v3498
      %v3501 = vsel %vm1091, %v3493, %v3500
      %v3503 = vshrl.u32 %v3209, 16
      %v3505 = vrot.slane %v3503, 7
      %v3506 = vshll.u32 %v3209, 16
      %v3508 = vor.u32 %v3505, %v3506
      %v3509 = vsel %vm1091, %v3497, %v3508
      %v3511 = vshrl.u32 %v3210, 16
      %v3513 = vrot.slane %v3511, 7
      %v3515 = vshrl.u32 %v3211, 16
      %v3517 = vrot.slane %v3515, 7
      %v3518 = vshll.u32 %v3211, 16
      %v3520 = vor.u32 %v3517, %v3518
      %v3521 = vsel %vm1091, %v3513, %v3520
      %v3523 = vshrl.u32 %v3212, 16
      %v3525 = vrot.slane %v3523, 7
      %v3526 = vshll.u32 %v3212, 16
      %v3528 = vor.u32 %v3525, %v3526
      %v3529 = vsel %vm1091, %v3517, %v3528
      %v3531 = vshrl.u32 %v3213, 16
      %v3533 = vrot.slane %v3531, 7
      %v3535 = vshrl.u32 %v3214, 16
      %v3537 = vrot.slane %v3535, 7
      %v3538 = vshll.u32 %v3214, 16
      %v3540 = vor.u32 %v3537, %v3538
      %v3541 = vsel %vm1091, %v3533, %v3540
      %v3543 = vshrl.u32 %v3215, 16
      %v3545 = vrot.slane %v3543, 7
      %v3546 = vshll.u32 %v3215, 16
      %v3548 = vor.u32 %v3545, %v3546
      %v3549 = vsel %vm1091, %v3537, %v3548
      %v3551 = vshrl.u32 %v3216, 16
      %v3553 = vrot.slane %v3551, 7
      %v3555 = vshrl.u32 %v3217, 16
      %v3557 = vrot.slane %v3555, 7
      %v3558 = vshll.u32 %v3217, 16
      %v3560 = vor.u32 %v3557, %v3558
      %v3561 = vsel %vm1091, %v3553, %v3560
      %v3563 = vshrl.u32 %v3218, 16
      %v3565 = vrot.slane %v3563, 7
      %v3566 = vshll.u32 %v3218, 16
      %v3568 = vor.u32 %v3565, %v3566
      %v3569 = vsel %vm1091, %v3557, %v3568
      %v3571 = vshrl.u32 %v3219, 16
      %v3573 = vrot.slane %v3571, 7
      %v3575 = vshrl.u32 %v3220, 16
      %v3577 = vrot.slane %v3575, 7
      %v3578 = vshll.u32 %v3220, 16
      %v3580 = vor.u32 %v3577, %v3578
      %v3581 = vsel %vm1091, %v3573, %v3580
      %v3583 = vshrl.u32 %v3221, 16
      %v3585 = vrot.slane %v3583, 7
      %v3586 = vshll.u32 %v3221, 16
      %v3588 = vor.u32 %v3585, %v3586
      %v3589 = vsel %vm1091, %v3577, %v3588
      %v3591 = vshrl.u32 %v3222, 16
      %v3593 = vrot.slane %v3591, 7
      %v3595 = vshrl.u32 %v3223, 16
      %v3597 = vrot.slane %v3595, 7
      %v3598 = vshll.u32 %v3223, 16
      %v3600 = vor.u32 %v3597, %v3598
      %v3601 = vsel %vm1091, %v3593, %v3600
      %v3603 = vshrl.u32 %v3224, 16
      %v3605 = vrot.slane %v3603, 7
      %v3606 = vshll.u32 %v3224, 16
      %v3608 = vor.u32 %v3605, %v3606
      %v3609 = vsel %vm1091, %v3597, %v3608
      %v3611 = vshrl.u32 %v3225, 16
      %v3613 = vrot.slane %v3611, 7
      %v3615 = vshrl.u32 %v3226, 16
      %v3617 = vrot.slane %v3615, 7
      %v3618 = vshll.u32 %v3226, 16
      %v3620 = vor.u32 %v3617, %v3618
      %v3621 = vsel %vm1091, %v3613, %v3620
      %v3623 = vshrl.u32 %v3227, 16
      %v3625 = vrot.slane %v3623, 7
      %v3626 = vshll.u32 %v3227, 16
      %v3628 = vor.u32 %v3625, %v3626
      %v3629 = vsel %vm1091, %v3617, %v3628
      %v3631 = vshrl.u32 %v3228, 16
      %v3633 = vrot.slane %v3631, 7
      %v3635 = vshrl.u32 %v3229, 16
      %v3637 = vrot.slane %v3635, 7
      %v3638 = vshll.u32 %v3229, 16
      %v3640 = vor.u32 %v3637, %v3638
      %v3641 = vsel %vm1091, %v3633, %v3640
      %v3643 = vshrl.u32 %v3230, 16
      %v3645 = vrot.slane %v3643, 7
      %v3646 = vshll.u32 %v3230, 16
      %v3648 = vor.u32 %v3645, %v3646
      %v3649 = vsel %vm1091, %v3637, %v3648
      %v3651 = vshrl.u32 %v3231, 16
      %v3653 = vrot.slane %v3651, 7
      %v3655 = vshrl.u32 %v3232, 16
      %v3657 = vrot.slane %v3655, 7
      %v3658 = vshll.u32 %v3232, 16
      %v3660 = vor.u32 %v3657, %v3658
      %v3661 = vsel %vm1091, %v3653, %v3660
      %v3663 = vshrl.u32 %v3233, 16
      %v3665 = vrot.slane %v3663, 7
      %v3666 = vshll.u32 %v3233, 16
      %v3668 = vor.u32 %v3665, %v3666
      %v3669 = vsel %vm1091, %v3657, %v3668
      %v3671 = vshrl.u32 %v3234, 16
      %v3673 = vrot.slane %v3671, 7
      %v3675 = vshrl.u32 %v3235, 16
      %v3677 = vrot.slane %v3675, 7
      %v3678 = vshll.u32 %v3235, 16
      %v3680 = vor.u32 %v3677, %v3678
      %v3681 = vsel %vm1091, %v3673, %v3680
      %v3683 = vshrl.u32 %v3236, 16
      %v3685 = vrot.slane %v3683, 7
      %v3686 = vshll.u32 %v3236, 16
      %v3688 = vor.u32 %v3685, %v3686
      %v3689 = vsel %vm1091, %v3677, %v3688
      %v3691 = vshrl.u32 %v3237, 16
      %v3693 = vrot.slane %v3691, 7
      %v3695 = vshrl.u32 %v3238, 16
      %v3697 = vrot.slane %v3695, 7
      %v3698 = vshll.u32 %v3238, 16
      %v3700 = vor.u32 %v3697, %v3698
      %v3701 = vsel %vm1091, %v3693, %v3700
      %v3703 = vshrl.u32 %v3239, 16
      %v3705 = vrot.slane %v3703, 7
      %v3706 = vshll.u32 %v3239, 16
      %v3708 = vor.u32 %v3705, %v3706
      %v3709 = vsel %vm1091, %v3697, %v3708
      %v3711 = vshrl.u32 %v3240, 16
      %v3713 = vrot.slane %v3711, 7
      %v3715 = vshrl.u32 %v3241, 16
      %v3717 = vrot.slane %v3715, 7
      %v3718 = vshll.u32 %v3241, 16
      %v3720 = vor.u32 %v3717, %v3718
      %v3721 = vsel %vm1091, %v3713, %v3720
      %v3723 = vshrl.u32 %v3242, 16
      %v3725 = vrot.slane %v3723, 7
      %v3726 = vshll.u32 %v3242, 16
      %v3728 = vor.u32 %v3725, %v3726
      %v3729 = vsel %vm1091, %v3717, %v3728
      %v3731 = vshrl.u32 %v3243, 16
      %v3733 = vrot.slane %v3731, 7
      %v3735 = vshrl.u32 %v3244, 16
      %v3737 = vrot.slane %v3735, 7
      %v3738 = vshll.u32 %v3244, 16
      %v3740 = vor.u32 %v3737, %v3738
      %v3741 = vsel %vm1091, %v3733, %v3740
      %v3743 = vshrl.u32 %v3245, 16
      %v3745 = vrot.slane %v3743, 7
      %v3746 = vshll.u32 %v3245, 16
      %v3748 = vor.u32 %v3745, %v3746
      %v3749 = vsel %vm1091, %v3737, %v3748
      %v3751 = vshrl.u32 %v3246, 16
      %v3753 = vrot.slane %v3751, 7
      %v3755 = vshrl.u32 %v3247, 16
      %v3757 = vrot.slane %v3755, 7
      %v3758 = vshll.u32 %v3247, 16
      %v3760 = vor.u32 %v3757, %v3758
      %v3761 = vsel %vm1091, %v3753, %v3760
      %v3763 = vshrl.u32 %v3248, 16
      %v3765 = vrot.slane %v3763, 7
      %v3766 = vshll.u32 %v3248, 16
      %v3768 = vor.u32 %v3765, %v3766
      %v3769 = vsel %vm1091, %v3757, %v3768
      %v3771 = vshrl.u32 %v3249, 16
      %v3773 = vrot.slane %v3771, 7
      %v3775 = vshrl.u32 %v3250, 16
      %v3777 = vrot.slane %v3775, 7
      %v3778 = vshll.u32 %v3250, 16
      %v3780 = vor.u32 %v3777, %v3778
      %v3781 = vsel %vm1091, %v3773, %v3780
      %v3783 = vshrl.u32 %v3251, 16
      %v3785 = vrot.slane %v3783, 7
      %v3786 = vshll.u32 %v3251, 16
      %v3788 = vor.u32 %v3785, %v3786
      %v3789 = vsel %vm1091, %v3777, %v3788
      %v3791 = vshrl.u32 %v3252, 16
      %v3793 = vrot.slane %v3791, 7
      %v3795 = vshrl.u32 %v3253, 16
      %v3797 = vrot.slane %v3795, 7
      %v3798 = vshll.u32 %v3253, 16
      %v3800 = vor.u32 %v3797, %v3798
      %v3801 = vsel %vm1091, %v3793, %v3800
      %v3803 = vshrl.u32 %v3254, 16
      %v3805 = vrot.slane %v3803, 7
      %v3806 = vshll.u32 %v3254, 16
      %v3808 = vor.u32 %v3805, %v3806
      %v3809 = vsel %vm1091, %v3797, %v3808
      %v3811 = vshrl.u32 %v3255, 16
      %v3813 = vrot.slane %v3811, 7
      %v3815 = vshrl.u32 %v3256, 16
      %v3817 = vrot.slane %v3815, 7
      %v3818 = vshll.u32 %v3256, 16
      %v3820 = vor.u32 %v3817, %v3818
      %v3821 = vsel %vm1091, %v3813, %v3820
      %v3823 = vshrl.u32 %v3257, 16
      %v3825 = vrot.slane %v3823, 7
      %v3826 = vshll.u32 %v3257, 16
      %v3828 = vor.u32 %v3825, %v3826
      %v3829 = vsel %vm1091, %v3817, %v3828
      %v3831 = vshrl.u32 %v3258, 16
      %v3833 = vrot.slane %v3831, 7
      %v3835 = vshrl.u32 %v3259, 16
      %v3837 = vrot.slane %v3835, 7
      %v3838 = vshll.u32 %v3259, 16
      %v3840 = vor.u32 %v3837, %v3838
      %v3841 = vsel %vm1091, %v3833, %v3840
      %v3843 = vshrl.u32 %v3260, 16
      %v3845 = vrot.slane %v3843, 7
      %v3846 = vshll.u32 %v3260, 16
      %v3848 = vor.u32 %v3845, %v3846
      %v3849 = vsel %vm1091, %v3837, %v3848
      %v3851 = vshrl.u32 %v3261, 16
      %v3853 = vrot.slane %v3851, 7
      %v3855 = vshrl.u32 %v3262, 16
      %v3857 = vrot.slane %v3855, 7
      %v3858 = vshll.u32 %v3262, 16
      %v3860 = vor.u32 %v3857, %v3858
      %v3861 = vsel %vm1091, %v3853, %v3860
      %v3863 = vshrl.u32 %v3263, 16
      %v3865 = vrot.slane %v3863, 7
      %v3866 = vshll.u32 %v3263, 16
      %v3868 = vor.u32 %v3865, %v3866
      %v3869 = vsel %vm1091, %v3857, %v3868
      %v3871 = vshrl.u32 %v3264, 16
      %v3873 = vrot.slane %v3871, 7
      %v3875 = vshrl.u32 %v3265, 16
      %v3877 = vrot.slane %v3875, 7
      %v3878 = vshll.u32 %v3265, 16
      %v3880 = vor.u32 %v3877, %v3878
      %v3881 = vsel %vm1091, %v3873, %v3880
      %v3883 = vshrl.u32 %v3266, 16
      %v3885 = vrot.slane %v3883, 7
      %v3886 = vshll.u32 %v3266, 16
      %v3888 = vor.u32 %v3885, %v3886
      %v3889 = vsel %vm1091, %v3877, %v3888
      %v3891 = vshrl.u32 %v3267, 16
      %v3893 = vrot.slane %v3891, 7
      %v3895 = vshrl.u32 %v3268, 16
      %v3897 = vrot.slane %v3895, 7
      %v3898 = vshll.u32 %v3268, 16
      %v3900 = vor.u32 %v3897, %v3898
      %v3901 = vsel %vm1091, %v3893, %v3900
      %v3903 = vshrl.u32 %v3269, 16
      %v3905 = vrot.slane %v3903, 7
      %v3906 = vshll.u32 %v3269, 16
      %v3908 = vor.u32 %v3905, %v3906
      %v3909 = vsel %vm1091, %v3897, %v3908
      %v3910 = vld [vmem:[%s3173 + $0x18] sm:$0x1]
      %v3911 = vld [vmem:[%s3173 + $0x38] sm:$0x1]
      %v3912 = vld [vmem:[%s3173 + $0x58] sm:$0x1]
      %v3913 = vld [vmem:[%s3173 + $0x78] sm:$0x1]
      %v3914 = vld [vmem:[%s3173 + $0x98] sm:$0x1]
      %v3915 = vld [vmem:[%s3173 + $0xb8] sm:$0x1]
      %v3916 = vld [vmem:[%s3173 + $0xd8] sm:$0x1]
      %v3917 = vld [vmem:[%s3173 + $0xf8] sm:$0x1]
      %v3918 = vld [vmem:[%s3173 + $0x118] sm:$0x1]
      %v3919 = vld [vmem:[%s3173 + $0x138] sm:$0x1]
      %v3920 = vld [vmem:[%s3173 + $0x158] sm:$0x1]
      %v3921 = vld [vmem:[%s3173 + $0x178] sm:$0x1]
      %v3922 = vld [vmem:[%s3173 + $0x198] sm:$0x1]
      %v3923 = vld [vmem:[%s3173 + $0x1b8] sm:$0x1]
      %v3924 = vld [vmem:[%s3173 + $0x1d8] sm:$0x1]
      %v3925 = vld [vmem:[%s3173 + $0x1f8] sm:$0x1]
      %v3926 = vld [vmem:[%s3173 + $0x218] sm:$0x1]
      %v3927 = vld [vmem:[%s3173 + $0x238] sm:$0x1]
      %v3928 = vld [vmem:[%s3173 + $0x258] sm:$0x1]
      %v3929 = vld [vmem:[%s3173 + $0x278] sm:$0x1]
      %v3930 = vld [vmem:[%s3173 + $0x298] sm:$0x1]
      %v3931 = vld [vmem:[%s3173 + $0x2b8] sm:$0x1]
      %v3932 = vld [vmem:[%s3173 + $0x2d8] sm:$0x1]
      %v3933 = vld [vmem:[%s3173 + $0x2f8] sm:$0x1]
      %v3934 = vld [vmem:[%s3173 + $0x318] sm:$0x1]
      %v3935 = vld [vmem:[%s3173 + $0x338] sm:$0x1]
      %v3936 = vld [vmem:[%s3173 + $0x358] sm:$0x1]
      %v3937 = vld [vmem:[%s3173 + $0x378] sm:$0x1]
      %v3938 = vld [vmem:[%s3173 + $0x398] sm:$0x1]
      %v3939 = vld [vmem:[%s3173 + $0x3b8] sm:$0x1]
      %v3940 = vld [vmem:[%s3173 + $0x3d8] sm:$0x1]
      %v3941 = vld [vmem:[%s3173 + $0x3f8] sm:$0x1]
      %v3942 = vrot.slane %v3278, 1
      %v3943 = vor.u32 %v3275, %v3942
      %v3944 = vrot.slane %v3286, 1
      %v3945 = vsel %vm1764, %v3943, %v3944
      %v3946 = vor.u32 %v3283, %v3944
      %v3948 = vshll.u32 %v3910, 16
      %v3950 = vrot.slane %v3948, 1
      %v3951 = vsel %vm1764, %v3946, %v3950
      %v3952 = vrot.slane %v3298, 1
      %v3953 = vor.u32 %v3295, %v3952
      %v3954 = vrot.slane %v3306, 1
      %v3955 = vsel %vm1764, %v3953, %v3954
      %v3956 = vor.u32 %v3303, %v3954
      %v3958 = vshll.u32 %v3911, 16
      %v3960 = vrot.slane %v3958, 1
      %v3961 = vsel %vm1764, %v3956, %v3960
      %v3962 = vrot.slane %v3318, 1
      %v3963 = vor.u32 %v3315, %v3962
      %v3964 = vrot.slane %v3326, 1
      %v3965 = vsel %vm1764, %v3963, %v3964
      %v3966 = vor.u32 %v3323, %v3964
      %v3968 = vshll.u32 %v3912, 16
      %v3970 = vrot.slane %v3968, 1
      %v3971 = vsel %vm1764, %v3966, %v3970
      %v3972 = vrot.slane %v3338, 1
      %v3973 = vor.u32 %v3335, %v3972
      %v3974 = vrot.slane %v3346, 1
      %v3975 = vsel %vm1764, %v3973, %v3974
      %v3976 = vor.u32 %v3343, %v3974
      %v3978 = vshll.u32 %v3913, 16
      %v3980 = vrot.slane %v3978, 1
      %v3981 = vsel %vm1764, %v3976, %v3980
      %v3982 = vrot.slane %v3358, 1
      %v3983 = vor.u32 %v3355, %v3982
      %v3984 = vrot.slane %v3366, 1
      %v3985 = vsel %vm1764, %v3983, %v3984
      %v3986 = vor.u32 %v3363, %v3984
      %v3988 = vshll.u32 %v3914, 16
      %v3990 = vrot.slane %v3988, 1
      %v3991 = vsel %vm1764, %v3986, %v3990
      %v3992 = vrot.slane %v3378, 1
      %v3993 = vor.u32 %v3375, %v3992
      %v3994 = vrot.slane %v3386, 1
      %v3995 = vsel %vm1764, %v3993, %v3994
      %v3996 = vor.u32 %v3383, %v3994
      %v3998 = vshll.u32 %v3915, 16
      %v4000 = vrot.slane %v3998, 1
      %v4001 = vsel %vm1764, %v3996, %v4000
      %v4002 = vrot.slane %v3398, 1
      %v4003 = vor.u32 %v3395, %v4002
      %v4004 = vrot.slane %v3406, 1
      %v4005 = vsel %vm1764, %v4003, %v4004
      %v4006 = vor.u32 %v3403, %v4004
      %v4008 = vshll.u32 %v3916, 16
      %v4010 = vrot.slane %v4008, 1
      %v4011 = vsel %vm1764, %v4006, %v4010
      %v4012 = vrot.slane %v3418, 1
      %v4013 = vor.u32 %v3415, %v4012
      %v4014 = vrot.slane %v3426, 1
      %v4015 = vsel %vm1764, %v4013, %v4014
      %v4016 = vor.u32 %v3423, %v4014
      %v4018 = vshll.u32 %v3917, 16
      %v4020 = vrot.slane %v4018, 1
      %v4021 = vsel %vm1764, %v4016, %v4020
      %v4022 = vrot.slane %v3438, 1
      %v4023 = vor.u32 %v3435, %v4022
      %v4024 = vrot.slane %v3446, 1
      %v4025 = vsel %vm1764, %v4023, %v4024
      %v4026 = vor.u32 %v3443, %v4024
      %v4028 = vshll.u32 %v3918, 16
      %v4030 = vrot.slane %v4028, 1
      %v4031 = vsel %vm1764, %v4026, %v4030
      %v4032 = vrot.slane %v3458, 1
      %v4033 = vor.u32 %v3455, %v4032
      %v4034 = vrot.slane %v3466, 1
      %v4035 = vsel %vm1764, %v4033, %v4034
      %v4036 = vor.u32 %v3463, %v4034
      %v4038 = vshll.u32 %v3919, 16
      %v4040 = vrot.slane %v4038, 1
      %v4041 = vsel %vm1764, %v4036, %v4040
      %v4042 = vrot.slane %v3478, 1
      %v4043 = vor.u32 %v3475, %v4042
      %v4044 = vrot.slane %v3486, 1
      %v4045 = vsel %vm1764, %v4043, %v4044
      %v4046 = vor.u32 %v3483, %v4044
      %v4048 = vshll.u32 %v3920, 16
      %v4050 = vrot.slane %v4048, 1
      %v4051 = vsel %vm1764, %v4046, %v4050
      %v4052 = vrot.slane %v3498, 1
      %v4053 = vor.u32 %v3495, %v4052
      %v4054 = vrot.slane %v3506, 1
      %v4055 = vsel %vm1764, %v4053, %v4054
      %v4056 = vor.u32 %v3503, %v4054
      %v4058 = vshll.u32 %v3921, 16
      %v4060 = vrot.slane %v4058, 1
      %v4061 = vsel %vm1764, %v4056, %v4060
      %v4062 = vrot.slane %v3518, 1
      %v4063 = vor.u32 %v3515, %v4062
      %v4064 = vrot.slane %v3526, 1
      %v4065 = vsel %vm1764, %v4063, %v4064
      %v4066 = vor.u32 %v3523, %v4064
      %v4068 = vshll.u32 %v3922, 16
      %v4070 = vrot.slane %v4068, 1
      %v4071 = vsel %vm1764, %v4066, %v4070
      %v4072 = vrot.slane %v3538, 1
      %v4073 = vor.u32 %v3535, %v4072
      %v4074 = vrot.slane %v3546, 1
      %v4075 = vsel %vm1764, %v4073, %v4074
      %v4076 = vor.u32 %v3543, %v4074
      %v4078 = vshll.u32 %v3923, 16
      %v4080 = vrot.slane %v4078, 1
      %v4081 = vsel %vm1764, %v4076, %v4080
      %v4082 = vrot.slane %v3558, 1
      %v4083 = vor.u32 %v3555, %v4082
      %v4084 = vrot.slane %v3566, 1
      %v4085 = vsel %vm1764, %v4083, %v4084
      %v4086 = vor.u32 %v3563, %v4084
      %v4088 = vshll.u32 %v3924, 16
      %v4090 = vrot.slane %v4088, 1
      %v4091 = vsel %vm1764, %v4086, %v4090
      %v4092 = vrot.slane %v3578, 1
      %v4093 = vor.u32 %v3575, %v4092
      %v4094 = vrot.slane %v3586, 1
      %v4095 = vsel %vm1764, %v4093, %v4094
      %v4096 = vor.u32 %v3583, %v4094
      %v4098 = vshll.u32 %v3925, 16
      %v4100 = vrot.slane %v4098, 1
      %v4101 = vsel %vm1764, %v4096, %v4100
      %v4102 = vrot.slane %v3598, 1
      %v4103 = vor.u32 %v3595, %v4102
      %v4104 = vrot.slane %v3606, 1
      %v4105 = vsel %vm1764, %v4103, %v4104
      %v4106 = vor.u32 %v3603, %v4104
      %v4108 = vshll.u32 %v3926, 16
      %v4110 = vrot.slane %v4108, 1
      %v4111 = vsel %vm1764, %v4106, %v4110
      %v4112 = vrot.slane %v3618, 1
      %v4113 = vor.u32 %v3615, %v4112
      %v4114 = vrot.slane %v3626, 1
      %v4115 = vsel %vm1764, %v4113, %v4114
      %v4116 = vor.u32 %v3623, %v4114
      %v4118 = vshll.u32 %v3927, 16
      %v4120 = vrot.slane %v4118, 1
      %v4121 = vsel %vm1764, %v4116, %v4120
      %v4122 = vrot.slane %v3638, 1
      %v4123 = vor.u32 %v3635, %v4122
      %v4124 = vrot.slane %v3646, 1
      %v4125 = vsel %vm1764, %v4123, %v4124
      %v4126 = vor.u32 %v3643, %v4124
      %v4128 = vshll.u32 %v3928, 16
      %v4130 = vrot.slane %v4128, 1
      %v4131 = vsel %vm1764, %v4126, %v4130
      %v4132 = vrot.slane %v3658, 1
      %v4133 = vor.u32 %v3655, %v4132
      %v4134 = vrot.slane %v3666, 1
      %v4135 = vsel %vm1764, %v4133, %v4134
      %v4136 = vor.u32 %v3663, %v4134
      %v4138 = vshll.u32 %v3929, 16
      %v4140 = vrot.slane %v4138, 1
      %v4141 = vsel %vm1764, %v4136, %v4140
      %v4142 = vrot.slane %v3678, 1
      %v4143 = vor.u32 %v3675, %v4142
      %v4144 = vrot.slane %v3686, 1
      %v4145 = vsel %vm1764, %v4143, %v4144
      %v4146 = vor.u32 %v3683, %v4144
      %v4148 = vshll.u32 %v3930, 16
      %v4150 = vrot.slane %v4148, 1
      %v4151 = vsel %vm1764, %v4146, %v4150
      %v4152 = vrot.slane %v3698, 1
      %v4153 = vor.u32 %v3695, %v4152
      %v4154 = vrot.slane %v3706, 1
      %v4155 = vsel %vm1764, %v4153, %v4154
      %v4156 = vor.u32 %v3703, %v4154
      %v4158 = vshll.u32 %v3931, 16
      %v4160 = vrot.slane %v4158, 1
      %v4161 = vsel %vm1764, %v4156, %v4160
      %v4162 = vrot.slane %v3718, 1
      %v4163 = vor.u32 %v3715, %v4162
      %v4164 = vrot.slane %v3726, 1
      %v4165 = vsel %vm1764, %v4163, %v4164
      %v4166 = vor.u32 %v3723, %v4164
      %v4168 = vshll.u32 %v3932, 16
      %v4170 = vrot.slane %v4168, 1
      %v4171 = vsel %vm1764, %v4166, %v4170
      %v4172 = vrot.slane %v3738, 1
      %v4173 = vor.u32 %v3735, %v4172
      %v4174 = vrot.slane %v3746, 1
      %v4175 = vsel %vm1764, %v4173, %v4174
      %v4176 = vor.u32 %v3743, %v4174
      %v4178 = vshll.u32 %v3933, 16
      %v4180 = vrot.slane %v4178, 1
      %v4181 = vsel %vm1764, %v4176, %v4180
      %v4182 = vrot.slane %v3758, 1
      %v4183 = vor.u32 %v3755, %v4182
      %v4184 = vrot.slane %v3766, 1
      %v4185 = vsel %vm1764, %v4183, %v4184
      %v4186 = vor.u32 %v3763, %v4184
      %v4188 = vshll.u32 %v3934, 16
      %v4190 = vrot.slane %v4188, 1
      %v4191 = vsel %vm1764, %v4186, %v4190
      %v4192 = vrot.slane %v3778, 1
      %v4193 = vor.u32 %v3775, %v4192
      %v4194 = vrot.slane %v3786, 1
      %v4195 = vsel %vm1764, %v4193, %v4194
      %v4196 = vor.u32 %v3783, %v4194
      %v4198 = vshll.u32 %v3935, 16
      %v4200 = vrot.slane %v4198, 1
      %v4201 = vsel %vm1764, %v4196, %v4200
      %v4202 = vrot.slane %v3798, 1
      %v4203 = vor.u32 %v3795, %v4202
      %v4204 = vrot.slane %v3806, 1
      %v4205 = vsel %vm1764, %v4203, %v4204
      %v4206 = vor.u32 %v3803, %v4204
      %v4208 = vshll.u32 %v3936, 16
      %v4210 = vrot.slane %v4208, 1
      %v4211 = vsel %vm1764, %v4206, %v4210
      %v4212 = vrot.slane %v3818, 1
      %v4213 = vor.u32 %v3815, %v4212
      %v4214 = vrot.slane %v3826, 1
      %v4215 = vsel %vm1764, %v4213, %v4214
      %v4216 = vor.u32 %v3823, %v4214
      %v4218 = vshll.u32 %v3937, 16
      %v4220 = vrot.slane %v4218, 1
      %v4221 = vsel %vm1764, %v4216, %v4220
      %v4222 = vrot.slane %v3838, 1
      %v4223 = vor.u32 %v3835, %v4222
      %v4224 = vrot.slane %v3846, 1
      %v4225 = vsel %vm1764, %v4223, %v4224
      %v4226 = vor.u32 %v3843, %v4224
      %v4228 = vshll.u32 %v3938, 16
      %v4230 = vrot.slane %v4228, 1
      %v4231 = vsel %vm1764, %v4226, %v4230
      %v4232 = vrot.slane %v3858, 1
      %v4233 = vor.u32 %v3855, %v4232
      %v4234 = vrot.slane %v3866, 1
      %v4235 = vsel %vm1764, %v4233, %v4234
      %v4236 = vor.u32 %v3863, %v4234
      %v4238 = vshll.u32 %v3939, 16
      %v4240 = vrot.slane %v4238, 1
      %v4241 = vsel %vm1764, %v4236, %v4240
      %v4242 = vrot.slane %v3878, 1
      %v4243 = vor.u32 %v3875, %v4242
      %v4244 = vrot.slane %v3886, 1
      %v4245 = vsel %vm1764, %v4243, %v4244
      %v4246 = vor.u32 %v3883, %v4244
      %v4248 = vshll.u32 %v3940, 16
      %v4250 = vrot.slane %v4248, 1
      %v4251 = vsel %vm1764, %v4246, %v4250
      %v4252 = vrot.slane %v3898, 1
      %v4253 = vor.u32 %v3895, %v4252
      %v4254 = vrot.slane %v3906, 1
      %v4255 = vsel %vm1764, %v4253, %v4254
      %v4256 = vor.u32 %v3903, %v4254
      %v4258 = vshll.u32 %v3941, 16
      %v4260 = vrot.slane %v4258, 1
      %v4261 = vsel %vm1764, %v4256, %v4260
      %4326 = vrot.lane.b32.xlu0 %v996, 4
      %v4327 = vpop.permute.xlu0 %4326
      %4328 = vrot.lane.b32.xlu0 %v997, 4
      %v4329 = vpop.permute.xlu0 %4328
      %4330 = vrot.lane.b32.xlu0 %v999, 4
      %v4331 = vpop.permute.xlu0 %4330
      %4332 = vrot.lane.b32.xlu0 %v1000, 4
      %v4333 = vpop.permute.xlu0 %4332
      %4334 = vrot.lane.b32.xlu0 %v1002, 4
      %v4335 = vpop.permute.xlu0 %4334
      %4336 = vrot.lane.b32.xlu0 %v1003, 4
      %v4337 = vpop.permute.xlu0 %4336
      %4338 = vrot.lane.b32.xlu0 %v1005, 4
      %v4339 = vpop.permute.xlu0 %4338
      %4340 = vrot.lane.b32.xlu0 %v1006, 4
      %v4341 = vpop.permute.xlu0 %4340
      %4342 = vrot.lane.b32.xlu0 %v1008, 4
      %v4343 = vpop.permute.xlu0 %4342
      %4344 = vrot.lane.b32.xlu0 %v1009, 4
      %v4345 = vpop.permute.xlu0 %4344
      %4346 = vrot.lane.b32.xlu0 %v1011, 4
      %v4347 = vpop.permute.xlu0 %4346
      %4348 = vrot.lane.b32.xlu0 %v1012, 4
      %v4349 = vpop.permute.xlu0 %4348
      %4350 = vrot.lane.b32.xlu0 %v1014, 4
      %v4351 = vpop.permute.xlu0 %4350
      %4352 = vrot.lane.b32.xlu0 %v1015, 4
      %v4353 = vpop.permute.xlu0 %4352
      %4354 = vrot.lane.b32.xlu0 %v1017, 4
      %v4355 = vpop.permute.xlu0 %4354
      %4356 = vrot.lane.b32.xlu0 %v1018, 4
      %v4357 = vpop.permute.xlu0 %4356
      %4358 = vrot.lane.b32.xlu0 %v1020, 4
      %v4359 = vpop.permute.xlu0 %4358
      %4360 = vrot.lane.b32.xlu0 %v1021, 4
      %v4361 = vpop.permute.xlu0 %4360
      %4362 = vrot.lane.b32.xlu0 %v1023, 4
      %v4363 = vpop.permute.xlu0 %4362
      %4364 = vrot.lane.b32.xlu0 %v1024, 4
      %v4365 = vpop.permute.xlu0 %4364
      %4366 = vrot.lane.b32.xlu0 %v1026, 4
      %v4367 = vpop.permute.xlu0 %4366
      %4368 = vrot.lane.b32.xlu0 %v1027, 4
      %v4369 = vpop.permute.xlu0 %4368
      %4370 = vrot.lane.b32.xlu0 %v1029, 4
      %v4371 = vpop.permute.xlu0 %4370
      %4372 = vrot.lane.b32.xlu0 %v1030, 4
      %v4373 = vpop.permute.xlu0 %4372
      %4374 = vrot.lane.b32.xlu0 %v1032, 4
      %v4375 = vpop.permute.xlu0 %4374
      %4376 = vrot.lane.b32.xlu0 %v1033, 4
      %v4377 = vpop.permute.xlu0 %4376
      %4378 = vrot.lane.b32.xlu0 %v1035, 4
      %v4379 = vpop.permute.xlu0 %4378
      %4380 = vrot.lane.b32.xlu0 %v1036, 4
      %v4381 = vpop.permute.xlu0 %4380
      %4382 = vrot.lane.b32.xlu0 %v1038, 4
      %v4383 = vpop.permute.xlu0 %4382
      %4384 = vrot.lane.b32.xlu0 %v1039, 4
      %v4385 = vpop.permute.xlu0 %4384
      %4386 = vrot.lane.b32.xlu0 %v1041, 4
      %v4387 = vpop.permute.xlu0 %4386
      %4388 = vrot.lane.b32.xlu0 %v1042, 4
      %v4389 = vpop.permute.xlu0 %4388
      %4390 = vrot.lane.b32.xlu0 %v1044, 4
      %v4391 = vpop.permute.xlu0 %4390
      %4392 = vrot.lane.b32.xlu0 %v1045, 4
      %v4393 = vpop.permute.xlu0 %4392
      %4394 = vrot.lane.b32.xlu0 %v1047, 4
      %v4395 = vpop.permute.xlu0 %4394
      %4396 = vrot.lane.b32.xlu0 %v1048, 4
      %v4397 = vpop.permute.xlu0 %4396
      %4398 = vrot.lane.b32.xlu0 %v1050, 4
      %v4399 = vpop.permute.xlu0 %4398
      %4400 = vrot.lane.b32.xlu0 %v1051, 4
      %v4401 = vpop.permute.xlu0 %4400
      %4402 = vrot.lane.b32.xlu0 %v1053, 4
      %v4403 = vpop.permute.xlu0 %4402
      %4404 = vrot.lane.b32.xlu0 %v1054, 4
      %v4405 = vpop.permute.xlu0 %4404
      %4406 = vrot.lane.b32.xlu0 %v1056, 4
      %v4407 = vpop.permute.xlu0 %4406
      %4408 = vrot.lane.b32.xlu0 %v1057, 4
      %v4409 = vpop.permute.xlu0 %4408
      %4410 = vrot.lane.b32.xlu0 %v1059, 4
      %v4411 = vpop.permute.xlu0 %4410
      %4412 = vrot.lane.b32.xlu0 %v1060, 4
      %v4413 = vpop.permute.xlu0 %4412
      %4414 = vrot.lane.b32.xlu0 %v1062, 4
      %v4415 = vpop.permute.xlu0 %4414
      %4416 = vrot.lane.b32.xlu0 %v1063, 4
      %v4417 = vpop.permute.xlu0 %4416
      %4418 = vrot.lane.b32.xlu0 %v1065, 4
      %v4419 = vpop.permute.xlu0 %4418
      %4420 = vrot.lane.b32.xlu0 %v1066, 4
      %v4421 = vpop.permute.xlu0 %4420
      %4422 = vrot.lane.b32.xlu0 %v1068, 4
      %v4423 = vpop.permute.xlu0 %4422
      %4424 = vrot.lane.b32.xlu0 %v1069, 4
      %v4425 = vpop.permute.xlu0 %4424
      %4426 = vrot.lane.b32.xlu0 %v1071, 4
      %v4427 = vpop.permute.xlu0 %4426
      %4428 = vrot.lane.b32.xlu0 %v1072, 4
      %v4429 = vpop.permute.xlu0 %4428
      %4430 = vrot.lane.b32.xlu0 %v1074, 4
      %v4431 = vpop.permute.xlu0 %4430
      %4432 = vrot.lane.b32.xlu0 %v1075, 4
      %v4433 = vpop.permute.xlu0 %4432
      %4434 = vrot.lane.b32.xlu0 %v1077, 4
      %v4435 = vpop.permute.xlu0 %4434
      %4436 = vrot.lane.b32.xlu0 %v1078, 4
      %v4437 = vpop.permute.xlu0 %4436
      %4438 = vrot.lane.b32.xlu0 %v1080, 4
      %v4439 = vpop.permute.xlu0 %4438
      %4440 = vrot.lane.b32.xlu0 %v1081, 4
      %v4441 = vpop.permute.xlu0 %4440
      %4442 = vrot.lane.b32.xlu0 %v1083, 4
      %v4443 = vpop.permute.xlu0 %4442
      %4444 = vrot.lane.b32.xlu0 %v1084, 4
      %v4445 = vpop.permute.xlu0 %4444
      %4446 = vrot.lane.b32.xlu0 %v1086, 4
      %v4447 = vpop.permute.xlu0 %4446
      %4448 = vrot.lane.b32.xlu0 %v1087, 4
      %v4449 = vpop.permute.xlu0 %4448
      %4450 = vrot.lane.b32.xlu0 %v1089, 4
      %v4451 = vpop.permute.xlu0 %4450
      %4452 = vrot.lane.b32.xlu0 %v1090, 4
      %v4453 = vpop.permute.xlu0 %4452
      %4454 = vrot.lane.b32.xlu0 %v1768, 8
      %v4455 = vpop.permute.xlu0 %4454
      %4456 = vrot.lane.b32.xlu0 %v1774, 8
      %v4457 = vpop.permute.xlu0 %4456
      %4458 = vrot.lane.b32.xlu0 %v1778, 8
      %v4459 = vpop.permute.xlu0 %4458
      %4460 = vrot.lane.b32.xlu0 %v1784, 8
      %v4461 = vpop.permute.xlu0 %4460
      %4462 = vrot.lane.b32.xlu0 %v1788, 8
      %v4463 = vpop.permute.xlu0 %4462
      %4464 = vrot.lane.b32.xlu0 %v1794, 8
      %v4465 = vpop.permute.xlu0 %4464
      %4466 = vrot.lane.b32.xlu0 %v1798, 8
      %v4467 = vpop.permute.xlu0 %4466
      %4468 = vrot.lane.b32.xlu0 %v1804, 8
      %v4469 = vpop.permute.xlu0 %4468
      %4470 = vrot.lane.b32.xlu0 %v1808, 8
      %v4471 = vpop.permute.xlu0 %4470
      %4472 = vrot.lane.b32.xlu0 %v1814, 8
      %v4473 = vpop.permute.xlu0 %4472
      %4474 = vrot.lane.b32.xlu0 %v1818, 8
      %v4475 = vpop.permute.xlu0 %4474
      %4476 = vrot.lane.b32.xlu0 %v1824, 8
      %v4477 = vpop.permute.xlu0 %4476
      %4478 = vrot.lane.b32.xlu0 %v1828, 8
      %v4479 = vpop.permute.xlu0 %4478
      %4480 = vrot.lane.b32.xlu0 %v1834, 8
      %v4481 = vpop.permute.xlu0 %4480
      %4482 = vrot.lane.b32.xlu0 %v1838, 8
      %v4483 = vpop.permute.xlu0 %4482
      %4484 = vrot.lane.b32.xlu0 %v1844, 8
      %v4485 = vpop.permute.xlu0 %4484
      %4486 = vrot.lane.b32.xlu0 %v1848, 8
      %v4487 = vpop.permute.xlu0 %4486
      %4488 = vrot.lane.b32.xlu0 %v1854, 8
      %v4489 = vpop.permute.xlu0 %4488
      %4490 = vrot.lane.b32.xlu0 %v1858, 8
      %v4491 = vpop.permute.xlu0 %4490
      %4492 = vrot.lane.b32.xlu0 %v1864, 8
      %v4493 = vpop.permute.xlu0 %4492
      %4494 = vrot.lane.b32.xlu0 %v1868, 8
      %v4495 = vpop.permute.xlu0 %4494
      %4496 = vrot.lane.b32.xlu0 %v1874, 8
      %v4497 = vpop.permute.xlu0 %4496
      %4498 = vrot.lane.b32.xlu0 %v1878, 8
      %v4499 = vpop.permute.xlu0 %4498
      %4500 = vrot.lane.b32.xlu0 %v1884, 8
      %v4501 = vpop.permute.xlu0 %4500
      %4502 = vrot.lane.b32.xlu0 %v1888, 8
      %v4503 = vpop.permute.xlu0 %4502
      %4504 = vrot.lane.b32.xlu0 %v1894, 8
      %v4505 = vpop.permute.xlu0 %4504
      %4506 = vrot.lane.b32.xlu0 %v1898, 8
      %v4507 = vpop.permute.xlu0 %4506
      %4508 = vrot.lane.b32.xlu0 %v1904, 8
      %v4509 = vpop.permute.xlu0 %4508
      %4510 = vrot.lane.b32.xlu0 %v1908, 8
      %v4511 = vpop.permute.xlu0 %4510
      %4512 = vrot.lane.b32.xlu0 %v1914, 8
      %v4513 = vpop.permute.xlu0 %4512
      %4514 = vrot.lane.b32.xlu0 %v1918, 8
      %v4515 = vpop.permute.xlu0 %4514
      %4516 = vrot.lane.b32.xlu0 %v1924, 8
      %v4517 = vpop.permute.xlu0 %4516
      %4518 = vrot.lane.b32.xlu0 %v1928, 8
      %v4519 = vpop.permute.xlu0 %4518
      %4520 = vrot.lane.b32.xlu0 %v1934, 8
      %v4521 = vpop.permute.xlu0 %4520
      %4522 = vrot.lane.b32.xlu0 %v1938, 8
      %v4523 = vpop.permute.xlu0 %4522
      %4524 = vrot.lane.b32.xlu0 %v1944, 8
      %v4525 = vpop.permute.xlu0 %4524
      %4526 = vrot.lane.b32.xlu0 %v1948, 8
      %v4527 = vpop.permute.xlu0 %4526
      %4528 = vrot.lane.b32.xlu0 %v1954, 8
      %v4529 = vpop.permute.xlu0 %4528
      %4530 = vrot.lane.b32.xlu0 %v1958, 8
      %v4531 = vpop.permute.xlu0 %4530
      %4532 = vrot.lane.b32.xlu0 %v1964, 8
      %v4533 = vpop.permute.xlu0 %4532
      %4534 = vrot.lane.b32.xlu0 %v1968, 8
      %v4535 = vpop.permute.xlu0 %4534
      %4536 = vrot.lane.b32.xlu0 %v1974, 8
      %v4537 = vpop.permute.xlu0 %4536
      %4538 = vrot.lane.b32.xlu0 %v1978, 8
      %v4539 = vpop.permute.xlu0 %4538
      %4540 = vrot.lane.b32.xlu0 %v1984, 8
      %v4541 = vpop.permute.xlu0 %4540
      %4542 = vrot.lane.b32.xlu0 %v1988, 8
      %v4543 = vpop.permute.xlu0 %4542
      %4544 = vrot.lane.b32.xlu0 %v1994, 8
      %v4545 = vpop.permute.xlu0 %4544
      %4546 = vrot.lane.b32.xlu0 %v1998, 8
      %v4547 = vpop.permute.xlu0 %4546
      %4548 = vrot.lane.b32.xlu0 %v2004, 8
      %v4549 = vpop.permute.xlu0 %4548
      %4550 = vrot.lane.b32.xlu0 %v2008, 8
      %v4551 = vpop.permute.xlu0 %4550
      %4552 = vrot.lane.b32.xlu0 %v2014, 8
      %v4553 = vpop.permute.xlu0 %4552
      %4554 = vrot.lane.b32.xlu0 %v2018, 8
      %v4555 = vpop.permute.xlu0 %4554
      %4556 = vrot.lane.b32.xlu0 %v2024, 8
      %v4557 = vpop.permute.xlu0 %4556
      %4558 = vrot.lane.b32.xlu0 %v2028, 8
      %v4559 = vpop.permute.xlu0 %4558
      %4560 = vrot.lane.b32.xlu0 %v2034, 8
      %v4561 = vpop.permute.xlu0 %4560
      %4562 = vrot.lane.b32.xlu0 %v2038, 8
      %v4563 = vpop.permute.xlu0 %4562
      %4564 = vrot.lane.b32.xlu0 %v2044, 8
      %v4565 = vpop.permute.xlu0 %4564
      %4566 = vrot.lane.b32.xlu0 %v2048, 8
      %v4567 = vpop.permute.xlu0 %4566
      %4568 = vrot.lane.b32.xlu0 %v2054, 8
      %v4569 = vpop.permute.xlu0 %4568
      %4570 = vrot.lane.b32.xlu0 %v2058, 8
      %v4571 = vpop.permute.xlu0 %4570
      %4572 = vrot.lane.b32.xlu0 %v2064, 8
      %v4573 = vpop.permute.xlu0 %4572
      %4574 = vrot.lane.b32.xlu0 %v2068, 8
      %v4575 = vpop.permute.xlu0 %4574
      %4576 = vrot.lane.b32.xlu0 %v2074, 8
      %v4577 = vpop.permute.xlu0 %4576
      %4578 = vrot.lane.b32.xlu0 %v2078, 8
      %v4579 = vpop.permute.xlu0 %4578
      %4580 = vrot.lane.b32.xlu0 %v2084, 8
      %v4581 = vpop.permute.xlu0 %4580
      %4582 = vrot.lane.b32.xlu0 %v2192, 12
      %v4583 = vpop.permute.xlu0 %4582
      %4584 = vrot.lane.b32.xlu0 %v2200, 12
      %v4585 = vpop.permute.xlu0 %4584
      %4586 = vrot.lane.b32.xlu0 %v2212, 12
      %v4587 = vpop.permute.xlu0 %4586
      %4588 = vrot.lane.b32.xlu0 %v2220, 12
      %v4589 = vpop.permute.xlu0 %4588
      %4590 = vrot.lane.b32.xlu0 %v2232, 12
      %v4591 = vpop.permute.xlu0 %4590
      %4592 = vrot.lane.b32.xlu0 %v2240, 12
      %v4593 = vpop.permute.xlu0 %4592
      %4594 = vrot.lane.b32.xlu0 %v2252, 12
      %v4595 = vpop.permute.xlu0 %4594
      %4596 = vrot.lane.b32.xlu0 %v2260, 12
      %v4597 = vpop.permute.xlu0 %4596
      %4598 = vrot.lane.b32.xlu0 %v2272, 12
      %v4599 = vpop.permute.xlu0 %4598
      %4600 = vrot.lane.b32.xlu0 %v2280, 12
      %v4601 = vpop.permute.xlu0 %4600
      %4602 = vrot.lane.b32.xlu0 %v2292, 12
      %v4603 = vpop.permute.xlu0 %4602
      %4604 = vrot.lane.b32.xlu0 %v2300, 12
      %v4605 = vpop.permute.xlu0 %4604
      %4606 = vrot.lane.b32.xlu0 %v2312, 12
      %v4607 = vpop.permute.xlu0 %4606
      %4608 = vrot.lane.b32.xlu0 %v2320, 12
      %v4609 = vpop.permute.xlu0 %4608
      %4610 = vrot.lane.b32.xlu0 %v2332, 12
      %v4611 = vpop.permute.xlu0 %4610
      %4612 = vrot.lane.b32.xlu0 %v2340, 12
      %v4613 = vpop.permute.xlu0 %4612
      %4614 = vrot.lane.b32.xlu0 %v2352, 12
      %v4615 = vpop.permute.xlu0 %4614
      %4616 = vrot.lane.b32.xlu0 %v2360, 12
      %v4617 = vpop.permute.xlu0 %4616
      %4618 = vrot.lane.b32.xlu0 %v2372, 12
      %v4619 = vpop.permute.xlu0 %4618
      %4620 = vrot.lane.b32.xlu0 %v2380, 12
      %v4621 = vpop.permute.xlu0 %4620
      %4622 = vrot.lane.b32.xlu0 %v2392, 12
      %v4623 = vpop.permute.xlu0 %4622
      %4624 = vrot.lane.b32.xlu0 %v2400, 12
      %v4625 = vpop.permute.xlu0 %4624
      %4626 = vrot.lane.b32.xlu0 %v2412, 12
      %v4627 = vpop.permute.xlu0 %4626
      %4628 = vrot.lane.b32.xlu0 %v2420, 12
      %v4629 = vpop.permute.xlu0 %4628
      %4630 = vrot.lane.b32.xlu0 %v2432, 12
      %v4631 = vpop.permute.xlu0 %4630
      %4632 = vrot.lane.b32.xlu0 %v2440, 12
      %v4633 = vpop.permute.xlu0 %4632
      %4634 = vrot.lane.b32.xlu0 %v2452, 12
      %v4635 = vpop.permute.xlu0 %4634
      %4636 = vrot.lane.b32.xlu0 %v2460, 12
      %v4637 = vpop.permute.xlu0 %4636
      %4638 = vrot.lane.b32.xlu0 %v2472, 12
      %v4639 = vpop.permute.xlu0 %4638
      %4640 = vrot.lane.b32.xlu0 %v2480, 12
      %v4641 = vpop.permute.xlu0 %4640
      %4642 = vrot.lane.b32.xlu0 %v2492, 12
      %v4643 = vpop.permute.xlu0 %4642
      %4644 = vrot.lane.b32.xlu0 %v2500, 12
      %v4645 = vpop.permute.xlu0 %4644
      %4646 = vrot.lane.b32.xlu0 %v2512, 12
      %v4647 = vpop.permute.xlu0 %4646
      %4648 = vrot.lane.b32.xlu0 %v2520, 12
      %v4649 = vpop.permute.xlu0 %4648
      %4650 = vrot.lane.b32.xlu0 %v2532, 12
      %v4651 = vpop.permute.xlu0 %4650
      %4652 = vrot.lane.b32.xlu0 %v2540, 12
      %v4653 = vpop.permute.xlu0 %4652
      %4654 = vrot.lane.b32.xlu0 %v2552, 12
      %v4655 = vpop.permute.xlu0 %4654
      %4656 = vrot.lane.b32.xlu0 %v2560, 12
      %v4657 = vpop.permute.xlu0 %4656
      %4658 = vrot.lane.b32.xlu0 %v2572, 12
      %v4659 = vpop.permute.xlu0 %4658
      %4660 = vrot.lane.b32.xlu0 %v2580, 12
      %v4661 = vpop.permute.xlu0 %4660
      %4662 = vrot.lane.b32.xlu0 %v2592, 12
      %v4663 = vpop.permute.xlu0 %4662
      %4664 = vrot.lane.b32.xlu0 %v2600, 12
      %v4665 = vpop.permute.xlu0 %4664
      %4666 = vrot.lane.b32.xlu0 %v2612, 12
      %v4667 = vpop.permute.xlu0 %4666
      %4668 = vrot.lane.b32.xlu0 %v2620, 12
      %v4669 = vpop.permute.xlu0 %4668
      %4670 = vrot.lane.b32.xlu0 %v2632, 12
      %v4671 = vpop.permute.xlu0 %4670
      %4672 = vrot.lane.b32.xlu0 %v2640, 12
      %v4673 = vpop.permute.xlu0 %4672
      %4674 = vrot.lane.b32.xlu0 %v2652, 12
      %v4675 = vpop.permute.xlu0 %4674
      %4676 = vrot.lane.b32.xlu0 %v2660, 12
      %v4677 = vpop.permute.xlu0 %4676
      %4678 = vrot.lane.b32.xlu0 %v2672, 12
      %v4679 = vpop.permute.xlu0 %4678
      %4680 = vrot.lane.b32.xlu0 %v2680, 12
      %v4681 = vpop.permute.xlu0 %4680
      %4682 = vrot.lane.b32.xlu0 %v2692, 12
      %v4683 = vpop.permute.xlu0 %4682
      %4684 = vrot.lane.b32.xlu0 %v2700, 12
      %v4685 = vpop.permute.xlu0 %4684
      %4686 = vrot.lane.b32.xlu0 %v2712, 12
      %v4687 = vpop.permute.xlu0 %4686
      %4688 = vrot.lane.b32.xlu0 %v2720, 12
      %v4689 = vpop.permute.xlu0 %4688
      %4690 = vrot.lane.b32.xlu0 %v2732, 12
      %v4691 = vpop.permute.xlu0 %4690
      %4692 = vrot.lane.b32.xlu0 %v2740, 12
      %v4693 = vpop.permute.xlu0 %4692
      %4694 = vrot.lane.b32.xlu0 %v2752, 12
      %v4695 = vpop.permute.xlu0 %4694
      %4696 = vrot.lane.b32.xlu0 %v2760, 12
      %v4697 = vpop.permute.xlu0 %4696
      %4698 = vrot.lane.b32.xlu0 %v2772, 12
      %v4699 = vpop.permute.xlu0 %4698
      %4700 = vrot.lane.b32.xlu0 %v2780, 12
      %v4701 = vpop.permute.xlu0 %4700
      %4702 = vrot.lane.b32.xlu0 %v2792, 12
      %v4703 = vpop.permute.xlu0 %4702
      %4704 = vrot.lane.b32.xlu0 %v2800, 12
      %v4705 = vpop.permute.xlu0 %4704
      %4706 = vrot.lane.b32.xlu0 %v2812, 12
      %v4707 = vpop.permute.xlu0 %4706
      %4708 = vrot.lane.b32.xlu0 %v2820, 12
      %v4709 = vpop.permute.xlu0 %4708
      %4774 = vrot.lane.b32.xlu0 %v2086, 16
      %v4775 = vpop.permute.xlu0 %4774
      %4776 = vrot.lane.b32.xlu0 %v2087, 16
      %v4777 = vpop.permute.xlu0 %4776
      %4778 = vrot.lane.b32.xlu0 %v2089, 16
      %v4779 = vpop.permute.xlu0 %4778
      %4780 = vrot.lane.b32.xlu0 %v2090, 16
      %v4781 = vpop.permute.xlu0 %4780
      %4782 = vrot.lane.b32.xlu0 %v2092, 16
      %v4783 = vpop.permute.xlu0 %4782
      %4784 = vrot.lane.b32.xlu0 %v2093, 16
      %v4785 = vpop.permute.xlu0 %4784
      %4786 = vrot.lane.b32.xlu0 %v2095, 16
      %v4787 = vpop.permute.xlu0 %4786
      %4788 = vrot.lane.b32.xlu0 %v2096, 16
      %v4789 = vpop.permute.xlu0 %4788
      %4790 = vrot.lane.b32.xlu0 %v2098, 16
      %v4791 = vpop.permute.xlu0 %4790
      %4792 = vrot.lane.b32.xlu0 %v2099, 16
      %v4793 = vpop.permute.xlu0 %4792
      %4794 = vrot.lane.b32.xlu0 %v2101, 16
      %v4795 = vpop.permute.xlu0 %4794
      %4796 = vrot.lane.b32.xlu0 %v2102, 16
      %v4797 = vpop.permute.xlu0 %4796
      %4798 = vrot.lane.b32.xlu0 %v2104, 16
      %v4799 = vpop.permute.xlu0 %4798
      %4800 = vrot.lane.b32.xlu0 %v2105, 16
      %v4801 = vpop.permute.xlu0 %4800
      %4802 = vrot.lane.b32.xlu0 %v2107, 16
      %v4803 = vpop.permute.xlu0 %4802
      %4804 = vrot.lane.b32.xlu0 %v2108, 16
      %v4805 = vpop.permute.xlu0 %4804
      %4806 = vrot.lane.b32.xlu0 %v2110, 16
      %v4807 = vpop.permute.xlu0 %4806
      %4808 = vrot.lane.b32.xlu0 %v2111, 16
      %v4809 = vpop.permute.xlu0 %4808
      %4810 = vrot.lane.b32.xlu0 %v2113, 16
      %v4811 = vpop.permute.xlu0 %4810
      %4812 = vrot.lane.b32.xlu0 %v2114, 16
      %v4813 = vpop.permute.xlu0 %4812
      %4814 = vrot.lane.b32.xlu0 %v2116, 16
      %v4815 = vpop.permute.xlu0 %4814
      %4816 = vrot.lane.b32.xlu0 %v2117, 16
      %v4817 = vpop.permute.xlu0 %4816
      %4818 = vrot.lane.b32.xlu0 %v2119, 16
      %v4819 = vpop.permute.xlu0 %4818
      %4820 = vrot.lane.b32.xlu0 %v2120, 16
      %v4821 = vpop.permute.xlu0 %4820
      %4822 = vrot.lane.b32.xlu0 %v2122, 16
      %v4823 = vpop.permute.xlu0 %4822
      %4824 = vrot.lane.b32.xlu0 %v2123, 16
      %v4825 = vpop.permute.xlu0 %4824
      %4826 = vrot.lane.b32.xlu0 %v2125, 16
      %v4827 = vpop.permute.xlu0 %4826
      %4828 = vrot.lane.b32.xlu0 %v2126, 16
      %v4829 = vpop.permute.xlu0 %4828
      %4830 = vrot.lane.b32.xlu0 %v2128, 16
      %v4831 = vpop.permute.xlu0 %4830
      %4832 = vrot.lane.b32.xlu0 %v2129, 16
      %v4833 = vpop.permute.xlu0 %4832
      %4834 = vrot.lane.b32.xlu0 %v2131, 16
      %v4835 = vpop.permute.xlu0 %4834
      %4836 = vrot.lane.b32.xlu0 %v2132, 16
      %v4837 = vpop.permute.xlu0 %4836
      %4838 = vrot.lane.b32.xlu0 %v2134, 16
      %v4839 = vpop.permute.xlu0 %4838
      %4840 = vrot.lane.b32.xlu0 %v2135, 16
      %v4841 = vpop.permute.xlu0 %4840
      %4842 = vrot.lane.b32.xlu0 %v2137, 16
      %v4843 = vpop.permute.xlu0 %4842
      %4844 = vrot.lane.b32.xlu0 %v2138, 16
      %v4845 = vpop.permute.xlu0 %4844
      %4846 = vrot.lane.b32.xlu0 %v2140, 16
      %v4847 = vpop.permute.xlu0 %4846
      %4848 = vrot.lane.b32.xlu0 %v2141, 16
      %v4849 = vpop.permute.xlu0 %4848
      %4850 = vrot.lane.b32.xlu0 %v2143, 16
      %v4851 = vpop.permute.xlu0 %4850
      %4852 = vrot.lane.b32.xlu0 %v2144, 16
      %v4853 = vpop.permute.xlu0 %4852
      %4854 = vrot.lane.b32.xlu0 %v2146, 16
      %v4855 = vpop.permute.xlu0 %4854
      %4856 = vrot.lane.b32.xlu0 %v2147, 16
      %v4857 = vpop.permute.xlu0 %4856
      %4858 = vrot.lane.b32.xlu0 %v2149, 16
      %v4859 = vpop.permute.xlu0 %4858
      %4860 = vrot.lane.b32.xlu0 %v2150, 16
      %v4861 = vpop.permute.xlu0 %4860
      %4862 = vrot.lane.b32.xlu0 %v2152, 16
      %v4863 = vpop.permute.xlu0 %4862
      %4864 = vrot.lane.b32.xlu0 %v2153, 16
      %v4865 = vpop.permute.xlu0 %4864
      %4866 = vrot.lane.b32.xlu0 %v2155, 16
      %v4867 = vpop.permute.xlu0 %4866
      %4868 = vrot.lane.b32.xlu0 %v2156, 16
      %v4869 = vpop.permute.xlu0 %4868
      %4870 = vrot.lane.b32.xlu0 %v2158, 16
      %v4871 = vpop.permute.xlu0 %4870
      %4872 = vrot.lane.b32.xlu0 %v2159, 16
      %v4873 = vpop.permute.xlu0 %4872
      %4874 = vrot.lane.b32.xlu0 %v2161, 16
      %v4875 = vpop.permute.xlu0 %4874
      %4876 = vrot.lane.b32.xlu0 %v2162, 16
      %v4877 = vpop.permute.xlu0 %4876
      %4878 = vrot.lane.b32.xlu0 %v2164, 16
      %v4879 = vpop.permute.xlu0 %4878
      %4880 = vrot.lane.b32.xlu0 %v2165, 16
      %v4881 = vpop.permute.xlu0 %4880
      %4882 = vrot.lane.b32.xlu0 %v2167, 16
      %v4883 = vpop.permute.xlu0 %4882
      %4884 = vrot.lane.b32.xlu0 %v2168, 16
      %v4885 = vpop.permute.xlu0 %4884
      %4886 = vrot.lane.b32.xlu0 %v2170, 16
      %v4887 = vpop.permute.xlu0 %4886
      %4888 = vrot.lane.b32.xlu0 %v2171, 16
      %v4889 = vpop.permute.xlu0 %4888
      %4890 = vrot.lane.b32.xlu0 %v2173, 16
      %v4891 = vpop.permute.xlu0 %4890
      %4892 = vrot.lane.b32.xlu0 %v2174, 16
      %v4893 = vpop.permute.xlu0 %4892
      %4894 = vrot.lane.b32.xlu0 %v2176, 16
      %v4895 = vpop.permute.xlu0 %4894
      %4896 = vrot.lane.b32.xlu0 %v2177, 16
      %v4897 = vpop.permute.xlu0 %4896
      %4898 = vrot.lane.b32.xlu0 %v2179, 16
      %v4899 = vpop.permute.xlu0 %4898
      %4900 = vrot.lane.b32.xlu0 %v2180, 16
      %v4901 = vpop.permute.xlu0 %4900
      %4902 = vrot.lane.b32.xlu0 %v2856, 20
      %v4903 = vpop.permute.xlu0 %4902
      %4904 = vrot.lane.b32.xlu0 %v2862, 20
      %v4905 = vpop.permute.xlu0 %4904
      %4906 = vrot.lane.b32.xlu0 %v2866, 20
      %v4907 = vpop.permute.xlu0 %4906
      %4908 = vrot.lane.b32.xlu0 %v2872, 20
      %v4909 = vpop.permute.xlu0 %4908
      %4910 = vrot.lane.b32.xlu0 %v2876, 20
      %v4911 = vpop.permute.xlu0 %4910
      %4912 = vrot.lane.b32.xlu0 %v2882, 20
      %v4913 = vpop.permute.xlu0 %4912
      %4914 = vrot.lane.b32.xlu0 %v2886, 20
      %v4915 = vpop.permute.xlu0 %4914
      %4916 = vrot.lane.b32.xlu0 %v2892, 20
      %v4917 = vpop.permute.xlu0 %4916
      %4918 = vrot.lane.b32.xlu0 %v2896, 20
      %v4919 = vpop.permute.xlu0 %4918
      %4920 = vrot.lane.b32.xlu0 %v2902, 20
      %v4921 = vpop.permute.xlu0 %4920
      %4922 = vrot.lane.b32.xlu0 %v2906, 20
      %v4923 = vpop.permute.xlu0 %4922
      %4924 = vrot.lane.b32.xlu0 %v2912, 20
      %v4925 = vpop.permute.xlu0 %4924
      %4926 = vrot.lane.b32.xlu0 %v2916, 20
      %v4927 = vpop.permute.xlu0 %4926
      %4928 = vrot.lane.b32.xlu0 %v2922, 20
      %v4929 = vpop.permute.xlu0 %4928
      %4930 = vrot.lane.b32.xlu0 %v2926, 20
      %v4931 = vpop.permute.xlu0 %4930
      %4932 = vrot.lane.b32.xlu0 %v2932, 20
      %v4933 = vpop.permute.xlu0 %4932
      %4934 = vrot.lane.b32.xlu0 %v2936, 20
      %v4935 = vpop.permute.xlu0 %4934
      %4936 = vrot.lane.b32.xlu0 %v2942, 20
      %v4937 = vpop.permute.xlu0 %4936
      %4938 = vrot.lane.b32.xlu0 %v2946, 20
      %v4939 = vpop.permute.xlu0 %4938
      %4940 = vrot.lane.b32.xlu0 %v2952, 20
      %v4941 = vpop.permute.xlu0 %4940
      %4942 = vrot.lane.b32.xlu0 %v2956, 20
      %v4943 = vpop.permute.xlu0 %4942
      %4944 = vrot.lane.b32.xlu0 %v2962, 20
      %v4945 = vpop.permute.xlu0 %4944
      %4946 = vrot.lane.b32.xlu0 %v2966, 20
      %v4947 = vpop.permute.xlu0 %4946
      %4948 = vrot.lane.b32.xlu0 %v2972, 20
      %v4949 = vpop.permute.xlu0 %4948
      %4950 = vrot.lane.b32.xlu0 %v2976, 20
      %v4951 = vpop.permute.xlu0 %4950
      %4952 = vrot.lane.b32.xlu0 %v2982, 20
      %v4953 = vpop.permute.xlu0 %4952
      %4954 = vrot.lane.b32.xlu0 %v2986, 20
      %v4955 = vpop.permute.xlu0 %4954
      %4956 = vrot.lane.b32.xlu0 %v2992, 20
      %v4957 = vpop.permute.xlu0 %4956
      %4958 = vrot.lane.b32.xlu0 %v2996, 20
      %v4959 = vpop.permute.xlu0 %4958
      %4960 = vrot.lane.b32.xlu0 %v3002, 20
      %v4961 = vpop.permute.xlu0 %4960
      %4962 = vrot.lane.b32.xlu0 %v3006, 20
      %v4963 = vpop.permute.xlu0 %4962
      %4964 = vrot.lane.b32.xlu0 %v3012, 20
      %v4965 = vpop.permute.xlu0 %4964
      %4966 = vrot.lane.b32.xlu0 %v3016, 20
      %v4967 = vpop.permute.xlu0 %4966
      %4968 = vrot.lane.b32.xlu0 %v3022, 20
      %v4969 = vpop.permute.xlu0 %4968
      %4970 = vrot.lane.b32.xlu0 %v3026, 20
      %v4971 = vpop.permute.xlu0 %4970
      %4972 = vrot.lane.b32.xlu0 %v3032, 20
      %v4973 = vpop.permute.xlu0 %4972
      %4974 = vrot.lane.b32.xlu0 %v3036, 20
      %v4975 = vpop.permute.xlu0 %4974
      %4976 = vrot.lane.b32.xlu0 %v3042, 20
      %v4977 = vpop.permute.xlu0 %4976
      %4978 = vrot.lane.b32.xlu0 %v3046, 20
      %v4979 = vpop.permute.xlu0 %4978
      %4980 = vrot.lane.b32.xlu0 %v3052, 20
      %v4981 = vpop.permute.xlu0 %4980
      %4982 = vrot.lane.b32.xlu0 %v3056, 20
      %v4983 = vpop.permute.xlu0 %4982
      %4984 = vrot.lane.b32.xlu0 %v3062, 20
      %v4985 = vpop.permute.xlu0 %4984
      %4986 = vrot.lane.b32.xlu0 %v3066, 20
      %v4987 = vpop.permute.xlu0 %4986
      %4988 = vrot.lane.b32.xlu0 %v3072, 20
      %v4989 = vpop.permute.xlu0 %4988
      %4990 = vrot.lane.b32.xlu0 %v3076, 20
      %v4991 = vpop.permute.xlu0 %4990
      %4992 = vrot.lane.b32.xlu0 %v3082, 20
      %v4993 = vpop.permute.xlu0 %4992
      %4994 = vrot.lane.b32.xlu0 %v3086, 20
      %v4995 = vpop.permute.xlu0 %4994
      %4996 = vrot.lane.b32.xlu0 %v3092, 20
      %v4997 = vpop.permute.xlu0 %4996
      %4998 = vrot.lane.b32.xlu0 %v3096, 20
      %v4999 = vpop.permute.xlu0 %4998
      %5000 = vrot.lane.b32.xlu0 %v3102, 20
      %v5001 = vpop.permute.xlu0 %5000
      %5002 = vrot.lane.b32.xlu0 %v3106, 20
      %v5003 = vpop.permute.xlu0 %5002
      %5004 = vrot.lane.b32.xlu0 %v3112, 20
      %v5005 = vpop.permute.xlu0 %5004
      %5006 = vrot.lane.b32.xlu0 %v3116, 20
      %v5007 = vpop.permute.xlu0 %5006
      %5008 = vrot.lane.b32.xlu0 %v3122, 20
      %v5009 = vpop.permute.xlu0 %5008
      %5010 = vrot.lane.b32.xlu0 %v3126, 20
      %v5011 = vpop.permute.xlu0 %5010
      %5012 = vrot.lane.b32.xlu0 %v3132, 20
      %v5013 = vpop.permute.xlu0 %5012
      %5014 = vrot.lane.b32.xlu0 %v3136, 20
      %v5015 = vpop.permute.xlu0 %5014
      %5016 = vrot.lane.b32.xlu0 %v3142, 20
      %v5017 = vpop.permute.xlu0 %5016
      %5018 = vrot.lane.b32.xlu0 %v3146, 20
      %v5019 = vpop.permute.xlu0 %5018
      %5020 = vrot.lane.b32.xlu0 %v3152, 20
      %v5021 = vpop.permute.xlu0 %5020
      %5022 = vrot.lane.b32.xlu0 %v3156, 20
      %v5023 = vpop.permute.xlu0 %5022
      %5024 = vrot.lane.b32.xlu0 %v3162, 20
      %v5025 = vpop.permute.xlu0 %5024
      %5026 = vrot.lane.b32.xlu0 %v3166, 20
      %v5027 = vpop.permute.xlu0 %5026
      %5028 = vrot.lane.b32.xlu0 %v3172, 20
      %v5029 = vpop.permute.xlu0 %5028
      %5030 = vrot.lane.b32.xlu0 %v3281, 24
      %v5031 = vpop.permute.xlu0 %5030
      %5032 = vrot.lane.b32.xlu0 %v3289, 24
      %v5033 = vpop.permute.xlu0 %5032
      %5034 = vrot.lane.b32.xlu0 %v3301, 24
      %v5035 = vpop.permute.xlu0 %5034
      %5036 = vrot.lane.b32.xlu0 %v3309, 24
      %v5037 = vpop.permute.xlu0 %5036
      %5038 = vrot.lane.b32.xlu0 %v3321, 24
      %v5039 = vpop.permute.xlu0 %5038
      %5040 = vrot.lane.b32.xlu0 %v3329, 24
      %v5041 = vpop.permute.xlu0 %5040
      %5042 = vrot.lane.b32.xlu0 %v3341, 24
      %v5043 = vpop.permute.xlu0 %5042
      %5044 = vrot.lane.b32.xlu0 %v3349, 24
      %v5045 = vpop.permute.xlu0 %5044
      %5046 = vrot.lane.b32.xlu0 %v3361, 24
      %v5047 = vpop.permute.xlu0 %5046
      %5048 = vrot.lane.b32.xlu0 %v3369, 24
      %v5049 = vpop.permute.xlu0 %5048
      %5050 = vrot.lane.b32.xlu0 %v3381, 24
      %v5051 = vpop.permute.xlu0 %5050
      %5052 = vrot.lane.b32.xlu0 %v3389, 24
      %v5053 = vpop.permute.xlu0 %5052
      %5054 = vrot.lane.b32.xlu0 %v3401, 24
      %v5055 = vpop.permute.xlu0 %5054
      %5056 = vrot.lane.b32.xlu0 %v3409, 24
      %v5057 = vpop.permute.xlu0 %5056
      %5058 = vrot.lane.b32.xlu0 %v3421, 24
      %v5059 = vpop.permute.xlu0 %5058
      %5060 = vrot.lane.b32.xlu0 %v3429, 24
      %v5061 = vpop.permute.xlu0 %5060
      %5062 = vrot.lane.b32.xlu0 %v3441, 24
      %v5063 = vpop.permute.xlu0 %5062
      %5064 = vrot.lane.b32.xlu0 %v3449, 24
      %v5065 = vpop.permute.xlu0 %5064
      %5066 = vrot.lane.b32.xlu0 %v3461, 24
      %v5067 = vpop.permute.xlu0 %5066
      %5068 = vrot.lane.b32.xlu0 %v3469, 24
      %v5069 = vpop.permute.xlu0 %5068
      %5070 = vrot.lane.b32.xlu0 %v3481, 24
      %v5071 = vpop.permute.xlu0 %5070
      %5072 = vrot.lane.b32.xlu0 %v3489, 24
      %v5073 = vpop.permute.xlu0 %5072
      %5074 = vrot.lane.b32.xlu0 %v3501, 24
      %v5075 = vpop.permute.xlu0 %5074
      %5076 = vrot.lane.b32.xlu0 %v3509, 24
      %v5077 = vpop.permute.xlu0 %5076
      %5078 = vrot.lane.b32.xlu0 %v3521, 24
      %v5079 = vpop.permute.xlu0 %5078
      %5080 = vrot.lane.b32.xlu0 %v3529, 24
      %v5081 = vpop.permute.xlu0 %5080
      %5082 = vrot.lane.b32.xlu0 %v3541, 24
      %v5083 = vpop.permute.xlu0 %5082
      %5084 = vrot.lane.b32.xlu0 %v3549, 24
      %v5085 = vpop.permute.xlu0 %5084
      %5086 = vrot.lane.b32.xlu0 %v3561, 24
      %v5087 = vpop.permute.xlu0 %5086
      %5088 = vrot.lane.b32.xlu0 %v3569, 24
      %v5089 = vpop.permute.xlu0 %5088
      %5090 = vrot.lane.b32.xlu0 %v3581, 24
      %v5091 = vpop.permute.xlu0 %5090
      %5092 = vrot.lane.b32.xlu0 %v3589, 24
      %v5093 = vpop.permute.xlu0 %5092
      %5094 = vrot.lane.b32.xlu0 %v3601, 24
      %v5095 = vpop.permute.xlu0 %5094
      %5096 = vrot.lane.b32.xlu0 %v3609, 24
      %v5097 = vpop.permute.xlu0 %5096
      %5098 = vrot.lane.b32.xlu0 %v3621, 24
      %v5099 = vpop.permute.xlu0 %5098
      %5100 = vrot.lane.b32.xlu0 %v3629, 24
      %v5101 = vpop.permute.xlu0 %5100
      %5102 = vrot.lane.b32.xlu0 %v3641, 24
      %v5103 = vpop.permute.xlu0 %5102
      %5104 = vrot.lane.b32.xlu0 %v3649, 24
      %v5105 = vpop.permute.xlu0 %5104
      %5106 = vrot.lane.b32.xlu0 %v3661, 24
      %v5107 = vpop.permute.xlu0 %5106
      %5108 = vrot.lane.b32.xlu0 %v3669, 24
      %v5109 = vpop.permute.xlu0 %5108
      %5110 = vrot.lane.b32.xlu0 %v3681, 24
      %v5111 = vpop.permute.xlu0 %5110
      %5112 = vrot.lane.b32.xlu0 %v3689, 24
      %v5113 = vpop.permute.xlu0 %5112
      %5114 = vrot.lane.b32.xlu0 %v3701, 24
      %v5115 = vpop.permute.xlu0 %5114
      %5116 = vrot.lane.b32.xlu0 %v3709, 24
      %v5117 = vpop.permute.xlu0 %5116
      %5118 = vrot.lane.b32.xlu0 %v3721, 24
      %v5119 = vpop.permute.xlu0 %5118
      %5120 = vrot.lane.b32.xlu0 %v3729, 24
      %v5121 = vpop.permute.xlu0 %5120
      %5122 = vrot.lane.b32.xlu0 %v3741, 24
      %v5123 = vpop.permute.xlu0 %5122
      %5124 = vrot.lane.b32.xlu0 %v3749, 24
      %v5125 = vpop.permute.xlu0 %5124
      %5126 = vrot.lane.b32.xlu0 %v3761, 24
      %v5127 = vpop.permute.xlu0 %5126
      %5128 = vrot.lane.b32.xlu0 %v3769, 24
      %v5129 = vpop.permute.xlu0 %5128
      %5130 = vrot.lane.b32.xlu0 %v3781, 24
      %v5131 = vpop.permute.xlu0 %5130
      %5132 = vrot.lane.b32.xlu0 %v3789, 24
      %v5133 = vpop.permute.xlu0 %5132
      %5134 = vrot.lane.b32.xlu0 %v3801, 24
      %v5135 = vpop.permute.xlu0 %5134
      %5136 = vrot.lane.b32.xlu0 %v3809, 24
      %v5137 = vpop.permute.xlu0 %5136
      %5138 = vrot.lane.b32.xlu0 %v3821, 24
      %v5139 = vpop.permute.xlu0 %5138
      %5140 = vrot.lane.b32.xlu0 %v3829, 24
      %v5141 = vpop.permute.xlu0 %5140
      %5142 = vrot.lane.b32.xlu0 %v3841, 24
      %v5143 = vpop.permute.xlu0 %5142
      %5144 = vrot.lane.b32.xlu0 %v3849, 24
      %v5145 = vpop.permute.xlu0 %5144
      %5146 = vrot.lane.b32.xlu0 %v3861, 24
      %v5147 = vpop.permute.xlu0 %5146
      %5148 = vrot.lane.b32.xlu0 %v3869, 24
      %v5149 = vpop.permute.xlu0 %5148
      %5150 = vrot.lane.b32.xlu0 %v3881, 24
      %v5151 = vpop.permute.xlu0 %5150
      %5152 = vrot.lane.b32.xlu0 %v3889, 24
      %v5153 = vpop.permute.xlu0 %5152
      %5154 = vrot.lane.b32.xlu0 %v3901, 24
      %v5155 = vpop.permute.xlu0 %5154
      %5156 = vrot.lane.b32.xlu0 %v3909, 24
      %v5157 = vpop.permute.xlu0 %5156
      %5222 = vrot.lane.b32.xlu0 %v3175, 28
      %v5223 = vpop.permute.xlu0 %5222
      %5224 = vrot.lane.b32.xlu0 %v3176, 28
      %v5225 = vpop.permute.xlu0 %5224
      %5226 = vrot.lane.b32.xlu0 %v3178, 28
      %v5227 = vpop.permute.xlu0 %5226
      %5228 = vrot.lane.b32.xlu0 %v3179, 28
      %v5229 = vpop.permute.xlu0 %5228
      %5230 = vrot.lane.b32.xlu0 %v3181, 28
      %v5231 = vpop.permute.xlu0 %5230
      %5232 = vrot.lane.b32.xlu0 %v3182, 28
      %v5233 = vpop.permute.xlu0 %5232
      %5234 = vrot.lane.b32.xlu0 %v3184, 28
      %v5235 = vpop.permute.xlu0 %5234
      %5236 = vrot.lane.b32.xlu0 %v3185, 28
      %v5237 = vpop.permute.xlu0 %5236
      %5238 = vrot.lane.b32.xlu0 %v3187, 28
      %v5239 = vpop.permute.xlu0 %5238
      %5240 = vrot.lane.b32.xlu0 %v3188, 28
      %v5241 = vpop.permute.xlu0 %5240
      %5242 = vrot.lane.b32.xlu0 %v3190, 28
      %v5243 = vpop.permute.xlu0 %5242
      %5244 = vrot.lane.b32.xlu0 %v3191, 28
      %v5245 = vpop.permute.xlu0 %5244
      %5246 = vrot.lane.b32.xlu0 %v3193, 28
      %v5247 = vpop.permute.xlu0 %5246
      %5248 = vrot.lane.b32.xlu0 %v3194, 28
      %v5249 = vpop.permute.xlu0 %5248
      %5250 = vrot.lane.b32.xlu0 %v3196, 28
      %v5251 = vpop.permute.xlu0 %5250
      %5252 = vrot.lane.b32.xlu0 %v3197, 28
      %v5253 = vpop.permute.xlu0 %5252
      %5254 = vrot.lane.b32.xlu0 %v3199, 28
      %v5255 = vpop.permute.xlu0 %5254
      %5256 = vrot.lane.b32.xlu0 %v3200, 28
      %v5257 = vpop.permute.xlu0 %5256
      %5258 = vrot.lane.b32.xlu0 %v3202, 28
      %v5259 = vpop.permute.xlu0 %5258
      %5260 = vrot.lane.b32.xlu0 %v3203, 28
      %v5261 = vpop.permute.xlu0 %5260
      %5262 = vrot.lane.b32.xlu0 %v3205, 28
      %v5263 = vpop.permute.xlu0 %5262
      %5264 = vrot.lane.b32.xlu0 %v3206, 28
      %v5265 = vpop.permute.xlu0 %5264
      %5266 = vrot.lane.b32.xlu0 %v3208, 28
      %v5267 = vpop.permute.xlu0 %5266
      %5268 = vrot.lane.b32.xlu0 %v3209, 28
      %v5269 = vpop.permute.xlu0 %5268
      %5270 = vrot.lane.b32.xlu0 %v3211, 28
      %v5271 = vpop.permute.xlu0 %5270
      %5272 = vrot.lane.b32.xlu0 %v3212, 28
      %v5273 = vpop.permute.xlu0 %5272
      %5274 = vrot.lane.b32.xlu0 %v3214, 28
      %v5275 = vpop.permute.xlu0 %5274
      %5276 = vrot.lane.b32.xlu0 %v3215, 28
      %v5277 = vpop.permute.xlu0 %5276
      %5278 = vrot.lane.b32.xlu0 %v3217, 28
      %v5279 = vpop.permute.xlu0 %5278
      %5280 = vrot.lane.b32.xlu0 %v3218, 28
      %v5281 = vpop.permute.xlu0 %5280
      %5282 = vrot.lane.b32.xlu0 %v3220, 28
      %v5283 = vpop.permute.xlu0 %5282
      %5284 = vrot.lane.b32.xlu0 %v3221, 28
      %v5285 = vpop.permute.xlu0 %5284
      %5286 = vrot.lane.b32.xlu0 %v3223, 28
      %v5287 = vpop.permute.xlu0 %5286
      %5288 = vrot.lane.b32.xlu0 %v3224, 28
      %v5289 = vpop.permute.xlu0 %5288
      %5290 = vrot.lane.b32.xlu0 %v3226, 28
      %v5291 = vpop.permute.xlu0 %5290
      %5292 = vrot.lane.b32.xlu0 %v3227, 28
      %v5293 = vpop.permute.xlu0 %5292
      %5294 = vrot.lane.b32.xlu0 %v3229, 28
      %v5295 = vpop.permute.xlu0 %5294
      %5296 = vrot.lane.b32.xlu0 %v3230, 28
      %v5297 = vpop.permute.xlu0 %5296
      %5298 = vrot.lane.b32.xlu0 %v3232, 28
      %v5299 = vpop.permute.xlu0 %5298
      %5300 = vrot.lane.b32.xlu0 %v3233, 28
      %v5301 = vpop.permute.xlu0 %5300
      %5302 = vrot.lane.b32.xlu0 %v3235, 28
      %v5303 = vpop.permute.xlu0 %5302
      %5304 = vrot.lane.b32.xlu0 %v3236, 28
      %v5305 = vpop.permute.xlu0 %5304
      %5306 = vrot.lane.b32.xlu0 %v3238, 28
      %v5307 = vpop.permute.xlu0 %5306
      %5308 = vrot.lane.b32.xlu0 %v3239, 28
      %v5309 = vpop.permute.xlu0 %5308
      %5310 = vrot.lane.b32.xlu0 %v3241, 28
      %v5311 = vpop.permute.xlu0 %5310
      %5312 = vrot.lane.b32.xlu0 %v3242, 28
      %v5313 = vpop.permute.xlu0 %5312
      %5314 = vrot.lane.b32.xlu0 %v3244, 28
      %v5315 = vpop.permute.xlu0 %5314
      %5316 = vrot.lane.b32.xlu0 %v3245, 28
      %v5317 = vpop.permute.xlu0 %5316
      %5318 = vrot.lane.b32.xlu0 %v3247, 28
      %v5319 = vpop.permute.xlu0 %5318
      %5320 = vrot.lane.b32.xlu0 %v3248, 28
      %v5321 = vpop.permute.xlu0 %5320
      %5322 = vrot.lane.b32.xlu0 %v3250, 28
      %v5323 = vpop.permute.xlu0 %5322
      %5324 = vrot.lane.b32.xlu0 %v3251, 28
      %v5325 = vpop.permute.xlu0 %5324
      %5326 = vrot.lane.b32.xlu0 %v3253, 28
      %v5327 = vpop.permute.xlu0 %5326
      %5328 = vrot.lane.b32.xlu0 %v3254, 28
      %v5329 = vpop.permute.xlu0 %5328
      %5330 = vrot.lane.b32.xlu0 %v3256, 28
      %v5331 = vpop.permute.xlu0 %5330
      %5332 = vrot.lane.b32.xlu0 %v3257, 28
      %v5333 = vpop.permute.xlu0 %5332
      %5334 = vrot.lane.b32.xlu0 %v3259, 28
      %v5335 = vpop.permute.xlu0 %5334
      %5336 = vrot.lane.b32.xlu0 %v3260, 28
      %v5337 = vpop.permute.xlu0 %5336
      %5338 = vrot.lane.b32.xlu0 %v3262, 28
      %v5339 = vpop.permute.xlu0 %5338
      %5340 = vrot.lane.b32.xlu0 %v3263, 28
      %v5341 = vpop.permute.xlu0 %5340
      %5342 = vrot.lane.b32.xlu0 %v3265, 28
      %v5343 = vpop.permute.xlu0 %5342
      %5344 = vrot.lane.b32.xlu0 %v3266, 28
      %v5345 = vpop.permute.xlu0 %5344
      %5346 = vrot.lane.b32.xlu0 %v3268, 28
      %v5347 = vpop.permute.xlu0 %5346
      %5348 = vrot.lane.b32.xlu0 %v3269, 28
      %v5349 = vpop.permute.xlu0 %5348
      %5350 = vrot.lane.b32.xlu0 %v3945, 32
      %v5351 = vpop.permute.xlu0 %5350
      %5352 = vrot.lane.b32.xlu0 %v3951, 32
      %v5353 = vpop.permute.xlu0 %5352
      %5354 = vrot.lane.b32.xlu0 %v3955, 32
      %v5355 = vpop.permute.xlu0 %5354
      %5356 = vrot.lane.b32.xlu0 %v3961, 32
      %v5357 = vpop.permute.xlu0 %5356
      %5358 = vrot.lane.b32.xlu0 %v3965, 32
      %v5359 = vpop.permute.xlu0 %5358
      %5360 = vrot.lane.b32.xlu0 %v3971, 32
      %v5361 = vpop.permute.xlu0 %5360
      %5362 = vrot.lane.b32.xlu0 %v3975, 32
      %v5363 = vpop.permute.xlu0 %5362
      %5364 = vrot.lane.b32.xlu0 %v3981, 32
      %v5365 = vpop.permute.xlu0 %5364
      %5366 = vrot.lane.b32.xlu0 %v3985, 32
      %v5367 = vpop.permute.xlu0 %5366
      %5368 = vrot.lane.b32.xlu0 %v3991, 32
      %v5369 = vpop.permute.xlu0 %5368
      %5370 = vrot.lane.b32.xlu0 %v3995, 32
      %v5371 = vpop.permute.xlu0 %5370
      %5372 = vrot.lane.b32.xlu0 %v4001, 32
      %v5373 = vpop.permute.xlu0 %5372
      %5374 = vrot.lane.b32.xlu0 %v4005, 32
      %v5375 = vpop.permute.xlu0 %5374
      %5376 = vrot.lane.b32.xlu0 %v4011, 32
      %v5377 = vpop.permute.xlu0 %5376
      %5378 = vrot.lane.b32.xlu0 %v4015, 32
      %v5379 = vpop.permute.xlu0 %5378
      %5380 = vrot.lane.b32.xlu0 %v4021, 32
      %v5381 = vpop.permute.xlu0 %5380
      %5382 = vrot.lane.b32.xlu0 %v4025, 32
      %v5383 = vpop.permute.xlu0 %5382
      %5384 = vrot.lane.b32.xlu0 %v4031, 32
      %v5385 = vpop.permute.xlu0 %5384
      %5386 = vrot.lane.b32.xlu0 %v4035, 32
      %v5387 = vpop.permute.xlu0 %5386
      %5388 = vrot.lane.b32.xlu0 %v4041, 32
      %v5389 = vpop.permute.xlu0 %5388
      %5390 = vrot.lane.b32.xlu0 %v4045, 32
      %v5391 = vpop.permute.xlu0 %5390
      %5392 = vrot.lane.b32.xlu0 %v4051, 32
      %v5393 = vpop.permute.xlu0 %5392
      %5394 = vrot.lane.b32.xlu0 %v4055, 32
      %v5395 = vpop.permute.xlu0 %5394
      %5396 = vrot.lane.b32.xlu0 %v4061, 32
      %v5397 = vpop.permute.xlu0 %5396
      %5398 = vrot.lane.b32.xlu0 %v4065, 32
      %v5399 = vpop.permute.xlu0 %5398
      %5400 = vrot.lane.b32.xlu0 %v4071, 32
      %v5401 = vpop.permute.xlu0 %5400
      %5402 = vrot.lane.b32.xlu0 %v4075, 32
      %v5403 = vpop.permute.xlu0 %5402
      %5404 = vrot.lane.b32.xlu0 %v4081, 32
      %v5405 = vpop.permute.xlu0 %5404
      %5406 = vrot.lane.b32.xlu0 %v4085, 32
      %v5407 = vpop.permute.xlu0 %5406
      %5408 = vrot.lane.b32.xlu0 %v4091, 32
      %v5409 = vpop.permute.xlu0 %5408
      %5410 = vrot.lane.b32.xlu0 %v4095, 32
      %v5411 = vpop.permute.xlu0 %5410
      %5412 = vrot.lane.b32.xlu0 %v4101, 32
      %v5413 = vpop.permute.xlu0 %5412
      %5414 = vrot.lane.b32.xlu0 %v4105, 32
      %v5415 = vpop.permute.xlu0 %5414
      %5416 = vrot.lane.b32.xlu0 %v4111, 32
      %v5417 = vpop.permute.xlu0 %5416
      %5418 = vrot.lane.b32.xlu0 %v4115, 32
      %v5419 = vpop.permute.xlu0 %5418
      %5420 = vrot.lane.b32.xlu0 %v4121, 32
      %v5421 = vpop.permute.xlu0 %5420
      %5422 = vrot.lane.b32.xlu0 %v4125, 32
      %v5423 = vpop.permute.xlu0 %5422
      %5424 = vrot.lane.b32.xlu0 %v4131, 32
      %v5425 = vpop.permute.xlu0 %5424
      %5426 = vrot.lane.b32.xlu0 %v4135, 32
      %v5427 = vpop.permute.xlu0 %5426
      %5428 = vrot.lane.b32.xlu0 %v4141, 32
      %v5429 = vpop.permute.xlu0 %5428
      %5430 = vrot.lane.b32.xlu0 %v4145, 32
      %v5431 = vpop.permute.xlu0 %5430
      %5432 = vrot.lane.b32.xlu0 %v4151, 32
      %v5433 = vpop.permute.xlu0 %5432
      %5434 = vrot.lane.b32.xlu0 %v4155, 32
      %v5435 = vpop.permute.xlu0 %5434
      %5436 = vrot.lane.b32.xlu0 %v4161, 32
      %v5437 = vpop.permute.xlu0 %5436
      %5438 = vrot.lane.b32.xlu0 %v4165, 32
      %v5439 = vpop.permute.xlu0 %5438
      %5440 = vrot.lane.b32.xlu0 %v4171, 32
      %v5441 = vpop.permute.xlu0 %5440
      %5442 = vrot.lane.b32.xlu0 %v4175, 32
      %v5443 = vpop.permute.xlu0 %5442
      %5444 = vrot.lane.b32.xlu0 %v4181, 32
      %v5445 = vpop.permute.xlu0 %5444
      %5446 = vrot.lane.b32.xlu0 %v4185, 32
      %v5447 = vpop.permute.xlu0 %5446
      %5448 = vrot.lane.b32.xlu0 %v4191, 32
      %v5449 = vpop.permute.xlu0 %5448
      %5450 = vrot.lane.b32.xlu0 %v4195, 32
      %v5451 = vpop.permute.xlu0 %5450
      %5452 = vrot.lane.b32.xlu0 %v4201, 32
      %v5453 = vpop.permute.xlu0 %5452
      %5454 = vrot.lane.b32.xlu0 %v4205, 32
      %v5455 = vpop.permute.xlu0 %5454
      %5456 = vrot.lane.b32.xlu0 %v4211, 32
      %v5457 = vpop.permute.xlu0 %5456
      %5458 = vrot.lane.b32.xlu0 %v4215, 32
      %v5459 = vpop.permute.xlu0 %5458
      %5460 = vrot.lane.b32.xlu0 %v4221, 32
      %v5461 = vpop.permute.xlu0 %5460
      %5462 = vrot.lane.b32.xlu0 %v4225, 32
      %v5463 = vpop.permute.xlu0 %5462
      %5464 = vrot.lane.b32.xlu0 %v4231, 32
      %v5465 = vpop.permute.xlu0 %5464
      %5466 = vrot.lane.b32.xlu0 %v4235, 32
      %v5467 = vpop.permute.xlu0 %5466
      %5468 = vrot.lane.b32.xlu0 %v4241, 32
      %v5469 = vpop.permute.xlu0 %5468
      %5470 = vrot.lane.b32.xlu0 %v4245, 32
      %v5471 = vpop.permute.xlu0 %5470
      %5472 = vrot.lane.b32.xlu0 %v4251, 32
      %v5473 = vpop.permute.xlu0 %5472
      %5474 = vrot.lane.b32.xlu0 %v4255, 32
      %v5475 = vpop.permute.xlu0 %5474
      %5476 = vrot.lane.b32.xlu0 %v4261, 32
      %v5477 = vpop.permute.xlu0 %5476
      %v5480 = vsel %vm226, %v1103, %v4327
      %v5483 = vsel %vm226, %v1111, %v4329
      %v5486 = vsel %vm226, %v1123, %v4331
      %v5489 = vsel %vm226, %v1131, %v4333
      %v5492 = vsel %vm226, %v1143, %v4335
      %v5495 = vsel %vm226, %v1151, %v4337
      %v5498 = vsel %vm226, %v1163, %v4339
      %v5501 = vsel %vm226, %v1171, %v4341
      %v5504 = vsel %vm226, %v1183, %v4343
      %v5507 = vsel %vm226, %v1191, %v4345
      %v5510 = vsel %vm226, %v1203, %v4347
      %v5513 = vsel %vm226, %v1211, %v4349
      %v5516 = vsel %vm226, %v1223, %v4351
      %v5519 = vsel %vm226, %v1231, %v4353
      %v5522 = vsel %vm226, %v1243, %v4355
      %v5525 = vsel %vm226, %v1251, %v4357
      %v5528 = vsel %vm226, %v1263, %v4359
      %v5531 = vsel %vm226, %v1271, %v4361
      %v5534 = vsel %vm226, %v1283, %v4363
      %v5537 = vsel %vm226, %v1291, %v4365
      %v5540 = vsel %vm226, %v1303, %v4367
      %v5543 = vsel %vm226, %v1311, %v4369
      %v5546 = vsel %vm226, %v1323, %v4371
      %v5549 = vsel %vm226, %v1331, %v4373
      %v5552 = vsel %vm226, %v1343, %v4375
      %v5555 = vsel %vm226, %v1351, %v4377
      %v5558 = vsel %vm226, %v1363, %v4379
      %v5561 = vsel %vm226, %v1371, %v4381
      %v5564 = vsel %vm226, %v1383, %v4383
      %v5567 = vsel %vm226, %v1391, %v4385
      %v5570 = vsel %vm226, %v1403, %v4387
      %v5573 = vsel %vm226, %v1411, %v4389
      %v5576 = vsel %vm226, %v1423, %v4391
      %v5579 = vsel %vm226, %v1431, %v4393
      %v5582 = vsel %vm226, %v1443, %v4395
      %v5585 = vsel %vm226, %v1451, %v4397
      %v5588 = vsel %vm226, %v1463, %v4399
      %v5591 = vsel %vm226, %v1471, %v4401
      %v5594 = vsel %vm226, %v1483, %v4403
      %v5597 = vsel %vm226, %v1491, %v4405
      %v5600 = vsel %vm226, %v1503, %v4407
      %v5603 = vsel %vm226, %v1511, %v4409
      %v5606 = vsel %vm226, %v1523, %v4411
      %v5609 = vsel %vm226, %v1531, %v4413
      %v5612 = vsel %vm226, %v1543, %v4415
      %v5615 = vsel %vm226, %v1551, %v4417
      %v5618 = vsel %vm226, %v1563, %v4419
      %v5621 = vsel %vm226, %v1571, %v4421
      %v5624 = vsel %vm226, %v1583, %v4423
      %v5627 = vsel %vm226, %v1591, %v4425
      %v5630 = vsel %vm226, %v1603, %v4427
      %v5633 = vsel %vm226, %v1611, %v4429
      %v5636 = vsel %vm226, %v1623, %v4431
      %v5639 = vsel %vm226, %v1631, %v4433
      %v5642 = vsel %vm226, %v1643, %v4435
      %v5645 = vsel %vm226, %v1651, %v4437
      %v5648 = vsel %vm226, %v1663, %v4439
      %v5651 = vsel %vm226, %v1671, %v4441
      %v5654 = vsel %vm226, %v1683, %v4443
      %v5657 = vsel %vm226, %v1691, %v4445
      %v5660 = vsel %vm226, %v1703, %v4447
      %v5663 = vsel %vm226, %v1711, %v4449
      %v5666 = vsel %vm226, %v1723, %v4451
      %v5669 = vsel %vm226, %v1731, %v4453
      %vm5670 = vcmask 64512
      %v5672 = vsel %vm5670, %v5480, %v4455
      %v5674 = vsel %vm5670, %v5483, %v4457
      %v5676 = vsel %vm5670, %v5486, %v4459
      %v5678 = vsel %vm5670, %v5489, %v4461
      %v5680 = vsel %vm5670, %v5492, %v4463
      %v5682 = vsel %vm5670, %v5495, %v4465
      %v5684 = vsel %vm5670, %v5498, %v4467
      %v5686 = vsel %vm5670, %v5501, %v4469
      %v5688 = vsel %vm5670, %v5504, %v4471
      %v5690 = vsel %vm5670, %v5507, %v4473
      %v5692 = vsel %vm5670, %v5510, %v4475
      %v5694 = vsel %vm5670, %v5513, %v4477
      %v5696 = vsel %vm5670, %v5516, %v4479
      %v5698 = vsel %vm5670, %v5519, %v4481
      %v5700 = vsel %vm5670, %v5522, %v4483
      %v5702 = vsel %vm5670, %v5525, %v4485
      %v5704 = vsel %vm5670, %v5528, %v4487
      %v5706 = vsel %vm5670, %v5531, %v4489
      %v5708 = vsel %vm5670, %v5534, %v4491
      %v5710 = vsel %vm5670, %v5537, %v4493
      %v5712 = vsel %vm5670, %v5540, %v4495
      %v5714 = vsel %vm5670, %v5543, %v4497
      %v5716 = vsel %vm5670, %v5546, %v4499
      %v5718 = vsel %vm5670, %v5549, %v4501
      %v5720 = vsel %vm5670, %v5552, %v4503
      %v5722 = vsel %vm5670, %v5555, %v4505
      %v5724 = vsel %vm5670, %v5558, %v4507
      %v5726 = vsel %vm5670, %v5561, %v4509
      %v5728 = vsel %vm5670, %v5564, %v4511
      %v5730 = vsel %vm5670, %v5567, %v4513
      %v5732 = vsel %vm5670, %v5570, %v4515
      %v5734 = vsel %vm5670, %v5573, %v4517
      %v5736 = vsel %vm5670, %v5576, %v4519
      %v5738 = vsel %vm5670, %v5579, %v4521
      %v5740 = vsel %vm5670, %v5582, %v4523
      %v5742 = vsel %vm5670, %v5585, %v4525
      %v5744 = vsel %vm5670, %v5588, %v4527
      %v5746 = vsel %vm5670, %v5591, %v4529
      %v5748 = vsel %vm5670, %v5594, %v4531
      %v5750 = vsel %vm5670, %v5597, %v4533
      %v5752 = vsel %vm5670, %v5600, %v4535
      %v5754 = vsel %vm5670, %v5603, %v4537
      %v5756 = vsel %vm5670, %v5606, %v4539
      %v5758 = vsel %vm5670, %v5609, %v4541
      %v5760 = vsel %vm5670, %v5612, %v4543
      %v5762 = vsel %vm5670, %v5615, %v4545
      %v5764 = vsel %vm5670, %v5618, %v4547
      %v5766 = vsel %vm5670, %v5621, %v4549
      %v5768 = vsel %vm5670, %v5624, %v4551
      %v5770 = vsel %vm5670, %v5627, %v4553
      %v5772 = vsel %vm5670, %v5630, %v4555
      %v5774 = vsel %vm5670, %v5633, %v4557
      %v5776 = vsel %vm5670, %v5636, %v4559
      %v5778 = vsel %vm5670, %v5639, %v4561
      %v5780 = vsel %vm5670, %v5642, %v4563
      %v5782 = vsel %vm5670, %v5645, %v4565
      %v5784 = vsel %vm5670, %v5648, %v4567
      %v5786 = vsel %vm5670, %v5651, %v4569
      %v5788 = vsel %vm5670, %v5654, %v4571
      %v5790 = vsel %vm5670, %v5657, %v4573
      %v5792 = vsel %vm5670, %v5660, %v4575
      %v5794 = vsel %vm5670, %v5663, %v4577
      %v5796 = vsel %vm5670, %v5666, %v4579
      %v5798 = vsel %vm5670, %v5669, %v4581
      %vm5799 = vcmask 97280
      %v5801 = vsel %vm5799, %v5672, %v4583
      %v5803 = vsel %vm5799, %v5674, %v4585
      %v5805 = vsel %vm5799, %v5676, %v4587
      %v5807 = vsel %vm5799, %v5678, %v4589
      %v5809 = vsel %vm5799, %v5680, %v4591
      %v5811 = vsel %vm5799, %v5682, %v4593
      %v5813 = vsel %vm5799, %v5684, %v4595
      %v5815 = vsel %vm5799, %v5686, %v4597
      %v5817 = vsel %vm5799, %v5688, %v4599
      %v5819 = vsel %vm5799, %v5690, %v4601
      %v5821 = vsel %vm5799, %v5692, %v4603
      %v5823 = vsel %vm5799, %v5694, %v4605
      %v5825 = vsel %vm5799, %v5696, %v4607
      %v5827 = vsel %vm5799, %v5698, %v4609
      %v5829 = vsel %vm5799, %v5700, %v4611
      %v5831 = vsel %vm5799, %v5702, %v4613
      %v5833 = vsel %vm5799, %v5704, %v4615
      %v5835 = vsel %vm5799, %v5706, %v4617
      %v5837 = vsel %vm5799, %v5708, %v4619
      %v5839 = vsel %vm5799, %v5710, %v4621
      %v5841 = vsel %vm5799, %v5712, %v4623
      %v5843 = vsel %vm5799, %v5714, %v4625
      %v5845 = vsel %vm5799, %v5716, %v4627
      %v5847 = vsel %vm5799, %v5718, %v4629
      %v5849 = vsel %vm5799, %v5720, %v4631
      %v5851 = vsel %vm5799, %v5722, %v4633
      %v5853 = vsel %vm5799, %v5724, %v4635
      %v5855 = vsel %vm5799, %v5726, %v4637
      %v5857 = vsel %vm5799, %v5728, %v4639
      %v5859 = vsel %vm5799, %v5730, %v4641
      %v5861 = vsel %vm5799, %v5732, %v4643
      %v5863 = vsel %vm5799, %v5734, %v4645
      %v5865 = vsel %vm5799, %v5736, %v4647
      %v5867 = vsel %vm5799, %v5738, %v4649
      %v5869 = vsel %vm5799, %v5740, %v4651
      %v5871 = vsel %vm5799, %v5742, %v4653
      %v5873 = vsel %vm5799, %v5744, %v4655
      %v5875 = vsel %vm5799, %v5746, %v4657
      %v5877 = vsel %vm5799, %v5748, %v4659
      %v5879 = vsel %vm5799, %v5750, %v4661
      %v5881 = vsel %vm5799, %v5752, %v4663
      %v5883 = vsel %vm5799, %v5754, %v4665
      %v5885 = vsel %vm5799, %v5756, %v4667
      %v5887 = vsel %vm5799, %v5758, %v4669
      %v5889 = vsel %vm5799, %v5760, %v4671
      %v5891 = vsel %vm5799, %v5762, %v4673
      %v5893 = vsel %vm5799, %v5764, %v4675
      %v5895 = vsel %vm5799, %v5766, %v4677
      %v5897 = vsel %vm5799, %v5768, %v4679
      %v5899 = vsel %vm5799, %v5770, %v4681
      %v5901 = vsel %vm5799, %v5772, %v4683
      %v5903 = vsel %vm5799, %v5774, %v4685
      %v5905 = vsel %vm5799, %v5776, %v4687
      %v5907 = vsel %vm5799, %v5778, %v4689
      %v5909 = vsel %vm5799, %v5780, %v4691
      %v5911 = vsel %vm5799, %v5782, %v4693
      %v5913 = vsel %vm5799, %v5784, %v4695
      %v5915 = vsel %vm5799, %v5786, %v4697
      %v5917 = vsel %vm5799, %v5788, %v4699
      %v5919 = vsel %vm5799, %v5790, %v4701
      %v5921 = vsel %vm5799, %v5792, %v4703
      %v5923 = vsel %vm5799, %v5794, %v4705
      %v5925 = vsel %vm5799, %v5796, %v4707
      %v5927 = vsel %vm5799, %v5798, %v4709
      %vm5928 = vcmask 130048
      %v5930 = vsel %vm5928, %v5801, %v4775
      %v5932 = vsel %vm5928, %v5803, %v4777
      %v5934 = vsel %vm5928, %v5805, %v4779
      %v5936 = vsel %vm5928, %v5807, %v4781
      %v5938 = vsel %vm5928, %v5809, %v4783
      %v5940 = vsel %vm5928, %v5811, %v4785
      %v5942 = vsel %vm5928, %v5813, %v4787
      %v5944 = vsel %vm5928, %v5815, %v4789
      %v5946 = vsel %vm5928, %v5817, %v4791
      %v5948 = vsel %vm5928, %v5819, %v4793
      %v5950 = vsel %vm5928, %v5821, %v4795
      %v5952 = vsel %vm5928, %v5823, %v4797
      %v5954 = vsel %vm5928, %v5825, %v4799
      %v5956 = vsel %vm5928, %v5827, %v4801
      %v5958 = vsel %vm5928, %v5829, %v4803
      %v5960 = vsel %vm5928, %v5831, %v4805
      %v5962 = vsel %vm5928, %v5833, %v4807
      %v5964 = vsel %vm5928, %v5835, %v4809
      %v5966 = vsel %vm5928, %v5837, %v4811
      %v5968 = vsel %vm5928, %v5839, %v4813
      %v5970 = vsel %vm5928, %v5841, %v4815
      %v5972 = vsel %vm5928, %v5843, %v4817
      %v5974 = vsel %vm5928, %v5845, %v4819
      %v5976 = vsel %vm5928, %v5847, %v4821
      %v5978 = vsel %vm5928, %v5849, %v4823
      %v5980 = vsel %vm5928, %v5851, %v4825
      %v5982 = vsel %vm5928, %v5853, %v4827
      %v5984 = vsel %vm5928, %v5855, %v4829
      %v5986 = vsel %vm5928, %v5857, %v4831
      %v5988 = vsel %vm5928, %v5859, %v4833
      %v5990 = vsel %vm5928, %v5861, %v4835
      %v5992 = vsel %vm5928, %v5863, %v4837
      %v5994 = vsel %vm5928, %v5865, %v4839
      %v5996 = vsel %vm5928, %v5867, %v4841
      %v5998 = vsel %vm5928, %v5869, %v4843
      %v6000 = vsel %vm5928, %v5871, %v4845
      %v6002 = vsel %vm5928, %v5873, %v4847
      %v6004 = vsel %vm5928, %v5875, %v4849
      %v6006 = vsel %vm5928, %v5877, %v4851
      %v6008 = vsel %vm5928, %v5879, %v4853
      %v6010 = vsel %vm5928, %v5881, %v4855
      %v6012 = vsel %vm5928, %v5883, %v4857
      %v6014 = vsel %vm5928, %v5885, %v4859
      %v6016 = vsel %vm5928, %v5887, %v4861
      %v6018 = vsel %vm5928, %v5889, %v4863
      %v6020 = vsel %vm5928, %v5891, %v4865
      %v6022 = vsel %vm5928, %v5893, %v4867
      %v6024 = vsel %vm5928, %v5895, %v4869
      %v6026 = vsel %vm5928, %v5897, %v4871
      %v6028 = vsel %vm5928, %v5899, %v4873
      %v6030 = vsel %vm5928, %v5901, %v4875
      %v6032 = vsel %vm5928, %v5903, %v4877
      %v6034 = vsel %vm5928, %v5905, %v4879
      %v6036 = vsel %vm5928, %v5907, %v4881
      %v6038 = vsel %vm5928, %v5909, %v4883
      %v6040 = vsel %vm5928, %v5911, %v4885
      %v6042 = vsel %vm5928, %v5913, %v4887
      %v6044 = vsel %vm5928, %v5915, %v4889
      %v6046 = vsel %vm5928, %v5917, %v4891
      %v6048 = vsel %vm5928, %v5919, %v4893
      %v6050 = vsel %vm5928, %v5921, %v4895
      %v6052 = vsel %vm5928, %v5923, %v4897
      %v6054 = vsel %vm5928, %v5925, %v4899
      %v6056 = vsel %vm5928, %v5927, %v4901
      %vm6057 = vcmask 162816
      %v6059 = vsel %vm6057, %v5930, %v4903
      %v6061 = vsel %vm6057, %v5932, %v4905
      %v6063 = vsel %vm6057, %v5934, %v4907
      %v6065 = vsel %vm6057, %v5936, %v4909
      %v6067 = vsel %vm6057, %v5938, %v4911
      %v6069 = vsel %vm6057, %v5940, %v4913
      %v6071 = vsel %vm6057, %v5942, %v4915
      %v6073 = vsel %vm6057, %v5944, %v4917
      %v6075 = vsel %vm6057, %v5946, %v4919
      %v6077 = vsel %vm6057, %v5948, %v4921
      %v6079 = vsel %vm6057, %v5950, %v4923
      %v6081 = vsel %vm6057, %v5952, %v4925
      %v6083 = vsel %vm6057, %v5954, %v4927
      %v6085 = vsel %vm6057, %v5956, %v4929
      %v6087 = vsel %vm6057, %v5958, %v4931
      %v6089 = vsel %vm6057, %v5960, %v4933
      %v6091 = vsel %vm6057, %v5962, %v4935
      %v6093 = vsel %vm6057, %v5964, %v4937
      %v6095 = vsel %vm6057, %v5966, %v4939
      %v6097 = vsel %vm6057, %v5968, %v4941
      %v6099 = vsel %vm6057, %v5970, %v4943
      %v6101 = vsel %vm6057, %v5972, %v4945
      %v6103 = vsel %vm6057, %v5974, %v4947
      %v6105 = vsel %vm6057, %v5976, %v4949
      %v6107 = vsel %vm6057, %v5978, %v4951
      %v6109 = vsel %vm6057, %v5980, %v4953
      %v6111 = vsel %vm6057, %v5982, %v4955
      %v6113 = vsel %vm6057, %v5984, %v4957
      %v6115 = vsel %vm6057, %v5986, %v4959
      %v6117 = vsel %vm6057, %v5988, %v4961
      %v6119 = vsel %vm6057, %v5990, %v4963
      %v6121 = vsel %vm6057, %v5992, %v4965
      %v6123 = vsel %vm6057, %v5994, %v4967
      %v6125 = vsel %vm6057, %v5996, %v4969
      %v6127 = vsel %vm6057, %v5998, %v4971
      %v6129 = vsel %vm6057, %v6000, %v4973
      %v6131 = vsel %vm6057, %v6002, %v4975
      %v6133 = vsel %vm6057, %v6004, %v4977
      %v6135 = vsel %vm6057, %v6006, %v4979
      %v6137 = vsel %vm6057, %v6008, %v4981
      %v6139 = vsel %vm6057, %v6010, %v4983
      %v6141 = vsel %vm6057, %v6012, %v4985
      %v6143 = vsel %vm6057, %v6014, %v4987
      %v6145 = vsel %vm6057, %v6016, %v4989
      %v6147 = vsel %vm6057, %v6018, %v4991
      %v6149 = vsel %vm6057, %v6020, %v4993
      %v6151 = vsel %vm6057, %v6022, %v4995
      %v6153 = vsel %vm6057, %v6024, %v4997
      %v6155 = vsel %vm6057, %v6026, %v4999
      %v6157 = vsel %vm6057, %v6028, %v5001
      %v6159 = vsel %vm6057, %v6030, %v5003
      %v6161 = vsel %vm6057, %v6032, %v5005
      %v6163 = vsel %vm6057, %v6034, %v5007
      %v6165 = vsel %vm6057, %v6036, %v5009
      %v6167 = vsel %vm6057, %v6038, %v5011
      %v6169 = vsel %vm6057, %v6040, %v5013
      %v6171 = vsel %vm6057, %v6042, %v5015
      %v6173 = vsel %vm6057, %v6044, %v5017
      %v6175 = vsel %vm6057, %v6046, %v5019
      %v6177 = vsel %vm6057, %v6048, %v5021
      %v6179 = vsel %vm6057, %v6050, %v5023
      %v6181 = vsel %vm6057, %v6052, %v5025
      %v6183 = vsel %vm6057, %v6054, %v5027
      %v6185 = vsel %vm6057, %v6056, %v5029
      %vm6186 = vcmask 195584
      %v6188 = vsel %vm6186, %v6059, %v5031
      %v6190 = vsel %vm6186, %v6061, %v5033
      %v6192 = vsel %vm6186, %v6063, %v5035
      %v6194 = vsel %vm6186, %v6065, %v5037
      %v6196 = vsel %vm6186, %v6067, %v5039
      %v6198 = vsel %vm6186, %v6069, %v5041
      %v6200 = vsel %vm6186, %v6071, %v5043
      %v6202 = vsel %vm6186, %v6073, %v5045
      %v6204 = vsel %vm6186, %v6075, %v5047
      %v6206 = vsel %vm6186, %v6077, %v5049
      %v6208 = vsel %vm6186, %v6079, %v5051
      %v6210 = vsel %vm6186, %v6081, %v5053
      %v6212 = vsel %vm6186, %v6083, %v5055
      %v6214 = vsel %vm6186, %v6085, %v5057
      %v6216 = vsel %vm6186, %v6087, %v5059
      %v6218 = vsel %vm6186, %v6089, %v5061
      %v6220 = vsel %vm6186, %v6091, %v5063
      %v6222 = vsel %vm6186, %v6093, %v5065
      %v6224 = vsel %vm6186, %v6095, %v5067
      %v6226 = vsel %vm6186, %v6097, %v5069
      %v6228 = vsel %vm6186, %v6099, %v5071
      %v6230 = vsel %vm6186, %v6101, %v5073
      %v6232 = vsel %vm6186, %v6103, %v5075
      %v6234 = vsel %vm6186, %v6105, %v5077
      %v6236 = vsel %vm6186, %v6107, %v5079
      %v6238 = vsel %vm6186, %v6109, %v5081
      %v6240 = vsel %vm6186, %v6111, %v5083
      %v6242 = vsel %vm6186, %v6113, %v5085
      %v6244 = vsel %vm6186, %v6115, %v5087
      %v6246 = vsel %vm6186, %v6117, %v5089
      %v6248 = vsel %vm6186, %v6119, %v5091
      %v6250 = vsel %vm6186, %v6121, %v5093
      %v6252 = vsel %vm6186, %v6123, %v5095
      %v6254 = vsel %vm6186, %v6125, %v5097
      %v6256 = vsel %vm6186, %v6127, %v5099
      %v6258 = vsel %vm6186, %v6129, %v5101
      %v6260 = vsel %vm6186, %v6131, %v5103
      %v6262 = vsel %vm6186, %v6133, %v5105
      %v6264 = vsel %vm6186, %v6135, %v5107
      %v6266 = vsel %vm6186, %v6137, %v5109
      %v6268 = vsel %vm6186, %v6139, %v5111
      %v6270 = vsel %vm6186, %v6141, %v5113
      %v6272 = vsel %vm6186, %v6143, %v5115
      %v6274 = vsel %vm6186, %v6145, %v5117
      %v6276 = vsel %vm6186, %v6147, %v5119
      %v6278 = vsel %vm6186, %v6149, %v5121
      %v6280 = vsel %vm6186, %v6151, %v5123
      %v6282 = vsel %vm6186, %v6153, %v5125
      %v6284 = vsel %vm6186, %v6155, %v5127
      %v6286 = vsel %vm6186, %v6157, %v5129
      %v6288 = vsel %vm6186, %v6159, %v5131
      %v6290 = vsel %vm6186, %v6161, %v5133
      %v6292 = vsel %vm6186, %v6163, %v5135
      %v6294 = vsel %vm6186, %v6165, %v5137
      %v6296 = vsel %vm6186, %v6167, %v5139
      %v6298 = vsel %vm6186, %v6169, %v5141
      %v6300 = vsel %vm6186, %v6171, %v5143
      %v6302 = vsel %vm6186, %v6173, %v5145
      %v6304 = vsel %vm6186, %v6175, %v5147
      %v6306 = vsel %vm6186, %v6177, %v5149
      %v6308 = vsel %vm6186, %v6179, %v5151
      %v6310 = vsel %vm6186, %v6181, %v5153
      %v6312 = vsel %vm6186, %v6183, %v5155
      %v6314 = vsel %vm6186, %v6185, %v5157
      %vm6315 = vcmask 228352
      %v6317 = vsel %vm6315, %v6188, %v5223
      %v6319 = vsel %vm6315, %v6190, %v5225
      %v6321 = vsel %vm6315, %v6192, %v5227
      %v6323 = vsel %vm6315, %v6194, %v5229
      %v6325 = vsel %vm6315, %v6196, %v5231
      %v6327 = vsel %vm6315, %v6198, %v5233
      %v6329 = vsel %vm6315, %v6200, %v5235
      %v6331 = vsel %vm6315, %v6202, %v5237
      %v6333 = vsel %vm6315, %v6204, %v5239
      %v6335 = vsel %vm6315, %v6206, %v5241
      %v6337 = vsel %vm6315, %v6208, %v5243
      %v6339 = vsel %vm6315, %v6210, %v5245
      %v6341 = vsel %vm6315, %v6212, %v5247
      %v6343 = vsel %vm6315, %v6214, %v5249
      %v6345 = vsel %vm6315, %v6216, %v5251
      %v6347 = vsel %vm6315, %v6218, %v5253
      %v6349 = vsel %vm6315, %v6220, %v5255
      %v6351 = vsel %vm6315, %v6222, %v5257
      %v6353 = vsel %vm6315, %v6224, %v5259
      %v6355 = vsel %vm6315, %v6226, %v5261
      %v6357 = vsel %vm6315, %v6228, %v5263
      %v6359 = vsel %vm6315, %v6230, %v5265
      %v6361 = vsel %vm6315, %v6232, %v5267
      %v6363 = vsel %vm6315, %v6234, %v5269
      %v6365 = vsel %vm6315, %v6236, %v5271
      %v6367 = vsel %vm6315, %v6238, %v5273
      %v6369 = vsel %vm6315, %v6240, %v5275
      %v6371 = vsel %vm6315, %v6242, %v5277
      %v6373 = vsel %vm6315, %v6244, %v5279
      %v6375 = vsel %vm6315, %v6246, %v5281
      %v6377 = vsel %vm6315, %v6248, %v5283
      %v6379 = vsel %vm6315, %v6250, %v5285
      %v6381 = vsel %vm6315, %v6252, %v5287
      %v6383 = vsel %vm6315, %v6254, %v5289
      %v6385 = vsel %vm6315, %v6256, %v5291
      %v6387 = vsel %vm6315, %v6258, %v5293
      %v6389 = vsel %vm6315, %v6260, %v5295
      %v6391 = vsel %vm6315, %v6262, %v5297
      %v6393 = vsel %vm6315, %v6264, %v5299
      %v6395 = vsel %vm6315, %v6266, %v5301
      %v6397 = vsel %vm6315, %v6268, %v5303
      %v6399 = vsel %vm6315, %v6270, %v5305
      %v6401 = vsel %vm6315, %v6272, %v5307
      %v6403 = vsel %vm6315, %v6274, %v5309
      %v6405 = vsel %vm6315, %v6276, %v5311
      %v6407 = vsel %vm6315, %v6278, %v5313
      %v6409 = vsel %vm6315, %v6280, %v5315
      %v6411 = vsel %vm6315, %v6282, %v5317
      %v6413 = vsel %vm6315, %v6284, %v5319
      %v6415 = vsel %vm6315, %v6286, %v5321
      %v6417 = vsel %vm6315, %v6288, %v5323
      %v6419 = vsel %vm6315, %v6290, %v5325
      %v6421 = vsel %vm6315, %v6292, %v5327
      %v6423 = vsel %vm6315, %v6294, %v5329
      %v6425 = vsel %vm6315, %v6296, %v5331
      %v6427 = vsel %vm6315, %v6298, %v5333
      %v6429 = vsel %vm6315, %v6300, %v5335
      %v6431 = vsel %vm6315, %v6302, %v5337
      %v6433 = vsel %vm6315, %v6304, %v5339
      %v6435 = vsel %vm6315, %v6306, %v5341
      %v6437 = vsel %vm6315, %v6308, %v5343
      %v6439 = vsel %vm6315, %v6310, %v5345
      %v6441 = vsel %vm6315, %v6312, %v5347
      %v6443 = vsel %vm6315, %v6314, %v5349
      %v6445 = vsel %vm363, %v6317, %v5351
      %v6447 = vsel %vm363, %v6319, %v5353
      %v6449 = vsel %vm363, %v6321, %v5355
      %v6451 = vsel %vm363, %v6323, %v5357
      %v6453 = vsel %vm363, %v6325, %v5359
      %v6455 = vsel %vm363, %v6327, %v5361
      %v6457 = vsel %vm363, %v6329, %v5363
      %v6459 = vsel %vm363, %v6331, %v5365
      %v6461 = vsel %vm363, %v6333, %v5367
      %v6463 = vsel %vm363, %v6335, %v5369
      %v6465 = vsel %vm363, %v6337, %v5371
      %v6467 = vsel %vm363, %v6339, %v5373
      %v6469 = vsel %vm363, %v6341, %v5375
      %v6471 = vsel %vm363, %v6343, %v5377
      %v6473 = vsel %vm363, %v6345, %v5379
      %v6475 = vsel %vm363, %v6347, %v5381
      %v6477 = vsel %vm363, %v6349, %v5383
      %v6479 = vsel %vm363, %v6351, %v5385
      %v6481 = vsel %vm363, %v6353, %v5387
      %v6483 = vsel %vm363, %v6355, %v5389
      %v6485 = vsel %vm363, %v6357, %v5391
      %v6487 = vsel %vm363, %v6359, %v5393
      %v6489 = vsel %vm363, %v6361, %v5395
      %v6491 = vsel %vm363, %v6363, %v5397
      %v6493 = vsel %vm363, %v6365, %v5399
      %v6495 = vsel %vm363, %v6367, %v5401
      %v6497 = vsel %vm363, %v6369, %v5403
      %v6499 = vsel %vm363, %v6371, %v5405
      %v6501 = vsel %vm363, %v6373, %v5407
      %v6503 = vsel %vm363, %v6375, %v5409
      %v6505 = vsel %vm363, %v6377, %v5411
      %v6507 = vsel %vm363, %v6379, %v5413
      %v6509 = vsel %vm363, %v6381, %v5415
      %v6511 = vsel %vm363, %v6383, %v5417
      %v6513 = vsel %vm363, %v6385, %v5419
      %v6515 = vsel %vm363, %v6387, %v5421
      %v6517 = vsel %vm363, %v6389, %v5423
      %v6519 = vsel %vm363, %v6391, %v5425
      %v6521 = vsel %vm363, %v6393, %v5427
      %v6523 = vsel %vm363, %v6395, %v5429
      %v6525 = vsel %vm363, %v6397, %v5431
      %v6527 = vsel %vm363, %v6399, %v5433
      %v6529 = vsel %vm363, %v6401, %v5435
      %v6531 = vsel %vm363, %v6403, %v5437
      %v6533 = vsel %vm363, %v6405, %v5439
      %v6535 = vsel %vm363, %v6407, %v5441
      %v6537 = vsel %vm363, %v6409, %v5443
      %v6539 = vsel %vm363, %v6411, %v5445
      %v6541 = vsel %vm363, %v6413, %v5447
      %v6543 = vsel %vm363, %v6415, %v5449
      %v6545 = vsel %vm363, %v6417, %v5451
      %v6547 = vsel %vm363, %v6419, %v5453
      %v6549 = vsel %vm363, %v6421, %v5455
      %v6551 = vsel %vm363, %v6423, %v5457
      %v6553 = vsel %vm363, %v6425, %v5459
      %v6555 = vsel %vm363, %v6427, %v5461
      %v6557 = vsel %vm363, %v6429, %v5463
      %v6559 = vsel %vm363, %v6431, %v5465
      %v6561 = vsel %vm363, %v6433, %v5467
      %v6563 = vsel %vm363, %v6435, %v5469
      %v6565 = vsel %vm363, %v6437, %v5471
      %v6567 = vsel %vm363, %v6439, %v5473
      %v6569 = vsel %vm363, %v6441, %v5475
      %v6571 = vsel %vm363, %v6443, %v5477
      %v6572 = vld [vmem:[%s1] sm:$0xf]
      %v6573 = vld [vmem:[%s1 + $0x4] sm:$0xf]
      %v6574 = vld [vmem:[%s1 + $0x8] sm:$0xf]
      %v6575 = vld [vmem:[%s1 + $0xc] sm:$0xf]
      %v6576 = vld [vmem:[%s1 + $0x10] sm:$0x3]
      %v6577 = vld [vmem:[%s2] sm:$0x1]
      %v6579 = vlaneseq
      %v6580 = vshrl.u32 %v6579, 7
      %v6581 = vsub.s32 0, %v6580
      %v6582 = vrot.slane %v6577, %v6581
      %v6589 = vunpack.c.l.b16 %v6572
      %v6590 = vunpack.c.l.b16 %v6573
      %v6591 = vunpack.c.l.b16 %v6574
      %v6592 = vunpack.c.l.b16 %v6575
      %v6593 = vunpack.c.l.b16 %v6576
      %v6594 = vpack.c.b16 %v6590, %v6589
      %v6595 = vpack.c.b16 %v6592, %v6591
      %v6596 = vpack.c.b16 %v6593, %v6593
      %vm6599 = vcmask 293888
      %v6600 = vsel %vm6599, %v6445, 0
      %v6602 = vsel %vm6599, %v6447, 0
      %v6604 = vsel %vm6599, %v6449, 0
      %v6606 = vsel %vm6599, %v6451, 0
      %v6608 = vsel %vm6599, %v6453, 0
      %v6610 = vsel %vm6599, %v6455, 0
      %v6612 = vsel %vm6599, %v6457, 0
      %v6614 = vsel %vm6599, %v6459, 0
      %v6616 = vsel %vm6599, %v6461, 0
      %v6618 = vsel %vm6599, %v6463, 0
      %v6620 = vsel %vm6599, %v6465, 0
      %v6622 = vsel %vm6599, %v6467, 0
      %v6624 = vsel %vm6599, %v6469, 0
      %v6626 = vsel %vm6599, %v6471, 0
      %v6628 = vsel %vm6599, %v6473, 0
      %v6630 = vsel %vm6599, %v6475, 0
      %v6632 = vsel %vm6599, %v6477, 0
      %v6634 = vsel %vm6599, %v6479, 0
      %v6636 = vsel %vm6599, %v6481, 0
      %v6638 = vsel %vm6599, %v6483, 0
      %v6640 = vsel %vm6599, %v6485, 0
      %v6642 = vsel %vm6599, %v6487, 0
      %v6644 = vsel %vm6599, %v6489, 0
      %v6646 = vsel %vm6599, %v6491, 0
      %v6648 = vsel %vm6599, %v6493, 0
      %v6650 = vsel %vm6599, %v6495, 0
      %v6652 = vsel %vm6599, %v6497, 0
      %v6654 = vsel %vm6599, %v6499, 0
      %v6656 = vsel %vm6599, %v6501, 0
      %v6658 = vsel %vm6599, %v6503, 0
      %v6660 = vsel %vm6599, %v6505, 0
      %v6662 = vsel %vm6599, %v6507, 0
      %v6664 = vsel %vm6599, %v6509, 0
      %v6666 = vsel %vm6599, %v6511, 0
      %v6668 = vsel %vm6599, %v6513, 0
      %v6670 = vsel %vm6599, %v6515, 0
      %v6672 = vsel %vm6599, %v6517, 0
      %v6674 = vsel %vm6599, %v6519, 0
      %v6676 = vsel %vm6599, %v6521, 0
      %v6678 = vsel %vm6599, %v6523, 0
      %v6680 = vsel %vm6599, %v6525, 0
      %v6682 = vsel %vm6599, %v6527, 0
      %v6684 = vsel %vm6599, %v6529, 0
      %v6686 = vsel %vm6599, %v6531, 0
      %v6688 = vsel %vm6599, %v6533, 0
      %v6690 = vsel %vm6599, %v6535, 0
      %v6692 = vsel %vm6599, %v6537, 0
      %v6694 = vsel %vm6599, %v6539, 0
      %v6696 = vsel %vm6599, %v6541, 0
      %v6698 = vsel %vm6599, %v6543, 0
      %v6700 = vsel %vm6599, %v6545, 0
      %v6702 = vsel %vm6599, %v6547, 0
      %v6704 = vsel %vm6599, %v6549, 0
      %v6706 = vsel %vm6599, %v6551, 0
      %v6708 = vsel %vm6599, %v6553, 0
      %v6710 = vsel %vm6599, %v6555, 0
      %v6712 = vsel %vm6599, %v6557, 0
      %v6714 = vsel %vm6599, %v6559, 0
      %v6716 = vsel %vm6599, %v6561, 0
      %v6718 = vsel %vm6599, %v6563, 0
      %v6720 = vsel %vm6599, %v6565, 0
      %v6722 = vsel %vm6599, %v6567, 0
      %v6724 = vsel %vm6599, %v6569, 0
      %v6726 = vsel %vm6599, %v6571, 0
      %vm6728 = vcmask 1041408
      %v6730 = vsel %vm6728, %v6596, 0
      %6732 = vmatprep.subr.bf16.mxu0 0
      %6733 = vmatpush1.bf16.msra.mxu0 %v6594
      %6734 = vmatprep.subr.bf16.mxu0 0
      %6735 = vmatpush1.bf16.msra.mxu0 %v6595
      %6736 = vmatprep.subr.bf16.mxu0 0
      %6737 = vmatpush1.bf16.msra.mxu0 %v6730
      %6738 = vmatprep.subr.bf16.mxu0 0
      %6739 = vmatpush1.bf16.msra.mxu0 0
      %6740 = vmatprep.subr.bf16.mxu0 0
      %6741 = vmatpush1.bf16.msra.mxu0 0
      %6742 = vmatprep.subr.bf16.mxu0 0
      %6743 = vmatpush1.bf16.msra.mxu0 0
      %6744 = vmatprep.subr.bf16.mxu0 0
      %6745 = vmatpush1.bf16.msra.mxu0 0
      %6746 = vmatprep.subr.bf16.mxu0 0
      %6747 = vmatpush1.bf16.msra.mxu0 0
      %6748 = vmatprep.subr.bf16.mxu0 0
      %6749 = vmatpush1.bf16.msra.mxu0 0
      %6750 = vmatprep.subr.bf16.mxu0 0
      %6751 = vmatpush1.bf16.msra.mxu0 0
      %6752 = vmatprep.subr.bf16.mxu0 0
      %6753 = vmatpush1.bf16.msra.mxu0 0
      %6754 = vmatprep.subr.bf16.mxu0 0
      %6755 = vmatpush1.bf16.msra.mxu0 0
      %6756 = vmatprep.subr.bf16.mxu0 0
      %6757 = vmatpush1.bf16.msra.mxu0 0
      %6758 = vmatprep.subr.bf16.mxu0 0
      %6759 = vmatpush1.bf16.msra.mxu0 0
      %6760 = vmatprep.subr.bf16.mxu0 0
      %6761 = vmatpush1.bf16.msra.mxu0 0
      %6762 = vmatprep.subr.bf16.mxu0 0
      %6763 = vmatpush1.bf16.msra.mxu0 0
      %6764 = vmatprep.mubr.bf16.mxu0 0
      %6765 = vmatmul.mubr.bf16.gmra.mrb[0].mxu0 %v6600
      %v6766 = vpop.f32.mrb[0].mxu0
      %v6767 = vadd.f32 %v6582, %v6766
      %v6768 = vpop.f32.mrb[0].mxu0
      %v6769 = vpop.f32.mrb[0].mxu0
      %v6770 = vadd.f32 %v6582, %v6769
      %v6771 = vpop.f32.mrb[0].mxu0
      %6772 = vmatprep.mubr.bf16.mxu0 0
      %6773 = vmatmul.mubr.bf16.gmra.mrb[0].mxu0 %v6602
      %v6774 = vpop.f32.mrb[0].mxu0
      %v6775 = vadd.f32 %v6582, %v6774
      %v6776 = vpop.f32.mrb[0].mxu0
      %v6777 = vpop.f32.mrb[0].mxu0
      %v6778 = vadd.f32 %v6582, %v6777
      %v6779 = vpop.f32.mrb[0].mxu0
      %6780 = vmatprep.mubr.bf16.mxu0 0
      %6781 = vmatmul.mubr.bf16.gmra.mrb[0].mxu0 %v6604
      %v6782 = vpop.f32.mrb[0].mxu0
      %v6783 = vadd.f32 %v6582, %v6782
      %v6784 = vpop.f32.mrb[0].mxu0
      %v6785 = vpop.f32.mrb[0].mxu0
      %v6786 = vadd.f32 %v6582, %v6785
      %v6787 = vpop.f32.mrb[0].mxu0
      %6788 = vmatprep.mubr.bf16.mxu0 0
      %6789 = vmatmul.mubr.bf16.gmra.mrb[0].mxu0 %v6606
      %v6790 = vpop.f32.mrb[0].mxu0
      %v6791 = vadd.f32 %v6582, %v6790
      %v6792 = vpop.f32.mrb[0].mxu0
      %v6793 = vpop.f32.mrb[0].mxu0
      %v6794 = vadd.f32 %v6582, %v6793
      %v6795 = vpop.f32.mrb[0].mxu0
      %6796 = vmatprep.mubr.bf16.mxu0 0
      %6797 = vmatmul.mubr.bf16.gmra.mrb[0].mxu0 %v6608
      %v6798 = vpop.f32.mrb[0].mxu0
      %v6799 = vadd.f32 %v6582, %v6798
      %v6800 = vpop.f32.mrb[0].mxu0
      %v6801 = vpop.f32.mrb[0].mxu0
      %v6802 = vadd.f32 %v6582, %v6801
      %v6803 = vpop.f32.mrb[0].mxu0
      %6804 = vmatprep.mubr.bf16.mxu0 0
      %6805 = vmatmul.mubr.bf16.gmra.mrb[0].mxu0 %v6610
      %v6806 = vpop.f32.mrb[0].mxu0
      %v6807 = vadd.f32 %v6582, %v6806
      %v6808 = vpop.f32.mrb[0].mxu0
      %v6809 = vpop.f32.mrb[0].mxu0
      %v6810 = vadd.f32 %v6582, %v6809
      %v6811 = vpop.f32.mrb[0].mxu0
      %6812 = vmatprep.mubr.bf16.mxu0 0
      %6813 = vmatmul.mubr.bf16.gmra.mrb[0].mxu0 %v6612
      %v6814 = vpop.f32.mrb[0].mxu0
      %v6815 = vadd.f32 %v6582, %v6814
      %v6816 = vpop.f32.mrb[0].mxu0
      %v6817 = vpop.f32.mrb[0].mxu0
      %v6818 = vadd.f32 %v6582, %v6817
      %v6819 = vpop.f32.mrb[0].mxu0
      %6820 = vmatprep.mubr.bf16.mxu0 0
      %6821 = vmatmul.mubr.bf16.gmra.mrb[0].mxu0 %v6614
      %v6822 = vpop.f32.mrb[0].mxu0
      %v6823 = vadd.f32 %v6582, %v6822
      %v6824 = vpop.f32.mrb[0].mxu0
      %v6825 = vpop.f32.mrb[0].mxu0
      %v6826 = vadd.f32 %v6582, %v6825
      %v6827 = vpop.f32.mrb[0].mxu0
      %6828 = vmatprep.mubr.bf16.mxu0 0
      %6829 = vmatmul.mubr.bf16.gmra.mrb[0].mxu0 %v6616
      %v6830 = vpop.f32.mrb[0].mxu0
      %v6831 = vadd.f32 %v6582, %v6830
      %v6832 = vpop.f32.mrb[0].mxu0
      %v6833 = vpop.f32.mrb[0].mxu0
      %v6834 = vadd.f32 %v6582, %v6833
      %v6835 = vpop.f32.mrb[0].mxu0
      %6836 = vmatprep.mubr.bf16.mxu0 0
      %6837 = vmatmul.mubr.bf16.gmra.mrb[0].mxu0 %v6618
      %v6838 = vpop.f32.mrb[0].mxu0
      %v6839 = vadd.f32 %v6582, %v6838
      %v6840 = vpop.f32.mrb[0].mxu0
      %v6841 = vpop.f32.mrb[0].mxu0
      %v6842 = vadd.f32 %v6582, %v6841
      %v6843 = vpop.f32.mrb[0].mxu0
      %6844 = vmatprep.mubr.bf16.mxu0 0
      %6845 = vmatmul.mubr.bf16.gmra.mrb[0].mxu0 %v6620
      %v6846 = vpop.f32.mrb[0].mxu0
      %v6847 = vadd.f32 %v6582, %v6846
      %v6848 = vpop.f32.mrb[0].mxu0
      %v6849 = vpop.f32.mrb[0].mxu0
      %v6850 = vadd.f32 %v6582, %v6849
      %v6851 = vpop.f32.mrb[0].mxu0
      %6852 = vmatprep.mubr.bf16.mxu0 0
      %6853 = vmatmul.mubr.bf16.gmra.mrb[0].mxu0 %v6622
      %v6854 = vpop.f32.mrb[0].mxu0
      %v6855 = vadd.f32 %v6582, %v6854
      %v6856 = vpop.f32.mrb[0].mxu0
      %v6857 = vpop.f32.mrb[0].mxu0
      %v6858 = vadd.f32 %v6582, %v6857
      %v6859 = vpop.f32.mrb[0].mxu0
      %6860 = vmatprep.mubr.bf16.mxu0 0
      %6861 = vmatmul.mubr.bf16.gmra.mrb[0].mxu0 %v6624
      %v6862 = vpop.f32.mrb[0].mxu0
      %v6863 = vadd.f32 %v6582, %v6862
      %v6864 = vpop.f32.mrb[0].mxu0
      %v6865 = vpop.f32.mrb[0].mxu0
      %v6866 = vadd.f32 %v6582, %v6865
      %v6867 = vpop.f32.mrb[0].mxu0
      %6868 = vmatprep.mubr.bf16.mxu0 0
      %6869 = vmatmul.mubr.bf16.gmra.mrb[0].mxu0 %v6626
      %v6870 = vpop.f32.mrb[0].mxu0
      %v6871 = vadd.f32 %v6582, %v6870
      %v6872 = vpop.f32.mrb[0].mxu0
      %v6873 = vpop.f32.mrb[0].mxu0
      %v6874 = vadd.f32 %v6582, %v6873
      %v6875 = vpop.f32.mrb[0].mxu0
      %6876 = vmatprep.mubr.bf16.mxu0 0
      %6877 = vmatmul.mubr.bf16.gmra.mrb[0].mxu0 %v6628
      %v6878 = vpop.f32.mrb[0].mxu0
      %v6879 = vadd.f32 %v6582, %v6878
      %v6880 = vpop.f32.mrb[0].mxu0
      %v6881 = vpop.f32.mrb[0].mxu0
      %v6882 = vadd.f32 %v6582, %v6881
      %v6883 = vpop.f32.mrb[0].mxu0
      %6884 = vmatprep.mubr.bf16.mxu0 0
      %6885 = vmatmul.mubr.bf16.gmra.mrb[0].mxu0 %v6630
      %v6886 = vpop.f32.mrb[0].mxu0
      %v6887 = vadd.f32 %v6582, %v6886
      %v6888 = vpop.f32.mrb[0].mxu0
      %v6889 = vpop.f32.mrb[0].mxu0
      %v6890 = vadd.f32 %v6582, %v6889
      %v6891 = vpop.f32.mrb[0].mxu0
      %6892 = vmatprep.mubr.bf16.mxu0 0
      %6893 = vmatmul.mubr.bf16.gmra.mrb[0].mxu0 %v6632
      %v6894 = vpop.f32.mrb[0].mxu0
      %v6895 = vadd.f32 %v6582, %v6894
      %v6896 = vpop.f32.mrb[0].mxu0
      %v6897 = vpop.f32.mrb[0].mxu0
      %v6898 = vadd.f32 %v6582, %v6897
      %v6899 = vpop.f32.mrb[0].mxu0
      %6900 = vmatprep.mubr.bf16.mxu0 0
      %6901 = vmatmul.mubr.bf16.gmra.mrb[0].mxu0 %v6634
      %v6902 = vpop.f32.mrb[0].mxu0
      %v6903 = vadd.f32 %v6582, %v6902
      %v6904 = vpop.f32.mrb[0].mxu0
      %v6905 = vpop.f32.mrb[0].mxu0
      %v6906 = vadd.f32 %v6582, %v6905
      %v6907 = vpop.f32.mrb[0].mxu0
      %6908 = vmatprep.mubr.bf16.mxu0 0
      %6909 = vmatmul.mubr.bf16.gmra.mrb[0].mxu0 %v6636
      %v6910 = vpop.f32.mrb[0].mxu0
      %v6911 = vadd.f32 %v6582, %v6910
      %v6912 = vpop.f32.mrb[0].mxu0
      %v6913 = vpop.f32.mrb[0].mxu0
      %v6914 = vadd.f32 %v6582, %v6913
      %v6915 = vpop.f32.mrb[0].mxu0
      %6916 = vmatprep.mubr.bf16.mxu0 0
      %6917 = vmatmul.mubr.bf16.gmra.mrb[0].mxu0 %v6638
      %v6918 = vpop.f32.mrb[0].mxu0
      %v6919 = vadd.f32 %v6582, %v6918
      %v6920 = vpop.f32.mrb[0].mxu0
      %v6921 = vpop.f32.mrb[0].mxu0
      %v6922 = vadd.f32 %v6582, %v6921
      %v6923 = vpop.f32.mrb[0].mxu0
      %6924 = vmatprep.mubr.bf16.mxu0 0
      %6925 = vmatmul.mubr.bf16.gmra.mrb[0].mxu0 %v6640
      %v6926 = vpop.f32.mrb[0].mxu0
      %v6927 = vadd.f32 %v6582, %v6926
      %v6928 = vpop.f32.mrb[0].mxu0
      %v6929 = vpop.f32.mrb[0].mxu0
      %v6930 = vadd.f32 %v6582, %v6929
      %v6931 = vpop.f32.mrb[0].mxu0
      %6932 = vmatprep.mubr.bf16.mxu0 0
      %6933 = vmatmul.mubr.bf16.gmra.mrb[0].mxu0 %v6642
      %v6934 = vpop.f32.mrb[0].mxu0
      %v6935 = vadd.f32 %v6582, %v6934
      %v6936 = vpop.f32.mrb[0].mxu0
      %v6937 = vpop.f32.mrb[0].mxu0
      %v6938 = vadd.f32 %v6582, %v6937
      %v6939 = vpop.f32.mrb[0].mxu0
      %6940 = vmatprep.mubr.bf16.mxu0 0
      %6941 = vmatmul.mubr.bf16.gmra.mrb[0].mxu0 %v6644
      %v6942 = vpop.f32.mrb[0].mxu0
      %v6943 = vadd.f32 %v6582, %v6942
      %v6944 = vpop.f32.mrb[0].mxu0
      %v6945 = vpop.f32.mrb[0].mxu0
      %v6946 = vadd.f32 %v6582, %v6945
      %v6947 = vpop.f32.mrb[0].mxu0
      %6948 = vmatprep.mubr.bf16.mxu0 0
      %6949 = vmatmul.mubr.bf16.gmra.mrb[0].mxu0 %v6646
      %v6950 = vpop.f32.mrb[0].mxu0
      %v6951 = vadd.f32 %v6582, %v6950
      %v6952 = vpop.f32.mrb[0].mxu0
      %v6953 = vpop.f32.mrb[0].mxu0
      %v6954 = vadd.f32 %v6582, %v6953
      %v6955 = vpop.f32.mrb[0].mxu0
      %6956 = vmatprep.mubr.bf16.mxu0 0
      %6957 = vmatmul.mubr.bf16.gmra.mrb[0].mxu0 %v6648
      %v6958 = vpop.f32.mrb[0].mxu0
      %v6959 = vadd.f32 %v6582, %v6958
      %v6960 = vpop.f32.mrb[0].mxu0
      %v6961 = vpop.f32.mrb[0].mxu0
      %v6962 = vadd.f32 %v6582, %v6961
      %v6963 = vpop.f32.mrb[0].mxu0
      %6964 = vmatprep.mubr.bf16.mxu0 0
      %6965 = vmatmul.mubr.bf16.gmra.mrb[0].mxu0 %v6650
      %v6966 = vpop.f32.mrb[0].mxu0
      %v6967 = vadd.f32 %v6582, %v6966
      %v6968 = vpop.f32.mrb[0].mxu0
      %v6969 = vpop.f32.mrb[0].mxu0
      %v6970 = vadd.f32 %v6582, %v6969
      %v6971 = vpop.f32.mrb[0].mxu0
      %6972 = vmatprep.mubr.bf16.mxu0 0
      %6973 = vmatmul.mubr.bf16.gmra.mrb[0].mxu0 %v6652
      %v6974 = vpop.f32.mrb[0].mxu0
      %v6975 = vadd.f32 %v6582, %v6974
      %v6976 = vpop.f32.mrb[0].mxu0
      %v6977 = vpop.f32.mrb[0].mxu0
      %v6978 = vadd.f32 %v6582, %v6977
      %v6979 = vpop.f32.mrb[0].mxu0
      %6980 = vmatprep.mubr.bf16.mxu0 0
      %6981 = vmatmul.mubr.bf16.gmra.mrb[0].mxu0 %v6654
      %v6982 = vpop.f32.mrb[0].mxu0
      %v6983 = vadd.f32 %v6582, %v6982
      %v6984 = vpop.f32.mrb[0].mxu0
      %v6985 = vpop.f32.mrb[0].mxu0
      %v6986 = vadd.f32 %v6582, %v6985
      %v6987 = vpop.f32.mrb[0].mxu0
      %6988 = vmatprep.mubr.bf16.mxu0 0
      %6989 = vmatmul.mubr.bf16.gmra.mrb[0].mxu0 %v6656
      %v6990 = vpop.f32.mrb[0].mxu0
      %v6991 = vadd.f32 %v6582, %v6990
      %v6992 = vpop.f32.mrb[0].mxu0
      %v6993 = vpop.f32.mrb[0].mxu0
      %v6994 = vadd.f32 %v6582, %v6993
      %v6995 = vpop.f32.mrb[0].mxu0
      %6996 = vmatprep.mubr.bf16.mxu0 0
      %6997 = vmatmul.mubr.bf16.gmra.mrb[0].mxu0 %v6658
      %v6998 = vpop.f32.mrb[0].mxu0
      %v6999 = vadd.f32 %v6582, %v6998
      %v7000 = vpop.f32.mrb[0].mxu0
      %v7001 = vpop.f32.mrb[0].mxu0
      %v7002 = vadd.f32 %v6582, %v7001
      %v7003 = vpop.f32.mrb[0].mxu0
      %7004 = vmatprep.mubr.bf16.mxu0 0
      %7005 = vmatmul.mubr.bf16.gmra.mrb[0].mxu0 %v6660
      %v7006 = vpop.f32.mrb[0].mxu0
      %v7007 = vadd.f32 %v6582, %v7006
      %v7008 = vpop.f32.mrb[0].mxu0
      %v7009 = vpop.f32.mrb[0].mxu0
      %v7010 = vadd.f32 %v6582, %v7009
      %v7011 = vpop.f32.mrb[0].mxu0
      %7012 = vmatprep.mubr.bf16.mxu0 0
      %7013 = vmatmul.mubr.bf16.gmra.mrb[0].mxu0 %v6662
      %v7014 = vpop.f32.mrb[0].mxu0
      %v7015 = vadd.f32 %v6582, %v7014
      %v7016 = vpop.f32.mrb[0].mxu0
      %v7017 = vpop.f32.mrb[0].mxu0
      %v7018 = vadd.f32 %v6582, %v7017
      %v7019 = vpop.f32.mrb[0].mxu0
      %7020 = vmatprep.mubr.bf16.mxu0 0
      %7021 = vmatmul.mubr.bf16.gmra.mrb[0].mxu0 %v6664
      %v7022 = vpop.f32.mrb[0].mxu0
      %v7023 = vadd.f32 %v6582, %v7022
      %v7024 = vpop.f32.mrb[0].mxu0
      %v7025 = vpop.f32.mrb[0].mxu0
      %v7026 = vadd.f32 %v6582, %v7025
      %v7027 = vpop.f32.mrb[0].mxu0
      %7028 = vmatprep.mubr.bf16.mxu0 0
      %7029 = vmatmul.mubr.bf16.gmra.mrb[0].mxu0 %v6666
      %v7030 = vpop.f32.mrb[0].mxu0
      %v7031 = vadd.f32 %v6582, %v7030
      %v7032 = vpop.f32.mrb[0].mxu0
      %v7033 = vpop.f32.mrb[0].mxu0
      %v7034 = vadd.f32 %v6582, %v7033
      %v7035 = vpop.f32.mrb[0].mxu0
      %7036 = vmatprep.mubr.bf16.mxu0 0
      %7037 = vmatmul.mubr.bf16.gmra.mrb[0].mxu0 %v6668
      %v7038 = vpop.f32.mrb[0].mxu0
      %v7039 = vadd.f32 %v6582, %v7038
      %v7040 = vpop.f32.mrb[0].mxu0
      %v7041 = vpop.f32.mrb[0].mxu0
      %v7042 = vadd.f32 %v6582, %v7041
      %v7043 = vpop.f32.mrb[0].mxu0
      %7044 = vmatprep.mubr.bf16.mxu0 0
      %7045 = vmatmul.mubr.bf16.gmra.mrb[0].mxu0 %v6670
      %v7046 = vpop.f32.mrb[0].mxu0
      %v7047 = vadd.f32 %v6582, %v7046
      %v7048 = vpop.f32.mrb[0].mxu0
      %v7049 = vpop.f32.mrb[0].mxu0
      %v7050 = vadd.f32 %v6582, %v7049
      %v7051 = vpop.f32.mrb[0].mxu0
      %7052 = vmatprep.mubr.bf16.mxu0 0
      %7053 = vmatmul.mubr.bf16.gmra.mrb[0].mxu0 %v6672
      %v7054 = vpop.f32.mrb[0].mxu0
      %v7055 = vadd.f32 %v6582, %v7054
      %v7056 = vpop.f32.mrb[0].mxu0
      %v7057 = vpop.f32.mrb[0].mxu0
      %v7058 = vadd.f32 %v6582, %v7057
      %v7059 = vpop.f32.mrb[0].mxu0
      %7060 = vmatprep.mubr.bf16.mxu0 0
      %7061 = vmatmul.mubr.bf16.gmra.mrb[0].mxu0 %v6674
      %v7062 = vpop.f32.mrb[0].mxu0
      %v7063 = vadd.f32 %v6582, %v7062
      %v7064 = vpop.f32.mrb[0].mxu0
      %v7065 = vpop.f32.mrb[0].mxu0
      %v7066 = vadd.f32 %v6582, %v7065
      %v7067 = vpop.f32.mrb[0].mxu0
      %7068 = vmatprep.mubr.bf16.mxu0 0
      %7069 = vmatmul.mubr.bf16.gmra.mrb[0].mxu0 %v6676
      %v7070 = vpop.f32.mrb[0].mxu0
      %v7071 = vadd.f32 %v6582, %v7070
      %v7072 = vpop.f32.mrb[0].mxu0
      %v7073 = vpop.f32.mrb[0].mxu0
      %v7074 = vadd.f32 %v6582, %v7073
      %v7075 = vpop.f32.mrb[0].mxu0
      %7076 = vmatprep.mubr.bf16.mxu0 0
      %7077 = vmatmul.mubr.bf16.gmra.mrb[0].mxu0 %v6678
      %v7078 = vpop.f32.mrb[0].mxu0
      %v7079 = vadd.f32 %v6582, %v7078
      %v7080 = vpop.f32.mrb[0].mxu0
      %v7081 = vpop.f32.mrb[0].mxu0
      %v7082 = vadd.f32 %v6582, %v7081
      %v7083 = vpop.f32.mrb[0].mxu0
      %7084 = vmatprep.mubr.bf16.mxu0 0
      %7085 = vmatmul.mubr.bf16.gmra.mrb[0].mxu0 %v6680
      %v7086 = vpop.f32.mrb[0].mxu0
      %v7087 = vadd.f32 %v6582, %v7086
      %v7088 = vpop.f32.mrb[0].mxu0
      %v7089 = vpop.f32.mrb[0].mxu0
      %v7090 = vadd.f32 %v6582, %v7089
      %v7091 = vpop.f32.mrb[0].mxu0
      %7092 = vmatprep.mubr.bf16.mxu0 0
      %7093 = vmatmul.mubr.bf16.gmra.mrb[0].mxu0 %v6682
      %v7094 = vpop.f32.mrb[0].mxu0
      %v7095 = vadd.f32 %v6582, %v7094
      %v7096 = vpop.f32.mrb[0].mxu0
      %v7097 = vpop.f32.mrb[0].mxu0
      %v7098 = vadd.f32 %v6582, %v7097
      %v7099 = vpop.f32.mrb[0].mxu0
      %7100 = vmatprep.mubr.bf16.mxu0 0
      %7101 = vmatmul.mubr.bf16.gmra.mrb[0].mxu0 %v6684
      %v7102 = vpop.f32.mrb[0].mxu0
      %v7103 = vadd.f32 %v6582, %v7102
      %v7104 = vpop.f32.mrb[0].mxu0
      %v7105 = vpop.f32.mrb[0].mxu0
      %v7106 = vadd.f32 %v6582, %v7105
      %v7107 = vpop.f32.mrb[0].mxu0
      %7108 = vmatprep.mubr.bf16.mxu0 0
      %7109 = vmatmul.mubr.bf16.gmra.mrb[0].mxu0 %v6686
      %v7110 = vpop.f32.mrb[0].mxu0
      %v7111 = vadd.f32 %v6582, %v7110
      %v7112 = vpop.f32.mrb[0].mxu0
      %v7113 = vpop.f32.mrb[0].mxu0
      %v7114 = vadd.f32 %v6582, %v7113
      %v7115 = vpop.f32.mrb[0].mxu0
      %7116 = vmatprep.mubr.bf16.mxu0 0
      %7117 = vmatmul.mubr.bf16.gmra.mrb[0].mxu0 %v6688
      %v7118 = vpop.f32.mrb[0].mxu0
      %v7119 = vadd.f32 %v6582, %v7118
      %v7120 = vpop.f32.mrb[0].mxu0
      %v7121 = vpop.f32.mrb[0].mxu0
      %v7122 = vadd.f32 %v6582, %v7121
      %v7123 = vpop.f32.mrb[0].mxu0
      %7124 = vmatprep.mubr.bf16.mxu0 0
      %7125 = vmatmul.mubr.bf16.gmra.mrb[0].mxu0 %v6690
      %v7126 = vpop.f32.mrb[0].mxu0
      %v7127 = vadd.f32 %v6582, %v7126
      %v7128 = vpop.f32.mrb[0].mxu0
      %v7129 = vpop.f32.mrb[0].mxu0
      %v7130 = vadd.f32 %v6582, %v7129
      %v7131 = vpop.f32.mrb[0].mxu0
      %7132 = vmatprep.mubr.bf16.mxu0 0
      %7133 = vmatmul.mubr.bf16.gmra.mrb[0].mxu0 %v6692
      %v7134 = vpop.f32.mrb[0].mxu0
      %v7135 = vadd.f32 %v6582, %v7134
      %v7136 = vpop.f32.mrb[0].mxu0
      %v7137 = vpop.f32.mrb[0].mxu0
      %v7138 = vadd.f32 %v6582, %v7137
      %v7139 = vpop.f32.mrb[0].mxu0
      %7140 = vmatprep.mubr.bf16.mxu0 0
      %7141 = vmatmul.mubr.bf16.gmra.mrb[0].mxu0 %v6694
      %v7142 = vpop.f32.mrb[0].mxu0
      %v7143 = vadd.f32 %v6582, %v7142
      %v7144 = vpop.f32.mrb[0].mxu0
      %v7145 = vpop.f32.mrb[0].mxu0
      %v7146 = vadd.f32 %v6582, %v7145
      %v7147 = vpop.f32.mrb[0].mxu0
      %7148 = vmatprep.mubr.bf16.mxu0 0
      %7149 = vmatmul.mubr.bf16.gmra.mrb[0].mxu0 %v6696
      %v7150 = vpop.f32.mrb[0].mxu0
      %v7151 = vadd.f32 %v6582, %v7150
      %v7152 = vpop.f32.mrb[0].mxu0
      %v7153 = vpop.f32.mrb[0].mxu0
      %v7154 = vadd.f32 %v6582, %v7153
      %v7155 = vpop.f32.mrb[0].mxu0
      %7156 = vmatprep.mubr.bf16.mxu0 0
      %7157 = vmatmul.mubr.bf16.gmra.mrb[0].mxu0 %v6698
      %v7158 = vpop.f32.mrb[0].mxu0
      %v7159 = vadd.f32 %v6582, %v7158
      %v7160 = vpop.f32.mrb[0].mxu0
      %v7161 = vpop.f32.mrb[0].mxu0
      %v7162 = vadd.f32 %v6582, %v7161
      %v7163 = vpop.f32.mrb[0].mxu0
      %7164 = vmatprep.mubr.bf16.mxu0 0
      %7165 = vmatmul.mubr.bf16.gmra.mrb[0].mxu0 %v6700
      %v7166 = vpop.f32.mrb[0].mxu0
      %v7167 = vadd.f32 %v6582, %v7166
      %v7168 = vpop.f32.mrb[0].mxu0
      %v7169 = vpop.f32.mrb[0].mxu0
      %v7170 = vadd.f32 %v6582, %v7169
      %v7171 = vpop.f32.mrb[0].mxu0
      %7172 = vmatprep.mubr.bf16.mxu0 0
      %7173 = vmatmul.mubr.bf16.gmra.mrb[0].mxu0 %v6702
      %v7174 = vpop.f32.mrb[0].mxu0
      %v7175 = vadd.f32 %v6582, %v7174
      %v7176 = vpop.f32.mrb[0].mxu0
      %v7177 = vpop.f32.mrb[0].mxu0
      %v7178 = vadd.f32 %v6582, %v7177
      %v7179 = vpop.f32.mrb[0].mxu0
      %7180 = vmatprep.mubr.bf16.mxu0 0
      %7181 = vmatmul.mubr.bf16.gmra.mrb[0].mxu0 %v6704
      %v7182 = vpop.f32.mrb[0].mxu0
      %v7183 = vadd.f32 %v6582, %v7182
      %v7184 = vpop.f32.mrb[0].mxu0
      %v7185 = vpop.f32.mrb[0].mxu0
      %v7186 = vadd.f32 %v6582, %v7185
      %v7187 = vpop.f32.mrb[0].mxu0
      %7188 = vmatprep.mubr.bf16.mxu0 0
      %7189 = vmatmul.mubr.bf16.gmra.mrb[0].mxu0 %v6706
      %v7190 = vpop.f32.mrb[0].mxu0
      %v7191 = vadd.f32 %v6582, %v7190
      %v7192 = vpop.f32.mrb[0].mxu0
      %v7193 = vpop.f32.mrb[0].mxu0
      %v7194 = vadd.f32 %v6582, %v7193
      %v7195 = vpop.f32.mrb[0].mxu0
      %7196 = vmatprep.mubr.bf16.mxu0 0
      %7197 = vmatmul.mubr.bf16.gmra.mrb[0].mxu0 %v6708
      %v7198 = vpop.f32.mrb[0].mxu0
      %v7199 = vadd.f32 %v6582, %v7198
      %v7200 = vpop.f32.mrb[0].mxu0
      %v7201 = vpop.f32.mrb[0].mxu0
      %v7202 = vadd.f32 %v6582, %v7201
      %v7203 = vpop.f32.mrb[0].mxu0
      %7204 = vmatprep.mubr.bf16.mxu0 0
      %7205 = vmatmul.mubr.bf16.gmra.mrb[0].mxu0 %v6710
      %v7206 = vpop.f32.mrb[0].mxu0
      %v7207 = vadd.f32 %v6582, %v7206
      %v7208 = vpop.f32.mrb[0].mxu0
      %v7209 = vpop.f32.mrb[0].mxu0
      %v7210 = vadd.f32 %v6582, %v7209
      %v7211 = vpop.f32.mrb[0].mxu0
      %7212 = vmatprep.mubr.bf16.mxu0 0
      %7213 = vmatmul.mubr.bf16.gmra.mrb[0].mxu0 %v6712
      %v7214 = vpop.f32.mrb[0].mxu0
      %v7215 = vadd.f32 %v6582, %v7214
      %v7216 = vpop.f32.mrb[0].mxu0
      %v7217 = vpop.f32.mrb[0].mxu0
      %v7218 = vadd.f32 %v6582, %v7217
      %v7219 = vpop.f32.mrb[0].mxu0
      %7220 = vmatprep.mubr.bf16.mxu0 0
      %7221 = vmatmul.mubr.bf16.gmra.mrb[0].mxu0 %v6714
      %v7222 = vpop.f32.mrb[0].mxu0
      %v7223 = vadd.f32 %v6582, %v7222
      %v7224 = vpop.f32.mrb[0].mxu0
      %v7225 = vpop.f32.mrb[0].mxu0
      %v7226 = vadd.f32 %v6582, %v7225
      %v7227 = vpop.f32.mrb[0].mxu0
      %7228 = vmatprep.mubr.bf16.mxu0 0
      %7229 = vmatmul.mubr.bf16.gmra.mrb[0].mxu0 %v6716
      %v7230 = vpop.f32.mrb[0].mxu0
      %v7231 = vadd.f32 %v6582, %v7230
      %v7232 = vpop.f32.mrb[0].mxu0
      %v7233 = vpop.f32.mrb[0].mxu0
      %v7234 = vadd.f32 %v6582, %v7233
      %v7235 = vpop.f32.mrb[0].mxu0
      %7236 = vmatprep.mubr.bf16.mxu0 0
      %7237 = vmatmul.mubr.bf16.gmra.mrb[0].mxu0 %v6718
      %v7238 = vpop.f32.mrb[0].mxu0
      %v7239 = vadd.f32 %v6582, %v7238
      %v7240 = vpop.f32.mrb[0].mxu0
      %v7241 = vpop.f32.mrb[0].mxu0
      %v7242 = vadd.f32 %v6582, %v7241
      %v7243 = vpop.f32.mrb[0].mxu0
      %7244 = vmatprep.mubr.bf16.mxu0 0
      %7245 = vmatmul.mubr.bf16.gmra.mrb[0].mxu0 %v6720
      %v7246 = vpop.f32.mrb[0].mxu0
      %v7247 = vadd.f32 %v6582, %v7246
      %v7248 = vpop.f32.mrb[0].mxu0
      %v7249 = vpop.f32.mrb[0].mxu0
      %v7250 = vadd.f32 %v6582, %v7249
      %v7251 = vpop.f32.mrb[0].mxu0
      %7252 = vmatprep.mubr.bf16.mxu0 0
      %7253 = vmatmul.mubr.bf16.gmra.mrb[0].mxu0 %v6722
      %v7254 = vpop.f32.mrb[0].mxu0
      %v7255 = vadd.f32 %v6582, %v7254
      %v7256 = vpop.f32.mrb[0].mxu0
      %v7257 = vpop.f32.mrb[0].mxu0
      %v7258 = vadd.f32 %v6582, %v7257
      %v7259 = vpop.f32.mrb[0].mxu0
      %7260 = vmatprep.mubr.bf16.mxu0 0
      %7261 = vmatmul.mubr.bf16.gmra.mrb[0].mxu0 %v6724
      %v7262 = vpop.f32.mrb[0].mxu0
      %v7263 = vadd.f32 %v6582, %v7262
      %v7264 = vpop.f32.mrb[0].mxu0
      %v7265 = vpop.f32.mrb[0].mxu0
      %v7266 = vadd.f32 %v6582, %v7265
      %v7267 = vpop.f32.mrb[0].mxu0
      %7268 = vmatprep.mubr.bf16.mxu0 0
      %7269 = vmatmul.mubr.bf16.gmra.mrb[0].mxu0 %v6726
      %v7270 = vpop.f32.mrb[0].mxu0
      %v7271 = vadd.f32 %v6582, %v7270
      %v7272 = vpop.f32.mrb[0].mxu0
      %v7273 = vpop.f32.mrb[0].mxu0
      %v7274 = vadd.f32 %v6582, %v7273
      %v7275 = vpop.f32.mrb[0].mxu0
      %7276 = vdwg.mxu0
      %v7277 = vmax.f32 %v6767, 0.0
      %v7278 = vmax.f32 %v6770, 0.0
      %v7279 = vmax.f32 %v6775, 0.0
      %v7280 = vmax.f32 %v6778, 0.0
      %v7281 = vmax.f32 %v6783, 0.0
      %v7282 = vmax.f32 %v6786, 0.0
      %v7283 = vmax.f32 %v6791, 0.0
      %v7284 = vmax.f32 %v6794, 0.0
      %v7285 = vmax.f32 %v6799, 0.0
      %v7286 = vmax.f32 %v6802, 0.0
      %v7287 = vmax.f32 %v6807, 0.0
      %v7288 = vmax.f32 %v6810, 0.0
      %v7289 = vmax.f32 %v6815, 0.0
      %v7290 = vmax.f32 %v6818, 0.0
      %v7291 = vmax.f32 %v6823, 0.0
      %v7292 = vmax.f32 %v6826, 0.0
      %v7293 = vmax.f32 %v6831, 0.0
      %v7294 = vmax.f32 %v6834, 0.0
      %v7295 = vmax.f32 %v6839, 0.0
      %v7296 = vmax.f32 %v6842, 0.0
      %v7297 = vmax.f32 %v6847, 0.0
      %v7298 = vmax.f32 %v6850, 0.0
      %v7299 = vmax.f32 %v6855, 0.0
      %v7300 = vmax.f32 %v6858, 0.0
      %v7301 = vmax.f32 %v6863, 0.0
      %v7302 = vmax.f32 %v6866, 0.0
      %v7303 = vmax.f32 %v6871, 0.0
      %v7304 = vmax.f32 %v6874, 0.0
      %v7305 = vmax.f32 %v6879, 0.0
      %v7306 = vmax.f32 %v6882, 0.0
      %v7307 = vmax.f32 %v6887, 0.0
      %v7308 = vmax.f32 %v6890, 0.0
      %v7309 = vmax.f32 %v6895, 0.0
      %v7310 = vmax.f32 %v6898, 0.0
      %v7311 = vmax.f32 %v6903, 0.0
      %v7312 = vmax.f32 %v6906, 0.0
      %v7313 = vmax.f32 %v6911, 0.0
      %v7314 = vmax.f32 %v6914, 0.0
      %v7315 = vmax.f32 %v6919, 0.0
      %v7316 = vmax.f32 %v6922, 0.0
      %v7317 = vmax.f32 %v6927, 0.0
      %v7318 = vmax.f32 %v6930, 0.0
      %v7319 = vmax.f32 %v6935, 0.0
      %v7320 = vmax.f32 %v6938, 0.0
      %v7321 = vmax.f32 %v6943, 0.0
      %v7322 = vmax.f32 %v6946, 0.0
      %v7323 = vmax.f32 %v6951, 0.0
      %v7324 = vmax.f32 %v6954, 0.0
      %v7325 = vmax.f32 %v6959, 0.0
      %v7326 = vmax.f32 %v6962, 0.0
      %v7327 = vmax.f32 %v6967, 0.0
      %v7328 = vmax.f32 %v6970, 0.0
      %v7329 = vmax.f32 %v6975, 0.0
      %v7330 = vmax.f32 %v6978, 0.0
      %v7331 = vmax.f32 %v6983, 0.0
      %v7332 = vmax.f32 %v6986, 0.0
      %v7333 = vmax.f32 %v6991, 0.0
      %v7334 = vmax.f32 %v6994, 0.0
      %v7335 = vmax.f32 %v6999, 0.0
      %v7336 = vmax.f32 %v7002, 0.0
      %v7337 = vmax.f32 %v7007, 0.0
      %v7338 = vmax.f32 %v7010, 0.0
      %v7339 = vmax.f32 %v7015, 0.0
      %v7340 = vmax.f32 %v7018, 0.0
      %v7341 = vmax.f32 %v7023, 0.0
      %v7342 = vmax.f32 %v7026, 0.0
      %v7343 = vmax.f32 %v7031, 0.0
      %v7344 = vmax.f32 %v7034, 0.0
      %v7345 = vmax.f32 %v7039, 0.0
      %v7346 = vmax.f32 %v7042, 0.0
      %v7347 = vmax.f32 %v7047, 0.0
      %v7348 = vmax.f32 %v7050, 0.0
      %v7349 = vmax.f32 %v7055, 0.0
      %v7350 = vmax.f32 %v7058, 0.0
      %v7351 = vmax.f32 %v7063, 0.0
      %v7352 = vmax.f32 %v7066, 0.0
      %v7353 = vmax.f32 %v7071, 0.0
      %v7354 = vmax.f32 %v7074, 0.0
      %v7355 = vmax.f32 %v7079, 0.0
      %v7356 = vmax.f32 %v7082, 0.0
      %v7357 = vmax.f32 %v7087, 0.0
      %v7358 = vmax.f32 %v7090, 0.0
      %v7359 = vmax.f32 %v7095, 0.0
      %v7360 = vmax.f32 %v7098, 0.0
      %v7361 = vmax.f32 %v7103, 0.0
      %v7362 = vmax.f32 %v7106, 0.0
      %v7363 = vmax.f32 %v7111, 0.0
      %v7364 = vmax.f32 %v7114, 0.0
      %v7365 = vmax.f32 %v7119, 0.0
      %v7366 = vmax.f32 %v7122, 0.0
      %v7367 = vmax.f32 %v7127, 0.0
      %v7368 = vmax.f32 %v7130, 0.0
      %v7369 = vmax.f32 %v7135, 0.0
      %v7370 = vmax.f32 %v7138, 0.0
      %v7371 = vmax.f32 %v7143, 0.0
      %v7372 = vmax.f32 %v7146, 0.0
      %v7373 = vmax.f32 %v7151, 0.0
      %v7374 = vmax.f32 %v7154, 0.0
      %v7375 = vmax.f32 %v7159, 0.0
      %v7376 = vmax.f32 %v7162, 0.0
      %v7377 = vmax.f32 %v7167, 0.0
      %v7378 = vmax.f32 %v7170, 0.0
      %v7379 = vmax.f32 %v7175, 0.0
      %v7380 = vmax.f32 %v7178, 0.0
      %v7381 = vmax.f32 %v7183, 0.0
      %v7382 = vmax.f32 %v7186, 0.0
      %v7383 = vmax.f32 %v7191, 0.0
      %v7384 = vmax.f32 %v7194, 0.0
      %v7385 = vmax.f32 %v7199, 0.0
      %v7386 = vmax.f32 %v7202, 0.0
      %v7387 = vmax.f32 %v7207, 0.0
      %v7388 = vmax.f32 %v7210, 0.0
      %v7389 = vmax.f32 %v7215, 0.0
      %v7390 = vmax.f32 %v7218, 0.0
      %v7391 = vmax.f32 %v7223, 0.0
      %v7392 = vmax.f32 %v7226, 0.0
      %v7393 = vmax.f32 %v7231, 0.0
      %v7394 = vmax.f32 %v7234, 0.0
      %v7395 = vmax.f32 %v7239, 0.0
      %v7396 = vmax.f32 %v7242, 0.0
      %v7397 = vmax.f32 %v7247, 0.0
      %v7398 = vmax.f32 %v7250, 0.0
      %v7399 = vmax.f32 %v7255, 0.0
      %v7400 = vmax.f32 %v7258, 0.0
      %v7401 = vmax.f32 %v7263, 0.0
      %v7402 = vmax.f32 %v7266, 0.0
      %v7403 = vmax.f32 %v7271, 0.0
      %v7404 = vmax.f32 %v7274, 0.0
      %7405 = vst.msk [vmem:[#allocation3] sm:$0xff] %vm363, %v7277
      %7406 = vst.msk [vmem:[#allocation3 + $0x8] sm:$0xff] %vm363, %v7278
      %7407 = vst.msk [vmem:[#allocation3 + $0x10] sm:$0xff] %vm363, %v7279
      %7408 = vst.msk [vmem:[#allocation3 + $0x18] sm:$0xff] %vm363, %v7280
      %7409 = vst.msk [vmem:[#allocation3 + $0x20] sm:$0xff] %vm363, %v7281
      %7410 = vst.msk [vmem:[#allocation3 + $0x28] sm:$0xff] %vm363, %v7282
      %7411 = vst.msk [vmem:[#allocation3 + $0x30] sm:$0xff] %vm363, %v7283
      %7412 = vst.msk [vmem:[#allocation3 + $0x38] sm:$0xff] %vm363, %v7284
      %7413 = vst.msk [vmem:[#allocation3 + $0x40] sm:$0xff] %vm363, %v7285
      %7414 = vst.msk [vmem:[#allocation3 + $0x48] sm:$0xff] %vm363, %v7286
      %7415 = vst.msk [vmem:[#allocation3 + $0x50] sm:$0xff] %vm363, %v7287
      %7416 = vst.msk [vmem:[#allocation3 + $0x58] sm:$0xff] %vm363, %v7288
      %7417 = vst.msk [vmem:[#allocation3 + $0x60] sm:$0xff] %vm363, %v7289
      %7418 = vst.msk [vmem:[#allocation3 + $0x68] sm:$0xff] %vm363, %v7290
      %7419 = vst.msk [vmem:[#allocation3 + $0x70] sm:$0xff] %vm363, %v7291
      %7420 = vst.msk [vmem:[#allocation3 + $0x78] sm:$0xff] %vm363, %v7292
      %7421 = vst.msk [vmem:[#allocation3 + $0x80] sm:$0xff] %vm363, %v7293
      %7422 = vst.msk [vmem:[#allocation3 + $0x88] sm:$0xff] %vm363, %v7294
      %7423 = vst.msk [vmem:[#allocation3 + $0x90] sm:$0xff] %vm363, %v7295
      %7424 = vst.msk [vmem:[#allocation3 + $0x98] sm:$0xff] %vm363, %v7296
      %7425 = vst.msk [vmem:[#allocation3 + $0xa0] sm:$0xff] %vm363, %v7297
      %7426 = vst.msk [vmem:[#allocation3 + $0xa8] sm:$0xff] %vm363, %v7298
      %7427 = vst.msk [vmem:[#allocation3 + $0xb0] sm:$0xff] %vm363, %v7299
      %7428 = vst.msk [vmem:[#allocation3 + $0xb8] sm:$0xff] %vm363, %v7300
      %7429 = vst.msk [vmem:[#allocation3 + $0xc0] sm:$0xff] %vm363, %v7301
      %7430 = vst.msk [vmem:[#allocation3 + $0xc8] sm:$0xff] %vm363, %v7302
      %7431 = vst.msk [vmem:[#allocation3 + $0xd0] sm:$0xff] %vm363, %v7303
      %7432 = vst.msk [vmem:[#allocation3 + $0xd8] sm:$0xff] %vm363, %v7304
      %7433 = vst.msk [vmem:[#allocation3 + $0xe0] sm:$0xff] %vm363, %v7305
      %7434 = vst.msk [vmem:[#allocation3 + $0xe8] sm:$0xff] %vm363, %v7306
      %7435 = vst.msk [vmem:[#allocation3 + $0xf0] sm:$0xff] %vm363, %v7307
      %7436 = vst.msk [vmem:[#allocation3 + $0xf8] sm:$0xff] %vm363, %v7308
      %7437 = vst.msk [vmem:[#allocation3 + $0x100] sm:$0xff] %vm363, %v7309
      %7438 = vst.msk [vmem:[#allocation3 + $0x108] sm:$0xff] %vm363, %v7310
      %7439 = vst.msk [vmem:[#allocation3 + $0x110] sm:$0xff] %vm363, %v7311
      %7440 = vst.msk [vmem:[#allocation3 + $0x118] sm:$0xff] %vm363, %v7312
      %7441 = vst.msk [vmem:[#allocation3 + $0x120] sm:$0xff] %vm363, %v7313
      %7442 = vst.msk [vmem:[#allocation3 + $0x128] sm:$0xff] %vm363, %v7314
      %7443 = vst.msk [vmem:[#allocation3 + $0x130] sm:$0xff] %vm363, %v7315
      %7444 = vst.msk [vmem:[#allocation3 + $0x138] sm:$0xff] %vm363, %v7316
      %7445 = vst.msk [vmem:[#allocation3 + $0x140] sm:$0xff] %vm363, %v7317
      %7446 = vst.msk [vmem:[#allocation3 + $0x148] sm:$0xff] %vm363, %v7318
      %7447 = vst.msk [vmem:[#allocation3 + $0x150] sm:$0xff] %vm363, %v7319
      %7448 = vst.msk [vmem:[#allocation3 + $0x158] sm:$0xff] %vm363, %v7320
      %7449 = vst.msk [vmem:[#allocation3 + $0x160] sm:$0xff] %vm363, %v7321
      %7450 = vst.msk [vmem:[#allocation3 + $0x168] sm:$0xff] %vm363, %v7322
      %7451 = vst.msk [vmem:[#allocation3 + $0x170] sm:$0xff] %vm363, %v7323
      %7452 = vst.msk [vmem:[#allocation3 + $0x178] sm:$0xff] %vm363, %v7324
      %7453 = vst.msk [vmem:[#allocation3 + $0x180] sm:$0xff] %vm363, %v7325
      %7454 = vst.msk [vmem:[#allocation3 + $0x188] sm:$0xff] %vm363, %v7326
      %7455 = vst.msk [vmem:[#allocation3 + $0x190] sm:$0xff] %vm363, %v7327
      %7456 = vst.msk [vmem:[#allocation3 + $0x198] sm:$0xff] %vm363, %v7328
      %7457 = vst.msk [vmem:[#allocation3 + $0x1a0] sm:$0xff] %vm363, %v7329
      %7458 = vst.msk [vmem:[#allocation3 + $0x1a8] sm:$0xff] %vm363, %v7330
      %7459 = vst.msk [vmem:[#allocation3 + $0x1b0] sm:$0xff] %vm363, %v7331
      %7460 = vst.msk [vmem:[#allocation3 + $0x1b8] sm:$0xff] %vm363, %v7332
      %7461 = vst.msk [vmem:[#allocation3 + $0x1c0] sm:$0xff] %vm363, %v7333
      %7462 = vst.msk [vmem:[#allocation3 + $0x1c8] sm:$0xff] %vm363, %v7334
      %7463 = vst.msk [vmem:[#allocation3 + $0x1d0] sm:$0xff] %vm363, %v7335
      %7464 = vst.msk [vmem:[#allocation3 + $0x1d8] sm:$0xff] %vm363, %v7336
      %7465 = vst.msk [vmem:[#allocation3 + $0x1e0] sm:$0xff] %vm363, %v7337
      %7466 = vst.msk [vmem:[#allocation3 + $0x1e8] sm:$0xff] %vm363, %v7338
      %7467 = vst.msk [vmem:[#allocation3 + $0x1f0] sm:$0xff] %vm363, %v7339
      %7468 = vst.msk [vmem:[#allocation3 + $0x1f8] sm:$0xff] %vm363, %v7340
      %7469 = vst.msk [vmem:[#allocation3 + $0x200] sm:$0xff] %vm363, %v7341
      %7470 = vst.msk [vmem:[#allocation3 + $0x208] sm:$0xff] %vm363, %v7342
      %7471 = vst.msk [vmem:[#allocation3 + $0x210] sm:$0xff] %vm363, %v7343
      %7472 = vst.msk [vmem:[#allocation3 + $0x218] sm:$0xff] %vm363, %v7344
      %7473 = vst.msk [vmem:[#allocation3 + $0x220] sm:$0xff] %vm363, %v7345
      %7474 = vst.msk [vmem:[#allocation3 + $0x228] sm:$0xff] %vm363, %v7346
      %7475 = vst.msk [vmem:[#allocation3 + $0x230] sm:$0xff] %vm363, %v7347
      %7476 = vst.msk [vmem:[#allocation3 + $0x238] sm:$0xff] %vm363, %v7348
      %7477 = vst.msk [vmem:[#allocation3 + $0x240] sm:$0xff] %vm363, %v7349
      %7478 = vst.msk [vmem:[#allocation3 + $0x248] sm:$0xff] %vm363, %v7350
      %7479 = vst.msk [vmem:[#allocation3 + $0x250] sm:$0xff] %vm363, %v7351
      %7480 = vst.msk [vmem:[#allocation3 + $0x258] sm:$0xff] %vm363, %v7352
      %7481 = vst.msk [vmem:[#allocation3 + $0x260] sm:$0xff] %vm363, %v7353
      %7482 = vst.msk [vmem:[#allocation3 + $0x268] sm:$0xff] %vm363, %v7354
      %7483 = vst.msk [vmem:[#allocation3 + $0x270] sm:$0xff] %vm363, %v7355
      %7484 = vst.msk [vmem:[#allocation3 + $0x278] sm:$0xff] %vm363, %v7356
      %7485 = vst.msk [vmem:[#allocation3 + $0x280] sm:$0xff] %vm363, %v7357
      %7486 = vst.msk [vmem:[#allocation3 + $0x288] sm:$0xff] %vm363, %v7358
      %7487 = vst.msk [vmem:[#allocation3 + $0x290] sm:$0xff] %vm363, %v7359
      %7488 = vst.msk [vmem:[#allocation3 + $0x298] sm:$0xff] %vm363, %v7360
      %7489 = vst.msk [vmem:[#allocation3 + $0x2a0] sm:$0xff] %vm363, %v7361
      %7490 = vst.msk [vmem:[#allocation3 + $0x2a8] sm:$0xff] %vm363, %v7362
      %7491 = vst.msk [vmem:[#allocation3 + $0x2b0] sm:$0xff] %vm363, %v7363
      %7492 = vst.msk [vmem:[#allocation3 + $0x2b8] sm:$0xff] %vm363, %v7364
      %7493 = vst.msk [vmem:[#allocation3 + $0x2c0] sm:$0xff] %vm363, %v7365
      %7494 = vst.msk [vmem:[#allocation3 + $0x2c8] sm:$0xff] %vm363, %v7366
      %7495 = vst.msk [vmem:[#allocation3 + $0x2d0] sm:$0xff] %vm363, %v7367
      %7496 = vst.msk [vmem:[#allocation3 + $0x2d8] sm:$0xff] %vm363, %v7368
      %7497 = vst.msk [vmem:[#allocation3 + $0x2e0] sm:$0xff] %vm363, %v7369
      %7498 = vst.msk [vmem:[#allocation3 + $0x2e8] sm:$0xff] %vm363, %v7370
      %7499 = vst.msk [vmem:[#allocation3 + $0x2f0] sm:$0xff] %vm363, %v7371
      %7500 = vst.msk [vmem:[#allocation3 + $0x2f8] sm:$0xff] %vm363, %v7372
      %7501 = vst.msk [vmem:[#allocation3 + $0x300] sm:$0xff] %vm363, %v7373
      %7502 = vst.msk [vmem:[#allocation3 + $0x308] sm:$0xff] %vm363, %v7374
      %7503 = vst.msk [vmem:[#allocation3 + $0x310] sm:$0xff] %vm363, %v7375
      %7504 = vst.msk [vmem:[#allocation3 + $0x318] sm:$0xff] %vm363, %v7376
      %7505 = vst.msk [vmem:[#allocation3 + $0x320] sm:$0xff] %vm363, %v7377
      %7506 = vst.msk [vmem:[#allocation3 + $0x328] sm:$0xff] %vm363, %v7378
      %7507 = vst.msk [vmem:[#allocation3 + $0x330] sm:$0xff] %vm363, %v7379
      %7508 = vst.msk [vmem:[#allocation3 + $0x338] sm:$0xff] %vm363, %v7380
      %7509 = vst.msk [vmem:[#allocation3 + $0x340] sm:$0xff] %vm363, %v7381
      %7510 = vst.msk [vmem:[#allocation3 + $0x348] sm:$0xff] %vm363, %v7382
      %7511 = vst.msk [vmem:[#allocation3 + $0x350] sm:$0xff] %vm363, %v7383
      %7512 = vst.msk [vmem:[#allocation3 + $0x358] sm:$0xff] %vm363, %v7384
      %7513 = vst.msk [vmem:[#allocation3 + $0x360] sm:$0xff] %vm363, %v7385
      %7514 = vst.msk [vmem:[#allocation3 + $0x368] sm:$0xff] %vm363, %v7386
      %7515 = vst.msk [vmem:[#allocation3 + $0x370] sm:$0xff] %vm363, %v7387
      %7516 = vst.msk [vmem:[#allocation3 + $0x378] sm:$0xff] %vm363, %v7388
      %7517 = vst.msk [vmem:[#allocation3 + $0x380] sm:$0xff] %vm363, %v7389
      %7518 = vst.msk [vmem:[#allocation3 + $0x388] sm:$0xff] %vm363, %v7390
      %7519 = vst.msk [vmem:[#allocation3 + $0x390] sm:$0xff] %vm363, %v7391
      %7520 = vst.msk [vmem:[#allocation3 + $0x398] sm:$0xff] %vm363, %v7392
      %7521 = vst.msk [vmem:[#allocation3 + $0x3a0] sm:$0xff] %vm363, %v7393
      %7522 = vst.msk [vmem:[#allocation3 + $0x3a8] sm:$0xff] %vm363, %v7394
      %7523 = vst.msk [vmem:[#allocation3 + $0x3b0] sm:$0xff] %vm363, %v7395
      %7524 = vst.msk [vmem:[#allocation3 + $0x3b8] sm:$0xff] %vm363, %v7396
      %7525 = vst.msk [vmem:[#allocation3 + $0x3c0] sm:$0xff] %vm363, %v7397
      %7526 = vst.msk [vmem:[#allocation3 + $0x3c8] sm:$0xff] %vm363, %v7398
      %7527 = vst.msk [vmem:[#allocation3 + $0x3d0] sm:$0xff] %vm363, %v7399
      %7528 = vst.msk [vmem:[#allocation3 + $0x3d8] sm:$0xff] %vm363, %v7400
      %7529 = vst.msk [vmem:[#allocation3 + $0x3e0] sm:$0xff] %vm363, %v7401
      %7530 = vst.msk [vmem:[#allocation3 + $0x3e8] sm:$0xff] %vm363, %v7402
      %7531 = vst.msk [vmem:[#allocation3 + $0x3f0] sm:$0xff] %vm363, %v7403
      %7532 = vst.msk [vmem:[#allocation3 + $0x3f8] sm:$0xff] %vm363, %v7404
      %v7533 = vld [vmem:[#allocation3] ss:$2 sm:$0xff]
      %s7534 = scalar_lea.vmem [#allocation3], 16
      %v7535 = vld [vmem:[%s7534] ss:$2 sm:$0xff]
      %s7536 = scalar_lea.vmem [#allocation3], 32
      %v7537 = vld [vmem:[%s7536] ss:$2 sm:$0xff]
      %s7538 = scalar_lea.vmem [#allocation3], 48
      %v7539 = vld [vmem:[%s7538] ss:$2 sm:$0xff]
      %s7540 = scalar_lea.vmem [#allocation3], 64
      %v7541 = vld [vmem:[%s7540] ss:$2 sm:$0xff]
      %s7542 = scalar_lea.vmem [#allocation3], 80
      %v7543 = vld [vmem:[%s7542] ss:$2 sm:$0xff]
      %s7544 = scalar_lea.vmem [#allocation3], 96
      %v7545 = vld [vmem:[%s7544] ss:$2 sm:$0xff]
      %s7546 = scalar_lea.vmem [#allocation3], 112
      %v7547 = vld [vmem:[%s7546] ss:$2 sm:$0xff]
      %s7548 = scalar_lea.vmem [#allocation3], 128
      %v7549 = vld [vmem:[%s7548] ss:$2 sm:$0xff]
      %s7550 = scalar_lea.vmem [#allocation3], 144
      %v7551 = vld [vmem:[%s7550] ss:$2 sm:$0xff]
      %s7552 = scalar_lea.vmem [#allocation3], 160
      %v7553 = vld [vmem:[%s7552] ss:$2 sm:$0xff]
      %s7554 = scalar_lea.vmem [#allocation3], 176
      %v7555 = vld [vmem:[%s7554] ss:$2 sm:$0xff]
      %s7556 = scalar_lea.vmem [#allocation3], 192
      %v7557 = vld [vmem:[%s7556] ss:$2 sm:$0xff]
      %s7558 = scalar_lea.vmem [#allocation3], 208
      %v7559 = vld [vmem:[%s7558] ss:$2 sm:$0xff]
      %s7560 = scalar_lea.vmem [#allocation3], 224
      %v7561 = vld [vmem:[%s7560] ss:$2 sm:$0xff]
      %s7562 = scalar_lea.vmem [#allocation3], 240
      %v7563 = vld [vmem:[%s7562] ss:$2 sm:$0xff]
      %s7564 = scalar_lea.vmem [#allocation3], 256
      %v7565 = vld [vmem:[%s7564] ss:$2 sm:$0xff]
      %s7566 = scalar_lea.vmem [#allocation3], 272
      %v7567 = vld [vmem:[%s7566] ss:$2 sm:$0xff]
      %s7568 = scalar_lea.vmem [#allocation3], 288
      %v7569 = vld [vmem:[%s7568] ss:$2 sm:$0xff]
      %s7570 = scalar_lea.vmem [#allocation3], 304
      %v7571 = vld [vmem:[%s7570] ss:$2 sm:$0xff]
      %s7572 = scalar_lea.vmem [#allocation3], 320
      %v7573 = vld [vmem:[%s7572] ss:$2 sm:$0xff]
      %s7574 = scalar_lea.vmem [#allocation3], 336
      %v7575 = vld [vmem:[%s7574] ss:$2 sm:$0xff]
      %s7576 = scalar_lea.vmem [#allocation3], 352
      %v7577 = vld [vmem:[%s7576] ss:$2 sm:$0xff]
      %s7578 = scalar_lea.vmem [#allocation3], 368
      %v7579 = vld [vmem:[%s7578] ss:$2 sm:$0xff]
      %s7580 = scalar_lea.vmem [#allocation3], 384
      %v7581 = vld [vmem:[%s7580] ss:$2 sm:$0xff]
      %s7582 = scalar_lea.vmem [#allocation3], 400
      %v7583 = vld [vmem:[%s7582] ss:$2 sm:$0xff]
      %s7584 = scalar_lea.vmem [#allocation3], 416
      %v7585 = vld [vmem:[%s7584] ss:$2 sm:$0xff]
      %s7586 = scalar_lea.vmem [#allocation3], 432
      %v7587 = vld [vmem:[%s7586] ss:$2 sm:$0xff]
      %s7588 = scalar_lea.vmem [#allocation3], 448
      %v7589 = vld [vmem:[%s7588] ss:$2 sm:$0xff]
      %s7590 = scalar_lea.vmem [#allocation3], 464
      %v7591 = vld [vmem:[%s7590] ss:$2 sm:$0xff]
      %s7592 = scalar_lea.vmem [#allocation3], 480
      %v7593 = vld [vmem:[%s7592] ss:$2 sm:$0xff]
      %s7594 = scalar_lea.vmem [#allocation3], 496
      %v7595 = vld [vmem:[%s7594] ss:$2 sm:$0xff]
      %s7596 = scalar_lea.vmem [#allocation3], 512
      %v7597 = vld [vmem:[%s7596] ss:$2 sm:$0xff]
      %s7598 = scalar_lea.vmem [#allocation3], 528
      %v7599 = vld [vmem:[%s7598] ss:$2 sm:$0xff]
      %s7600 = scalar_lea.vmem [#allocation3], 544
      %v7601 = vld [vmem:[%s7600] ss:$2 sm:$0xff]
      %s7602 = scalar_lea.vmem [#allocation3], 560
      %v7603 = vld [vmem:[%s7602] ss:$2 sm:$0xff]
      %s7604 = scalar_lea.vmem [#allocation3], 576
      %v7605 = vld [vmem:[%s7604] ss:$2 sm:$0xff]
      %s7606 = scalar_lea.vmem [#allocation3], 592
      %v7607 = vld [vmem:[%s7606] ss:$2 sm:$0xff]
      %s7608 = scalar_lea.vmem [#allocation3], 608
      %v7609 = vld [vmem:[%s7608] ss:$2 sm:$0xff]
      %s7610 = scalar_lea.vmem [#allocation3], 624
      %v7611 = vld [vmem:[%s7610] ss:$2 sm:$0xff]
      %s7612 = scalar_lea.vmem [#allocation3], 640
      %v7613 = vld [vmem:[%s7612] ss:$2 sm:$0xff]
      %s7614 = scalar_lea.vmem [#allocation3], 656
      %v7615 = vld [vmem:[%s7614] ss:$2 sm:$0xff]
      %s7616 = scalar_lea.vmem [#allocation3], 672
      %v7617 = vld [vmem:[%s7616] ss:$2 sm:$0xff]
      %s7618 = scalar_lea.vmem [#allocation3], 688
      %v7619 = vld [vmem:[%s7618] ss:$2 sm:$0xff]
      %s7620 = scalar_lea.vmem [#allocation3], 704
      %v7621 = vld [vmem:[%s7620] ss:$2 sm:$0xff]
      %s7622 = scalar_lea.vmem [#allocation3], 720
      %v7623 = vld [vmem:[%s7622] ss:$2 sm:$0xff]
      %s7624 = scalar_lea.vmem [#allocation3], 736
      %v7625 = vld [vmem:[%s7624] ss:$2 sm:$0xff]
      %s7626 = scalar_lea.vmem [#allocation3], 752
      %v7627 = vld [vmem:[%s7626] ss:$2 sm:$0xff]
      %s7628 = scalar_lea.vmem [#allocation3], 768
      %v7629 = vld [vmem:[%s7628] ss:$2 sm:$0xff]
      %s7630 = scalar_lea.vmem [#allocation3], 784
      %v7631 = vld [vmem:[%s7630] ss:$2 sm:$0xff]
      %s7632 = scalar_lea.vmem [#allocation3], 800
      %v7633 = vld [vmem:[%s7632] ss:$2 sm:$0xff]
      %s7634 = scalar_lea.vmem [#allocation3], 816
      %v7635 = vld [vmem:[%s7634] ss:$2 sm:$0xff]
      %s7636 = scalar_lea.vmem [#allocation3], 832
      %v7637 = vld [vmem:[%s7636] ss:$2 sm:$0xff]
      %s7638 = scalar_lea.vmem [#allocation3], 848
      %v7639 = vld [vmem:[%s7638] ss:$2 sm:$0xff]
      %s7640 = scalar_lea.vmem [#allocation3], 864
      %v7641 = vld [vmem:[%s7640] ss:$2 sm:$0xff]
      %s7642 = scalar_lea.vmem [#allocation3], 880
      %v7643 = vld [vmem:[%s7642] ss:$2 sm:$0xff]
      %s7644 = scalar_lea.vmem [#allocation3], 896
      %v7645 = vld [vmem:[%s7644] ss:$2 sm:$0xff]
      %s7646 = scalar_lea.vmem [#allocation3], 912
      %v7647 = vld [vmem:[%s7646] ss:$2 sm:$0xff]
      %s7648 = scalar_lea.vmem [#allocation3], 928
      %v7649 = vld [vmem:[%s7648] ss:$2 sm:$0xff]
      %s7650 = scalar_lea.vmem [#allocation3], 944
      %v7651 = vld [vmem:[%s7650] ss:$2 sm:$0xff]
      %s7652 = scalar_lea.vmem [#allocation3], 960
      %v7653 = vld [vmem:[%s7652] ss:$2 sm:$0xff]
      %s7654 = scalar_lea.vmem [#allocation3], 976
      %v7655 = vld [vmem:[%s7654] ss:$2 sm:$0xff]
      %s7656 = scalar_lea.vmem [#allocation3], 992
      %v7657 = vld [vmem:[%s7656] ss:$2 sm:$0xff]
      %s7658 = scalar_lea.vmem [#allocation3], 1008
      %v7659 = vld [vmem:[%s7658] ss:$2 sm:$0xff]
      %s7660 = scalar_lea.vmem [#allocation3], 1
      %v7661 = vld [vmem:[%s7660] ss:$2 sm:$0xff]
      %s7662 = scalar_lea.vmem [#allocation3], 17
      %v7663 = vld [vmem:[%s7662] ss:$2 sm:$0xff]
      %s7664 = scalar_lea.vmem [#allocation3], 33
      %v7665 = vld [vmem:[%s7664] ss:$2 sm:$0xff]
      %s7666 = scalar_lea.vmem [#allocation3], 49
      %v7667 = vld [vmem:[%s7666] ss:$2 sm:$0xff]
      %s7668 = scalar_lea.vmem [#allocation3], 65
      %v7669 = vld [vmem:[%s7668] ss:$2 sm:$0xff]
      %s7670 = scalar_lea.vmem [#allocation3], 81
      %v7671 = vld [vmem:[%s7670] ss:$2 sm:$0xff]
      %s7672 = scalar_lea.vmem [#allocation3], 97
      %v7673 = vld [vmem:[%s7672] ss:$2 sm:$0xff]
      %s7674 = scalar_lea.vmem [#allocation3], 113
      %v7675 = vld [vmem:[%s7674] ss:$2 sm:$0xff]
      %s7676 = scalar_lea.vmem [#allocation3], 129
      %v7677 = vld [vmem:[%s7676] ss:$2 sm:$0xff]
      %s7678 = scalar_lea.vmem [#allocation3], 145
      %v7679 = vld [vmem:[%s7678] ss:$2 sm:$0xff]
      %s7680 = scalar_lea.vmem [#allocation3], 161
      %v7681 = vld [vmem:[%s7680] ss:$2 sm:$0xff]
      %s7682 = scalar_lea.vmem [#allocation3], 177
      %v7683 = vld [vmem:[%s7682] ss:$2 sm:$0xff]
      %s7684 = scalar_lea.vmem [#allocation3], 193
      %v7685 = vld [vmem:[%s7684] ss:$2 sm:$0xff]
      %s7686 = scalar_lea.vmem [#allocation3], 209
      %v7687 = vld [vmem:[%s7686] ss:$2 sm:$0xff]
      %s7688 = scalar_lea.vmem [#allocation3], 225
      %v7689 = vld [vmem:[%s7688] ss:$2 sm:$0xff]
      %s7690 = scalar_lea.vmem [#allocation3], 241
      %v7691 = vld [vmem:[%s7690] ss:$2 sm:$0xff]
      %s7692 = scalar_lea.vmem [#allocation3], 257
      %v7693 = vld [vmem:[%s7692] ss:$2 sm:$0xff]
      %s7694 = scalar_lea.vmem [#allocation3], 273
      %v7695 = vld [vmem:[%s7694] ss:$2 sm:$0xff]
      %s7696 = scalar_lea.vmem [#allocation3], 289
      %v7697 = vld [vmem:[%s7696] ss:$2 sm:$0xff]
      %s7698 = scalar_lea.vmem [#allocation3], 305
      %v7699 = vld [vmem:[%s7698] ss:$2 sm:$0xff]
      %s7700 = scalar_lea.vmem [#allocation3], 321
      %v7701 = vld [vmem:[%s7700] ss:$2 sm:$0xff]
      %s7702 = scalar_lea.vmem [#allocation3], 337
      %v7703 = vld [vmem:[%s7702] ss:$2 sm:$0xff]
      %s7704 = scalar_lea.vmem [#allocation3], 353
      %v7705 = vld [vmem:[%s7704] ss:$2 sm:$0xff]
      %s7706 = scalar_lea.vmem [#allocation3], 369
      %v7707 = vld [vmem:[%s7706] ss:$2 sm:$0xff]
      %s7708 = scalar_lea.vmem [#allocation3], 385
      %v7709 = vld [vmem:[%s7708] ss:$2 sm:$0xff]
      %s7710 = scalar_lea.vmem [#allocation3], 401
      %v7711 = vld [vmem:[%s7710] ss:$2 sm:$0xff]
      %s7712 = scalar_lea.vmem [#allocation3], 417
      %v7713 = vld [vmem:[%s7712] ss:$2 sm:$0xff]
      %s7714 = scalar_lea.vmem [#allocation3], 433
      %v7715 = vld [vmem:[%s7714] ss:$2 sm:$0xff]
      %s7716 = scalar_lea.vmem [#allocation3], 449
      %v7717 = vld [vmem:[%s7716] ss:$2 sm:$0xff]
      %s7718 = scalar_lea.vmem [#allocation3], 465
      %v7719 = vld [vmem:[%s7718] ss:$2 sm:$0xff]
      %s7720 = scalar_lea.vmem [#allocation3], 481
      %v7721 = vld [vmem:[%s7720] ss:$2 sm:$0xff]
      %s7722 = scalar_lea.vmem [#allocation3], 497
      %v7723 = vld [vmem:[%s7722] ss:$2 sm:$0xff]
      %s7724 = scalar_lea.vmem [#allocation3], 513
      %v7725 = vld [vmem:[%s7724] ss:$2 sm:$0xff]
      %s7726 = scalar_lea.vmem [#allocation3], 529
      %v7727 = vld [vmem:[%s7726] ss:$2 sm:$0xff]
      %s7728 = scalar_lea.vmem [#allocation3], 545
      %v7729 = vld [vmem:[%s7728] ss:$2 sm:$0xff]
      %s7730 = scalar_lea.vmem [#allocation3], 561
      %v7731 = vld [vmem:[%s7730] ss:$2 sm:$0xff]
      %s7732 = scalar_lea.vmem [#allocation3], 577
      %v7733 = vld [vmem:[%s7732] ss:$2 sm:$0xff]
      %s7734 = scalar_lea.vmem [#allocation3], 593
      %v7735 = vld [vmem:[%s7734] ss:$2 sm:$0xff]
      %s7736 = scalar_lea.vmem [#allocation3], 609
      %v7737 = vld [vmem:[%s7736] ss:$2 sm:$0xff]
      %s7738 = scalar_lea.vmem [#allocation3], 625
      %v7739 = vld [vmem:[%s7738] ss:$2 sm:$0xff]
      %s7740 = scalar_lea.vmem [#allocation3], 641
      %v7741 = vld [vmem:[%s7740] ss:$2 sm:$0xff]
      %s7742 = scalar_lea.vmem [#allocation3], 657
      %v7743 = vld [vmem:[%s7742] ss:$2 sm:$0xff]
      %s7744 = scalar_lea.vmem [#allocation3], 673
      %v7745 = vld [vmem:[%s7744] ss:$2 sm:$0xff]
      %s7746 = scalar_lea.vmem [#allocation3], 689
      %v7747 = vld [vmem:[%s7746] ss:$2 sm:$0xff]
      %s7748 = scalar_lea.vmem [#allocation3], 705
      %v7749 = vld [vmem:[%s7748] ss:$2 sm:$0xff]
      %s7750 = scalar_lea.vmem [#allocation3], 721
      %v7751 = vld [vmem:[%s7750] ss:$2 sm:$0xff]
      %s7752 = scalar_lea.vmem [#allocation3], 737
      %v7753 = vld [vmem:[%s7752] ss:$2 sm:$0xff]
      %s7754 = scalar_lea.vmem [#allocation3], 753
      %v7755 = vld [vmem:[%s7754] ss:$2 sm:$0xff]
      %s7756 = scalar_lea.vmem [#allocation3], 769
      %v7757 = vld [vmem:[%s7756] ss:$2 sm:$0xff]
      %s7758 = scalar_lea.vmem [#allocation3], 785
      %v7759 = vld [vmem:[%s7758] ss:$2 sm:$0xff]
      %s7760 = scalar_lea.vmem [#allocation3], 801
      %v7761 = vld [vmem:[%s7760] ss:$2 sm:$0xff]
      %s7762 = scalar_lea.vmem [#allocation3], 817
      %v7763 = vld [vmem:[%s7762] ss:$2 sm:$0xff]
      %s7764 = scalar_lea.vmem [#allocation3], 833
      %v7765 = vld [vmem:[%s7764] ss:$2 sm:$0xff]
      %s7766 = scalar_lea.vmem [#allocation3], 849
      %v7767 = vld [vmem:[%s7766] ss:$2 sm:$0xff]
      %s7768 = scalar_lea.vmem [#allocation3], 865
      %v7769 = vld [vmem:[%s7768] ss:$2 sm:$0xff]
      %s7770 = scalar_lea.vmem [#allocation3], 881
      %v7771 = vld [vmem:[%s7770] ss:$2 sm:$0xff]
      %s7772 = scalar_lea.vmem [#allocation3], 897
      %v7773 = vld [vmem:[%s7772] ss:$2 sm:$0xff]
      %s7774 = scalar_lea.vmem [#allocation3], 913
      %v7775 = vld [vmem:[%s7774] ss:$2 sm:$0xff]
      %s7776 = scalar_lea.vmem [#allocation3], 929
      %v7777 = vld [vmem:[%s7776] ss:$2 sm:$0xff]
      %s7778 = scalar_lea.vmem [#allocation3], 945
      %v7779 = vld [vmem:[%s7778] ss:$2 sm:$0xff]
      %s7780 = scalar_lea.vmem [#allocation3], 961
      %v7781 = vld [vmem:[%s7780] ss:$2 sm:$0xff]
      %s7782 = scalar_lea.vmem [#allocation3], 977
      %v7783 = vld [vmem:[%s7782] ss:$2 sm:$0xff]
      %s7784 = scalar_lea.vmem [#allocation3], 993
      %v7785 = vld [vmem:[%s7784] ss:$2 sm:$0xff]
      %s7786 = scalar_lea.vmem [#allocation3], 1009
      %v7787 = vld [vmem:[%s7786] ss:$2 sm:$0xff]
      %v7788 = vmax.f32 %v7533, %v7661
      %v7789 = vmax.f32 %v7535, %v7663
      %v7790 = vmax.f32 %v7537, %v7665
      %v7791 = vmax.f32 %v7539, %v7667
      %v7792 = vmax.f32 %v7541, %v7669
      %v7793 = vmax.f32 %v7543, %v7671
      %v7794 = vmax.f32 %v7545, %v7673
      %v7795 = vmax.f32 %v7547, %v7675
      %v7796 = vmax.f32 %v7549, %v7677
      %v7797 = vmax.f32 %v7551, %v7679
      %v7798 = vmax.f32 %v7553, %v7681
      %v7799 = vmax.f32 %v7555, %v7683
      %v7800 = vmax.f32 %v7557, %v7685
      %v7801 = vmax.f32 %v7559, %v7687
      %v7802 = vmax.f32 %v7561, %v7689
      %v7803 = vmax.f32 %v7563, %v7691
      %v7804 = vmax.f32 %v7565, %v7693
      %v7805 = vmax.f32 %v7567, %v7695
      %v7806 = vmax.f32 %v7569, %v7697
      %v7807 = vmax.f32 %v7571, %v7699
      %v7808 = vmax.f32 %v7573, %v7701
      %v7809 = vmax.f32 %v7575, %v7703
      %v7810 = vmax.f32 %v7577, %v7705
      %v7811 = vmax.f32 %v7579, %v7707
      %v7812 = vmax.f32 %v7581, %v7709
      %v7813 = vmax.f32 %v7583, %v7711
      %v7814 = vmax.f32 %v7585, %v7713
      %v7815 = vmax.f32 %v7587, %v7715
      %v7816 = vmax.f32 %v7589, %v7717
      %v7817 = vmax.f32 %v7591, %v7719
      %v7818 = vmax.f32 %v7593, %v7721
      %v7819 = vmax.f32 %v7595, %v7723
      %v7820 = vmax.f32 %v7597, %v7725
      %v7821 = vmax.f32 %v7599, %v7727
      %v7822 = vmax.f32 %v7601, %v7729
      %v7823 = vmax.f32 %v7603, %v7731
      %v7824 = vmax.f32 %v7605, %v7733
      %v7825 = vmax.f32 %v7607, %v7735
      %v7826 = vmax.f32 %v7609, %v7737
      %v7827 = vmax.f32 %v7611, %v7739
      %v7828 = vmax.f32 %v7613, %v7741
      %v7829 = vmax.f32 %v7615, %v7743
      %v7830 = vmax.f32 %v7617, %v7745
      %v7831 = vmax.f32 %v7619, %v7747
      %v7832 = vmax.f32 %v7621, %v7749
      %v7833 = vmax.f32 %v7623, %v7751
      %v7834 = vmax.f32 %v7625, %v7753
      %v7835 = vmax.f32 %v7627, %v7755
      %v7836 = vmax.f32 %v7629, %v7757
      %v7837 = vmax.f32 %v7631, %v7759
      %v7838 = vmax.f32 %v7633, %v7761
      %v7839 = vmax.f32 %v7635, %v7763
      %v7840 = vmax.f32 %v7637, %v7765
      %v7841 = vmax.f32 %v7639, %v7767
      %v7842 = vmax.f32 %v7641, %v7769
      %v7843 = vmax.f32 %v7643, %v7771
      %v7844 = vmax.f32 %v7645, %v7773
      %v7845 = vmax.f32 %v7647, %v7775
      %v7846 = vmax.f32 %v7649, %v7777
      %v7847 = vmax.f32 %v7651, %v7779
      %v7848 = vmax.f32 %v7653, %v7781
      %v7849 = vmax.f32 %v7655, %v7783
      %v7850 = vmax.f32 %v7657, %v7785
      %v7851 = vmax.f32 %v7659, %v7787
      %v7852 = vmax.f32 %v7788, %v7790
      %v7853 = vmax.f32 %v7789, %v7791
      %v7854 = vmax.f32 %v7792, %v7794
      %v7855 = vmax.f32 %v7793, %v7795
      %v7856 = vmax.f32 %v7796, %v7798
      %v7857 = vmax.f32 %v7797, %v7799
      %v7858 = vmax.f32 %v7800, %v7802
      %v7859 = vmax.f32 %v7801, %v7803
      %v7860 = vmax.f32 %v7804, %v7806
      %v7861 = vmax.f32 %v7805, %v7807
      %v7862 = vmax.f32 %v7808, %v7810
      %v7863 = vmax.f32 %v7809, %v7811
      %v7864 = vmax.f32 %v7812, %v7814
      %v7865 = vmax.f32 %v7813, %v7815
      %v7866 = vmax.f32 %v7816, %v7818
      %v7867 = vmax.f32 %v7817, %v7819
      %v7868 = vmax.f32 %v7820, %v7822
      %v7869 = vmax.f32 %v7821, %v7823
      %v7870 = vmax.f32 %v7824, %v7826
      %v7871 = vmax.f32 %v7825, %v7827
      %v7872 = vmax.f32 %v7828, %v7830
      %v7873 = vmax.f32 %v7829, %v7831
      %v7874 = vmax.f32 %v7832, %v7834
      %v7875 = vmax.f32 %v7833, %v7835
      %v7876 = vmax.f32 %v7836, %v7838
      %v7877 = vmax.f32 %v7837, %v7839
      %v7878 = vmax.f32 %v7840, %v7842
      %v7879 = vmax.f32 %v7841, %v7843
      %v7880 = vmax.f32 %v7844, %v7846
      %v7881 = vmax.f32 %v7845, %v7847
      %v7882 = vmax.f32 %v7848, %v7850
      %v7883 = vmax.f32 %v7849, %v7851
      %v7884 = vpack.c.bf16 %v7853, %v7852
      %v7885 = vpack.c.bf16 %v7855, %v7854
      %v7886 = vpack.c.bf16 %v7857, %v7856
      %v7887 = vpack.c.bf16 %v7859, %v7858
      %v7888 = vpack.c.bf16 %v7861, %v7860
      %v7889 = vpack.c.bf16 %v7863, %v7862
      %v7890 = vpack.c.bf16 %v7865, %v7864
      %v7891 = vpack.c.bf16 %v7867, %v7866
      %v7892 = vpack.c.bf16 %v7869, %v7868
      %v7893 = vpack.c.bf16 %v7871, %v7870
      %v7894 = vpack.c.bf16 %v7873, %v7872
      %v7895 = vpack.c.bf16 %v7875, %v7874
      %v7896 = vpack.c.bf16 %v7877, %v7876
      %v7897 = vpack.c.bf16 %v7879, %v7878
      %v7898 = vpack.c.bf16 %v7881, %v7880
      %v7899 = vpack.c.bf16 %v7883, %v7882
      %s7900 = scalar_lea.vmem [#allocation4], 24
      %7901 = vst.msk [vmem:[%s7900 + $0x8] sm:$0xff] %vm363, %v7884
      %7902 = vst.msk [vmem:[%s7900 + $0x20] sm:$0xff] %vm363, %v7885
      %7903 = vst.msk [vmem:[%s7900 + $0x38] sm:$0xff] %vm363, %v7886
      %7904 = vst.msk [vmem:[%s7900 + $0x50] sm:$0xff] %vm363, %v7887
      %7905 = vst.msk [vmem:[%s7900 + $0x68] sm:$0xff] %vm363, %v7888
      %7906 = vst.msk [vmem:[%s7900 + $0x80] sm:$0xff] %vm363, %v7889
      %7907 = vst.msk [vmem:[%s7900 + $0x98] sm:$0xff] %vm363, %v7890
      %7908 = vst.msk [vmem:[%s7900 + $0xb0] sm:$0xff] %vm363, %v7891
      %7909 = vst.msk [vmem:[%s7900 + $0xc8] sm:$0xff] %vm363, %v7892
      %7910 = vst.msk [vmem:[%s7900 + $0xe0] sm:$0xff] %vm363, %v7893
      %7911 = vst.msk [vmem:[%s7900 + $0xf8] sm:$0xff] %vm363, %v7894
      %7912 = vst.msk [vmem:[%s7900 + $0x110] sm:$0xff] %vm363, %v7895
      %7913 = vst.msk [vmem:[%s7900 + $0x128] sm:$0xff] %vm363, %v7896
      %7914 = vst.msk [vmem:[%s7900 + $0x140] sm:$0xff] %vm363, %v7897
      %7915 = vst.msk [vmem:[%s7900 + $0x158] sm:$0xff] %vm363, %v7898
      %7916 = vst.msk [vmem:[%s7900 + $0x170] sm:$0xff] %vm363, %v7899
      %v7917 = vld [vmem:[#allocation4] sm:$0x80]
      %v7918 = vld [vmem:[#allocation4 + $0x8] sm:$0xff]
      %v7919 = vld [vmem:[#allocation4 + $0x18] sm:$0x80]
      %v7920 = vld [vmem:[#allocation4 + $0x20] sm:$0xff]
      %v7921 = vld [vmem:[#allocation4 + $0x30] sm:$0x80]
      %v7922 = vld [vmem:[#allocation4 + $0x38] sm:$0xff]
      %v7923 = vld [vmem:[#allocation4 + $0x48] sm:$0x80]
      %v7924 = vld [vmem:[#allocation4 + $0x50] sm:$0xff]
      %v7925 = vld [vmem:[#allocation4 + $0x60] sm:$0x80]
      %v7926 = vld [vmem:[#allocation4 + $0x68] sm:$0xff]
      %v7927 = vld [vmem:[#allocation4 + $0x78] sm:$0x80]
      %v7928 = vld [vmem:[#allocation4 + $0x80] sm:$0xff]
      %v7929 = vld [vmem:[#allocation4 + $0x90] sm:$0x80]
      %v7930 = vld [vmem:[#allocation4 + $0x98] sm:$0xff]
      %v7931 = vld [vmem:[#allocation4 + $0xa8] sm:$0x80]
      %v7932 = vld [vmem:[#allocation4 + $0xb0] sm:$0xff]
      %v7933 = vld [vmem:[#allocation4 + $0xc0] sm:$0x80]
      %v7934 = vld [vmem:[#allocation4 + $0xc8] sm:$0xff]
      %v7935 = vld [vmem:[#allocation4 + $0xd8] sm:$0x80]
      %v7936 = vld [vmem:[#allocation4 + $0xe0] sm:$0xff]
      %v7937 = vld [vmem:[#allocation4 + $0xf0] sm:$0x80]
      %v7938 = vld [vmem:[#allocation4 + $0xf8] sm:$0xff]
      %v7939 = vld [vmem:[#allocation4 + $0x108] sm:$0x80]
      %v7940 = vld [vmem:[#allocation4 + $0x110] sm:$0xff]
      %v7941 = vld [vmem:[#allocation4 + $0x120] sm:$0x80]
      %v7942 = vld [vmem:[#allocation4 + $0x128] sm:$0xff]
      %v7943 = vld [vmem:[#allocation4 + $0x138] sm:$0x80]
      %v7944 = vld [vmem:[#allocation4 + $0x140] sm:$0xff]
      %v7945 = vld [vmem:[#allocation4 + $0x150] sm:$0x80]
      %v7946 = vld [vmem:[#allocation4 + $0x158] sm:$0xff]
      %v7947 = vld [vmem:[#allocation4 + $0x168] sm:$0x80]
      %v7948 = vld [vmem:[#allocation4 + $0x170] sm:$0xff]
      %v7950 = vshrl.u32 %v7917, 16
      %v7952 = vrot.slane %v7950, 7
      %v7954 = vshrl.u32 %v7918, 16
      %v7956 = vrot.slane %v7954, 7
      %v7957 = vshll.u32 %v7918, 16
      %v7959 = vor.u32 %v7956, %v7957
      %v7960 = vsel %vm1091, %v7952, %v7959
      %v7962 = vshrl.u32 %v7919, 16
      %v7964 = vrot.slane %v7962, 7
      %v7966 = vshrl.u32 %v7920, 16
      %v7968 = vrot.slane %v7966, 7
      %v7969 = vshll.u32 %v7920, 16
      %v7971 = vor.u32 %v7968, %v7969
      %v7972 = vsel %vm1091, %v7964, %v7971
      %v7974 = vshrl.u32 %v7921, 16
      %v7976 = vrot.slane %v7974, 7
      %v7978 = vshrl.u32 %v7922, 16
      %v7980 = vrot.slane %v7978, 7
      %v7981 = vshll.u32 %v7922, 16
      %v7983 = vor.u32 %v7980, %v7981
      %v7984 = vsel %vm1091, %v7976, %v7983
      %v7986 = vshrl.u32 %v7923, 16
      %v7988 = vrot.slane %v7986, 7
      %v7990 = vshrl.u32 %v7924, 16
      %v7992 = vrot.slane %v7990, 7
      %v7993 = vshll.u32 %v7924, 16
      %v7995 = vor.u32 %v7992, %v7993
      %v7996 = vsel %vm1091, %v7988, %v7995
      %v7998 = vshrl.u32 %v7925, 16
      %v8000 = vrot.slane %v7998, 7
      %v8002 = vshrl.u32 %v7926, 16
      %v8004 = vrot.slane %v8002, 7
      %v8005 = vshll.u32 %v7926, 16
      %v8007 = vor.u32 %v8004, %v8005
      %v8008 = vsel %vm1091, %v8000, %v8007
      %v8010 = vshrl.u32 %v7927, 16
      %v8012 = vrot.slane %v8010, 7
      %v8014 = vshrl.u32 %v7928, 16
      %v8016 = vrot.slane %v8014, 7
      %v8017 = vshll.u32 %v7928, 16
      %v8019 = vor.u32 %v8016, %v8017
      %v8020 = vsel %vm1091, %v8012, %v8019
      %v8022 = vshrl.u32 %v7929, 16
      %v8024 = vrot.slane %v8022, 7
      %v8026 = vshrl.u32 %v7930, 16
      %v8028 = vrot.slane %v8026, 7
      %v8029 = vshll.u32 %v7930, 16
      %v8031 = vor.u32 %v8028, %v8029
      %v8032 = vsel %vm1091, %v8024, %v8031
      %v8034 = vshrl.u32 %v7931, 16
      %v8036 = vrot.slane %v8034, 7
      %v8038 = vshrl.u32 %v7932, 16
      %v8040 = vrot.slane %v8038, 7
      %v8041 = vshll.u32 %v7932, 16
      %v8043 = vor.u32 %v8040, %v8041
      %v8044 = vsel %vm1091, %v8036, %v8043
      %v8046 = vshrl.u32 %v7933, 16
      %v8048 = vrot.slane %v8046, 7
      %v8050 = vshrl.u32 %v7934, 16
      %v8052 = vrot.slane %v8050, 7
      %v8053 = vshll.u32 %v7934, 16
      %v8055 = vor.u32 %v8052, %v8053
      %v8056 = vsel %vm1091, %v8048, %v8055
      %v8058 = vshrl.u32 %v7935, 16
      %v8060 = vrot.slane %v8058, 7
      %v8062 = vshrl.u32 %v7936, 16
      %v8064 = vrot.slane %v8062, 7
      %v8065 = vshll.u32 %v7936, 16
      %v8067 = vor.u32 %v8064, %v8065
      %v8068 = vsel %vm1091, %v8060, %v8067
      %v8070 = vshrl.u32 %v7937, 16
      %v8072 = vrot.slane %v8070, 7
      %v8074 = vshrl.u32 %v7938, 16
      %v8076 = vrot.slane %v8074, 7
      %v8077 = vshll.u32 %v7938, 16
      %v8079 = vor.u32 %v8076, %v8077
      %v8080 = vsel %vm1091, %v8072, %v8079
      %v8082 = vshrl.u32 %v7939, 16
      %v8084 = vrot.slane %v8082, 7
      %v8086 = vshrl.u32 %v7940, 16
      %v8088 = vrot.slane %v8086, 7
      %v8089 = vshll.u32 %v7940, 16
      %v8091 = vor.u32 %v8088, %v8089
      %v8092 = vsel %vm1091, %v8084, %v8091
      %v8094 = vshrl.u32 %v7941, 16
      %v8096 = vrot.slane %v8094, 7
      %v8098 = vshrl.u32 %v7942, 16
      %v8100 = vrot.slane %v8098, 7
      %v8101 = vshll.u32 %v7942, 16
      %v8103 = vor.u32 %v8100, %v8101
      %v8104 = vsel %vm1091, %v8096, %v8103
      %v8106 = vshrl.u32 %v7943, 16
      %v8108 = vrot.slane %v8106, 7
      %v8110 = vshrl.u32 %v7944, 16
      %v8112 = vrot.slane %v8110, 7
      %v8113 = vshll.u32 %v7944, 16
      %v8115 = vor.u32 %v8112, %v8113
      %v8116 = vsel %vm1091, %v8108, %v8115
      %v8118 = vshrl.u32 %v7945, 16
      %v8120 = vrot.slane %v8118, 7
      %v8122 = vshrl.u32 %v7946, 16
      %v8124 = vrot.slane %v8122, 7
      %v8125 = vshll.u32 %v7946, 16
      %v8127 = vor.u32 %v8124, %v8125
      %v8128 = vsel %vm1091, %v8120, %v8127
      %v8130 = vshrl.u32 %v7947, 16
      %v8132 = vrot.slane %v8130, 7
      %v8134 = vshrl.u32 %v7948, 16
      %v8136 = vrot.slane %v8134, 7
      %v8137 = vshll.u32 %v7948, 16
      %v8139 = vor.u32 %v8136, %v8137
      %v8140 = vsel %vm1091, %v8132, %v8139
      %v8141 = vld [vmem:[#allocation4 + $0x10] sm:$0x1]
      %v8142 = vld [vmem:[#allocation4 + $0x28] sm:$0x1]
      %v8143 = vld [vmem:[#allocation4 + $0x40] sm:$0x1]
      %v8144 = vld [vmem:[#allocation4 + $0x58] sm:$0x1]
      %v8145 = vld [vmem:[#allocation4 + $0x70] sm:$0x1]
      %v8146 = vld [vmem:[#allocation4 + $0x88] sm:$0x1]
      %v8147 = vld [vmem:[#allocation4 + $0xa0] sm:$0x1]
      %v8148 = vld [vmem:[#allocation4 + $0xb8] sm:$0x1]
      %v8149 = vld [vmem:[#allocation4 + $0xd0] sm:$0x1]
      %v8150 = vld [vmem:[#allocation4 + $0xe8] sm:$0x1]
      %v8151 = vld [vmem:[#allocation4 + $0x100] sm:$0x1]
      %v8152 = vld [vmem:[#allocation4 + $0x118] sm:$0x1]
      %v8153 = vld [vmem:[#allocation4 + $0x130] sm:$0x1]
      %v8154 = vld [vmem:[#allocation4 + $0x148] sm:$0x1]
      %v8155 = vld [vmem:[#allocation4 + $0x160] sm:$0x1]
      %v8156 = vld [vmem:[#allocation4 + $0x178] sm:$0x1]
      %v8157 = vrot.slane %v7957, 1
      %v8158 = vor.u32 %v7954, %v8157
      %v8160 = vshll.u32 %v8141, 16
      %v8162 = vrot.slane %v8160, 1
      %v8163 = vsel %vm1764, %v8158, %v8162
      %v8164 = vrot.slane %v7969, 1
      %v8165 = vor.u32 %v7966, %v8164
      %v8167 = vshll.u32 %v8142, 16
      %v8169 = vrot.slane %v8167, 1
      %v8170 = vsel %vm1764, %v8165, %v8169
      %v8171 = vrot.slane %v7981, 1
      %v8172 = vor.u32 %v7978, %v8171
      %v8174 = vshll.u32 %v8143, 16
      %v8176 = vrot.slane %v8174, 1
      %v8177 = vsel %vm1764, %v8172, %v8176
      %v8178 = vrot.slane %v7993, 1
      %v8179 = vor.u32 %v7990, %v8178
      %v8181 = vshll.u32 %v8144, 16
      %v8183 = vrot.slane %v8181, 1
      %v8184 = vsel %vm1764, %v8179, %v8183
      %v8185 = vrot.slane %v8005, 1
      %v8186 = vor.u32 %v8002, %v8185
      %v8188 = vshll.u32 %v8145, 16
      %v8190 = vrot.slane %v8188, 1
      %v8191 = vsel %vm1764, %v8186, %v8190
      %v8192 = vrot.slane %v8017, 1
      %v8193 = vor.u32 %v8014, %v8192
      %v8195 = vshll.u32 %v8146, 16
      %v8197 = vrot.slane %v8195, 1
      %v8198 = vsel %vm1764, %v8193, %v8197
      %v8199 = vrot.slane %v8029, 1
      %v8200 = vor.u32 %v8026, %v8199
      %v8202 = vshll.u32 %v8147, 16
      %v8204 = vrot.slane %v8202, 1
      %v8205 = vsel %vm1764, %v8200, %v8204
      %v8206 = vrot.slane %v8041, 1
      %v8207 = vor.u32 %v8038, %v8206
      %v8209 = vshll.u32 %v8148, 16
      %v8211 = vrot.slane %v8209, 1
      %v8212 = vsel %vm1764, %v8207, %v8211
      %v8213 = vrot.slane %v8053, 1
      %v8214 = vor.u32 %v8050, %v8213
      %v8216 = vshll.u32 %v8149, 16
      %v8218 = vrot.slane %v8216, 1
      %v8219 = vsel %vm1764, %v8214, %v8218
      %v8220 = vrot.slane %v8065, 1
      %v8221 = vor.u32 %v8062, %v8220
      %v8223 = vshll.u32 %v8150, 16
      %v8225 = vrot.slane %v8223, 1
      %v8226 = vsel %vm1764, %v8221, %v8225
      %v8227 = vrot.slane %v8077, 1
      %v8228 = vor.u32 %v8074, %v8227
      %v8230 = vshll.u32 %v8151, 16
      %v8232 = vrot.slane %v8230, 1
      %v8233 = vsel %vm1764, %v8228, %v8232
      %v8234 = vrot.slane %v8089, 1
      %v8235 = vor.u32 %v8086, %v8234
      %v8237 = vshll.u32 %v8152, 16
      %v8239 = vrot.slane %v8237, 1
      %v8240 = vsel %vm1764, %v8235, %v8239
      %v8241 = vrot.slane %v8101, 1
      %v8242 = vor.u32 %v8098, %v8241
      %v8244 = vshll.u32 %v8153, 16
      %v8246 = vrot.slane %v8244, 1
      %v8247 = vsel %vm1764, %v8242, %v8246
      %v8248 = vrot.slane %v8113, 1
      %v8249 = vor.u32 %v8110, %v8248
      %v8251 = vshll.u32 %v8154, 16
      %v8253 = vrot.slane %v8251, 1
      %v8254 = vsel %vm1764, %v8249, %v8253
      %v8255 = vrot.slane %v8125, 1
      %v8256 = vor.u32 %v8122, %v8255
      %v8258 = vshll.u32 %v8155, 16
      %v8260 = vrot.slane %v8258, 1
      %v8261 = vsel %vm1764, %v8256, %v8260
      %v8262 = vrot.slane %v8137, 1
      %v8263 = vor.u32 %v8134, %v8262
      %v8265 = vshll.u32 %v8156, 16
      %v8267 = vrot.slane %v8265, 1
      %v8268 = vsel %vm1764, %v8263, %v8267
      %8285 = vrot.lane.b32.xlu0 %v7918, 32
      %v8286 = vpop.permute.xlu0 %8285
      %8287 = vrot.lane.b32.xlu0 %v7920, 32
      %v8288 = vpop.permute.xlu0 %8287
      %8289 = vrot.lane.b32.xlu0 %v7922, 32
      %v8290 = vpop.permute.xlu0 %8289
      %8291 = vrot.lane.b32.xlu0 %v7924, 32
      %v8292 = vpop.permute.xlu0 %8291
      %8293 = vrot.lane.b32.xlu0 %v7926, 32
      %v8294 = vpop.permute.xlu0 %8293
      %8295 = vrot.lane.b32.xlu0 %v7928, 32
      %v8296 = vpop.permute.xlu0 %8295
      %8297 = vrot.lane.b32.xlu0 %v7930, 32
      %v8298 = vpop.permute.xlu0 %8297
      %8299 = vrot.lane.b32.xlu0 %v7932, 32
      %v8300 = vpop.permute.xlu0 %8299
      %8301 = vrot.lane.b32.xlu0 %v7934, 32
      %v8302 = vpop.permute.xlu0 %8301
      %8303 = vrot.lane.b32.xlu0 %v7936, 32
      %v8304 = vpop.permute.xlu0 %8303
      %8305 = vrot.lane.b32.xlu0 %v7938, 32
      %v8306 = vpop.permute.xlu0 %8305
      %8307 = vrot.lane.b32.xlu0 %v7940, 32
      %v8308 = vpop.permute.xlu0 %8307
      %8309 = vrot.lane.b32.xlu0 %v7942, 32
      %v8310 = vpop.permute.xlu0 %8309
      %8311 = vrot.lane.b32.xlu0 %v7944, 32
      %v8312 = vpop.permute.xlu0 %8311
      %8313 = vrot.lane.b32.xlu0 %v7946, 32
      %v8314 = vpop.permute.xlu0 %8313
      %8315 = vrot.lane.b32.xlu0 %v7948, 32
      %v8316 = vpop.permute.xlu0 %8315
      %8317 = vrot.lane.b32.xlu0 %v8163, 64
      %v8318 = vpop.permute.xlu0 %8317
      %8319 = vrot.lane.b32.xlu0 %v8170, 64
      %v8320 = vpop.permute.xlu0 %8319
      %8321 = vrot.lane.b32.xlu0 %v8177, 64
      %v8322 = vpop.permute.xlu0 %8321
      %8323 = vrot.lane.b32.xlu0 %v8184, 64
      %v8324 = vpop.permute.xlu0 %8323
      %8325 = vrot.lane.b32.xlu0 %v8191, 64
      %v8326 = vpop.permute.xlu0 %8325
      %8327 = vrot.lane.b32.xlu0 %v8198, 64
      %v8328 = vpop.permute.xlu0 %8327
      %8329 = vrot.lane.b32.xlu0 %v8205, 64
      %v8330 = vpop.permute.xlu0 %8329
      %8331 = vrot.lane.b32.xlu0 %v8212, 64
      %v8332 = vpop.permute.xlu0 %8331
      %8333 = vrot.lane.b32.xlu0 %v8219, 64
      %v8334 = vpop.permute.xlu0 %8333
      %8335 = vrot.lane.b32.xlu0 %v8226, 64
      %v8336 = vpop.permute.xlu0 %8335
      %8337 = vrot.lane.b32.xlu0 %v8233, 64
      %v8338 = vpop.permute.xlu0 %8337
      %8339 = vrot.lane.b32.xlu0 %v8240, 64
      %v8340 = vpop.permute.xlu0 %8339
      %8341 = vrot.lane.b32.xlu0 %v8247, 64
      %v8342 = vpop.permute.xlu0 %8341
      %8343 = vrot.lane.b32.xlu0 %v8254, 64
      %v8344 = vpop.permute.xlu0 %8343
      %8345 = vrot.lane.b32.xlu0 %v8261, 64
      %v8346 = vpop.permute.xlu0 %8345
      %8347 = vrot.lane.b32.xlu0 %v8268, 64
      %v8348 = vpop.permute.xlu0 %8347
      %v8351 = vsel %vm363, %v7960, %v8286
      %v8354 = vsel %vm363, %v7972, %v8288
      %v8357 = vsel %vm363, %v7984, %v8290
      %v8360 = vsel %vm363, %v7996, %v8292
      %v8363 = vsel %vm363, %v8008, %v8294
      %v8366 = vsel %vm363, %v8020, %v8296
      %v8369 = vsel %vm363, %v8032, %v8298
      %v8372 = vsel %vm363, %v8044, %v8300
      %v8375 = vsel %vm363, %v8056, %v8302
      %v8378 = vsel %vm363, %v8068, %v8304
      %v8381 = vsel %vm363, %v8080, %v8306
      %v8384 = vsel %vm363, %v8092, %v8308
      %v8387 = vsel %vm363, %v8104, %v8310
      %v8390 = vsel %vm363, %v8116, %v8312
      %v8393 = vsel %vm363, %v8128, %v8314
      %v8396 = vsel %vm363, %v8140, %v8316
      %vm8397 = vcmask 523264
      %v8399 = vsel %vm8397, %v8351, %v8318
      %v8401 = vsel %vm8397, %v8354, %v8320
      %v8403 = vsel %vm8397, %v8357, %v8322
      %v8405 = vsel %vm8397, %v8360, %v8324
      %v8407 = vsel %vm8397, %v8363, %v8326
      %v8409 = vsel %vm8397, %v8366, %v8328
      %v8411 = vsel %vm8397, %v8369, %v8330
      %v8413 = vsel %vm8397, %v8372, %v8332
      %v8415 = vsel %vm8397, %v8375, %v8334
      %v8417 = vsel %vm8397, %v8378, %v8336
      %v8419 = vsel %vm8397, %v8381, %v8338
      %v8421 = vsel %vm8397, %v8384, %v8340
      %v8423 = vsel %vm8397, %v8387, %v8342
      %v8425 = vsel %vm8397, %v8390, %v8344
      %v8427 = vsel %vm8397, %v8393, %v8346
      %v8429 = vsel %vm8397, %v8396, %v8348
      %v8430 = vld [vmem:[%s3] sm:$0xf]
      %v8431 = vld [vmem:[%s3 + $0x4] sm:$0xf]
      %v8432 = vld [vmem:[%s3 + $0x8] sm:$0xf]
      %v8433 = vld [vmem:[%s3 + $0xc] sm:$0xf]
      %v8434 = vld [vmem:[%s3 + $0x10] sm:$0xf]
      %v8435 = vld [vmem:[%s3 + $0x14] sm:$0xf]
      %v8436 = vld [vmem:[%s3 + $0x18] sm:$0xf]
      %v8437 = vld [vmem:[%s3 + $0x1c] sm:$0xf]
      %v8438 = vld [vmem:[%s3 + $0x20] sm:$0xf]
      %v8439 = vld [vmem:[%s3 + $0x24] sm:$0xf]
      %v8440 = vld [vmem:[%s3 + $0x28] sm:$0xf]
      %v8441 = vld [vmem:[%s3 + $0x2c] sm:$0xf]
      %v8442 = vld [vmem:[%s7900] sm:$0x80]
      %v8443 = vld [vmem:[%s7900 + $0x8] sm:$0xff]
      %v8444 = vld [vmem:[%s7900 + $0x18] sm:$0x80]
      %v8445 = vld [vmem:[%s7900 + $0x20] sm:$0xff]
      %v8446 = vld [vmem:[%s7900 + $0x30] sm:$0x80]
      %v8447 = vld [vmem:[%s7900 + $0x38] sm:$0xff]
      %v8448 = vld [vmem:[%s7900 + $0x48] sm:$0x80]
      %v8449 = vld [vmem:[%s7900 + $0x50] sm:$0xff]
      %v8450 = vld [vmem:[%s7900 + $0x60] sm:$0x80]
      %v8451 = vld [vmem:[%s7900 + $0x68] sm:$0xff]
      %v8452 = vld [vmem:[%s7900 + $0x78] sm:$0x80]
      %v8453 = vld [vmem:[%s7900 + $0x80] sm:$0xff]
      %v8454 = vld [vmem:[%s7900 + $0x90] sm:$0x80]
      %v8455 = vld [vmem:[%s7900 + $0x98] sm:$0xff]
      %v8456 = vld [vmem:[%s7900 + $0xa8] sm:$0x80]
      %v8457 = vld [vmem:[%s7900 + $0xb0] sm:$0xff]
      %v8458 = vld [vmem:[%s7900 + $0xc0] sm:$0x80]
      %v8459 = vld [vmem:[%s7900 + $0xc8] sm:$0xff]
      %v8460 = vld [vmem:[%s7900 + $0xd8] sm:$0x80]
      %v8461 = vld [vmem:[%s7900 + $0xe0] sm:$0xff]
      %v8462 = vld [vmem:[%s7900 + $0xf0] sm:$0x80]
      %v8463 = vld [vmem:[%s7900 + $0xf8] sm:$0xff]
      %v8464 = vld [vmem:[%s7900 + $0x108] sm:$0x80]
      %v8465 = vld [vmem:[%s7900 + $0x110] sm:$0xff]
      %v8466 = vld [vmem:[%s7900 + $0x120] sm:$0x80]
      %v8467 = vld [vmem:[%s7900 + $0x128] sm:$0xff]
      %v8468 = vld [vmem:[%s7900 + $0x138] sm:$0x80]
      %v8469 = vld [vmem:[%s7900 + $0x140] sm:$0xff]
      %v8470 = vld [vmem:[%s7900 + $0x150] sm:$0x80]
      %v8471 = vld [vmem:[%s7900 + $0x158] sm:$0xff]
      %v8472 = vld [vmem:[%s7900 + $0x168] sm:$0x80]
      %v8473 = vld [vmem:[%s7900 + $0x170] sm:$0xff]
      %v8475 = vshrl.u32 %v8442, 16
      %v8477 = vrot.slane %v8475, 7
      %v8479 = vshrl.u32 %v8443, 16
      %v8481 = vrot.slane %v8479, 7
      %v8482 = vshll.u32 %v8443, 16
      %v8484 = vor.u32 %v8481, %v8482
      %v8485 = vsel %vm1091, %v8477, %v8484
      %v8487 = vshrl.u32 %v8444, 16
      %v8489 = vrot.slane %v8487, 7
      %v8491 = vshrl.u32 %v8445, 16
      %v8493 = vrot.slane %v8491, 7
      %v8494 = vshll.u32 %v8445, 16
      %v8496 = vor.u32 %v8493, %v8494
      %v8497 = vsel %vm1091, %v8489, %v8496
      %v8499 = vshrl.u32 %v8446, 16
      %v8501 = vrot.slane %v8499, 7
      %v8503 = vshrl.u32 %v8447, 16
      %v8505 = vrot.slane %v8503, 7
      %v8506 = vshll.u32 %v8447, 16
      %v8508 = vor.u32 %v8505, %v8506
      %v8509 = vsel %vm1091, %v8501, %v8508
      %v8511 = vshrl.u32 %v8448, 16
      %v8513 = vrot.slane %v8511, 7
      %v8515 = vshrl.u32 %v8449, 16
      %v8517 = vrot.slane %v8515, 7
      %v8518 = vshll.u32 %v8449, 16
      %v8520 = vor.u32 %v8517, %v8518
      %v8521 = vsel %vm1091, %v8513, %v8520
      %v8523 = vshrl.u32 %v8450, 16
      %v8525 = vrot.slane %v8523, 7
      %v8527 = vshrl.u32 %v8451, 16
      %v8529 = vrot.slane %v8527, 7
      %v8530 = vshll.u32 %v8451, 16
      %v8532 = vor.u32 %v8529, %v8530
      %v8533 = vsel %vm1091, %v8525, %v8532
      %v8535 = vshrl.u32 %v8452, 16
      %v8537 = vrot.slane %v8535, 7
      %v8539 = vshrl.u32 %v8453, 16
      %v8541 = vrot.slane %v8539, 7
      %v8542 = vshll.u32 %v8453, 16
      %v8544 = vor.u32 %v8541, %v8542
      %v8545 = vsel %vm1091, %v8537, %v8544
      %v8547 = vshrl.u32 %v8454, 16
      %v8549 = vrot.slane %v8547, 7
      %v8551 = vshrl.u32 %v8455, 16
      %v8553 = vrot.slane %v8551, 7
      %v8554 = vshll.u32 %v8455, 16
      %v8556 = vor.u32 %v8553, %v8554
      %v8557 = vsel %vm1091, %v8549, %v8556
      %v8559 = vshrl.u32 %v8456, 16
      %v8561 = vrot.slane %v8559, 7
      %v8563 = vshrl.u32 %v8457, 16
      %v8565 = vrot.slane %v8563, 7
      %v8566 = vshll.u32 %v8457, 16
      %v8568 = vor.u32 %v8565, %v8566
      %v8569 = vsel %vm1091, %v8561, %v8568
      %v8571 = vshrl.u32 %v8458, 16
      %v8573 = vrot.slane %v8571, 7
      %v8575 = vshrl.u32 %v8459, 16
      %v8577 = vrot.slane %v8575, 7
      %v8578 = vshll.u32 %v8459, 16
      %v8580 = vor.u32 %v8577, %v8578
      %v8581 = vsel %vm1091, %v8573, %v8580
      %v8583 = vshrl.u32 %v8460, 16
      %v8585 = vrot.slane %v8583, 7
      %v8587 = vshrl.u32 %v8461, 16
      %v8589 = vrot.slane %v8587, 7
      %v8590 = vshll.u32 %v8461, 16
      %v8592 = vor.u32 %v8589, %v8590
      %v8593 = vsel %vm1091, %v8585, %v8592
      %v8595 = vshrl.u32 %v8462, 16
      %v8597 = vrot.slane %v8595, 7
      %v8599 = vshrl.u32 %v8463, 16
      %v8601 = vrot.slane %v8599, 7
      %v8602 = vshll.u32 %v8463, 16
      %v8604 = vor.u32 %v8601, %v8602
      %v8605 = vsel %vm1091, %v8597, %v8604
      %v8607 = vshrl.u32 %v8464, 16
      %v8609 = vrot.slane %v8607, 7
      %v8611 = vshrl.u32 %v8465, 16
      %v8613 = vrot.slane %v8611, 7
      %v8614 = vshll.u32 %v8465, 16
      %v8616 = vor.u32 %v8613, %v8614
      %v8617 = vsel %vm1091, %v8609, %v8616
      %v8619 = vshrl.u32 %v8466, 16
      %v8621 = vrot.slane %v8619, 7
      %v8623 = vshrl.u32 %v8467, 16
      %v8625 = vrot.slane %v8623, 7
      %v8626 = vshll.u32 %v8467, 16
      %v8628 = vor.u32 %v8625, %v8626
      %v8629 = vsel %vm1091, %v8621, %v8628
      %v8631 = vshrl.u32 %v8468, 16
      %v8633 = vrot.slane %v8631, 7
      %v8635 = vshrl.u32 %v8469, 16
      %v8637 = vrot.slane %v8635, 7
      %v8638 = vshll.u32 %v8469, 16
      %v8640 = vor.u32 %v8637, %v8638
      %v8641 = vsel %vm1091, %v8633, %v8640
      %v8643 = vshrl.u32 %v8470, 16
      %v8645 = vrot.slane %v8643, 7
      %v8647 = vshrl.u32 %v8471, 16
      %v8649 = vrot.slane %v8647, 7
      %v8650 = vshll.u32 %v8471, 16
      %v8652 = vor.u32 %v8649, %v8650
      %v8653 = vsel %vm1091, %v8645, %v8652
      %v8655 = vshrl.u32 %v8472, 16
      %v8657 = vrot.slane %v8655, 7
      %v8659 = vshrl.u32 %v8473, 16
      %v8661 = vrot.slane %v8659, 7
      %v8662 = vshll.u32 %v8473, 16
      %v8664 = vor.u32 %v8661, %v8662
      %v8665 = vsel %vm1091, %v8657, %v8664
      %v8666 = vld [vmem:[%s7900 + $0x10] sm:$0x1]
      %v8667 = vld [vmem:[%s7900 + $0x28] sm:$0x1]
      %v8668 = vld [vmem:[%s7900 + $0x40] sm:$0x1]
      %v8669 = vld [vmem:[%s7900 + $0x58] sm:$0x1]
      %v8670 = vld [vmem:[%s7900 + $0x70] sm:$0x1]
      %v8671 = vld [vmem:[%s7900 + $0x88] sm:$0x1]
      %v8672 = vld [vmem:[%s7900 + $0xa0] sm:$0x1]
      %v8673 = vld [vmem:[%s7900 + $0xb8] sm:$0x1]
      %v8674 = vld [vmem:[%s7900 + $0xd0] sm:$0x1]
      %v8675 = vld [vmem:[%s7900 + $0xe8] sm:$0x1]
      %v8676 = vld [vmem:[%s7900 + $0x100] sm:$0x1]
      %v8677 = vld [vmem:[%s7900 + $0x118] sm:$0x1]
      %v8678 = vld [vmem:[%s7900 + $0x130] sm:$0x1]
      %v8679 = vld [vmem:[%s7900 + $0x148] sm:$0x1]
      %v8680 = vld [vmem:[%s7900 + $0x160] sm:$0x1]
      %v8681 = vld [vmem:[%s7900 + $0x178] sm:$0x1]
      %v8682 = vrot.slane %v8482, 1
      %v8683 = vor.u32 %v8479, %v8682
      %v8685 = vshll.u32 %v8666, 16
      %v8687 = vrot.slane %v8685, 1
      %v8688 = vsel %vm1764, %v8683, %v8687
      %v8689 = vrot.slane %v8494, 1
      %v8690 = vor.u32 %v8491, %v8689
      %v8692 = vshll.u32 %v8667, 16
      %v8694 = vrot.slane %v8692, 1
      %v8695 = vsel %vm1764, %v8690, %v8694
      %v8696 = vrot.slane %v8506, 1
      %v8697 = vor.u32 %v8503, %v8696
      %v8699 = vshll.u32 %v8668, 16
      %v8701 = vrot.slane %v8699, 1
      %v8702 = vsel %vm1764, %v8697, %v8701
      %v8703 = vrot.slane %v8518, 1
      %v8704 = vor.u32 %v8515, %v8703
      %v8706 = vshll.u32 %v8669, 16
      %v8708 = vrot.slane %v8706, 1
      %v8709 = vsel %vm1764, %v8704, %v8708
      %v8710 = vrot.slane %v8530, 1
      %v8711 = vor.u32 %v8527, %v8710
      %v8713 = vshll.u32 %v8670, 16
      %v8715 = vrot.slane %v8713, 1
      %v8716 = vsel %vm1764, %v8711, %v8715
      %v8717 = vrot.slane %v8542, 1
      %v8718 = vor.u32 %v8539, %v8717
      %v8720 = vshll.u32 %v8671, 16
      %v8722 = vrot.slane %v8720, 1
      %v8723 = vsel %vm1764, %v8718, %v8722
      %v8724 = vrot.slane %v8554, 1
      %v8725 = vor.u32 %v8551, %v8724
      %v8727 = vshll.u32 %v8672, 16
      %v8729 = vrot.slane %v8727, 1
      %v8730 = vsel %vm1764, %v8725, %v8729
      %v8731 = vrot.slane %v8566, 1
      %v8732 = vor.u32 %v8563, %v8731
      %v8734 = vshll.u32 %v8673, 16
      %v8736 = vrot.slane %v8734, 1
      %v8737 = vsel %vm1764, %v8732, %v8736
      %v8738 = vrot.slane %v8578, 1
      %v8739 = vor.u32 %v8575, %v8738
      %v8741 = vshll.u32 %v8674, 16
      %v8743 = vrot.slane %v8741, 1
      %v8744 = vsel %vm1764, %v8739, %v8743
      %v8745 = vrot.slane %v8590, 1
      %v8746 = vor.u32 %v8587, %v8745
      %v8748 = vshll.u32 %v8675, 16
      %v8750 = vrot.slane %v8748, 1
      %v8751 = vsel %vm1764, %v8746, %v8750
      %v8752 = vrot.slane %v8602, 1
      %v8753 = vor.u32 %v8599, %v8752
      %v8755 = vshll.u32 %v8676, 16
      %v8757 = vrot.slane %v8755, 1
      %v8758 = vsel %vm1764, %v8753, %v8757
      %v8759 = vrot.slane %v8614, 1
      %v8760 = vor.u32 %v8611, %v8759
      %v8762 = vshll.u32 %v8677, 16
      %v8764 = vrot.slane %v8762, 1
      %v8765 = vsel %vm1764, %v8760, %v8764
      %v8766 = vrot.slane %v8626, 1
      %v8767 = vor.u32 %v8623, %v8766
      %v8769 = vshll.u32 %v8678, 16
      %v8771 = vrot.slane %v8769, 1
      %v8772 = vsel %vm1764, %v8767, %v8771
      %v8773 = vrot.slane %v8638, 1
      %v8774 = vor.u32 %v8635, %v8773
      %v8776 = vshll.u32 %v8679, 16
      %v8778 = vrot.slane %v8776, 1
      %v8779 = vsel %vm1764, %v8774, %v8778
      %v8780 = vrot.slane %v8650, 1
      %v8781 = vor.u32 %v8647, %v8780
      %v8783 = vshll.u32 %v8680, 16
      %v8785 = vrot.slane %v8783, 1
      %v8786 = vsel %vm1764, %v8781, %v8785
      %v8787 = vrot.slane %v8662, 1
      %v8788 = vor.u32 %v8659, %v8787
      %v8790 = vshll.u32 %v8681, 16
      %v8792 = vrot.slane %v8790, 1
      %v8793 = vsel %vm1764, %v8788, %v8792
      %8810 = vrot.lane.b32.xlu0 %v8443, 32
      %v8811 = vpop.permute.xlu0 %8810
      %8812 = vrot.lane.b32.xlu0 %v8445, 32
      %v8813 = vpop.permute.xlu0 %8812
      %8814 = vrot.lane.b32.xlu0 %v8447, 32
      %v8815 = vpop.permute.xlu0 %8814
      %8816 = vrot.lane.b32.xlu0 %v8449, 32
      %v8817 = vpop.permute.xlu0 %8816
      %8818 = vrot.lane.b32.xlu0 %v8451, 32
      %v8819 = vpop.permute.xlu0 %8818
      %8820 = vrot.lane.b32.xlu0 %v8453, 32
      %v8821 = vpop.permute.xlu0 %8820
      %8822 = vrot.lane.b32.xlu0 %v8455, 32
      %v8823 = vpop.permute.xlu0 %8822
      %8824 = vrot.lane.b32.xlu0 %v8457, 32
      %v8825 = vpop.permute.xlu0 %8824
      %8826 = vrot.lane.b32.xlu0 %v8459, 32
      %v8827 = vpop.permute.xlu0 %8826
      %8828 = vrot.lane.b32.xlu0 %v8461, 32
      %v8829 = vpop.permute.xlu0 %8828
      %8830 = vrot.lane.b32.xlu0 %v8463, 32
      %v8831 = vpop.permute.xlu0 %8830
      %8832 = vrot.lane.b32.xlu0 %v8465, 32
      %v8833 = vpop.permute.xlu0 %8832
      %8834 = vrot.lane.b32.xlu0 %v8467, 32
      %v8835 = vpop.permute.xlu0 %8834
      %8836 = vrot.lane.b32.xlu0 %v8469, 32
      %v8837 = vpop.permute.xlu0 %8836
      %8838 = vrot.lane.b32.xlu0 %v8471, 32
      %v8839 = vpop.permute.xlu0 %8838
      %8840 = vrot.lane.b32.xlu0 %v8473, 32
      %v8841 = vpop.permute.xlu0 %8840
      %8842 = vrot.lane.b32.xlu0 %v8688, 64
      %v8843 = vpop.permute.xlu0 %8842
      %8844 = vrot.lane.b32.xlu0 %v8695, 64
      %v8845 = vpop.permute.xlu0 %8844
      %8846 = vrot.lane.b32.xlu0 %v8702, 64
      %v8847 = vpop.permute.xlu0 %8846
      %8848 = vrot.lane.b32.xlu0 %v8709, 64
      %v8849 = vpop.permute.xlu0 %8848
      %8850 = vrot.lane.b32.xlu0 %v8716, 64
      %v8851 = vpop.permute.xlu0 %8850
      %8852 = vrot.lane.b32.xlu0 %v8723, 64
      %v8853 = vpop.permute.xlu0 %8852
      %8854 = vrot.lane.b32.xlu0 %v8730, 64
      %v8855 = vpop.permute.xlu0 %8854
      %8856 = vrot.lane.b32.xlu0 %v8737, 64
      %v8857 = vpop.permute.xlu0 %8856
      %8858 = vrot.lane.b32.xlu0 %v8744, 64
      %v8859 = vpop.permute.xlu0 %8858
      %8860 = vrot.lane.b32.xlu0 %v8751, 64
      %v8861 = vpop.permute.xlu0 %8860
      %8862 = vrot.lane.b32.xlu0 %v8758, 64
      %v8863 = vpop.permute.xlu0 %8862
      %8864 = vrot.lane.b32.xlu0 %v8765, 64
      %v8865 = vpop.permute.xlu0 %8864
      %8866 = vrot.lane.b32.xlu0 %v8772, 64
      %v8867 = vpop.permute.xlu0 %8866
      %8868 = vrot.lane.b32.xlu0 %v8779, 64
      %v8869 = vpop.permute.xlu0 %8868
      %8870 = vrot.lane.b32.xlu0 %v8786, 64
      %v8871 = vpop.permute.xlu0 %8870
      %8872 = vrot.lane.b32.xlu0 %v8793, 64
      %v8873 = vpop.permute.xlu0 %8872
      %v8876 = vsel %vm363, %v8485, %v8811
      %v8879 = vsel %vm363, %v8497, %v8813
      %v8882 = vsel %vm363, %v8509, %v8815
      %v8885 = vsel %vm363, %v8521, %v8817
      %v8888 = vsel %vm363, %v8533, %v8819
      %v8891 = vsel %vm363, %v8545, %v8821
      %v8894 = vsel %vm363, %v8557, %v8823
      %v8897 = vsel %vm363, %v8569, %v8825
      %v8900 = vsel %vm363, %v8581, %v8827
      %v8903 = vsel %vm363, %v8593, %v8829
      %v8906 = vsel %vm363, %v8605, %v8831
      %v8909 = vsel %vm363, %v8617, %v8833
      %v8912 = vsel %vm363, %v8629, %v8835
      %v8915 = vsel %vm363, %v8641, %v8837
      %v8918 = vsel %vm363, %v8653, %v8839
      %v8921 = vsel %vm363, %v8665, %v8841
      %v8923 = vsel %vm8397, %v8876, %v8843
      %v8925 = vsel %vm8397, %v8879, %v8845
      %v8927 = vsel %vm8397, %v8882, %v8847
      %v8929 = vsel %vm8397, %v8885, %v8849
      %v8931 = vsel %vm8397, %v8888, %v8851
      %v8933 = vsel %vm8397, %v8891, %v8853
      %v8935 = vsel %vm8397, %v8894, %v8855
      %v8937 = vsel %vm8397, %v8897, %v8857
      %v8939 = vsel %vm8397, %v8900, %v8859
      %v8941 = vsel %vm8397, %v8903, %v8861
      %v8943 = vsel %vm8397, %v8906, %v8863
      %v8945 = vsel %vm8397, %v8909, %v8865
      %v8947 = vsel %vm8397, %v8912, %v8867
      %v8949 = vsel %vm8397, %v8915, %v8869
      %v8951 = vsel %vm8397, %v8918, %v8871
      %v8953 = vsel %vm8397, %v8921, %v8873
      %v8954 = vld [vmem:[%s3 + $0x30] sm:$0xf]
      %v8955 = vld [vmem:[%s3 + $0x34] sm:$0xf]
      %v8956 = vld [vmem:[%s3 + $0x38] sm:$0xf]
      %v8957 = vld [vmem:[%s3 + $0x3c] sm:$0xf]
      %v8958 = vld [vmem:[%s3 + $0x40] sm:$0xf]
      %v8959 = vld [vmem:[%s3 + $0x44] sm:$0xf]
      %v8960 = vld [vmem:[%s3 + $0x48] sm:$0xf]
      %v8961 = vld [vmem:[%s3 + $0x4c] sm:$0xf]
      %v8962 = vld [vmem:[%s3 + $0x50] sm:$0xf]
      %v8963 = vld [vmem:[%s3 + $0x54] sm:$0xf]
      %v8964 = vld [vmem:[%s3 + $0x58] sm:$0xf]
      %v8965 = vld [vmem:[%s3 + $0x5c] sm:$0xf]
      %v8978 = vunpack.c.l.b16 %v8954
      %v8979 = vunpack.c.l.b16 %v8955
      %v8980 = vunpack.c.l.b16 %v8956
      %v8981 = vunpack.c.l.b16 %v8957
      %v8982 = vunpack.c.l.b16 %v8958
      %v8983 = vunpack.c.l.b16 %v8959
      %v8984 = vunpack.c.l.b16 %v8960
      %v8985 = vunpack.c.l.b16 %v8961
      %v8986 = vunpack.c.l.b16 %v8962
      %v8987 = vunpack.c.l.b16 %v8963
      %v8988 = vunpack.c.l.b16 %v8964
      %v8989 = vunpack.c.l.b16 %v8965
      %v8990 = vpack.c.b16 %v8979, %v8978
      %v8991 = vpack.c.b16 %v8981, %v8980
      %v8992 = vpack.c.b16 %v8983, %v8982
      %v8993 = vpack.c.b16 %v8985, %v8984
      %v8994 = vpack.c.b16 %v8987, %v8986
      %v8995 = vpack.c.b16 %v8989, %v8988
      %vm9002 = vcmask 785408
      %v9003 = vsel %vm9002, %v8923, 0
      %v9005 = vsel %vm9002, %v8925, 0
      %v9007 = vsel %vm9002, %v8927, 0
      %v9009 = vsel %vm9002, %v8929, 0
      %v9011 = vsel %vm9002, %v8931, 0
      %v9013 = vsel %vm9002, %v8933, 0
      %v9015 = vsel %vm9002, %v8935, 0
      %v9017 = vsel %vm9002, %v8937, 0
      %v9019 = vsel %vm9002, %v8939, 0
      %v9021 = vsel %vm9002, %v8941, 0
      %v9023 = vsel %vm9002, %v8943, 0
      %v9025 = vsel %vm9002, %v8945, 0
      %v9027 = vsel %vm9002, %v8947, 0
      %v9029 = vsel %vm9002, %v8949, 0
      %v9031 = vsel %vm9002, %v8951, 0
      %v9033 = vsel %vm9002, %v8953, 0
      %9035 = vmatprep.subr.bf16.mxu0 0
      %9036 = vmatpush1.bf16.msra.mxu0 %v8990
      %9037 = vmatprep.subr.bf16.mxu0 0
      %9038 = vmatpush1.bf16.msra.mxu0 %v8991
      %9039 = vmatprep.subr.bf16.mxu0 0
      %9040 = vmatpush1.bf16.msra.mxu0 %v8992
      %9041 = vmatprep.subr.bf16.mxu0 0
      %9042 = vmatpush1.bf16.msra.mxu0 %v8993
      %9043 = vmatprep.subr.bf16.mxu0 0
      %9044 = vmatpush1.bf16.msra.mxu0 %v8994
      %9045 = vmatprep.subr.bf16.mxu0 0
      %9046 = vmatpush1.bf16.msra.mxu0 %v8995
      %9047 = vmatprep.subr.bf16.mxu0 0
      %9048 = vmatpush1.bf16.msra.mxu0 0
      %9049 = vmatprep.subr.bf16.mxu0 0
      %9050 = vmatpush1.bf16.msra.mxu0 0
      %9051 = vmatprep.subr.bf16.mxu0 0
      %9052 = vmatpush1.bf16.msra.mxu0 0
      %9053 = vmatprep.subr.bf16.mxu0 0
      %9054 = vmatpush1.bf16.msra.mxu0 0
      %9055 = vmatprep.subr.bf16.mxu0 0
      %9056 = vmatpush1.bf16.msra.mxu0 0
      %9057 = vmatprep.subr.bf16.mxu0 0
      %9058 = vmatpush1.bf16.msra.mxu0 0
      %9059 = vmatprep.subr.bf16.mxu0 0
      %9060 = vmatpush1.bf16.msra.mxu0 0
      %9061 = vmatprep.subr.bf16.mxu0 0
      %9062 = vmatpush1.bf16.msra.mxu0 0
      %9063 = vmatprep.subr.bf16.mxu0 0
      %9064 = vmatpush1.bf16.msra.mxu0 0
      %9065 = vmatprep.subr.bf16.mxu0 0
      %9066 = vmatpush1.bf16.msra.mxu0 0
      %9067 = vmatprep.mubr.bf16.mxu0 0
      %9068 = vmatmul.mubr.bf16.gmra.mrb[0].mxu0 %v9003
      %v9069 = vpop.f32.mrb[0].mxu0
      %v9070 = vadd.f32 0.0, %v9069
      %v9071 = vpop.f32.mrb[0].mxu0
      %v9072 = vpop.f32.mrb[0].mxu0
      %v9073 = vadd.f32 0.0, %v9072
      %v9074 = vpop.f32.mrb[0].mxu0
      %9075 = vmatprep.mubr.bf16.mxu0 0
      %9076 = vmatmul.mubr.bf16.gmra.mrb[0].mxu0 %v9005
      %v9077 = vpop.f32.mrb[0].mxu0
      %v9078 = vadd.f32 0.0, %v9077
      %v9079 = vpop.f32.mrb[0].mxu0
      %v9080 = vpop.f32.mrb[0].mxu0
      %v9081 = vadd.f32 0.0, %v9080
      %v9082 = vpop.f32.mrb[0].mxu0
      %9083 = vmatprep.mubr.bf16.mxu0 0
      %9084 = vmatmul.mubr.bf16.gmra.mrb[0].mxu0 %v9007
      %v9085 = vpop.f32.mrb[0].mxu0
      %v9086 = vadd.f32 0.0, %v9085
      %v9087 = vpop.f32.mrb[0].mxu0
      %v9088 = vpop.f32.mrb[0].mxu0
      %v9089 = vadd.f32 0.0, %v9088
      %v9090 = vpop.f32.mrb[0].mxu0
      %9091 = vmatprep.mubr.bf16.mxu0 0
      %9092 = vmatmul.mubr.bf16.gmra.mrb[0].mxu0 %v9009
      %v9093 = vpop.f32.mrb[0].mxu0
      %v9094 = vadd.f32 0.0, %v9093
      %v9095 = vpop.f32.mrb[0].mxu0
      %v9096 = vpop.f32.mrb[0].mxu0
      %v9097 = vadd.f32 0.0, %v9096
      %v9098 = vpop.f32.mrb[0].mxu0
      %9099 = vmatprep.mubr.bf16.mxu0 0
      %9100 = vmatmul.mubr.bf16.gmra.mrb[0].mxu0 %v9011
      %v9101 = vpop.f32.mrb[0].mxu0
      %v9102 = vadd.f32 0.0, %v9101
      %v9103 = vpop.f32.mrb[0].mxu0
      %v9104 = vpop.f32.mrb[0].mxu0
      %v9105 = vadd.f32 0.0, %v9104
      %v9106 = vpop.f32.mrb[0].mxu0
      %9107 = vmatprep.mubr.bf16.mxu0 0
      %9108 = vmatmul.mubr.bf16.gmra.mrb[0].mxu0 %v9013
      %v9109 = vpop.f32.mrb[0].mxu0
      %v9110 = vadd.f32 0.0, %v9109
      %v9111 = vpop.f32.mrb[0].mxu0
      %v9112 = vpop.f32.mrb[0].mxu0
      %v9113 = vadd.f32 0.0, %v9112
      %v9114 = vpop.f32.mrb[0].mxu0
      %9115 = vmatprep.mubr.bf16.mxu0 0
      %9116 = vmatmul.mubr.bf16.gmra.mrb[0].mxu0 %v9015
      %v9117 = vpop.f32.mrb[0].mxu0
      %v9118 = vadd.f32 0.0, %v9117
      %v9119 = vpop.f32.mrb[0].mxu0
      %v9120 = vpop.f32.mrb[0].mxu0
      %v9121 = vadd.f32 0.0, %v9120
      %v9122 = vpop.f32.mrb[0].mxu0
      %9123 = vmatprep.mubr.bf16.mxu0 0
      %9124 = vmatmul.mubr.bf16.gmra.mrb[0].mxu0 %v9017
      %v9125 = vpop.f32.mrb[0].mxu0
      %v9126 = vadd.f32 0.0, %v9125
      %v9127 = vpop.f32.mrb[0].mxu0
      %v9128 = vpop.f32.mrb[0].mxu0
      %v9129 = vadd.f32 0.0, %v9128
      %v9130 = vpop.f32.mrb[0].mxu0
      %9131 = vmatprep.mubr.bf16.mxu0 0
      %9132 = vmatmul.mubr.bf16.gmra.mrb[0].mxu0 %v9019
      %v9133 = vpop.f32.mrb[0].mxu0
      %v9134 = vadd.f32 0.0, %v9133
      %v9135 = vpop.f32.mrb[0].mxu0
      %v9136 = vpop.f32.mrb[0].mxu0
      %v9137 = vadd.f32 0.0, %v9136
      %v9138 = vpop.f32.mrb[0].mxu0
      %9139 = vmatprep.mubr.bf16.mxu0 0
      %9140 = vmatmul.mubr.bf16.gmra.mrb[0].mxu0 %v9021
      %v9141 = vpop.f32.mrb[0].mxu0
      %v9142 = vadd.f32 0.0, %v9141
      %v9143 = vpop.f32.mrb[0].mxu0
      %v9144 = vpop.f32.mrb[0].mxu0
      %v9145 = vadd.f32 0.0, %v9144
      %v9146 = vpop.f32.mrb[0].mxu0
      %9147 = vmatprep.mubr.bf16.mxu0 0
      %9148 = vmatmul.mubr.bf16.gmra.mrb[0].mxu0 %v9023
      %v9149 = vpop.f32.mrb[0].mxu0
      %v9150 = vadd.f32 0.0, %v9149
      %v9151 = vpop.f32.mrb[0].mxu0
      %v9152 = vpop.f32.mrb[0].mxu0
      %v9153 = vadd.f32 0.0, %v9152
      %v9154 = vpop.f32.mrb[0].mxu0
      %9155 = vmatprep.mubr.bf16.mxu0 0
      %9156 = vmatmul.mubr.bf16.gmra.mrb[0].mxu0 %v9025
      %v9157 = vpop.f32.mrb[0].mxu0
      %v9158 = vadd.f32 0.0, %v9157
      %v9159 = vpop.f32.mrb[0].mxu0
      %v9160 = vpop.f32.mrb[0].mxu0
      %v9161 = vadd.f32 0.0, %v9160
      %v9162 = vpop.f32.mrb[0].mxu0
      %9163 = vmatprep.mubr.bf16.mxu0 0
      %9164 = vmatmul.mubr.bf16.gmra.mrb[0].mxu0 %v9027
      %v9165 = vpop.f32.mrb[0].mxu0
      %v9166 = vadd.f32 0.0, %v9165
      %v9167 = vpop.f32.mrb[0].mxu0
      %v9168 = vpop.f32.mrb[0].mxu0
      %v9169 = vadd.f32 0.0, %v9168
      %v9170 = vpop.f32.mrb[0].mxu0
      %9171 = vmatprep.mubr.bf16.mxu0 0
      %9172 = vmatmul.mubr.bf16.gmra.mrb[0].mxu0 %v9029
      %v9173 = vpop.f32.mrb[0].mxu0
      %v9174 = vadd.f32 0.0, %v9173
      %v9175 = vpop.f32.mrb[0].mxu0
      %v9176 = vpop.f32.mrb[0].mxu0
      %v9177 = vadd.f32 0.0, %v9176
      %v9178 = vpop.f32.mrb[0].mxu0
      %9179 = vmatprep.mubr.bf16.mxu0 0
      %9180 = vmatmul.mubr.bf16.gmra.mrb[0].mxu0 %v9031
      %v9181 = vpop.f32.mrb[0].mxu0
      %v9182 = vadd.f32 0.0, %v9181
      %v9183 = vpop.f32.mrb[0].mxu0
      %v9184 = vpop.f32.mrb[0].mxu0
      %v9185 = vadd.f32 0.0, %v9184
      %v9186 = vpop.f32.mrb[0].mxu0
      %9187 = vmatprep.mubr.bf16.mxu0 0
      %9188 = vmatmul.mubr.bf16.gmra.mrb[0].mxu0 %v9033
      %v9189 = vpop.f32.mrb[0].mxu0
      %v9190 = vadd.f32 0.0, %v9189
      %v9191 = vpop.f32.mrb[0].mxu0
      %v9192 = vpop.f32.mrb[0].mxu0
      %v9193 = vadd.f32 0.0, %v9192
      %v9194 = vpop.f32.mrb[0].mxu0
      %9195 = vdwg.mxu0
      %v9208 = vunpack.c.l.b16 %v8430
      %v9209 = vunpack.c.l.b16 %v8431
      %v9210 = vunpack.c.l.b16 %v8432
      %v9211 = vunpack.c.l.b16 %v8433
      %v9212 = vunpack.c.l.b16 %v8434
      %v9213 = vunpack.c.l.b16 %v8435
      %v9214 = vunpack.c.l.b16 %v8436
      %v9215 = vunpack.c.l.b16 %v8437
      %v9216 = vunpack.c.l.b16 %v8438
      %v9217 = vunpack.c.l.b16 %v8439
      %v9218 = vunpack.c.l.b16 %v8440
      %v9219 = vunpack.c.l.b16 %v8441
      %v9220 = vpack.c.b16 %v9209, %v9208
      %v9221 = vpack.c.b16 %v9211, %v9210
      %v9222 = vpack.c.b16 %v9213, %v9212
      %v9223 = vpack.c.b16 %v9215, %v9214
      %v9224 = vpack.c.b16 %v9217, %v9216
      %v9225 = vpack.c.b16 %v9219, %v9218
      %v9232 = vsel %vm9002, %v8399, 0
      %v9234 = vsel %vm9002, %v8401, 0
      %v9236 = vsel %vm9002, %v8403, 0
      %v9238 = vsel %vm9002, %v8405, 0
      %v9240 = vsel %vm9002, %v8407, 0
      %v9242 = vsel %vm9002, %v8409, 0
      %v9244 = vsel %vm9002, %v8411, 0
      %v9246 = vsel %vm9002, %v8413, 0
      %v9248 = vsel %vm9002, %v8415, 0
      %v9250 = vsel %vm9002, %v8417, 0
      %v9252 = vsel %vm9002, %v8419, 0
      %v9254 = vsel %vm9002, %v8421, 0
      %v9256 = vsel %vm9002, %v8423, 0
      %v9258 = vsel %vm9002, %v8425, 0
      %v9260 = vsel %vm9002, %v8427, 0
      %v9262 = vsel %vm9002, %v8429, 0
      %9264 = vmatprep.subr.bf16.mxu0 0
      %9265 = vmatpush1.bf16.msra.mxu0 %v9220
      %9266 = vmatprep.subr.bf16.mxu0 0
      %9267 = vmatpush1.bf16.msra.mxu0 %v9221
      %9268 = vmatprep.subr.bf16.mxu0 0
      %9269 = vmatpush1.bf16.msra.mxu0 %v9222
      %9270 = vmatprep.subr.bf16.mxu0 0
      %9271 = vmatpush1.bf16.msra.mxu0 %v9223
      %9272 = vmatprep.subr.bf16.mxu0 0
      %9273 = vmatpush1.bf16.msra.mxu0 %v9224
      %9274 = vmatprep.subr.bf16.mxu0 0
      %9275 = vmatpush1.bf16.msra.mxu0 %v9225
      %9276 = vmatprep.subr.bf16.mxu0 0
      %9277 = vmatpush1.bf16.msra.mxu0 0
      %9278 = vmatprep.subr.bf16.mxu0 0
      %9279 = vmatpush1.bf16.msra.mxu0 0
      %9280 = vmatprep.subr.bf16.mxu0 0
      %9281 = vmatpush1.bf16.msra.mxu0 0
      %9282 = vmatprep.subr.bf16.mxu0 0
      %9283 = vmatpush1.bf16.msra.mxu0 0
      %9284 = vmatprep.subr.bf16.mxu0 0
      %9285 = vmatpush1.bf16.msra.mxu0 0
      %9286 = vmatprep.subr.bf16.mxu0 0
      %9287 = vmatpush1.bf16.msra.mxu0 0
      %9288 = vmatprep.subr.bf16.mxu0 0
      %9289 = vmatpush1.bf16.msra.mxu0 0
      %9290 = vmatprep.subr.bf16.mxu0 0
      %9291 = vmatpush1.bf16.msra.mxu0 0
      %9292 = vmatprep.subr.bf16.mxu0 0
      %9293 = vmatpush1.bf16.msra.mxu0 0
      %9294 = vmatprep.subr.bf16.mxu0 0
      %9295 = vmatpush1.bf16.msra.mxu0 0
      %9296 = vmatprep.mubr.bf16.mxu0 0
      %9297 = vmatmul.mubr.bf16.gmra.mrb[0].mxu0 %v9232
      %v9298 = vpop.f32.mrb[0].mxu0
      %v9299 = vadd.f32 %v9070, %v9298
      %v9300 = vpop.f32.mrb[0].mxu0
      %v9301 = vpop.f32.mrb[0].mxu0
      %v9302 = vadd.f32 %v9073, %v9301
      %v9303 = vpop.f32.mrb[0].mxu0
      %9304 = vmatprep.mubr.bf16.mxu0 0
      %9305 = vmatmul.mubr.bf16.gmra.mrb[0].mxu0 %v9234
      %v9306 = vpop.f32.mrb[0].mxu0
      %v9307 = vadd.f32 %v9078, %v9306
      %v9308 = vpop.f32.mrb[0].mxu0
      %v9309 = vpop.f32.mrb[0].mxu0
      %v9310 = vadd.f32 %v9081, %v9309
      %v9311 = vpop.f32.mrb[0].mxu0
      %9312 = vmatprep.mubr.bf16.mxu0 0
      %9313 = vmatmul.mubr.bf16.gmra.mrb[0].mxu0 %v9236
      %v9314 = vpop.f32.mrb[0].mxu0
      %v9315 = vadd.f32 %v9086, %v9314
      %v9316 = vpop.f32.mrb[0].mxu0
      %v9317 = vpop.f32.mrb[0].mxu0
      %v9318 = vadd.f32 %v9089, %v9317
      %v9319 = vpop.f32.mrb[0].mxu0
      %9320 = vmatprep.mubr.bf16.mxu0 0
      %9321 = vmatmul.mubr.bf16.gmra.mrb[0].mxu0 %v9238
      %v9322 = vpop.f32.mrb[0].mxu0
      %v9323 = vadd.f32 %v9094, %v9322
      %v9324 = vpop.f32.mrb[0].mxu0
      %v9325 = vpop.f32.mrb[0].mxu0
      %v9326 = vadd.f32 %v9097, %v9325
      %v9327 = vpop.f32.mrb[0].mxu0
      %9328 = vmatprep.mubr.bf16.mxu0 0
      %9329 = vmatmul.mubr.bf16.gmra.mrb[0].mxu0 %v9240
      %v9330 = vpop.f32.mrb[0].mxu0
      %v9331 = vadd.f32 %v9102, %v9330
      %v9332 = vpop.f32.mrb[0].mxu0
      %v9333 = vpop.f32.mrb[0].mxu0
      %v9334 = vadd.f32 %v9105, %v9333
      %v9335 = vpop.f32.mrb[0].mxu0
      %9336 = vmatprep.mubr.bf16.mxu0 0
      %9337 = vmatmul.mubr.bf16.gmra.mrb[0].mxu0 %v9242
      %v9338 = vpop.f32.mrb[0].mxu0
      %v9339 = vadd.f32 %v9110, %v9338
      %v9340 = vpop.f32.mrb[0].mxu0
      %v9341 = vpop.f32.mrb[0].mxu0
      %v9342 = vadd.f32 %v9113, %v9341
      %v9343 = vpop.f32.mrb[0].mxu0
      %9344 = vmatprep.mubr.bf16.mxu0 0
      %9345 = vmatmul.mubr.bf16.gmra.mrb[0].mxu0 %v9244
      %v9346 = vpop.f32.mrb[0].mxu0
      %v9347 = vadd.f32 %v9118, %v9346
      %v9348 = vpop.f32.mrb[0].mxu0
      %v9349 = vpop.f32.mrb[0].mxu0
      %v9350 = vadd.f32 %v9121, %v9349
      %v9351 = vpop.f32.mrb[0].mxu0
      %9352 = vmatprep.mubr.bf16.mxu0 0
      %9353 = vmatmul.mubr.bf16.gmra.mrb[0].mxu0 %v9246
      %v9354 = vpop.f32.mrb[0].mxu0
      %v9355 = vadd.f32 %v9126, %v9354
      %v9356 = vpop.f32.mrb[0].mxu0
      %v9357 = vpop.f32.mrb[0].mxu0
      %v9358 = vadd.f32 %v9129, %v9357
      %v9359 = vpop.f32.mrb[0].mxu0
      %9360 = vmatprep.mubr.bf16.mxu0 0
      %9361 = vmatmul.mubr.bf16.gmra.mrb[0].mxu0 %v9248
      %v9362 = vpop.f32.mrb[0].mxu0
      %v9363 = vadd.f32 %v9134, %v9362
      %v9364 = vpop.f32.mrb[0].mxu0
      %v9365 = vpop.f32.mrb[0].mxu0
      %v9366 = vadd.f32 %v9137, %v9365
      %v9367 = vpop.f32.mrb[0].mxu0
      %9368 = vmatprep.mubr.bf16.mxu0 0
      %9369 = vmatmul.mubr.bf16.gmra.mrb[0].mxu0 %v9250
      %v9370 = vpop.f32.mrb[0].mxu0
      %v9371 = vadd.f32 %v9142, %v9370
      %v9372 = vpop.f32.mrb[0].mxu0
      %v9373 = vpop.f32.mrb[0].mxu0
      %v9374 = vadd.f32 %v9145, %v9373
      %v9375 = vpop.f32.mrb[0].mxu0
      %9376 = vmatprep.mubr.bf16.mxu0 0
      %9377 = vmatmul.mubr.bf16.gmra.mrb[0].mxu0 %v9252
      %v9378 = vpop.f32.mrb[0].mxu0
      %v9379 = vadd.f32 %v9150, %v9378
      %v9380 = vpop.f32.mrb[0].mxu0
      %v9381 = vpop.f32.mrb[0].mxu0
      %v9382 = vadd.f32 %v9153, %v9381
      %v9383 = vpop.f32.mrb[0].mxu0
      %9384 = vmatprep.mubr.bf16.mxu0 0
      %9385 = vmatmul.mubr.bf16.gmra.mrb[0].mxu0 %v9254
      %v9386 = vpop.f32.mrb[0].mxu0
      %v9387 = vadd.f32 %v9158, %v9386
      %v9388 = vpop.f32.mrb[0].mxu0
      %v9389 = vpop.f32.mrb[0].mxu0
      %v9390 = vadd.f32 %v9161, %v9389
      %v9391 = vpop.f32.mrb[0].mxu0
      %9392 = vmatprep.mubr.bf16.mxu0 0
      %9393 = vmatmul.mubr.bf16.gmra.mrb[0].mxu0 %v9256
      %v9394 = vpop.f32.mrb[0].mxu0
      %v9395 = vadd.f32 %v9166, %v9394
      %v9396 = vpop.f32.mrb[0].mxu0
      %v9397 = vpop.f32.mrb[0].mxu0
      %v9398 = vadd.f32 %v9169, %v9397
      %v9399 = vpop.f32.mrb[0].mxu0
      %9400 = vmatprep.mubr.bf16.mxu0 0
      %9401 = vmatmul.mubr.bf16.gmra.mrb[0].mxu0 %v9258
      %v9402 = vpop.f32.mrb[0].mxu0
      %v9403 = vadd.f32 %v9174, %v9402
      %v9404 = vpop.f32.mrb[0].mxu0
      %v9405 = vpop.f32.mrb[0].mxu0
      %v9406 = vadd.f32 %v9177, %v9405
      %v9407 = vpop.f32.mrb[0].mxu0
      %9408 = vmatprep.mubr.bf16.mxu0 0
      %9409 = vmatmul.mubr.bf16.gmra.mrb[0].mxu0 %v9260
      %v9410 = vpop.f32.mrb[0].mxu0
      %v9411 = vadd.f32 %v9182, %v9410
      %v9412 = vpop.f32.mrb[0].mxu0
      %v9413 = vpop.f32.mrb[0].mxu0
      %v9414 = vadd.f32 %v9185, %v9413
      %v9415 = vpop.f32.mrb[0].mxu0
      %9416 = vmatprep.mubr.bf16.mxu0 0
      %9417 = vmatmul.mubr.bf16.gmra.mrb[0].mxu0 %v9262
      %v9418 = vpop.f32.mrb[0].mxu0
      %v9419 = vadd.f32 %v9190, %v9418
      %v9420 = vpop.f32.mrb[0].mxu0
      %v9421 = vpop.f32.mrb[0].mxu0
      %v9422 = vadd.f32 %v9193, %v9421
      %v9423 = vpop.f32.mrb[0].mxu0
      %9424 = vdwg.mxu0
      %s9425 = scalar_lea.vmem [#allocation4], 48
      %v9426 = vld [vmem:[%s9425] sm:$0x80]
      %v9427 = vld [vmem:[%s9425 + $0x8] sm:$0xff]
      %v9428 = vld [vmem:[%s9425 + $0x18] sm:$0x80]
      %v9429 = vld [vmem:[%s9425 + $0x20] sm:$0xff]
      %v9430 = vld [vmem:[%s9425 + $0x30] sm:$0x80]
      %v9431 = vld [vmem:[%s9425 + $0x38] sm:$0xff]
      %v9432 = vld [vmem:[%s9425 + $0x48] sm:$0x80]
      %v9433 = vld [vmem:[%s9425 + $0x50] sm:$0xff]
      %v9434 = vld [vmem:[%s9425 + $0x60] sm:$0x80]
      %v9435 = vld [vmem:[%s9425 + $0x68] sm:$0xff]
      %v9436 = vld [vmem:[%s9425 + $0x78] sm:$0x80]
      %v9437 = vld [vmem:[%s9425 + $0x80] sm:$0xff]
      %v9438 = vld [vmem:[%s9425 + $0x90] sm:$0x80]
      %v9439 = vld [vmem:[%s9425 + $0x98] sm:$0xff]
      %v9440 = vld [vmem:[%s9425 + $0xa8] sm:$0x80]
      %v9441 = vld [vmem:[%s9425 + $0xb0] sm:$0xff]
      %v9442 = vld [vmem:[%s9425 + $0xc0] sm:$0x80]
      %v9443 = vld [vmem:[%s9425 + $0xc8] sm:$0xff]
      %v9444 = vld [vmem:[%s9425 + $0xd8] sm:$0x80]
      %v9445 = vld [vmem:[%s9425 + $0xe0] sm:$0xff]
      %v9446 = vld [vmem:[%s9425 + $0xf0] sm:$0x80]
      %v9447 = vld [vmem:[%s9425 + $0xf8] sm:$0xff]
      %v9448 = vld [vmem:[%s9425 + $0x108] sm:$0x80]
      %v9449 = vld [vmem:[%s9425 + $0x110] sm:$0xff]
      %v9450 = vld [vmem:[%s9425 + $0x120] sm:$0x80]
      %v9451 = vld [vmem:[%s9425 + $0x128] sm:$0xff]
      %v9452 = vld [vmem:[%s9425 + $0x138] sm:$0x80]
      %v9453 = vld [vmem:[%s9425 + $0x140] sm:$0xff]
      %v9454 = vld [vmem:[%s9425 + $0x150] sm:$0x80]
      %v9455 = vld [vmem:[%s9425 + $0x158] sm:$0xff]
      %v9456 = vld [vmem:[%s9425 + $0x168] sm:$0x80]
      %v9457 = vld [vmem:[%s9425 + $0x170] sm:$0xff]
      %v9459 = vshrl.u32 %v9426, 16
      %v9461 = vrot.slane %v9459, 7
      %v9463 = vshrl.u32 %v9427, 16
      %v9465 = vrot.slane %v9463, 7
      %v9466 = vshll.u32 %v9427, 16
      %v9468 = vor.u32 %v9465, %v9466
      %v9469 = vsel %vm1091, %v9461, %v9468
      %v9471 = vshrl.u32 %v9428, 16
      %v9473 = vrot.slane %v9471, 7
      %v9475 = vshrl.u32 %v9429, 16
      %v9477 = vrot.slane %v9475, 7
      %v9478 = vshll.u32 %v9429, 16
      %v9480 = vor.u32 %v9477, %v9478
      %v9481 = vsel %vm1091, %v9473, %v9480
      %v9483 = vshrl.u32 %v9430, 16
      %v9485 = vrot.slane %v9483, 7
      %v9487 = vshrl.u32 %v9431, 16
      %v9489 = vrot.slane %v9487, 7
      %v9490 = vshll.u32 %v9431, 16
      %v9492 = vor.u32 %v9489, %v9490
      %v9493 = vsel %vm1091, %v9485, %v9492
      %v9495 = vshrl.u32 %v9432, 16
      %v9497 = vrot.slane %v9495, 7
      %v9499 = vshrl.u32 %v9433, 16
      %v9501 = vrot.slane %v9499, 7
      %v9502 = vshll.u32 %v9433, 16
      %v9504 = vor.u32 %v9501, %v9502
      %v9505 = vsel %vm1091, %v9497, %v9504
      %v9507 = vshrl.u32 %v9434, 16
      %v9509 = vrot.slane %v9507, 7
      %v9511 = vshrl.u32 %v9435, 16
      %v9513 = vrot.slane %v9511, 7
      %v9514 = vshll.u32 %v9435, 16
      %v9516 = vor.u32 %v9513, %v9514
      %v9517 = vsel %vm1091, %v9509, %v9516
      %v9519 = vshrl.u32 %v9436, 16
      %v9521 = vrot.slane %v9519, 7
      %v9523 = vshrl.u32 %v9437, 16
      %v9525 = vrot.slane %v9523, 7
      %v9526 = vshll.u32 %v9437, 16
      %v9528 = vor.u32 %v9525, %v9526
      %v9529 = vsel %vm1091, %v9521, %v9528
      %v9531 = vshrl.u32 %v9438, 16
      %v9533 = vrot.slane %v9531, 7
      %v9535 = vshrl.u32 %v9439, 16
      %v9537 = vrot.slane %v9535, 7
      %v9538 = vshll.u32 %v9439, 16
      %v9540 = vor.u32 %v9537, %v9538
      %v9541 = vsel %vm1091, %v9533, %v9540
      %v9543 = vshrl.u32 %v9440, 16
      %v9545 = vrot.slane %v9543, 7
      %v9547 = vshrl.u32 %v9441, 16
      %v9549 = vrot.slane %v9547, 7
      %v9550 = vshll.u32 %v9441, 16
      %v9552 = vor.u32 %v9549, %v9550
      %v9553 = vsel %vm1091, %v9545, %v9552
      %v9555 = vshrl.u32 %v9442, 16
      %v9557 = vrot.slane %v9555, 7
      %v9559 = vshrl.u32 %v9443, 16
      %v9561 = vrot.slane %v9559, 7
      %v9562 = vshll.u32 %v9443, 16
      %v9564 = vor.u32 %v9561, %v9562
      %v9565 = vsel %vm1091, %v9557, %v9564
      %v9567 = vshrl.u32 %v9444, 16
      %v9569 = vrot.slane %v9567, 7
      %v9571 = vshrl.u32 %v9445, 16
      %v9573 = vrot.slane %v9571, 7
      %v9574 = vshll.u32 %v9445, 16
      %v9576 = vor.u32 %v9573, %v9574
      %v9577 = vsel %vm1091, %v9569, %v9576
      %v9579 = vshrl.u32 %v9446, 16
      %v9581 = vrot.slane %v9579, 7
      %v9583 = vshrl.u32 %v9447, 16
      %v9585 = vrot.slane %v9583, 7
      %v9586 = vshll.u32 %v9447, 16
      %v9588 = vor.u32 %v9585, %v9586
      %v9589 = vsel %vm1091, %v9581, %v9588
      %v9591 = vshrl.u32 %v9448, 16
      %v9593 = vrot.slane %v9591, 7
      %v9595 = vshrl.u32 %v9449, 16
      %v9597 = vrot.slane %v9595, 7
      %v9598 = vshll.u32 %v9449, 16
      %v9600 = vor.u32 %v9597, %v9598
      %v9601 = vsel %vm1091, %v9593, %v9600
      %v9603 = vshrl.u32 %v9450, 16
      %v9605 = vrot.slane %v9603, 7
      %v9607 = vshrl.u32 %v9451, 16
      %v9609 = vrot.slane %v9607, 7
      %v9610 = vshll.u32 %v9451, 16
      %v9612 = vor.u32 %v9609, %v9610
      %v9613 = vsel %vm1091, %v9605, %v9612
      %v9615 = vshrl.u32 %v9452, 16
      %v9617 = vrot.slane %v9615, 7
      %v9619 = vshrl.u32 %v9453, 16
      %v9621 = vrot.slane %v9619, 7
      %v9622 = vshll.u32 %v9453, 16
      %v9624 = vor.u32 %v9621, %v9622
      %v9625 = vsel %vm1091, %v9617, %v9624
      %v9627 = vshrl.u32 %v9454, 16
      %v9629 = vrot.slane %v9627, 7
      %v9631 = vshrl.u32 %v9455, 16
      %v9633 = vrot.slane %v9631, 7
      %v9634 = vshll.u32 %v9455, 16
      %v9636 = vor.u32 %v9633, %v9634
      %v9637 = vsel %vm1091, %v9629, %v9636
      %v9639 = vshrl.u32 %v9456, 16
      %v9641 = vrot.slane %v9639, 7
      %v9643 = vshrl.u32 %v9457, 16
      %v9645 = vrot.slane %v9643, 7
      %v9646 = vshll.u32 %v9457, 16
      %v9648 = vor.u32 %v9645, %v9646
      %v9649 = vsel %vm1091, %v9641, %v9648
      %v9650 = vld [vmem:[%s9425 + $0x10] sm:$0x1]
      %v9651 = vld [vmem:[%s9425 + $0x28] sm:$0x1]
      %v9652 = vld [vmem:[%s9425 + $0x40] sm:$0x1]
      %v9653 = vld [vmem:[%s9425 + $0x58] sm:$0x1]
      %v9654 = vld [vmem:[%s9425 + $0x70] sm:$0x1]
      %v9655 = vld [vmem:[%s9425 + $0x88] sm:$0x1]
      %v9656 = vld [vmem:[%s9425 + $0xa0] sm:$0x1]
      %v9657 = vld [vmem:[%s9425 + $0xb8] sm:$0x1]
      %v9658 = vld [vmem:[%s9425 + $0xd0] sm:$0x1]
      %v9659 = vld [vmem:[%s9425 + $0xe8] sm:$0x1]
      %v9660 = vld [vmem:[%s9425 + $0x100] sm:$0x1]
      %v9661 = vld [vmem:[%s9425 + $0x118] sm:$0x1]
      %v9662 = vld [vmem:[%s9425 + $0x130] sm:$0x1]
      %v9663 = vld [vmem:[%s9425 + $0x148] sm:$0x1]
      %v9664 = vld [vmem:[%s9425 + $0x160] sm:$0x1]
      %v9665 = vld [vmem:[%s9425 + $0x178] sm:$0x1]
      %v9666 = vrot.slane %v9466, 1
      %v9667 = vor.u32 %v9463, %v9666
      %v9669 = vshll.u32 %v9650, 16
      %v9671 = vrot.slane %v9669, 1
      %v9672 = vsel %vm1764, %v9667, %v9671
      %v9673 = vrot.slane %v9478, 1
      %v9674 = vor.u32 %v9475, %v9673
      %v9676 = vshll.u32 %v9651, 16
      %v9678 = vrot.slane %v9676, 1
      %v9679 = vsel %vm1764, %v9674, %v9678
      %v9680 = vrot.slane %v9490, 1
      %v9681 = vor.u32 %v9487, %v9680
      %v9683 = vshll.u32 %v9652, 16
      %v9685 = vrot.slane %v9683, 1
      %v9686 = vsel %vm1764, %v9681, %v9685
      %v9687 = vrot.slane %v9502, 1
      %v9688 = vor.u32 %v9499, %v9687
      %v9690 = vshll.u32 %v9653, 16
      %v9692 = vrot.slane %v9690, 1
      %v9693 = vsel %vm1764, %v9688, %v9692
      %v9694 = vrot.slane %v9514, 1
      %v9695 = vor.u32 %v9511, %v9694
      %v9697 = vshll.u32 %v9654, 16
      %v9699 = vrot.slane %v9697, 1
      %v9700 = vsel %vm1764, %v9695, %v9699
      %v9701 = vrot.slane %v9526, 1
      %v9702 = vor.u32 %v9523, %v9701
      %v9704 = vshll.u32 %v9655, 16
      %v9706 = vrot.slane %v9704, 1
      %v9707 = vsel %vm1764, %v9702, %v9706
      %v9708 = vrot.slane %v9538, 1
      %v9709 = vor.u32 %v9535, %v9708
      %v9711 = vshll.u32 %v9656, 16
      %v9713 = vrot.slane %v9711, 1
      %v9714 = vsel %vm1764, %v9709, %v9713
      %v9715 = vrot.slane %v9550, 1
      %v9716 = vor.u32 %v9547, %v9715
      %v9718 = vshll.u32 %v9657, 16
      %v9720 = vrot.slane %v9718, 1
      %v9721 = vsel %vm1764, %v9716, %v9720
      %v9722 = vrot.slane %v9562, 1
      %v9723 = vor.u32 %v9559, %v9722
      %v9725 = vshll.u32 %v9658, 16
      %v9727 = vrot.slane %v9725, 1
      %v9728 = vsel %vm1764, %v9723, %v9727
      %v9729 = vrot.slane %v9574, 1
      %v9730 = vor.u32 %v9571, %v9729
      %v9732 = vshll.u32 %v9659, 16
      %v9734 = vrot.slane %v9732, 1
      %v9735 = vsel %vm1764, %v9730, %v9734
      %v9736 = vrot.slane %v9586, 1
      %v9737 = vor.u32 %v9583, %v9736
      %v9739 = vshll.u32 %v9660, 16
      %v9741 = vrot.slane %v9739, 1
      %v9742 = vsel %vm1764, %v9737, %v9741
      %v9743 = vrot.slane %v9598, 1
      %v9744 = vor.u32 %v9595, %v9743
      %v9746 = vshll.u32 %v9661, 16
      %v9748 = vrot.slane %v9746, 1
      %v9749 = vsel %vm1764, %v9744, %v9748
      %v9750 = vrot.slane %v9610, 1
      %v9751 = vor.u32 %v9607, %v9750
      %v9753 = vshll.u32 %v9662, 16
      %v9755 = vrot.slane %v9753, 1
      %v9756 = vsel %vm1764, %v9751, %v9755
      %v9757 = vrot.slane %v9622, 1
      %v9758 = vor.u32 %v9619, %v9757
      %v9760 = vshll.u32 %v9663, 16
      %v9762 = vrot.slane %v9760, 1
      %v9763 = vsel %vm1764, %v9758, %v9762
      %v9764 = vrot.slane %v9634, 1
      %v9765 = vor.u32 %v9631, %v9764
      %v9767 = vshll.u32 %v9664, 16
      %v9769 = vrot.slane %v9767, 1
      %v9770 = vsel %vm1764, %v9765, %v9769
      %v9771 = vrot.slane %v9646, 1
      %v9772 = vor.u32 %v9643, %v9771
      %v9774 = vshll.u32 %v9665, 16
      %v9776 = vrot.slane %v9774, 1
      %v9777 = vsel %vm1764, %v9772, %v9776
      %9794 = vrot.lane.b32.xlu0 %v9427, 32
      %v9795 = vpop.permute.xlu0 %9794
      %9796 = vrot.lane.b32.xlu0 %v9429, 32
      %v9797 = vpop.permute.xlu0 %9796
      %9798 = vrot.lane.b32.xlu0 %v9431, 32
      %v9799 = vpop.permute.xlu0 %9798
      %9800 = vrot.lane.b32.xlu0 %v9433, 32
      %v9801 = vpop.permute.xlu0 %9800
      %9802 = vrot.lane.b32.xlu0 %v9435, 32
      %v9803 = vpop.permute.xlu0 %9802
      %9804 = vrot.lane.b32.xlu0 %v9437, 32
      %v9805 = vpop.permute.xlu0 %9804
      %9806 = vrot.lane.b32.xlu0 %v9439, 32
      %v9807 = vpop.permute.xlu0 %9806
      %9808 = vrot.lane.b32.xlu0 %v9441, 32
      %v9809 = vpop.permute.xlu0 %9808
      %9810 = vrot.lane.b32.xlu0 %v9443, 32
      %v9811 = vpop.permute.xlu0 %9810
      %9812 = vrot.lane.b32.xlu0 %v9445, 32
      %v9813 = vpop.permute.xlu0 %9812
      %9814 = vrot.lane.b32.xlu0 %v9447, 32
      %v9815 = vpop.permute.xlu0 %9814
      %9816 = vrot.lane.b32.xlu0 %v9449, 32
      %v9817 = vpop.permute.xlu0 %9816
      %9818 = vrot.lane.b32.xlu0 %v9451, 32
      %v9819 = vpop.permute.xlu0 %9818
      %9820 = vrot.lane.b32.xlu0 %v9453, 32
      %v9821 = vpop.permute.xlu0 %9820
      %9822 = vrot.lane.b32.xlu0 %v9455, 32
      %v9823 = vpop.permute.xlu0 %9822
      %9824 = vrot.lane.b32.xlu0 %v9457, 32
      %v9825 = vpop.permute.xlu0 %9824
      %9826 = vrot.lane.b32.xlu0 %v9672, 64
      %v9827 = vpop.permute.xlu0 %9826
      %9828 = vrot.lane.b32.xlu0 %v9679, 64
      %v9829 = vpop.permute.xlu0 %9828
      %9830 = vrot.lane.b32.xlu0 %v9686, 64
      %v9831 = vpop.permute.xlu0 %9830
      %9832 = vrot.lane.b32.xlu0 %v9693, 64
      %v9833 = vpop.permute.xlu0 %9832
      %9834 = vrot.lane.b32.xlu0 %v9700, 64
      %v9835 = vpop.permute.xlu0 %9834
      %9836 = vrot.lane.b32.xlu0 %v9707, 64
      %v9837 = vpop.permute.xlu0 %9836
      %9838 = vrot.lane.b32.xlu0 %v9714, 64
      %v9839 = vpop.permute.xlu0 %9838
      %9840 = vrot.lane.b32.xlu0 %v9721, 64
      %v9841 = vpop.permute.xlu0 %9840
      %9842 = vrot.lane.b32.xlu0 %v9728, 64
      %v9843 = vpop.permute.xlu0 %9842
      %9844 = vrot.lane.b32.xlu0 %v9735, 64
      %v9845 = vpop.permute.xlu0 %9844
      %9846 = vrot.lane.b32.xlu0 %v9742, 64
      %v9847 = vpop.permute.xlu0 %9846
      %9848 = vrot.lane.b32.xlu0 %v9749, 64
      %v9849 = vpop.permute.xlu0 %9848
      %9850 = vrot.lane.b32.xlu0 %v9756, 64
      %v9851 = vpop.permute.xlu0 %9850
      %9852 = vrot.lane.b32.xlu0 %v9763, 64
      %v9853 = vpop.permute.xlu0 %9852
      %9854 = vrot.lane.b32.xlu0 %v9770, 64
      %v9855 = vpop.permute.xlu0 %9854
      %9856 = vrot.lane.b32.xlu0 %v9777, 64
      %v9857 = vpop.permute.xlu0 %9856
      %v9860 = vsel %vm363, %v9469, %v9795
      %v9863 = vsel %vm363, %v9481, %v9797
      %v9866 = vsel %vm363, %v9493, %v9799
      %v9869 = vsel %vm363, %v9505, %v9801
      %v9872 = vsel %vm363, %v9517, %v9803
      %v9875 = vsel %vm363, %v9529, %v9805
      %v9878 = vsel %vm363, %v9541, %v9807
      %v9881 = vsel %vm363, %v9553, %v9809
      %v9884 = vsel %vm363, %v9565, %v9811
      %v9887 = vsel %vm363, %v9577, %v9813
      %v9890 = vsel %vm363, %v9589, %v9815
      %v9893 = vsel %vm363, %v9601, %v9817
      %v9896 = vsel %vm363, %v9613, %v9819
      %v9899 = vsel %vm363, %v9625, %v9821
      %v9902 = vsel %vm363, %v9637, %v9823
      %v9905 = vsel %vm363, %v9649, %v9825
      %v9907 = vsel %vm8397, %v9860, %v9827
      %v9909 = vsel %vm8397, %v9863, %v9829
      %v9911 = vsel %vm8397, %v9866, %v9831
      %v9913 = vsel %vm8397, %v9869, %v9833
      %v9915 = vsel %vm8397, %v9872, %v9835
      %v9917 = vsel %vm8397, %v9875, %v9837
      %v9919 = vsel %vm8397, %v9878, %v9839
      %v9921 = vsel %vm8397, %v9881, %v9841
      %v9923 = vsel %vm8397, %v9884, %v9843
      %v9925 = vsel %vm8397, %v9887, %v9845
      %v9927 = vsel %vm8397, %v9890, %v9847
      %v9929 = vsel %vm8397, %v9893, %v9849
      %v9931 = vsel %vm8397, %v9896, %v9851
      %v9933 = vsel %vm8397, %v9899, %v9853
      %v9935 = vsel %vm8397, %v9902, %v9855
      %v9937 = vsel %vm8397, %v9905, %v9857
      %v9938 = vld [vmem:[%s3 + $0x60] sm:$0xf]
      %v9939 = vld [vmem:[%s3 + $0x64] sm:$0xf]
      %v9940 = vld [vmem:[%s3 + $0x68] sm:$0xf]
      %v9941 = vld [vmem:[%s3 + $0x6c] sm:$0xf]
      %v9942 = vld [vmem:[%s3 + $0x70] sm:$0xf]
      %v9943 = vld [vmem:[%s3 + $0x74] sm:$0xf]
      %v9944 = vld [vmem:[%s3 + $0x78] sm:$0xf]
      %v9945 = vld [vmem:[%s3 + $0x7c] sm:$0xf]
      %v9946 = vld [vmem:[%s3 + $0x80] sm:$0xf]
      %v9947 = vld [vmem:[%s3 + $0x84] sm:$0xf]
      %v9948 = vld [vmem:[%s3 + $0x88] sm:$0xf]
      %v9949 = vld [vmem:[%s3 + $0x8c] sm:$0xf]
      %v9962 = vunpack.c.l.b16 %v9938
      %v9963 = vunpack.c.l.b16 %v9939
      %v9964 = vunpack.c.l.b16 %v9940
      %v9965 = vunpack.c.l.b16 %v9941
      %v9966 = vunpack.c.l.b16 %v9942
      %v9967 = vunpack.c.l.b16 %v9943
      %v9968 = vunpack.c.l.b16 %v9944
      %v9969 = vunpack.c.l.b16 %v9945
      %v9970 = vunpack.c.l.b16 %v9946
      %v9971 = vunpack.c.l.b16 %v9947
      %v9972 = vunpack.c.l.b16 %v9948
      %v9973 = vunpack.c.l.b16 %v9949
      %v9974 = vpack.c.b16 %v9963, %v9962
      %v9975 = vpack.c.b16 %v9965, %v9964
      %v9976 = vpack.c.b16 %v9967, %v9966
      %v9977 = vpack.c.b16 %v9969, %v9968
      %v9978 = vpack.c.b16 %v9971, %v9970
      %v9979 = vpack.c.b16 %v9973, %v9972
      %v9986 = vsel %vm9002, %v9907, 0
      %v9988 = vsel %vm9002, %v9909, 0
      %v9990 = vsel %vm9002, %v9911, 0
      %v9992 = vsel %vm9002, %v9913, 0
      %v9994 = vsel %vm9002, %v9915, 0
      %v9996 = vsel %vm9002, %v9917, 0
      %v9998 = vsel %vm9002, %v9919, 0
      %v10000 = vsel %vm9002, %v9921, 0
      %v10002 = vsel %vm9002, %v9923, 0
      %v10004 = vsel %vm9002, %v9925, 0
      %v10006 = vsel %vm9002, %v9927, 0
      %v10008 = vsel %vm9002, %v9929, 0
      %v10010 = vsel %vm9002, %v9931, 0
      %v10012 = vsel %vm9002, %v9933, 0
      %v10014 = vsel %vm9002, %v9935, 0
      %v10016 = vsel %vm9002, %v9937, 0
      %10018 = vmatprep.subr.bf16.mxu0 0
      %10019 = vmatpush1.bf16.msra.mxu0 %v9974
      %10020 = vmatprep.subr.bf16.mxu0 0
      %10021 = vmatpush1.bf16.msra.mxu0 %v9975
      %10022 = vmatprep.subr.bf16.mxu0 0
      %10023 = vmatpush1.bf16.msra.mxu0 %v9976
      %10024 = vmatprep.subr.bf16.mxu0 0
      %10025 = vmatpush1.bf16.msra.mxu0 %v9977
      %10026 = vmatprep.subr.bf16.mxu0 0
      %10027 = vmatpush1.bf16.msra.mxu0 %v9978
      %10028 = vmatprep.subr.bf16.mxu0 0
      %10029 = vmatpush1.bf16.msra.mxu0 %v9979
      %10030 = vmatprep.subr.bf16.mxu0 0
      %10031 = vmatpush1.bf16.msra.mxu0 0
      %10032 = vmatprep.subr.bf16.mxu0 0
      %10033 = vmatpush1.bf16.msra.mxu0 0
      %10034 = vmatprep.subr.bf16.mxu0 0
      %10035 = vmatpush1.bf16.msra.mxu0 0
      %10036 = vmatprep.subr.bf16.mxu0 0
      %10037 = vmatpush1.bf16.msra.mxu0 0
      %10038 = vmatprep.subr.bf16.mxu0 0
      %10039 = vmatpush1.bf16.msra.mxu0 0
      %10040 = vmatprep.subr.bf16.mxu0 0
      %10041 = vmatpush1.bf16.msra.mxu0 0
      %10042 = vmatprep.subr.bf16.mxu0 0
      %10043 = vmatpush1.bf16.msra.mxu0 0
      %10044 = vmatprep.subr.bf16.mxu0 0
      %10045 = vmatpush1.bf16.msra.mxu0 0
      %10046 = vmatprep.subr.bf16.mxu0 0
      %10047 = vmatpush1.bf16.msra.mxu0 0
      %10048 = vmatprep.subr.bf16.mxu0 0
      %10049 = vmatpush1.bf16.msra.mxu0 0
      %10050 = vmatprep.mubr.bf16.mxu0 0
      %10051 = vmatmul.mubr.bf16.gmra.mrb[0].mxu0 %v9986
      %v10052 = vpop.f32.mrb[0].mxu0
      %v10053 = vadd.f32 0.0, %v10052
      %v10054 = vpop.f32.mrb[0].mxu0
      %v10055 = vpop.f32.mrb[0].mxu0
      %v10056 = vadd.f32 0.0, %v10055
      %v10057 = vpop.f32.mrb[0].mxu0
      %10058 = vmatprep.mubr.bf16.mxu0 0
      %10059 = vmatmul.mubr.bf16.gmra.mrb[0].mxu0 %v9988
      %v10060 = vpop.f32.mrb[0].mxu0
      %v10061 = vadd.f32 0.0, %v10060
      %v10062 = vpop.f32.mrb[0].mxu0
      %v10063 = vpop.f32.mrb[0].mxu0
      %v10064 = vadd.f32 0.0, %v10063
      %v10065 = vpop.f32.mrb[0].mxu0
      %10066 = vmatprep.mubr.bf16.mxu0 0
      %10067 = vmatmul.mubr.bf16.gmra.mrb[0].mxu0 %v9990
      %v10068 = vpop.f32.mrb[0].mxu0
      %v10069 = vadd.f32 0.0, %v10068
      %v10070 = vpop.f32.mrb[0].mxu0
      %v10071 = vpop.f32.mrb[0].mxu0
      %v10072 = vadd.f32 0.0, %v10071
      %v10073 = vpop.f32.mrb[0].mxu0
      %10074 = vmatprep.mubr.bf16.mxu0 0
      %10075 = vmatmul.mubr.bf16.gmra.mrb[0].mxu0 %v9992
      %v10076 = vpop.f32.mrb[0].mxu0
      %v10077 = vadd.f32 0.0, %v10076
      %v10078 = vpop.f32.mrb[0].mxu0
      %v10079 = vpop.f32.mrb[0].mxu0
      %v10080 = vadd.f32 0.0, %v10079
      %v10081 = vpop.f32.mrb[0].mxu0
      %10082 = vmatprep.mubr.bf16.mxu0 0
      %10083 = vmatmul.mubr.bf16.gmra.mrb[0].mxu0 %v9994
      %v10084 = vpop.f32.mrb[0].mxu0
      %v10085 = vadd.f32 0.0, %v10084
      %v10086 = vpop.f32.mrb[0].mxu0
      %v10087 = vpop.f32.mrb[0].mxu0
      %v10088 = vadd.f32 0.0, %v10087
      %v10089 = vpop.f32.mrb[0].mxu0
      %10090 = vmatprep.mubr.bf16.mxu0 0
      %10091 = vmatmul.mubr.bf16.gmra.mrb[0].mxu0 %v9996
      %v10092 = vpop.f32.mrb[0].mxu0
      %v10093 = vadd.f32 0.0, %v10092
      %v10094 = vpop.f32.mrb[0].mxu0
      %v10095 = vpop.f32.mrb[0].mxu0
      %v10096 = vadd.f32 0.0, %v10095
      %v10097 = vpop.f32.mrb[0].mxu0
      %10098 = vmatprep.mubr.bf16.mxu0 0
      %10099 = vmatmul.mubr.bf16.gmra.mrb[0].mxu0 %v9998
      %v10100 = vpop.f32.mrb[0].mxu0
      %v10101 = vadd.f32 0.0, %v10100
      %v10102 = vpop.f32.mrb[0].mxu0
      %v10103 = vpop.f32.mrb[0].mxu0
      %v10104 = vadd.f32 0.0, %v10103
      %v10105 = vpop.f32.mrb[0].mxu0
      %10106 = vmatprep.mubr.bf16.mxu0 0
      %10107 = vmatmul.mubr.bf16.gmra.mrb[0].mxu0 %v10000
      %v10108 = vpop.f32.mrb[0].mxu0
      %v10109 = vadd.f32 0.0, %v10108
      %v10110 = vpop.f32.mrb[0].mxu0
      %v10111 = vpop.f32.mrb[0].mxu0
      %v10112 = vadd.f32 0.0, %v10111
      %v10113 = vpop.f32.mrb[0].mxu0
      %10114 = vmatprep.mubr.bf16.mxu0 0
      %10115 = vmatmul.mubr.bf16.gmra.mrb[0].mxu0 %v10002
      %v10116 = vpop.f32.mrb[0].mxu0
      %v10117 = vadd.f32 0.0, %v10116
      %v10118 = vpop.f32.mrb[0].mxu0
      %v10119 = vpop.f32.mrb[0].mxu0
      %v10120 = vadd.f32 0.0, %v10119
      %v10121 = vpop.f32.mrb[0].mxu0
      %10122 = vmatprep.mubr.bf16.mxu0 0
      %10123 = vmatmul.mubr.bf16.gmra.mrb[0].mxu0 %v10004
      %v10124 = vpop.f32.mrb[0].mxu0
      %v10125 = vadd.f32 0.0, %v10124
      %v10126 = vpop.f32.mrb[0].mxu0
      %v10127 = vpop.f32.mrb[0].mxu0
      %v10128 = vadd.f32 0.0, %v10127
      %v10129 = vpop.f32.mrb[0].mxu0
      %10130 = vmatprep.mubr.bf16.mxu0 0
      %10131 = vmatmul.mubr.bf16.gmra.mrb[0].mxu0 %v10006
      %v10132 = vpop.f32.mrb[0].mxu0
      %v10133 = vadd.f32 0.0, %v10132
      %v10134 = vpop.f32.mrb[0].mxu0
      %v10135 = vpop.f32.mrb[0].mxu0
      %v10136 = vadd.f32 0.0, %v10135
      %v10137 = vpop.f32.mrb[0].mxu0
      %10138 = vmatprep.mubr.bf16.mxu0 0
      %10139 = vmatmul.mubr.bf16.gmra.mrb[0].mxu0 %v10008
      %v10140 = vpop.f32.mrb[0].mxu0
      %v10141 = vadd.f32 0.0, %v10140
      %v10142 = vpop.f32.mrb[0].mxu0
      %v10143 = vpop.f32.mrb[0].mxu0
      %v10144 = vadd.f32 0.0, %v10143
      %v10145 = vpop.f32.mrb[0].mxu0
      %10146 = vmatprep.mubr.bf16.mxu0 0
      %10147 = vmatmul.mubr.bf16.gmra.mrb[0].mxu0 %v10010
      %v10148 = vpop.f32.mrb[0].mxu0
      %v10149 = vadd.f32 0.0, %v10148
      %v10150 = vpop.f32.mrb[0].mxu0
      %v10151 = vpop.f32.mrb[0].mxu0
      %v10152 = vadd.f32 0.0, %v10151
      %v10153 = vpop.f32.mrb[0].mxu0
      %10154 = vmatprep.mubr.bf16.mxu0 0
      %10155 = vmatmul.mubr.bf16.gmra.mrb[0].mxu0 %v10012
      %v10156 = vpop.f32.mrb[0].mxu0
      %v10157 = vadd.f32 0.0, %v10156
      %v10158 = vpop.f32.mrb[0].mxu0
      %v10159 = vpop.f32.mrb[0].mxu0
      %v10160 = vadd.f32 0.0, %v10159
      %v10161 = vpop.f32.mrb[0].mxu0
      %10162 = vmatprep.mubr.bf16.mxu0 0
      %10163 = vmatmul.mubr.bf16.gmra.mrb[0].mxu0 %v10014
      %v10164 = vpop.f32.mrb[0].mxu0
      %v10165 = vadd.f32 0.0, %v10164
      %v10166 = vpop.f32.mrb[0].mxu0
      %v10167 = vpop.f32.mrb[0].mxu0
      %v10168 = vadd.f32 0.0, %v10167
      %v10169 = vpop.f32.mrb[0].mxu0
      %10170 = vmatprep.mubr.bf16.mxu0 0
      %10171 = vmatmul.mubr.bf16.gmra.mrb[0].mxu0 %v10016
      %v10172 = vpop.f32.mrb[0].mxu0
      %v10173 = vadd.f32 0.0, %v10172
      %v10174 = vpop.f32.mrb[0].mxu0
      %v10175 = vpop.f32.mrb[0].mxu0
      %v10176 = vadd.f32 0.0, %v10175
      %v10177 = vpop.f32.mrb[0].mxu0
      %10178 = vdwg.mxu0
      %v10179 = vadd.f32 %v9299, %v10053
      %v10180 = vadd.f32 %v9302, %v10056
      %v10181 = vadd.f32 %v9307, %v10061
      %v10182 = vadd.f32 %v9310, %v10064
      %v10183 = vadd.f32 %v9315, %v10069
      %v10184 = vadd.f32 %v9318, %v10072
      %v10185 = vadd.f32 %v9323, %v10077
      %v10186 = vadd.f32 %v9326, %v10080
      %v10187 = vadd.f32 %v9331, %v10085
      %v10188 = vadd.f32 %v9334, %v10088
      %v10189 = vadd.f32 %v9339, %v10093
      %v10190 = vadd.f32 %v9342, %v10096
      %v10191 = vadd.f32 %v9347, %v10101
      %v10192 = vadd.f32 %v9350, %v10104
      %v10193 = vadd.f32 %v9355, %v10109
      %v10194 = vadd.f32 %v9358, %v10112
      %v10195 = vadd.f32 %v9363, %v10117
      %v10196 = vadd.f32 %v9366, %v10120
      %v10197 = vadd.f32 %v9371, %v10125
      %v10198 = vadd.f32 %v9374, %v10128
      %v10199 = vadd.f32 %v9379, %v10133
      %v10200 = vadd.f32 %v9382, %v10136
      %v10201 = vadd.f32 %v9387, %v10141
      %v10202 = vadd.f32 %v9390, %v10144
      %v10203 = vadd.f32 %v9395, %v10149
      %v10204 = vadd.f32 %v9398, %v10152
      %v10205 = vadd.f32 %v9403, %v10157
      %v10206 = vadd.f32 %v9406, %v10160
      %v10207 = vadd.f32 %v9411, %v10165
      %v10208 = vadd.f32 %v9414, %v10168
      %v10209 = vadd.f32 %v9419, %v10173
      %v10210 = vadd.f32 %v9422, %v10176
      %v10211 = vld [vmem:[%s4] sm:$0x1]
      %v10213 = vlaneseq
      %v10214 = vshrl.u32 %v10213, 7
      %v10215 = vsub.s32 0, %v10214
      %v10216 = vrot.slane %v10211, %v10215
      %v10218 = vadd.f32 %v10179, %v10216
      %v10219 = vadd.f32 %v10180, %v10216
      %v10220 = vadd.f32 %v10181, %v10216
      %v10221 = vadd.f32 %v10182, %v10216
      %v10222 = vadd.f32 %v10183, %v10216
      %v10223 = vadd.f32 %v10184, %v10216
      %v10224 = vadd.f32 %v10185, %v10216
      %v10225 = vadd.f32 %v10186, %v10216
      %v10226 = vadd.f32 %v10187, %v10216
      %v10227 = vadd.f32 %v10188, %v10216
      %v10228 = vadd.f32 %v10189, %v10216
      %v10229 = vadd.f32 %v10190, %v10216
      %v10230 = vadd.f32 %v10191, %v10216
      %v10231 = vadd.f32 %v10192, %v10216
      %v10232 = vadd.f32 %v10193, %v10216
      %v10233 = vadd.f32 %v10194, %v10216
      %v10234 = vadd.f32 %v10195, %v10216
      %v10235 = vadd.f32 %v10196, %v10216
      %v10236 = vadd.f32 %v10197, %v10216
      %v10237 = vadd.f32 %v10198, %v10216
      %v10238 = vadd.f32 %v10199, %v10216
      %v10239 = vadd.f32 %v10200, %v10216
      %v10240 = vadd.f32 %v10201, %v10216
      %v10241 = vadd.f32 %v10202, %v10216
      %v10242 = vadd.f32 %v10203, %v10216
      %v10243 = vadd.f32 %v10204, %v10216
      %v10244 = vadd.f32 %v10205, %v10216
      %v10245 = vadd.f32 %v10206, %v10216
      %v10246 = vadd.f32 %v10207, %v10216
      %v10247 = vadd.f32 %v10208, %v10216
      %v10248 = vadd.f32 %v10209, %v10216
      %v10249 = vadd.f32 %v10210, %v10216
      %v10250 = vmax.f32 %v10218, 0.0
      %v10251 = vmax.f32 %v10219, 0.0
      %v10252 = vmax.f32 %v10220, 0.0
      %v10253 = vmax.f32 %v10221, 0.0
      %v10254 = vmax.f32 %v10222, 0.0
      %v10255 = vmax.f32 %v10223, 0.0
      %v10256 = vmax.f32 %v10224, 0.0
      %v10257 = vmax.f32 %v10225, 0.0
      %v10258 = vmax.f32 %v10226, 0.0
      %v10259 = vmax.f32 %v10227, 0.0
      %v10260 = vmax.f32 %v10228, 0.0
      %v10261 = vmax.f32 %v10229, 0.0
      %v10262 = vmax.f32 %v10230, 0.0
      %v10263 = vmax.f32 %v10231, 0.0
      %v10264 = vmax.f32 %v10232, 0.0
      %v10265 = vmax.f32 %v10233, 0.0
      %v10266 = vmax.f32 %v10234, 0.0
      %v10267 = vmax.f32 %v10235, 0.0
      %v10268 = vmax.f32 %v10236, 0.0
      %v10269 = vmax.f32 %v10237, 0.0
      %v10270 = vmax.f32 %v10238, 0.0
      %v10271 = vmax.f32 %v10239, 0.0
      %v10272 = vmax.f32 %v10240, 0.0
      %v10273 = vmax.f32 %v10241, 0.0
      %v10274 = vmax.f32 %v10242, 0.0
      %v10275 = vmax.f32 %v10243, 0.0
      %v10276 = vmax.f32 %v10244, 0.0
      %v10277 = vmax.f32 %v10245, 0.0
      %v10278 = vmax.f32 %v10246, 0.0
      %v10279 = vmax.f32 %v10247, 0.0
      %v10280 = vmax.f32 %v10248, 0.0
      %v10281 = vmax.f32 %v10249, 0.0
      %10282 = vst.msk [vmem:[#allocation5] sm:$0xff] %vm8397, %v10250
      %10283 = vst.msk [vmem:[#allocation5 + $0x8] sm:$0xff] %vm8397, %v10251
      %10284 = vst.msk [vmem:[#allocation5 + $0x10] sm:$0xff] %vm8397, %v10252
      %10285 = vst.msk [vmem:[#allocation5 + $0x18] sm:$0xff] %vm8397, %v10253
      %10286 = vst.msk [vmem:[#allocation5 + $0x20] sm:$0xff] %vm8397, %v10254
      %10287 = vst.msk [vmem:[#allocation5 + $0x28] sm:$0xff] %vm8397, %v10255
      %10288 = vst.msk [vmem:[#allocation5 + $0x30] sm:$0xff] %vm8397, %v10256
      %10289 = vst.msk [vmem:[#allocation5 + $0x38] sm:$0xff] %vm8397, %v10257
      %10290 = vst.msk [vmem:[#allocation5 + $0x40] sm:$0xff] %vm8397, %v10258
      %10291 = vst.msk [vmem:[#allocation5 + $0x48] sm:$0xff] %vm8397, %v10259
      %10292 = vst.msk [vmem:[#allocation5 + $0x50] sm:$0xff] %vm8397, %v10260
      %10293 = vst.msk [vmem:[#allocation5 + $0x58] sm:$0xff] %vm8397, %v10261
      %10294 = vst.msk [vmem:[#allocation5 + $0x60] sm:$0xff] %vm8397, %v10262
      %10295 = vst.msk [vmem:[#allocation5 + $0x68] sm:$0xff] %vm8397, %v10263
      %10296 = vst.msk [vmem:[#allocation5 + $0x70] sm:$0xff] %vm8397, %v10264
      %10297 = vst.msk [vmem:[#allocation5 + $0x78] sm:$0xff] %vm8397, %v10265
      %10298 = vst.msk [vmem:[#allocation5 + $0x80] sm:$0xff] %vm8397, %v10266
      %10299 = vst.msk [vmem:[#allocation5 + $0x88] sm:$0xff] %vm8397, %v10267
      %10300 = vst.msk [vmem:[#allocation5 + $0x90] sm:$0xff] %vm8397, %v10268
      %10301 = vst.msk [vmem:[#allocation5 + $0x98] sm:$0xff] %vm8397, %v10269
      %10302 = vst.msk [vmem:[#allocation5 + $0xa0] sm:$0xff] %vm8397, %v10270
      %10303 = vst.msk [vmem:[#allocation5 + $0xa8] sm:$0xff] %vm8397, %v10271
      %10304 = vst.msk [vmem:[#allocation5 + $0xb0] sm:$0xff] %vm8397, %v10272
      %10305 = vst.msk [vmem:[#allocation5 + $0xb8] sm:$0xff] %vm8397, %v10273
      %10306 = vst.msk [vmem:[#allocation5 + $0xc0] sm:$0xff] %vm8397, %v10274
      %10307 = vst.msk [vmem:[#allocation5 + $0xc8] sm:$0xff] %vm8397, %v10275
      %10308 = vst.msk [vmem:[#allocation5 + $0xd0] sm:$0xff] %vm8397, %v10276
      %10309 = vst.msk [vmem:[#allocation5 + $0xd8] sm:$0xff] %vm8397, %v10277
      %10310 = vst.msk [vmem:[#allocation5 + $0xe0] sm:$0xff] %vm8397, %v10278
      %10311 = vst.msk [vmem:[#allocation5 + $0xe8] sm:$0xff] %vm8397, %v10279
      %10312 = vst.msk [vmem:[#allocation5 + $0xf0] sm:$0xff] %vm8397, %v10280
      %10313 = vst.msk [vmem:[#allocation5 + $0xf8] sm:$0xff] %vm8397, %v10281
      %v10314 = vld [vmem:[#allocation5] ss:$2 sm:$0xff]
      %s10315 = scalar_lea.vmem [#allocation5], 16
      %v10316 = vld [vmem:[%s10315] ss:$2 sm:$0xff]
      %s10317 = scalar_lea.vmem [#allocation5], 32
      %v10318 = vld [vmem:[%s10317] ss:$2 sm:$0xff]
      %s10319 = scalar_lea.vmem [#allocation5], 48
      %v10320 = vld [vmem:[%s10319] ss:$2 sm:$0xff]
      %s10321 = scalar_lea.vmem [#allocation5], 64
      %v10322 = vld [vmem:[%s10321] ss:$2 sm:$0xff]
      %s10323 = scalar_lea.vmem [#allocation5], 80
      %v10324 = vld [vmem:[%s10323] ss:$2 sm:$0xff]
      %s10325 = scalar_lea.vmem [#allocation5], 96
      %v10326 = vld [vmem:[%s10325] ss:$2 sm:$0xff]
      %s10327 = scalar_lea.vmem [#allocation5], 112
      %v10328 = vld [vmem:[%s10327] ss:$2 sm:$0xff]
      %s10329 = scalar_lea.vmem [#allocation5], 128
      %v10330 = vld [vmem:[%s10329] ss:$2 sm:$0xff]
      %s10331 = scalar_lea.vmem [#allocation5], 144
      %v10332 = vld [vmem:[%s10331] ss:$2 sm:$0xff]
      %s10333 = scalar_lea.vmem [#allocation5], 160
      %v10334 = vld [vmem:[%s10333] ss:$2 sm:$0xff]
      %s10335 = scalar_lea.vmem [#allocation5], 176
      %v10336 = vld [vmem:[%s10335] ss:$2 sm:$0xff]
      %s10337 = scalar_lea.vmem [#allocation5], 192
      %v10338 = vld [vmem:[%s10337] ss:$2 sm:$0xff]
      %s10339 = scalar_lea.vmem [#allocation5], 208
      %v10340 = vld [vmem:[%s10339] ss:$2 sm:$0xff]
      %s10341 = scalar_lea.vmem [#allocation5], 224
      %v10342 = vld [vmem:[%s10341] ss:$2 sm:$0xff]
      %s10343 = scalar_lea.vmem [#allocation5], 240
      %v10344 = vld [vmem:[%s10343] ss:$2 sm:$0xff]
      %s10345 = scalar_lea.vmem [#allocation5], 1
      %v10346 = vld [vmem:[%s10345] ss:$2 sm:$0xff]
      %s10347 = scalar_lea.vmem [#allocation5], 17
      %v10348 = vld [vmem:[%s10347] ss:$2 sm:$0xff]
      %s10349 = scalar_lea.vmem [#allocation5], 33
      %v10350 = vld [vmem:[%s10349] ss:$2 sm:$0xff]
      %s10351 = scalar_lea.vmem [#allocation5], 49
      %v10352 = vld [vmem:[%s10351] ss:$2 sm:$0xff]
      %s10353 = scalar_lea.vmem [#allocation5], 65
      %v10354 = vld [vmem:[%s10353] ss:$2 sm:$0xff]
      %s10355 = scalar_lea.vmem [#allocation5], 81
      %v10356 = vld [vmem:[%s10355] ss:$2 sm:$0xff]
      %s10357 = scalar_lea.vmem [#allocation5], 97
      %v10358 = vld [vmem:[%s10357] ss:$2 sm:$0xff]
      %s10359 = scalar_lea.vmem [#allocation5], 113
      %v10360 = vld [vmem:[%s10359] ss:$2 sm:$0xff]
      %s10361 = scalar_lea.vmem [#allocation5], 129
      %v10362 = vld [vmem:[%s10361] ss:$2 sm:$0xff]
      %s10363 = scalar_lea.vmem [#allocation5], 145
      %v10364 = vld [vmem:[%s10363] ss:$2 sm:$0xff]
      %s10365 = scalar_lea.vmem [#allocation5], 161
      %v10366 = vld [vmem:[%s10365] ss:$2 sm:$0xff]
      %s10367 = scalar_lea.vmem [#allocation5], 177
      %v10368 = vld [vmem:[%s10367] ss:$2 sm:$0xff]
      %s10369 = scalar_lea.vmem [#allocation5], 193
      %v10370 = vld [vmem:[%s10369] ss:$2 sm:$0xff]
      %s10371 = scalar_lea.vmem [#allocation5], 209
      %v10372 = vld [vmem:[%s10371] ss:$2 sm:$0xff]
      %s10373 = scalar_lea.vmem [#allocation5], 225
      %v10374 = vld [vmem:[%s10373] ss:$2 sm:$0xff]
      %s10375 = scalar_lea.vmem [#allocation5], 241
      %v10376 = vld [vmem:[%s10375] ss:$2 sm:$0xff]
      %v10377 = vmax.f32 %v10314, %v10346
      %v10378 = vmax.f32 %v10316, %v10348
      %v10379 = vmax.f32 %v10318, %v10350
      %v10380 = vmax.f32 %v10320, %v10352
      %v10381 = vmax.f32 %v10322, %v10354
      %v10382 = vmax.f32 %v10324, %v10356
      %v10383 = vmax.f32 %v10326, %v10358
      %v10384 = vmax.f32 %v10328, %v10360
      %v10385 = vmax.f32 %v10330, %v10362
      %v10386 = vmax.f32 %v10332, %v10364
      %v10387 = vmax.f32 %v10334, %v10366
      %v10388 = vmax.f32 %v10336, %v10368
      %v10389 = vmax.f32 %v10338, %v10370
      %v10390 = vmax.f32 %v10340, %v10372
      %v10391 = vmax.f32 %v10342, %v10374
      %v10392 = vmax.f32 %v10344, %v10376
      %v10393 = vmax.f32 %v10377, %v10378
      %v10394 = vmax.f32 %v10379, %v10380
      %v10395 = vmax.f32 %v10381, %v10382
      %v10396 = vmax.f32 %v10383, %v10384
      %v10397 = vmax.f32 %v10385, %v10386
      %v10398 = vmax.f32 %v10387, %v10388
      %v10399 = vmax.f32 %v10389, %v10390
      %v10400 = vmax.f32 %v10391, %v10392
      %v10401 = vpack.c.bf16 %v10394, %v10393
      %v10402 = vpack.c.bf16 %v10396, %v10395
      %v10403 = vpack.c.bf16 %v10398, %v10397
      %v10404 = vpack.c.bf16 %v10400, %v10399
      %v10409 = vunpack.c.l.b16 %v10401
      %v10410 = vunpack.c.h.b16 %v10401
      %v10411 = vunpack.c.l.b16 %v10402
      %v10412 = vunpack.c.h.b16 %v10402
      %v10413 = vunpack.c.l.b16 %v10403
      %v10414 = vunpack.c.h.b16 %v10403
      %v10415 = vunpack.c.l.b16 %v10404
      %v10416 = vunpack.c.h.b16 %v10404
      %v10417 = vpack.c.b16 %v10409, %v10409
      %v10418 = vpack.c.b16 %v10410, %v10410
      %v10419 = vpack.c.b16 %v10411, %v10411
      %v10420 = vpack.c.b16 %v10412, %v10412
      %v10421 = vpack.c.b16 %v10413, %v10413
      %v10422 = vpack.c.b16 %v10414, %v10414
      %v10423 = vpack.c.b16 %v10415, %v10415
      %v10424 = vpack.c.b16 %v10416, %v10416
      %vm10433 = vcmask 519168
      %10434 = vst.msk [vmem:[%s224] sm:$0xf] %vm10433, %v10417
      %10435 = vst.msk [vmem:[%s224 + $0x4] sm:$0xf] %vm10433, %v10418
      %10436 = vst.msk [vmem:[%s224 + $0x8] sm:$0xf] %vm10433, %v10419
      %10437 = vst.msk [vmem:[%s224 + $0xc] sm:$0xf] %vm10433, %v10420
      %10438 = vst.msk [vmem:[%s224 + $0x10] sm:$0xf] %vm10433, %v10421
      %10439 = vst.msk [vmem:[%s224 + $0x14] sm:$0xf] %vm10433, %v10422
      %10440 = vst.msk [vmem:[%s224 + $0x18] sm:$0xf] %vm10433, %v10423
      %10441 = vst.msk [vmem:[%s224 + $0x1c] sm:$0xf] %vm10433, %v10424
      %p10442 = scmp.lt.s32.totalorder %s16, 1
      %s10443 = scalar_select %p10442, %s16, 1
      %s10444 = smul.addr %s10443, 8
      %s10445 = smul.addr %s10444, 4
      %s10446 = scalar_lea.vmem %s5, %s10445
      // Predicated region
      $region41: #{simple_cnn_forward.2} parent=39 // pred_check
        %p10447 = pneg %p144
      $region42: #{simple_cnn_forward.2} parent=39 // pred_check_branch
        %10449 = sbr.rel (%p10447) target = $region44
      $region43: #{simple_cnn_forward.2} parent=39 // pred_region
        _
      $region44: #{simple_cnn_forward.2} parent=39 // pred_fallthru
        _
    $region40: #{simple_cnn_forward.2} parent=5 // pred_fallthru
      _
    %p10450 = scmp.le.s32.totalorder 2, %s11
    // Predicated region
    $region45: #{simple_cnn_forward.2} parent=5 // pred_check
      %p10451 = pneg %p10450
    $region46: #{simple_cnn_forward.2} parent=5 // pred_check_branch
      %10453 = sbr.rel (%p10451) target = $region48
    $region47: #{simple_cnn_forward.2} parent=5 // pred_region
      %s10454 = ssub.s32 %s11, 2
      // Predicated region
      $region49: #{simple_cnn_forward.2} parent=47 // pred_check
        %p10455 = pneg %p150
      $region50: #{simple_cnn_forward.2} parent=47 // pred_check_branch
        %10457 = sbr.rel (%p10455) target = $region52
      $region51: #{simple_cnn_forward.2} parent=47 // pred_region
        %p10458 = scmp.lt.s32.totalorder %s17, 1
        %s10459 = scalar_select %p10458, %s17, 1
        %s10460 = smul.addr %s10459, 8
        %s10461 = smul.addr %s10460, 4
        %s10462 = scalar_lea.vmem %s5, %s10461
      $region52: #{simple_cnn_forward.2} parent=47 // pred_fallthru
        _
    $region48: #{simple_cnn_forward.2} parent=5 // pred_fallthru
      _
  $region6: #{simple_cnn_forward.2} parent=0 // loop_footer
    %s15 = sadd.s32 1, %s11
  $region7: #{simple_cnn_forward.2} parent=0 // loop_footer_branch
    %10 = sbr.rel target = $region3
  $region8: #{simple_cnn_forward.2} parent=0 // loop_exit
    _

</llo_original>
